<compile_context>
chip_gen: v6e
topology: v6e:2x2x1
jax: 0.10.0
libtpu: 0.0.40
codegen_flags: <defaults>
</compile_context>

<pallas_src>
import functools
import math

import jax
import jax.numpy as jnp
from jax.experimental import pallas as pl
from jax.experimental.pallas import tpu as pltpu

VMEM_LIMIT_BYTES = 32 * 1024 * 1024  # scoped-VMEM budget, safe on v5e/v6e/v7x


def _round_up(v, m):
    return (v + m - 1) // m * m


def _pick_tile(dim, pref, align):
    """Tile size: `pref` for large dims, else the dim rounded up to `align`."""
    if dim >= pref:
        return pref
    return _round_up(dim, align)


# ------------------------- tiled matmul kernel -------------------------

def _mm_kernel(a_ref, b_ref, bias_ref, o_ref, acc_ref, *, act):
    @pl.when(pl.program_id(2) == 0)
    def _():
        acc_ref[...] = jnp.zeros_like(acc_ref)

    acc_ref[...] += jnp.dot(a_ref[...], b_ref[...],
                            preferred_element_type=jnp.float32)

    @pl.when(pl.program_id(2) == pl.num_programs(2) - 1)
    def _():
        y = acc_ref[...] + bias_ref[...]
        if act == "relu":
            y = jnp.maximum(y, 0.0)
        elif act == "leaky":
            y = jnp.where(y >= 0.0, y, 0.1 * y)   # module uses LeakyReLU(0.1)
        o_ref[...] = y


def pallas_matmul(a, b, bias=None, act=None):
    """out = act(a @ b + bias). a:(M,K), b:(K,N), bias:(N,) or None.
    bf16 MXU inputs, f32 accumulator, tiled + pipelined grid."""
    M, K = a.shape
    K2, N = b.shape
    assert K == K2
    a16 = a.astype(jnp.bfloat16)
    b16 = b.astype(jnp.bfloat16)
    if bias is None:
        bias = jnp.zeros((N,), jnp.float32)

    tm = _pick_tile(M, 512, 8)
    tn = _pick_tile(N, 256, 128)
    tk = _pick_tile(K, 512, 128)
    Mp, Np, Kp = _round_up(M, tm), _round_up(N, tn), _round_up(K, tk)

    ap = jnp.pad(a16, ((0, Mp - M), (0, Kp - K)))
    bp = jnp.pad(b16, ((0, Kp - K), (0, Np - N)))
    biasp = jnp.pad(bias.astype(jnp.float32).reshape(1, N), ((0, 0), (0, Np - N)))

    grid = (Mp // tm, Np // tn, Kp // tk)
    out = pl.pallas_call(
        functools.partial(_mm_kernel, act=act),
        grid=grid,
        in_specs=[
            pl.BlockSpec((tm, tk), lambda i, j, k: (i, k)),
            pl.BlockSpec((tk, tn), lambda i, j, k: (k, j)),
            pl.BlockSpec((1, tn), lambda i, j, k: (0, j)),
        ],
        out_specs=pl.BlockSpec((tm, tn), lambda i, j, k: (i, j)),
        out_shape=jax.ShapeDtypeStruct((Mp, Np), jnp.float32),
        scratch_shapes=[pltpu.VMEM((tm, tn), jnp.float32)],
        compiler_params=pltpu.CompilerParams(
            dimension_semantics=("parallel", "parallel", "arbitrary"),
            vmem_limit_bytes=VMEM_LIMIT_BYTES),
    )(ap, bp, biasp)
    return out[:M, :N]


# ------------------------- LayerNorm kernels -------------------------

def pallas_layernorm(x2d, gamma, beta, eps=1e-5):
    """Row-tiled LayerNorm over the last dim of a (M, F) array."""
    M, F = x2d.shape
    tm = _pick_tile(M, 512, 8)
    Mp = _round_up(M, tm)
    xp = jnp.pad(x2d.astype(jnp.float32), ((0, Mp - M), (0, 0)))

    def kernel(x_ref, g_ref, b_ref, o_ref):
        xv = x_ref[...]
        mu = jnp.mean(xv, axis=-1, keepdims=True)
        var = jnp.mean((xv - mu) ** 2, axis=-1, keepdims=True)
        o_ref[...] = (xv - mu) * jax.lax.rsqrt(var + eps) * g_ref[...] + b_ref[...]

    out = pl.pallas_call(
        kernel,
        grid=(Mp // tm,),
        in_specs=[
            pl.BlockSpec((tm, F), lambda i: (i, 0)),
            pl.BlockSpec((1, F), lambda i: (0, 0)),
            pl.BlockSpec((1, F), lambda i: (0, 0)),
        ],
        out_specs=pl.BlockSpec((tm, F), lambda i: (i, 0)),
        out_shape=jax.ShapeDtypeStruct((Mp, F), jnp.float32),
        compiler_params=pltpu.CompilerParams(
            dimension_semantics=("parallel",),
            vmem_limit_bytes=VMEM_LIMIT_BYTES),
    )(xp, gamma.reshape(1, F).astype(jnp.float32),
      beta.reshape(1, F).astype(jnp.float32))
    return out[:M]


def pallas_ln_matmul(x2d, gamma, beta, w, bias, eps=1e-5):
    """Fused: out = LayerNorm(x2d) @ w + bias  (LN over last dim of x2d)."""
    M, K = x2d.shape
    K2, N = w.shape
    assert K == K2
    Kp = _round_up(K, 128)
    tm = _pick_tile(M, 512, 8)
    tn = _pick_tile(N, 256, 128)
    Mp, Np = _round_up(M, tm), _round_up(N, tn)

    xp = jnp.pad(x2d.astype(jnp.float32), ((0, Mp - M), (0, Kp - K)))
    gp = jnp.pad(gamma.astype(jnp.float32).reshape(1, K), ((0, 0), (0, Kp - K)))
    bp = jnp.pad(beta.astype(jnp.float32).reshape(1, K), ((0, 0), (0, Kp - K)))
    wp = jnp.pad(w.astype(jnp.bfloat16), ((0, Kp - K), (0, Np - N)))
    biasp = jnp.pad(bias.astype(jnp.float32).reshape(1, N), ((0, 0), (0, Np - N)))
    inv_k = 1.0 / K

    def kernel(x_ref, g_ref, b_ref, w_ref, bias_ref, o_ref):
        xv = x_ref[...]                                         # (tm, Kp) f32
        col = jax.lax.broadcasted_iota(jnp.int32, xv.shape, 1)
        mask = (col < K).astype(jnp.float32)                    # ignore K padding
        mu = jnp.sum(xv, axis=-1, keepdims=True) * inv_k        # padded cols are zero
        diff = (xv - mu) * mask
        var = jnp.sum(diff * diff, axis=-1, keepdims=True) * inv_k
        xn = diff * jax.lax.rsqrt(var + eps) * g_ref[...] + b_ref[...] * mask
        y = jnp.dot(xn.astype(jnp.bfloat16), w_ref[...],
                    preferred_element_type=jnp.float32) + bias_ref[...]
        o_ref[...] = y

    out = pl.pallas_call(
        kernel,
        grid=(Mp // tm, Np // tn),
        in_specs=[
            pl.BlockSpec((tm, Kp), lambda i, j: (i, 0)),
            pl.BlockSpec((1, Kp), lambda i, j: (0, 0)),
            pl.BlockSpec((1, Kp), lambda i, j: (0, 0)),
            pl.BlockSpec((Kp, tn), lambda i, j: (0, j)),
            pl.BlockSpec((1, tn), lambda i, j: (0, j)),
        ],
        out_specs=pl.BlockSpec((tm, tn), lambda i, j: (i, j)),
        out_shape=jax.ShapeDtypeStruct((Mp, Np), jnp.float32),
        compiler_params=pltpu.CompilerParams(
            dimension_semantics=("parallel", "parallel"),
            vmem_limit_bytes=VMEM_LIMIT_BYTES),
    )(xp, gp, bp, wp, biasp)
    return out[:M, :N]


# ------------------------- Mamba selective scan -------------------------

def pallas_selective_scan(delta, u, Bs, Cs, A, D):
    """Sequential Mamba recurrence with in-kernel discretization.

    All NS independent sequences are packed on the LANE axis
    (lane = s * d_inner + d), so the sequential loop runs L steps total
    instead of NS * L, and each step uses wider vector ops.

    delta, u : (NS, L, d_inner) f32
    Bs, Cs   : (NS, L, d_state) f32
    A        : (d_inner, d_state) f32   (= -exp(A_log))
    D        : (d_inner,) f32
    returns y: (NS, L, d_inner) f32
    """
    NS, L, d_inner = delta.shape
    d_state = Bs.shape[-1]
    NSD = NS * d_inner

    # lane-pack sequences (cheap XLA transposes/reshapes outside the kernel)
    dlt = jnp.transpose(delta, (1, 0, 2)).reshape(L, NSD).astype(jnp.float32)
    ut = jnp.transpose(u, (1, 0, 2)).reshape(L, NSD).astype(jnp.float32)
    # B/C need the per-sequence scalar broadcast over that sequence's d_inner lanes
    bx = jnp.broadcast_to(jnp.transpose(Bs, (1, 2, 0))[..., None],
                          (L, d_state, NS, d_inner)).reshape(L, d_state, NSD)
    cx = jnp.broadcast_to(jnp.transpose(Cs, (1, 2, 0))[..., None],
                          (L, d_state, NS, d_inner)).reshape(L, d_state, NSD)
    at = jnp.tile(A.T, (1, NS)).astype(jnp.float32)                    # (d_state, NSD)
    dvec = jnp.tile(D.reshape(1, d_inner), (1, NS)).astype(jnp.float32)  # (1, NSD)

    tl = 128 if (L % 128 == 0) else L       # token-axis tiling; h carried in scratch
    grid = (L // tl,)

    def kernel(delta_ref, u_ref, b_ref, c_ref, a_ref, d_ref, y_ref, h_ref):
        @pl.when(pl.program_id(0) == 0)
        def _():
            h_ref[...] = jnp.zeros_like(h_ref)

        Av = a_ref[...]                       # (d_state, NSD)
        Dv = d_ref[...]                       # (1, NSD)

        def body(t, h):
            dt = delta_ref[pl.ds(t, 1), :]    # (1, NSD)
            uu = u_ref[pl.ds(t, 1), :]        # (1, NSD)
            bt = b_ref[t]                     # (d_state, NSD)
            ct = c_ref[t]                     # (d_state, NSD)
            dA = jnp.exp(dt * Av)             # exp(delta*A) computed in-kernel
            h = dA * h + (dt * uu) * bt       # delta*B*u computed in-kernel
            y_ref[pl.ds(t, 1), :] = (jnp.sum(h * ct, axis=0, keepdims=True)
                                     + Dv * uu)
            return h

        h_ref[...] = jax.lax.fori_loop(0, tl, body, h_ref[...])

    y = pl.pallas_call(
        kernel,
        grid=grid,
        in_specs=[
            pl.BlockSpec((tl, NSD), lambda j: (j, 0)),
            pl.BlockSpec((tl, NSD), lambda j: (j, 0)),
            pl.BlockSpec((tl, d_state, NSD), lambda j: (j, 0, 0)),
            pl.BlockSpec((tl, d_state, NSD), lambda j: (j, 0, 0)),
            pl.BlockSpec((d_state, NSD), lambda j: (0, 0)),
            pl.BlockSpec((1, NSD), lambda j: (0, 0)),
        ],
        out_specs=pl.BlockSpec((tl, NSD), lambda j: (j, 0)),
        out_shape=jax.ShapeDtypeStruct((L, NSD), jnp.float32),
        scratch_shapes=[pltpu.VMEM((d_state, NSD), jnp.float32)],
        compiler_params=pltpu.CompilerParams(
            dimension_semantics=("arbitrary",),
            vmem_limit_bytes=VMEM_LIMIT_BYTES),
    )(dlt, ut, bx, cx, at, dvec)
    return jnp.transpose(y.reshape(L, NS, d_inner), (1, 0, 2))


# ------------------------- conv helpers -------------------------

def _im2col(x_nchw, ksize, pad):
    """NCHW -> (B*H*W, k*k*Cin) bf16 patches (tap-major, Cin-minor)."""
    B, Cin, H, W = x_nchw.shape
    x_nhwc = jnp.transpose(x_nchw, (0, 2, 3, 1)).astype(jnp.bfloat16)
    if ksize == 1:
        return x_nhwc.reshape(B * H * W, Cin)
    xp = jnp.pad(x_nhwc, ((0, 0), (pad, pad), (pad, pad), (0, 0)))
    cols = []
    for i in range(ksize):
        for j in range(ksize):
            cols.append(xp[:, i:i + H, j:j + W, :])
    return jnp.stack(cols, axis=3).reshape(B * H * W, ksize * ksize * Cin)


def _conv_wmat(w, ksize):
    """PyTorch (Cout,Cin,kh,kw) -> (k*k*Cin, Cout) bf16 matmul weight."""
    Cout, Cin = w.shape[0], w.shape[1]
    if ksize == 1:
        return w.reshape(Cout, Cin).T.astype(jnp.bfloat16)
    return jnp.transpose(w, (2, 3, 1, 0)).reshape(ksize * ksize * Cin, Cout).astype(jnp.bfloat16)


def conv2d_pallas(x_nchw, w, b, ksize, pad, act=None):
    """PyTorch-semantics Conv2d (stride 1) via bf16 im2col + tiled Pallas matmul."""
    B, Cin, H, W = x_nchw.shape
    Cout = w.shape[0]
    out = pallas_matmul(_im2col(x_nchw, ksize, pad), _conv_wmat(w, ksize), b, act=act)
    return jnp.transpose(out.reshape(B, H, W, Cout), (0, 3, 1, 2))


def conv2d_pair_pallas(x1, w1, b1, x2, w2, b2, ksize, pad, act=None):
    """Two same-shape convs (different inputs & weights) fused into one Pallas
    matmul: K-concatenated patches x block-diagonal weights."""
    B, Cin, H, W = x1.shape
    Cout = w1.shape[0]
    p1 = _im2col(x1, ksize, pad)
    p2 = _im2col(x2, ksize, pad)
    m1 = _conv_wmat(w1, ksize)
    m2 = _conv_wmat(w2, ksize)
    zeros = jnp.zeros_like(m1)
    patches = jnp.concatenate([p1, p2], axis=1)
    wblk = jnp.concatenate(
        [jnp.concatenate([m1, zeros], axis=1),
         jnp.concatenate([zeros, m2], axis=1)], axis=0)
    bias = jnp.concatenate([b1, b2]).astype(jnp.float32)
    out = pallas_matmul(patches, wblk, bias, act=act)
    o1 = jnp.transpose(out[:, :Cout].reshape(B, H, W, Cout), (0, 3, 1, 2))
    o2 = jnp.transpose(out[:, Cout:].reshape(B, H, W, Cout), (0, 3, 1, 2))
    return o1, o2


def batchnorm2d(x, gamma, beta, eps=1e-5):
    # nn.BatchNorm2d in training mode (module default): per-channel batch stats.
    mu = jnp.mean(x, axis=(0, 2, 3), keepdims=True)
    var = jnp.mean((x - mu) ** 2, axis=(0, 2, 3), keepdims=True)
    return ((x - mu) * jax.lax.rsqrt(var + eps) * gamma.reshape(1, -1, 1, 1)
            + beta.reshape(1, -1, 1, 1))


# ------------------------- sub-modules -------------------------

def frequency_filter(x, p):
    B, C, H, W = x.shape
    # TODO(synk): FFT / complex math has no Pallas equivalent -> plain XLA around the conv kernels.
    msF = jnp.fft.rfft2(x + 1e-8, norm="backward")
    amp = jnp.abs(msF)
    pha = jnp.angle(msF)

    h_amp, h_pha = conv2d_pair_pallas(amp, p["amp_w1"], p["amp_b1"],
                                      pha, p["pha_w1"], p["pha_b1"],
                                      ksize=3, pad=1, act="leaky")
    a2, p2 = conv2d_pair_pallas(h_amp, p["amp_w2"], p["amp_b2"],
                                h_pha, p["pha_w2"], p["pha_b2"],
                                ksize=3, pad=1)
    amp_fuse = a2 + amp
    pha_fuse = p2 + pha
    real = amp_fuse * jnp.cos(pha_fuse) + 1e-8
    imag = amp_fuse * jnp.sin(pha_fuse) + 1e-8
    out_c = jax.lax.complex(real + 1e-8, imag)   # torch.complex(...)+1e-8 adds to real part
    out = jnp.abs(jnp.fft.irfft2(out_c, s=(H, W), norm="backward"))
    out = out + x
    out = conv2d_pallas(out, p["ca_w"], p["ca_b"], ksize=1, pad=0)
    return jnp.nan_to_num(out, nan=1e-5, posinf=1e-5, neginf=1e-5)


def double_conv(x, p):
    h = conv2d_pallas(x, p["w1"], p["b1"], 3, 1)
    h = jnp.maximum(batchnorm2d(h, p["bn1_g"], p["bn1_b"]), 0.0)
    h = conv2d_pallas(h, p["w2"], p["b2"], 3, 1)
    h = batchnorm2d(h, p["bn2_g"], p["bn2_b"])
    res = conv2d_pallas(x, p["w3"], p["b3"], 1, 0)
    return jnp.maximum(h + res, 0.0)


def mamba_forward(x, p):
    """Mamba forward (reference-path semantics). x: (NB, L, d_model)."""
    NB, L, d_model = x.shape
    d_inner = p["in_proj_w"].shape[0] // 2
    d_state = p["A_log"].shape[1]
    dt_rank = p["dt_proj_w"].shape[1]
    d_conv = p["conv_w"].shape[-1]

    xz = pallas_matmul(x.reshape(NB * L, d_model), p["in_proj_w"].T)
    xz = xz.reshape(NB, L, 2 * d_inner)
    xi, z = xz[..., :d_inner], xz[..., d_inner:]

    # depthwise causal conv1d along tokens + SiLU (tiny elementwise work -> XLA)
    xpad = jnp.pad(xi, ((0, 0), (d_conv - 1, 0), (0, 0)))
    xc = jnp.zeros_like(xi)
    for k in range(d_conv):
        xc = xc + xpad[:, k:k + L, :] * p["conv_w"][:, 0, k][None, None, :]
    xc = xc + p["conv_b"][None, None, :]
    xa = jax.nn.silu(xc)

    # x_proj and dt_proj folded into ONE matmul (x_proj has no bias, so
    # dt_proj(x_proj(x)[:, :dt_rank]) == x @ (x_proj_w[:dt_rank].T @ dt_proj_w.T) + dt_proj_b)
    w_dt = p["x_proj_w"][:dt_rank, :].T @ p["dt_proj_w"].T            # (d_inner, d_inner)
    w_b = p["x_proj_w"][dt_rank:dt_rank + d_state, :].T               # (d_inner, d_state)
    w_c = p["x_proj_w"][dt_rank + d_state:, :].T                      # (d_inner, d_state)
    w_cat = jnp.concatenate([w_dt, w_b, w_c], axis=1)
    b_cat = jnp.concatenate([p["dt_proj_b"],
                             jnp.zeros((2 * d_state,), jnp.float32)])
    dbc = pallas_matmul(xa.reshape(NB * L, d_inner), w_cat, b_cat)
    delta = jax.nn.softplus(dbc[:, :d_inner]).reshape(NB, L, d_inner)
    Bs = dbc[:, d_inner:d_inner + d_state].reshape(NB, L, d_state)
    Cs = dbc[:, d_inner + d_state:].reshape(NB, L, d_state)

    A = -jnp.exp(p["A_log"])                             # (d_inner, d_state)
    # discretization (exp(delta*A), delta*B*u) happens INSIDE the Pallas scan.
    y = pallas_selective_scan(delta, xa, Bs, Cs, A, p["D"])
    y = y * jax.nn.silu(z)
    out = pallas_matmul(y.reshape(NB * L, d_inner), p["out_proj_w"].T)
    return out.reshape(NB, L, d_model)


# ------------------------- SFIMoudle forward -------------------------

def sfi_forward(x, params):
    x = x.astype(jnp.float32)
    B, C, H, W = x.shape
    n_tokens = H * W

    m1 = frequency_filter(x, params["fft"])
    m2 = double_conv(x, params["enc"])
    result = jnp.concatenate([m1, m2], axis=1)                 # (B, 2C, H, W)
    idx = []
    for i in range(C):
        idx += [i, C + i]
    result = result[:, jnp.array(idx), :, :]                   # interleave m1/m2 channels
    # TODO(synk): torch.randperm + print in the reference does not affect the output; omitted.

    x_flat = result.reshape(B, 2 * C, n_tokens).transpose(0, 2, 1)    # (B, n, 2C)
    x_norm = pallas_layernorm(
        x_flat.reshape(B * n_tokens, 2 * C), params["norm_g"], params["norm_b"]
    ).reshape(B, n_tokens, 2 * C)

    chunks = jnp.split(x_norm, 4, axis=2)                      # 4 x (B, n, C//2)
    # the same Mamba (shared weights) is applied to each chunk -> batch them together
    ycat = mamba_forward(jnp.concatenate(chunks, axis=0), params["mamba"])
    ys = jnp.split(ycat, 4, axis=0)
    outs = [ys[i] + params["skip_scale"] * chunks[i] for i in range(4)]
    x_mamba = jnp.concatenate(outs, axis=2)                    # (B, n, 2C)

    # fused LayerNorm + final projection (single Pallas kernel)
    out_dim = params["proj_w"].shape[0]
    y = pallas_ln_matmul(
        x_mamba.reshape(B * n_tokens, 2 * C),
        params["norm_g"], params["norm_b"],
        params["proj_w"].T, params["proj_b"],
    ).reshape(B, n_tokens, out_dim)
    return y.transpose(0, 2, 1).reshape(B, out_dim, H, W)


# ------------------------- parameter init -------------------------

def init_params(input_dim, output_dim, d_state=16, d_conv=4, expand=2, seed=42):
    C = input_dim
    d_model = C // 2
    d_inner = expand * d_model
    dt_rank = math.ceil(d_model / 16)
    ks = iter(jax.random.split(jax.random.PRNGKey(seed), 40))

    def w(shape, scale=0.1):
        return scale * jax.random.normal(next(ks), shape, dtype=jnp.float32)

    p = {}
    p["fft"] = dict(
        amp_w1=w((C, C, 3, 3)), amp_b1=w((C,), 0.01),
        amp_w2=w((C, C, 3, 3)), amp_b2=w((C,), 0.01),
        pha_w1=w((C, C, 3, 3)), pha_b1=w((C,), 0.01),
        pha_w2=w((C, C, 3, 3)), pha_b2=w((C,), 0.01),
        ca_w=w((C, C, 1, 1)), ca_b=w((C,), 0.01),
    )
    p["enc"] = dict(
        w1=w((C, C, 3, 3)), b1=w((C,), 0.01),
        w2=w((C, C, 3, 3)), b2=w((C,), 0.01),
        w3=w((C, C, 1, 1)), b3=w((C,), 0.01),
        bn1_g=jnp.ones((C,), jnp.float32), bn1_b=jnp.zeros((C,), jnp.float32),
        bn2_g=jnp.ones((C,), jnp.float32), bn2_b=jnp.zeros((C,), jnp.float32),
    )
    p["norm_g"] = jnp.ones((2 * C,), jnp.float32)
    p["norm_b"] = jnp.zeros((2 * C,), jnp.float32)
    p["proj_w"] = w((output_dim, 2 * C))
    p["proj_b"] = w((output_dim,), 0.01)
    p["skip_scale"] = jnp.ones((1,), jnp.float32)

    A = jnp.tile(jnp.arange(1, d_state + 1, dtype=jnp.float32)[None, :], (d_inner, 1))
    p["mamba"] = dict(
        in_proj_w=w((2 * d_inner, d_model)),
        conv_w=w((d_inner, 1, d_conv)), conv_b=w((d_inner,), 0.01),
        x_proj_w=w((dt_rank + 2 * d_state, d_inner)),
        dt_proj_w=w((d_inner, dt_rank), 0.5), dt_proj_b=w((d_inner,), 0.1),
        A_log=jnp.log(A), D=jnp.ones((d_inner,), jnp.float32),
        out_proj_w=w((d_model, d_inner)),
    )
    return p


if __name__ == "__main__":
    B, C, H, W = 2, 4, 16, 16      # input_dim = 4
    output_dim = 4
    x = jax.random.normal(jax.random.PRNGKey(0), (B, C, H, W), dtype=jnp.float32)
    params = init_params(C, output_dim)

    out = jax.jit(sfi_forward)(x, params)
    out = jax.block_until_ready(out)
    assert out.shape == (B, output_dim, H, W), out.shape
    assert bool(jnp.all(jnp.isfinite(out)))
    print("KERNEL_OK")
</pallas_src>

<mosaic_0001>
module attributes {stable_mosaic.version = 11 : i64} {
  func.func @_mm_kernel(%arg0: i32, %arg1: i32, %arg2: i32, %arg3: memref<512x128xbf16, #tpu.memory_space<vmem>>, %arg4: memref<128x128xbf16, #tpu.memory_space<vmem>>, %arg5: memref<1x128xf32, #tpu.memory_space<vmem>>, %arg6: memref<512x128xf32, #tpu.memory_space<vmem>>, %arg7: memref<512x128xf32, #tpu.memory_space<vmem>>) attributes {dimension_semantics = [#tpu.dimension_semantics<parallel>, #tpu.dimension_semantics<parallel>, #tpu.dimension_semantics<arbitrary>], iteration_bounds = array<i64: 1, 1, 1>, scalar_prefetch = 0 : i64, scratch_operands = 1 : i64, tpu.core_type = #tpu.core_type<tc>, window_params = [{transform_indices = @transform_0, window_bounds = array<i64: 512, 128>}, {transform_indices = @transform_1, window_bounds = array<i64: 128, 128>}, {transform_indices = @transform_2, window_bounds = array<i64: 1, 128>}, {transform_indices = @transform_3, window_bounds = array<i64: 512, 128>}]} {
    %c0_i32 = arith.constant 0 : i32
    %0 = arith.cmpi eq, %arg2, %c0_i32 : i32
    %1 = arith.extui %0 : i1 to i32
    %c0_i32_0 = arith.constant 0 : i32
    %2 = arith.cmpi ne, %1, %c0_i32_0 : i32
    scf.if %2 {
      %cst_10 = arith.constant 0.000000e+00 : f32
      %12 = vector.broadcast %cst_10 : f32 to vector<512x128xf32>
      %c0_11 = arith.constant 0 : index
      %c0_12 = arith.constant 0 : index
      %13 = vector.load %arg7[%c0_11, %c0_12] : memref<512x128xf32, #tpu.memory_space<vmem>>, vector<512x128xf32>
      tpu.vector_store %arg7[%c0_11, %c0_12], %12 {strides = array<i32>} : memref<512x128xf32, #tpu.memory_space<vmem>>, vector<512x128xf32>,
    } else {
    }
    %c0 = arith.constant 0 : index
    %c0_1 = arith.constant 0 : index
    %3 = vector.load %arg7[%c0, %c0_1] : memref<512x128xf32, #tpu.memory_space<vmem>>, vector<512x128xf32>
    %c0_2 = arith.constant 0 : index
    %c0_3 = arith.constant 0 : index
    %4 = vector.load %arg3[%c0_2, %c0_3] : memref<512x128xbf16, #tpu.memory_space<vmem>>, vector<512x128xbf16>
    %c0_4 = arith.constant 0 : index
    %c0_5 = arith.constant 0 : index
    %5 = vector.load %arg4[%c0_4, %c0_5] : memref<128x128xbf16, #tpu.memory_space<vmem>>, vector<128x128xbf16>
    %cst = arith.constant dense<0.000000e+00> : vector<512x128xf32>
    %6 = tpu.matmul %4, %5, %cst {dimension_numbers = #tpu.dot_dimension_numbers<[1], [0], [0], [1], [0, 0, 1, 1], [], []>} : vector<512x128xbf16>, vector<128x128xbf16>, vector<512x128xf32> -> vector<512x128xf32>
    %7 = arith.addf %3, %6 : vector<512x128xf32>
    %c0_6 = arith.constant 0 : index
    %c0_7 = arith.constant 0 : index
    %8 = vector.load %arg7[%c0_6, %c0_7] : memref<512x128xf32, #tpu.memory_space<vmem>>, vector<512x128xf32>
    tpu.vector_store %arg7[%c0_6, %c0_7], %7 {strides = array<i32>} : memref<512x128xf32, #tpu.memory_space<vmem>>, vector<512x128xf32>,
    %c0_i32_8 = arith.constant 0 : i32
    %9 = arith.cmpi eq, %arg2, %c0_i32_8 : i32
    %10 = arith.extui %9 : i1 to i32
    %c0_i32_9 = arith.constant 0 : i32
    %11 = arith.cmpi ne, %10, %c0_i32_9 : i32
    scf.if %11 {
      %c0_10 = arith.constant 0 : index
      %c0_11 = arith.constant 0 : index
      %12 = vector.load %arg7[%c0_10, %c0_11] : memref<512x128xf32, #tpu.memory_space<vmem>>, vector<512x128xf32>
      %c0_12 = arith.constant 0 : index
      %c0_13 = arith.constant 0 : index
      %13 = vector.load %arg5[%c0_12, %c0_13] : memref<1x128xf32, #tpu.memory_space<vmem>>, vector<1x128xf32>
      %14 = vector.broadcast %13 : vector<1x128xf32> to vector<512x128xf32>
      %15 = arith.addf %12, %14 : vector<512x128xf32>
      %c0_14 = arith.constant 0 : index
      %c0_15 = arith.constant 0 : index
      %16 = vector.load %arg6[%c0_14, %c0_15] : memref<512x128xf32, #tpu.memory_space<vmem>>, vector<512x128xf32>
      tpu.vector_store %arg6[%c0_14, %c0_15], %15 {strides = array<i32>} : memref<512x128xf32, #tpu.memory_space<vmem>>, vector<512x128xf32>,
    } else {
    }
    return
  }
  func.func @transform_0(%arg0: i32, %arg1: i32, %arg2: i32) -> (i32, i32) {
    %c0_i32 = arith.constant 0 : i32
    return %arg0, %arg2 : i32, i32
  }
  func.func @transform_1(%arg0: i32, %arg1: i32, %arg2: i32) -> (i32, i32) {
    %c0_i32 = arith.constant 0 : i32
    return %arg2, %arg1 : i32, i32
  }
  func.func @transform_2(%arg0: i32, %arg1: i32, %arg2: i32) -> (i32, i32) {
    %c0_i32 = arith.constant 0 : i32
    %c0_i32_0 = arith.constant 0 : i32
    return %c0_i32, %arg1 : i32, i32
  }
  func.func @transform_3(%arg0: i32, %arg1: i32, %arg2: i32) -> (i32, i32) {
    %c0_i32 = arith.constant 0 : i32
    return %arg0, %arg1 : i32, i32
  }
}

module attributes {stable_mosaic.version = 11 : i64} {
  func.func @_mm_kernel(%arg0: i32, %arg1: i32, %arg2: i32, %arg3: memref<288x128xbf16, #tpu.memory_space<vmem>>, %arg4: memref<128x128xbf16, #tpu.memory_space<vmem>>, %arg5: memref<1x128xf32, #tpu.memory_space<vmem>>, %arg6: memref<288x128xf32, #tpu.memory_space<vmem>>, %arg7: memref<288x128xf32, #tpu.memory_space<vmem>>) attributes {dimension_semantics = [#tpu.dimension_semantics<parallel>, #tpu.dimension_semantics<parallel>, #tpu.dimension_semantics<arbitrary>], iteration_bounds = array<i64: 1, 1, 1>, scalar_prefetch = 0 : i64, scratch_operands = 1 : i64, tpu.core_type = #tpu.core_type<tc>, window_params = [{transform_indices = @transform_0, window_bounds = array<i64: 288, 128>}, {transform_indices = @transform_1, window_bounds = array<i64: 128, 128>}, {transform_indices = @transform_2, window_bounds = array<i64: 1, 128>}, {transform_indices = @transform_3, window_bounds = array<i64: 288, 128>}]} {
    %c0_i32 = arith.constant 0 : i32
    %0 = arith.cmpi eq, %arg2, %c0_i32 : i32
    %1 = arith.extui %0 : i1 to i32
    %c0_i32_0 = arith.constant 0 : i32
    %2 = arith.cmpi ne, %1, %c0_i32_0 : i32
    scf.if %2 {
      %cst_10 = arith.constant 0.000000e+00 : f32
      %12 = vector.broadcast %cst_10 : f32 to vector<288x128xf32>
      %c0_11 = arith.constant 0 : index
      %c0_12 = arith.constant 0 : index
      %13 = vector.load %arg7[%c0_11, %c0_12] : memref<288x128xf32, #tpu.memory_space<vmem>>, vector<288x128xf32>
      tpu.vector_store %arg7[%c0_11, %c0_12], %12 {strides = array<i32>} : memref<288x128xf32, #tpu.memory_space<vmem>>, vector<288x128xf32>,
    } else {
    }
    %c0 = arith.constant 0 : index
    %c0_1 = arith.constant 0 : index
    %3 = vector.load %arg7[%c0, %c0_1] : memref<288x128xf32, #tpu.memory_space<vmem>>, vector<288x128xf32>
    %c0_2 = arith.constant 0 : index
    %c0_3 = arith.constant 0 : index
    %4 = vector.load %arg3[%c0_2, %c0_3] : memref<288x128xbf16, #tpu.memory_space<vmem>>, vector<288x128xbf16>
    %c0_4 = arith.constant 0 : index
    %c0_5 = arith.constant 0 : index
    %5 = vector.load %arg4[%c0_4, %c0_5] : memref<128x128xbf16, #tpu.memory_space<vmem>>, vector<128x128xbf16>
    %cst = arith.constant dense<0.000000e+00> : vector<288x128xf32>
    %6 = tpu.matmul %4, %5, %cst {dimension_numbers = #tpu.dot_dimension_numbers<[1], [0], [0], [1], [0, 0, 1, 1], [], []>} : vector<288x128xbf16>, vector<128x128xbf16>, vector<288x128xf32> -> vector<288x128xf32>
    %7 = arith.addf %3, %6 : vector<288x128xf32>
    %c0_6 = arith.constant 0 : index
    %c0_7 = arith.constant 0 : index
    %8 = vector.load %arg7[%c0_6, %c0_7] : memref<288x128xf32, #tpu.memory_space<vmem>>, vector<288x128xf32>
    tpu.vector_store %arg7[%c0_6, %c0_7], %7 {strides = array<i32>} : memref<288x128xf32, #tpu.memory_space<vmem>>, vector<288x128xf32>,
    %c0_i32_8 = arith.constant 0 : i32
    %9 = arith.cmpi eq, %arg2, %c0_i32_8 : i32
    %10 = arith.extui %9 : i1 to i32
    %c0_i32_9 = arith.constant 0 : i32
    %11 = arith.cmpi ne, %10, %c0_i32_9 : i32
    scf.if %11 {
      %c0_10 = arith.constant 0 : index
      %c0_11 = arith.constant 0 : index
      %12 = vector.load %arg7[%c0_10, %c0_11] : memref<288x128xf32, #tpu.memory_space<vmem>>, vector<288x128xf32>
      %c0_12 = arith.constant 0 : index
      %c0_13 = arith.constant 0 : index
      %13 = vector.load %arg5[%c0_12, %c0_13] : memref<1x128xf32, #tpu.memory_space<vmem>>, vector<1x128xf32>
      %14 = vector.broadcast %13 : vector<1x128xf32> to vector<288x128xf32>
      %15 = arith.addf %12, %14 : vector<288x128xf32>
      %cst_14 = arith.constant 0.000000e+00 : f32
      %16 = vector.broadcast %cst_14 : f32 to vector<288x128xf32>
      %17 = arith.cmpf oge, %15, %16 : vector<288x128xf32>
      %cst_15 = arith.constant 1.000000e-01 : f32
      %18 = vector.broadcast %cst_15 : f32 to vector<288x128xf32>
      %19 = arith.mulf %18, %15 : vector<288x128xf32>
      %20 = arith.select %17, %15, %19 : vector<288x128xi1>, vector<288x128xf32>
      %c0_16 = arith.constant 0 : index
      %c0_17 = arith.constant 0 : index
      %21 = vector.load %arg6[%c0_16, %c0_17] : memref<288x128xf32, #tpu.memory_space<vmem>>, vector<288x128xf32>
      tpu.vector_store %arg6[%c0_16, %c0_17], %20 {strides = array<i32>} : memref<288x128xf32, #tpu.memory_space<vmem>>, vector<288x128xf32>,
    } else {
    }
    return
  }
  func.func @transform_0(%arg0: i32, %arg1: i32, %arg2: i32) -> (i32, i32) {
    %c0_i32 = arith.constant 0 : i32
    return %arg0, %arg2 : i32, i32
  }
  func.func @transform_1(%arg0: i32, %arg1: i32, %arg2: i32) -> (i32, i32) {
    %c0_i32 = arith.constant 0 : i32
    return %arg2, %arg1 : i32, i32
  }
  func.func @transform_2(%arg0: i32, %arg1: i32, %arg2: i32) -> (i32, i32) {
    %c0_i32 = arith.constant 0 : i32
    %c0_i32_0 = arith.constant 0 : i32
    return %c0_i32, %arg1 : i32, i32
  }
  func.func @transform_3(%arg0: i32, %arg1: i32, %arg2: i32) -> (i32, i32) {
    %c0_i32 = arith.constant 0 : i32
    return %arg0, %arg1 : i32, i32
  }
}

module attributes {stable_mosaic.version = 11 : i64} {
  func.func @_mm_kernel(%arg0: i32, %arg1: i32, %arg2: i32, %arg3: memref<288x128xbf16, #tpu.memory_space<vmem>>, %arg4: memref<128x128xbf16, #tpu.memory_space<vmem>>, %arg5: memref<1x128xf32, #tpu.memory_space<vmem>>, %arg6: memref<288x128xf32, #tpu.memory_space<vmem>>, %arg7: memref<288x128xf32, #tpu.memory_space<vmem>>) attributes {dimension_semantics = [#tpu.dimension_semantics<parallel>, #tpu.dimension_semantics<parallel>, #tpu.dimension_semantics<arbitrary>], iteration_bounds = array<i64: 1, 1, 1>, scalar_prefetch = 0 : i64, scratch_operands = 1 : i64, tpu.core_type = #tpu.core_type<tc>, window_params = [{transform_indices = @transform_0, window_bounds = array<i64: 288, 128>}, {transform_indices = @transform_1, window_bounds = array<i64: 128, 128>}, {transform_indices = @transform_2, window_bounds = array<i64: 1, 128>}, {transform_indices = @transform_3, window_bounds = array<i64: 288, 128>}]} {
    %c0_i32 = arith.constant 0 : i32
    %0 = arith.cmpi eq, %arg2, %c0_i32 : i32
    %1 = arith.extui %0 : i1 to i32
    %c0_i32_0 = arith.constant 0 : i32
    %2 = arith.cmpi ne, %1, %c0_i32_0 : i32
    scf.if %2 {
      %cst_10 = arith.constant 0.000000e+00 : f32
      %12 = vector.broadcast %cst_10 : f32 to vector<288x128xf32>
      %c0_11 = arith.constant 0 : index
      %c0_12 = arith.constant 0 : index
      %13 = vector.load %arg7[%c0_11, %c0_12] : memref<288x128xf32, #tpu.memory_space<vmem>>, vector<288x128xf32>
      tpu.vector_store %arg7[%c0_11, %c0_12], %12 {strides = array<i32>} : memref<288x128xf32, #tpu.memory_space<vmem>>, vector<288x128xf32>,
    } else {
    }
    %c0 = arith.constant 0 : index
    %c0_1 = arith.constant 0 : index
    %3 = vector.load %arg7[%c0, %c0_1] : memref<288x128xf32, #tpu.memory_space<vmem>>, vector<288x128xf32>
    %c0_2 = arith.constant 0 : index
    %c0_3 = arith.constant 0 : index
    %4 = vector.load %arg3[%c0_2, %c0_3] : memref<288x128xbf16, #tpu.memory_space<vmem>>, vector<288x128xbf16>
    %c0_4 = arith.constant 0 : index
    %c0_5 = arith.constant 0 : index
    %5 = vector.load %arg4[%c0_4, %c0_5] : memref<128x128xbf16, #tpu.memory_space<vmem>>, vector<128x128xbf16>
    %cst = arith.constant dense<0.000000e+00> : vector<288x128xf32>
    %6 = tpu.matmul %4, %5, %cst {dimension_numbers = #tpu.dot_dimension_numbers<[1], [0], [0], [1], [0, 0, 1, 1], [], []>} : vector<288x128xbf16>, vector<128x128xbf16>, vector<288x128xf32> -> vector<288x128xf32>
    %7 = arith.addf %3, %6 : vector<288x128xf32>
    %c0_6 = arith.constant 0 : index
    %c0_7 = arith.constant 0 : index
    %8 = vector.load %arg7[%c0_6, %c0_7] : memref<288x128xf32, #tpu.memory_space<vmem>>, vector<288x128xf32>
    tpu.vector_store %arg7[%c0_6, %c0_7], %7 {strides = array<i32>} : memref<288x128xf32, #tpu.memory_space<vmem>>, vector<288x128xf32>,
    %c0_i32_8 = arith.constant 0 : i32
    %9 = arith.cmpi eq, %arg2, %c0_i32_8 : i32
    %10 = arith.extui %9 : i1 to i32
    %c0_i32_9 = arith.constant 0 : i32
    %11 = arith.cmpi ne, %10, %c0_i32_9 : i32
    scf.if %11 {
      %c0_10 = arith.constant 0 : index
      %c0_11 = arith.constant 0 : index
      %12 = vector.load %arg7[%c0_10, %c0_11] : memref<288x128xf32, #tpu.memory_space<vmem>>, vector<288x128xf32>
      %c0_12 = arith.constant 0 : index
      %c0_13 = arith.constant 0 : index
      %13 = vector.load %arg5[%c0_12, %c0_13] : memref<1x128xf32, #tpu.memory_space<vmem>>, vector<1x128xf32>
      %14 = vector.broadcast %13 : vector<1x128xf32> to vector<288x128xf32>
      %15 = arith.addf %12, %14 : vector<288x128xf32>
      %c0_14 = arith.constant 0 : index
      %c0_15 = arith.constant 0 : index
      %16 = vector.load %arg6[%c0_14, %c0_15] : memref<288x128xf32, #tpu.memory_space<vmem>>, vector<288x128xf32>
      tpu.vector_store %arg6[%c0_14, %c0_15], %15 {strides = array<i32>} : memref<288x128xf32, #tpu.memory_space<vmem>>, vector<288x128xf32>,
    } else {
    }
    return
  }
  func.func @transform_0(%arg0: i32, %arg1: i32, %arg2: i32) -> (i32, i32) {
    %c0_i32 = arith.constant 0 : i32
    return %arg0, %arg2 : i32, i32
  }
  func.func @transform_1(%arg0: i32, %arg1: i32, %arg2: i32) -> (i32, i32) {
    %c0_i32 = arith.constant 0 : i32
    return %arg2, %arg1 : i32, i32
  }
  func.func @transform_2(%arg0: i32, %arg1: i32, %arg2: i32) -> (i32, i32) {
    %c0_i32 = arith.constant 0 : i32
    %c0_i32_0 = arith.constant 0 : i32
    return %c0_i32, %arg1 : i32, i32
  }
  func.func @transform_3(%arg0: i32, %arg1: i32, %arg2: i32) -> (i32, i32) {
    %c0_i32 = arith.constant 0 : i32
    return %arg0, %arg1 : i32, i32
  }
}

module attributes {stable_mosaic.version = 11 : i64} {
  func.func @kernel(%arg0: i32, %arg1: memref<512x8xf32, #tpu.memory_space<vmem>>, %arg2: memref<1x8xf32, #tpu.memory_space<vmem>>, %arg3: memref<1x8xf32, #tpu.memory_space<vmem>>, %arg4: memref<512x8xf32, #tpu.memory_space<vmem>>) attributes {dimension_semantics = [#tpu.dimension_semantics<parallel>], iteration_bounds = array<i64: 1>, scalar_prefetch = 0 : i64, scratch_operands = 0 : i64, tpu.core_type = #tpu.core_type<tc>, window_params = [{transform_indices = @transform_0, window_bounds = array<i64: 512, 8>}, {pipeline_mode = #tpu.pipeline_mode<synchronous>, transform_indices = @transform_1, window_bounds = array<i64: 1, 8>}, {pipeline_mode = #tpu.pipeline_mode<synchronous>, transform_indices = @transform_2, window_bounds = array<i64: 1, 8>}, {transform_indices = @transform_3, window_bounds = array<i64: 512, 8>}]} {
    %c0 = arith.constant 0 : index
    %c0_0 = arith.constant 0 : index
    %0 = vector.load %arg1[%c0, %c0_0] : memref<512x8xf32, #tpu.memory_space<vmem>>, vector<512x8xf32>
    %cst = arith.constant dense<0.000000e+00> : vector<512xf32>
    %1 = vector.multi_reduction <add>, %0, %cst [1] : vector<512x8xf32> to vector<512xf32>
    %2 = vector.shape_cast %1 : vector<512xf32> to vector<512x1xf32>
    %cst_1 = arith.constant 8.000000e+00 : f32
    %3 = vector.broadcast %cst_1 : f32 to vector<512x1xf32>
    %4 = arith.divf %2, %3 : vector<512x1xf32>
    %5 = vector.broadcast %4 : vector<512x1xf32> to vector<512x8xf32>
    %6 = arith.subf %0, %5 : vector<512x8xf32>
    %7 = arith.mulf %6, %6 : vector<512x8xf32>
    %cst_2 = arith.constant dense<0.000000e+00> : vector<512xf32>
    %8 = vector.multi_reduction <add>, %7, %cst_2 [1] : vector<512x8xf32> to vector<512xf32>
    %9 = vector.shape_cast %8 : vector<512xf32> to vector<512x1xf32>
    %cst_3 = arith.constant 8.000000e+00 : f32
    %10 = vector.broadcast %cst_3 : f32 to vector<512x1xf32>
    %11 = arith.divf %9, %10 : vector<512x1xf32>
    %12 = vector.broadcast %4 : vector<512x1xf32> to vector<512x8xf32>
    %13 = arith.subf %0, %12 : vector<512x8xf32>
    %cst_4 = arith.constant 9.99999974E-6 : f32
    %14 = vector.broadcast %cst_4 : f32 to vector<512x1xf32>
    %15 = arith.addf %11, %14 : vector<512x1xf32>
    %16 = math.rsqrt %15 : vector<512x1xf32>
    %17 = vector.broadcast %16 : vector<512x1xf32> to vector<512x8xf32>
    %18 = arith.mulf %13, %17 : vector<512x8xf32>
    %c0_5 = arith.constant 0 : index
    %c0_6 = arith.constant 0 : index
    %19 = vector.load %arg2[%c0_5, %c0_6] : memref<1x8xf32, #tpu.memory_space<vmem>>, vector<1x8xf32>
    %20 = vector.broadcast %19 : vector<1x8xf32> to vector<512x8xf32>
    %21 = arith.mulf %18, %20 : vector<512x8xf32>
    %c0_7 = arith.constant 0 : index
    %c0_8 = arith.constant 0 : index
    %22 = vector.load %arg3[%c0_7, %c0_8] : memref<1x8xf32, #tpu.memory_space<vmem>>, vector<1x8xf32>
    %23 = vector.broadcast %22 : vector<1x8xf32> to vector<512x8xf32>
    %24 = arith.addf %21, %23 : vector<512x8xf32>
    %c0_9 = arith.constant 0 : index
    %c0_10 = arith.constant 0 : index
    %25 = vector.load %arg4[%c0_9, %c0_10] : memref<512x8xf32, #tpu.memory_space<vmem>>, vector<512x8xf32>
    tpu.vector_store %arg4[%c0_9, %c0_10], %24 {strides = array<i32>} : memref<512x8xf32, #tpu.memory_space<vmem>>, vector<512x8xf32>,
    return
  }
  func.func @transform_0(%arg0: i32) -> (i32, i32) {
    %c0_i32 = arith.constant 0 : i32
    %c0_i32_0 = arith.constant 0 : i32
    return %arg0, %c0_i32 : i32, i32
  }
  func.func @transform_1(%arg0: i32) -> (i32, i32) {
    %c0_i32 = arith.constant 0 : i32
    %c0_i32_0 = arith.constant 0 : i32
    %c0_i32_1 = arith.constant 0 : i32
    return %c0_i32, %c0_i32_0 : i32, i32
  }
  func.func @transform_2(%arg0: i32) -> (i32, i32) {
    %c0_i32 = arith.constant 0 : i32
    %c0_i32_0 = arith.constant 0 : i32
    %c0_i32_1 = arith.constant 0 : i32
    return %c0_i32, %c0_i32_0 : i32, i32
  }
  func.func @transform_3(%arg0: i32) -> (i32, i32) {
    %c0_i32 = arith.constant 0 : i32
    %c0_i32_0 = arith.constant 0 : i32
    return %arg0, %c0_i32 : i32, i32
  }
}

module attributes {stable_mosaic.version = 11 : i64} {
  func.func @_mm_kernel(%arg0: i32, %arg1: i32, %arg2: i32, %arg3: memref<512x128xbf16, #tpu.memory_space<vmem>>, %arg4: memref<128x128xbf16, #tpu.memory_space<vmem>>, %arg5: memref<1x128xf32, #tpu.memory_space<vmem>>, %arg6: memref<512x128xf32, #tpu.memory_space<vmem>>, %arg7: memref<512x128xf32, #tpu.memory_space<vmem>>) attributes {dimension_semantics = [#tpu.dimension_semantics<parallel>, #tpu.dimension_semantics<parallel>, #tpu.dimension_semantics<arbitrary>], iteration_bounds = array<i64: 4, 1, 1>, scalar_prefetch = 0 : i64, scratch_operands = 1 : i64, tpu.core_type = #tpu.core_type<tc>, window_params = [{transform_indices = @transform_0, window_bounds = array<i64: 512, 128>}, {transform_indices = @transform_1, window_bounds = array<i64: 128, 128>}, {transform_indices = @transform_2, window_bounds = array<i64: 1, 128>}, {transform_indices = @transform_3, window_bounds = array<i64: 512, 128>}]} {
    %c0_i32 = arith.constant 0 : i32
    %0 = arith.cmpi eq, %arg2, %c0_i32 : i32
    %1 = arith.extui %0 : i1 to i32
    %c0_i32_0 = arith.constant 0 : i32
    %2 = arith.cmpi ne, %1, %c0_i32_0 : i32
    scf.if %2 {
      %cst_10 = arith.constant 0.000000e+00 : f32
      %12 = vector.broadcast %cst_10 : f32 to vector<512x128xf32>
      %c0_11 = arith.constant 0 : index
      %c0_12 = arith.constant 0 : index
      %13 = vector.load %arg7[%c0_11, %c0_12] : memref<512x128xf32, #tpu.memory_space<vmem>>, vector<512x128xf32>
      tpu.vector_store %arg7[%c0_11, %c0_12], %12 {strides = array<i32>} : memref<512x128xf32, #tpu.memory_space<vmem>>, vector<512x128xf32>,
    } else {
    }
    %c0 = arith.constant 0 : index
    %c0_1 = arith.constant 0 : index
    %3 = vector.load %arg7[%c0, %c0_1] : memref<512x128xf32, #tpu.memory_space<vmem>>, vector<512x128xf32>
    %c0_2 = arith.constant 0 : index
    %c0_3 = arith.constant 0 : index
    %4 = vector.load %arg3[%c0_2, %c0_3] : memref<512x128xbf16, #tpu.memory_space<vmem>>, vector<512x128xbf16>
    %c0_4 = arith.constant 0 : index
    %c0_5 = arith.constant 0 : index
    %5 = vector.load %arg4[%c0_4, %c0_5] : memref<128x128xbf16, #tpu.memory_space<vmem>>, vector<128x128xbf16>
    %cst = arith.constant dense<0.000000e+00> : vector<512x128xf32>
    %6 = tpu.matmul %4, %5, %cst {dimension_numbers = #tpu.dot_dimension_numbers<[1], [0], [0], [1], [0, 0, 1, 1], [], []>} : vector<512x128xbf16>, vector<128x128xbf16>, vector<512x128xf32> -> vector<512x128xf32>
    %7 = arith.addf %3, %6 : vector<512x128xf32>
    %c0_6 = arith.constant 0 : index
    %c0_7 = arith.constant 0 : index
    %8 = vector.load %arg7[%c0_6, %c0_7] : memref<512x128xf32, #tpu.memory_space<vmem>>, vector<512x128xf32>
    tpu.vector_store %arg7[%c0_6, %c0_7], %7 {strides = array<i32>} : memref<512x128xf32, #tpu.memory_space<vmem>>, vector<512x128xf32>,
    %c0_i32_8 = arith.constant 0 : i32
    %9 = arith.cmpi eq, %arg2, %c0_i32_8 : i32
    %10 = arith.extui %9 : i1 to i32
    %c0_i32_9 = arith.constant 0 : i32
    %11 = arith.cmpi ne, %10, %c0_i32_9 : i32
    scf.if %11 {
      %c0_10 = arith.constant 0 : index
      %c0_11 = arith.constant 0 : index
      %12 = vector.load %arg7[%c0_10, %c0_11] : memref<512x128xf32, #tpu.memory_space<vmem>>, vector<512x128xf32>
      %c0_12 = arith.constant 0 : index
      %c0_13 = arith.constant 0 : index
      %13 = vector.load %arg5[%c0_12, %c0_13] : memref<1x128xf32, #tpu.memory_space<vmem>>, vector<1x128xf32>
      %14 = vector.broadcast %13 : vector<1x128xf32> to vector<512x128xf32>
      %15 = arith.addf %12, %14 : vector<512x128xf32>
      %c0_14 = arith.constant 0 : index
      %c0_15 = arith.constant 0 : index
      %16 = vector.load %arg6[%c0_14, %c0_15] : memref<512x128xf32, #tpu.memory_space<vmem>>, vector<512x128xf32>
      tpu.vector_store %arg6[%c0_14, %c0_15], %15 {strides = array<i32>} : memref<512x128xf32, #tpu.memory_space<vmem>>, vector<512x128xf32>,
    } else {
    }
    return
  }
  func.func @transform_0(%arg0: i32, %arg1: i32, %arg2: i32) -> (i32, i32) {
    %c0_i32 = arith.constant 0 : i32
    return %arg0, %arg2 : i32, i32
  }
  func.func @transform_1(%arg0: i32, %arg1: i32, %arg2: i32) -> (i32, i32) {
    %c0_i32 = arith.constant 0 : i32
    return %arg2, %arg1 : i32, i32
  }
  func.func @transform_2(%arg0: i32, %arg1: i32, %arg2: i32) -> (i32, i32) {
    %c0_i32 = arith.constant 0 : i32
    %c0_i32_0 = arith.constant 0 : i32
    return %c0_i32, %arg1 : i32, i32
  }
  func.func @transform_3(%arg0: i32, %arg1: i32, %arg2: i32) -> (i32, i32) {
    %c0_i32 = arith.constant 0 : i32
    return %arg0, %arg1 : i32, i32
  }
}

module attributes {stable_mosaic.version = 11 : i64} {
  func.func @kernel(%arg0: i32, %arg1: memref<128x32xf32, #tpu.memory_space<vmem>>, %arg2: memref<128x32xf32, #tpu.memory_space<vmem>>, %arg3: memref<128x16x32xf32, #tpu.memory_space<vmem>>, %arg4: memref<128x16x32xf32, #tpu.memory_space<vmem>>, %arg5: memref<16x32xf32, #tpu.memory_space<vmem>>, %arg6: memref<1x32xf32, #tpu.memory_space<vmem>>, %arg7: memref<128x32xf32, #tpu.memory_space<vmem>>, %arg8: memref<16x32xf32, #tpu.memory_space<vmem>>) attributes {dimension_semantics = [#tpu.dimension_semantics<arbitrary>], iteration_bounds = array<i64: 2>, scalar_prefetch = 0 : i64, scratch_operands = 1 : i64, tpu.core_type = #tpu.core_type<tc>, window_params = [{transform_indices = @transform_0, window_bounds = array<i64: 128, 32>}, {transform_indices = @transform_1, window_bounds = array<i64: 128, 32>}, {transform_indices = @transform_2, window_bounds = array<i64: 128, 16, 32>}, {transform_indices = @transform_3, window_bounds = array<i64: 128, 16, 32>}, {pipeline_mode = #tpu.pipeline_mode<synchronous>, transform_indices = @transform_4, window_bounds = array<i64: 16, 32>}, {pipeline_mode = #tpu.pipeline_mode<synchronous>, transform_indices = @transform_5, window_bounds = array<i64: 1, 32>}, {transform_indices = @transform_6, window_bounds = array<i64: 128, 32>}]} {
    %c0_i32 = arith.constant 0 : i32
    %0 = arith.cmpi eq, %arg0, %c0_i32 : i32
    %1 = arith.extui %0 : i1 to i32
    %c0_i32_0 = arith.constant 0 : i32
    %2 = arith.cmpi ne, %1, %c0_i32_0 : i32
    scf.if %2 {
      %cst = arith.constant 0.000000e+00 : f32
      %9 = vector.broadcast %cst : f32 to vector<16x32xf32>
      %c0_10 = arith.constant 0 : index
      %c0_11 = arith.constant 0 : index
      %10 = vector.load %arg8[%c0_10, %c0_11] : memref<16x32xf32, #tpu.memory_space<vmem>>, vector<16x32xf32>
      tpu.vector_store %arg8[%c0_10, %c0_11], %9 {strides = array<i32>} : memref<16x32xf32, #tpu.memory_space<vmem>>, vector<16x32xf32>,
    } else {
    }
    %c0 = arith.constant 0 : index
    %c0_1 = arith.constant 0 : index
    %3 = vector.load %arg5[%c0, %c0_1] : memref<16x32xf32, #tpu.memory_space<vmem>>, vector<16x32xf32>
    %c0_2 = arith.constant 0 : index
    %c0_3 = arith.constant 0 : index
    %4 = vector.load %arg6[%c0_2, %c0_3] : memref<1x32xf32, #tpu.memory_space<vmem>>, vector<1x32xf32>
    %c0_4 = arith.constant 0 : index
    %c0_5 = arith.constant 0 : index
    %5 = vector.load %arg8[%c0_4, %c0_5] : memref<16x32xf32, #tpu.memory_space<vmem>>, vector<16x32xf32>
    %c0_i32_6 = arith.constant 0 : i32
    %c128_i32 = arith.constant 128 : i32
    %6 = arith.addi %c0_i32_6, %c128_i32 : i32
    %c1_i32 = arith.constant 1 : i32
    %7 = scf.for %arg9 = %c0_i32_6 to %6 step %c1_i32 iter_args(%arg10 = %5) -> (vector<16x32xf32>)  : i32 {
      %9 = arith.index_cast %arg9 : i32 to index
      %c0_10 = arith.constant 0 : index
      %10 = vector.load %arg1[%9, %c0_10] : memref<128x32xf32, #tpu.memory_space<vmem>>, vector<1x32xf32>
      %11 = arith.index_cast %arg9 : i32 to index
      %c0_11 = arith.constant 0 : index
      %12 = vector.load %arg2[%11, %c0_11] : memref<128x32xf32, #tpu.memory_space<vmem>>, vector<1x32xf32>
      %13 = arith.index_cast %arg9 : i32 to index
      %c0_12 = arith.constant 0 : index
      %c0_13 = arith.constant 0 : index
      %14 = vector.load %arg3[%13, %c0_12, %c0_13] : memref<128x16x32xf32, #tpu.memory_space<vmem>>, vector<1x16x32xf32>
      %15 = vector.shape_cast %14 : vector<1x16x32xf32> to vector<16x32xf32>
      %16 = arith.index_cast %arg9 : i32 to index
      %c0_14 = arith.constant 0 : index
      %c0_15 = arith.constant 0 : index
      %17 = vector.load %arg4[%16, %c0_14, %c0_15] : memref<128x16x32xf32, #tpu.memory_space<vmem>>, vector<1x16x32xf32>
      %18 = vector.shape_cast %17 : vector<1x16x32xf32> to vector<16x32xf32>
      %19 = vector.broadcast %10 : vector<1x32xf32> to vector<16x32xf32>
      %20 = arith.mulf %19, %3 : vector<16x32xf32>
      %21 = math.exp %20 : vector<16x32xf32>
      %22 = arith.mulf %21, %arg10 : vector<16x32xf32>
      %23 = arith.mulf %10, %12 : vector<1x32xf32>
      %24 = vector.broadcast %23 : vector<1x32xf32> to vector<16x32xf32>
      %25 = arith.mulf %24, %15 : vector<16x32xf32>
      %26 = arith.addf %22, %25 : vector<16x32xf32>
      %27 = arith.mulf %26, %18 : vector<16x32xf32>
      %cst = arith.constant dense<0.000000e+00> : vector<32xf32>
      %28 = vector.multi_reduction <add>, %27, %cst [0] : vector<16x32xf32> to vector<32xf32>
      %29 = vector.shape_cast %28 : vector<32xf32> to vector<1x32xf32>
      %30 = arith.mulf %4, %12 : vector<1x32xf32>
      %31 = arith.addf %29, %30 : vector<1x32xf32>
      %32 = arith.index_cast %arg9 : i32 to index
      %c0_16 = arith.constant 0 : index
      %33 = vector.load %arg7[%32, %c0_16] : memref<128x32xf32, #tpu.memory_space<vmem>>, vector<1x32xf32>
      tpu.vector_store %arg7[%32, %c0_16], %31 {strides = array<i32>} : memref<128x32xf32, #tpu.memory_space<vmem>>, vector<1x32xf32>,
      scf.yield %26 : vector<16x32xf32>
    }
    %c128_i32_7 = arith.constant 128 : i32
    %c0_8 = arith.constant 0 : index
    %c0_9 = arith.constant 0 : index
    %8 = vector.load %arg8[%c0_8, %c0_9] : memref<16x32xf32, #tpu.memory_space<vmem>>, vector<16x32xf32>
    tpu.vector_store %arg8[%c0_8, %c0_9], %7 {strides = array<i32>} : memref<16x32xf32, #tpu.memory_space<vmem>>, vector<16x32xf32>,
    return
  }
  func.func @transform_0(%arg0: i32) -> (i32, i32) {
    %c0_i32 = arith.constant 0 : i32
    %c0_i32_0 = arith.constant 0 : i32
    return %arg0, %c0_i32 : i32, i32
  }
  func.func @transform_1(%arg0: i32) -> (i32, i32) {
    %c0_i32 = arith.constant 0 : i32
    %c0_i32_0 = arith.constant 0 : i32
    return %arg0, %c0_i32 : i32, i32
  }
  func.func @transform_2(%arg0: i32) -> (i32, i32, i32) {
    %c0_i32 = arith.constant 0 : i32
    %c0_i32_0 = arith.constant 0 : i32
    %c0_i32_1 = arith.constant 0 : i32
    return %arg0, %c0_i32, %c0_i32_0 : i32, i32, i32
  }
  func.func @transform_3(%arg0: i32) -> (i32, i32, i32) {
    %c0_i32 = arith.constant 0 : i32
    %c0_i32_0 = arith.constant 0 : i32
    %c0_i32_1 = arith.constant 0 : i32
    return %arg0, %c0_i32, %c0_i32_0 : i32, i32, i32
  }
  func.func @transform_4(%arg0: i32) -> (i32, i32) {
    %c0_i32 = arith.constant 0 : i32
    %c0_i32_0 = arith.constant 0 : i32
    %c0_i32_1 = arith.constant 0 : i32
    return %c0_i32, %c0_i32_0 : i32, i32
  }
  func.func @transform_5(%arg0: i32) -> (i32, i32) {
    %c0_i32 = arith.constant 0 : i32
    %c0_i32_0 = arith.constant 0 : i32
    %c0_i32_1 = arith.constant 0 : i32
    return %c0_i32, %c0_i32_0 : i32, i32
  }
  func.func @transform_6(%arg0: i32) -> (i32, i32) {
    %c0_i32 = arith.constant 0 : i32
    %c0_i32_0 = arith.constant 0 : i32
    return %arg0, %c0_i32 : i32, i32
  }
}

module attributes {stable_mosaic.version = 11 : i64} {
  func.func @kernel(%arg0: i32, %arg1: i32, %arg2: memref<512x128xf32, #tpu.memory_space<vmem>>, %arg3: memref<1x128xf32, #tpu.memory_space<vmem>>, %arg4: memref<1x128xf32, #tpu.memory_space<vmem>>, %arg5: memref<128x128xbf16, #tpu.memory_space<vmem>>, %arg6: memref<1x128xf32, #tpu.memory_space<vmem>>, %arg7: memref<512x128xf32, #tpu.memory_space<vmem>>) attributes {dimension_semantics = [#tpu.dimension_semantics<parallel>, #tpu.dimension_semantics<parallel>], iteration_bounds = array<i64: 1, 1>, scalar_prefetch = 0 : i64, scratch_operands = 0 : i64, tpu.core_type = #tpu.core_type<tc>, window_params = [{transform_indices = @transform_0, window_bounds = array<i64: 512, 128>}, {pipeline_mode = #tpu.pipeline_mode<synchronous>, transform_indices = @transform_1, window_bounds = array<i64: 1, 128>}, {pipeline_mode = #tpu.pipeline_mode<synchronous>, transform_indices = @transform_2, window_bounds = array<i64: 1, 128>}, {transform_indices = @transform_3, window_bounds = array<i64: 128, 128>}, {transform_indices = @transform_4, window_bounds = array<i64: 1, 128>}, {transform_indices = @transform_5, window_bounds = array<i64: 512, 128>}]} {
    %c0 = arith.constant 0 : index
    %c0_0 = arith.constant 0 : index
    %0 = vector.load %arg2[%c0, %c0_0] : memref<512x128xf32, #tpu.memory_space<vmem>>, vector<512x128xf32>
    %1 = tpu.iota {dimensions = array<i32: 1>} : vector<512x128xi32>
    %c8_i32 = arith.constant 8 : i32
    %2 = vector.broadcast %c8_i32 : i32 to vector<512x128xi32>
    %3 = arith.cmpi slt, %1, %2 : vector<512x128xi32>
    %4 = arith.extui %3 : vector<512x128xi1> to vector<512x128xi32>
    %5 = arith.sitofp %4 : vector<512x128xi32> to vector<512x128xf32>
    %cst = arith.constant dense<0.000000e+00> : vector<512xf32>
    %6 = vector.multi_reduction <add>, %0, %cst [1] : vector<512x128xf32> to vector<512xf32>
    %7 = vector.shape_cast %6 : vector<512xf32> to vector<512x1xf32>
    %cst_1 = arith.constant 1.250000e-01 : f32
    %8 = vector.broadcast %cst_1 : f32 to vector<512x1xf32>
    %9 = arith.mulf %7, %8 : vector<512x1xf32>
    %10 = vector.broadcast %9 : vector<512x1xf32> to vector<512x128xf32>
    %11 = arith.subf %0, %10 : vector<512x128xf32>
    %12 = arith.mulf %11, %5 : vector<512x128xf32>
    %13 = arith.mulf %12, %12 : vector<512x128xf32>
    %cst_2 = arith.constant dense<0.000000e+00> : vector<512xf32>
    %14 = vector.multi_reduction <add>, %13, %cst_2 [1] : vector<512x128xf32> to vector<512xf32>
    %15 = vector.shape_cast %14 : vector<512xf32> to vector<512x1xf32>
    %cst_3 = arith.constant 1.250000e-01 : f32
    %16 = vector.broadcast %cst_3 : f32 to vector<512x1xf32>
    %17 = arith.mulf %15, %16 : vector<512x1xf32>
    %cst_4 = arith.constant 9.99999974E-6 : f32
    %18 = vector.broadcast %cst_4 : f32 to vector<512x1xf32>
    %19 = arith.addf %17, %18 : vector<512x1xf32>
    %20 = math.rsqrt %19 : vector<512x1xf32>
    %21 = vector.broadcast %20 : vector<512x1xf32> to vector<512x128xf32>
    %22 = arith.mulf %12, %21 : vector<512x128xf32>
    %c0_5 = arith.constant 0 : index
    %c0_6 = arith.constant 0 : index
    %23 = vector.load %arg3[%c0_5, %c0_6] : memref<1x128xf32, #tpu.memory_space<vmem>>, vector<1x128xf32>
    %24 = vector.broadcast %23 : vector<1x128xf32> to vector<512x128xf32>
    %25 = arith.mulf %22, %24 : vector<512x128xf32>
    %c0_7 = arith.constant 0 : index
    %c0_8 = arith.constant 0 : index
    %26 = vector.load %arg4[%c0_7, %c0_8] : memref<1x128xf32, #tpu.memory_space<vmem>>, vector<1x128xf32>
    %27 = vector.broadcast %26 : vector<1x128xf32> to vector<512x128xf32>
    %28 = arith.mulf %27, %5 : vector<512x128xf32>
    %29 = arith.addf %25, %28 : vector<512x128xf32>
    %30 = arith.truncf %29 : vector<512x128xf32> to vector<512x128xbf16>
    %c0_9 = arith.constant 0 : index
    %c0_10 = arith.constant 0 : index
    %31 = vector.load %arg5[%c0_9, %c0_10] : memref<128x128xbf16, #tpu.memory_space<vmem>>, vector<128x128xbf16>
    %cst_11 = arith.constant dense<0.000000e+00> : vector<512x128xf32>
    %32 = tpu.matmul %30, %31, %cst_11 {dimension_numbers = #tpu.dot_dimension_numbers<[1], [0], [0], [1], [0, 0, 1, 1], [], []>} : vector<512x128xbf16>, vector<128x128xbf16>, vector<512x128xf32> -> vector<512x128xf32>
    %c0_12 = arith.constant 0 : index
    %c0_13 = arith.constant 0 : index
    %33 = vector.load %arg6[%c0_12, %c0_13] : memref<1x128xf32, #tpu.memory_space<vmem>>, vector<1x128xf32>
    %34 = vector.broadcast %33 : vector<1x128xf32> to vector<512x128xf32>
    %35 = arith.addf %32, %34 : vector<512x128xf32>
    %c0_14 = arith.constant 0 : index
    %c0_15 = arith.constant 0 : index
    %36 = vector.load %arg7[%c0_14, %c0_15] : memref<512x128xf32, #tpu.memory_space<vmem>>, vector<512x128xf32>
    tpu.vector_store %arg7[%c0_14, %c0_15], %35 {strides = array<i32>} : memref<512x128xf32, #tpu.memory_space<vmem>>, vector<512x128xf32>,
    return
  }
  func.func @transform_0(%arg0: i32, %arg1: i32) -> (i32, i32) {
    %c0_i32 = arith.constant 0 : i32
    %c0_i32_0 = arith.constant 0 : i32
    return %arg0, %c0_i32 : i32, i32
  }
  func.func @transform_1(%arg0: i32, %arg1: i32) -> (i32, i32) {
    %c0_i32 = arith.constant 0 : i32
    %c0_i32_0 = arith.constant 0 : i32
    %c0_i32_1 = arith.constant 0 : i32
    return %c0_i32, %c0_i32_0 : i32, i32
  }
  func.func @transform_2(%arg0: i32, %arg1: i32) -> (i32, i32) {
    %c0_i32 = arith.constant 0 : i32
    %c0_i32_0 = arith.constant 0 : i32
    %c0_i32_1 = arith.constant 0 : i32
    return %c0_i32, %c0_i32_0 : i32, i32
  }
  func.func @transform_3(%arg0: i32, %arg1: i32) -> (i32, i32) {
    %c0_i32 = arith.constant 0 : i32
    %c0_i32_0 = arith.constant 0 : i32
    return %c0_i32, %arg1 : i32, i32
  }
  func.func @transform_4(%arg0: i32, %arg1: i32) -> (i32, i32) {
    %c0_i32 = arith.constant 0 : i32
    %c0_i32_0 = arith.constant 0 : i32
    return %c0_i32, %arg1 : i32, i32
  }
  func.func @transform_5(%arg0: i32, %arg1: i32) -> (i32, i32) {
    %c0_i32 = arith.constant 0 : i32
    return %arg0, %arg1 : i32, i32
  }
}

</mosaic_0001>

<llo_original>
// kernel: sfi_forward.17
$region0: #{sfi_forward.17}
  #allocation0 [shape = 'u32[]', space=smem, size = 0x4, offset = 0x4, fixed_abs, tag = 'smem constant byte address 0x4 - core index']
  #allocation1 [shape = 'u32[144,128]{1,0:T(1,128)}', space=vmem, size = 0x12000, scoped, tag = 'internal scratch']
  #allocation2 [shape = 'f32[512,128]{1,0:T(8,128)}', space=vmem, size = 0x40000, scoped, tag = 'scratch operand']
  %s0 = inlined_call_operand.vmem [shape: bf16[512,128], index: 0, kind: input, shape index: {}]
  %s1 = inlined_call_operand.vmem [shape: bf16[128,128], index: 1, kind: input, shape index: {}]
  %s2 = inlined_call_operand.vmem [shape: f32[1,128], index: 2, kind: input, shape index: {}]
  %s3 = inlined_call_operand.vmem [shape: f32[512,128], index: 3, kind: output, shape index: {}]
  %s4 = sld [smem:[#allocation0]]
  $region30: #{sfi_forward.17} parent=0
    _
  %s6 = ssub.s32 1, %s4
  %s7 = scalar_select 0, %s6, %s4
  // Predicated region
  $region2: #{sfi_forward.17} parent=0 // pred_check
    _
  $region3: #{sfi_forward.17} parent=0 // pred_check_branch
    %9 = sbr.rel (0) target = $region5
  $region4: #{sfi_forward.17} parent=0 // pred_region
    _
  $region5: #{sfi_forward.17} parent=0 // pred_fallthru
    _
  // Predicated region
  $region6: #{sfi_forward.17} parent=0 // pred_check
    _
  $region7: #{sfi_forward.17} parent=0 // pred_check_branch
    %11 = sbr.rel (0) target = $region9
  $region8: #{sfi_forward.17} parent=0 // pred_region
    _
  $region9: #{sfi_forward.17} parent=0 // pred_fallthru
    _
  // Predicated region
  $region10: #{sfi_forward.17} parent=0 // pred_check
    _
  $region11: #{sfi_forward.17} parent=0 // pred_check_branch
    %13 = sbr.rel (0) target = $region13
  $region12: #{sfi_forward.17} parent=0 // pred_region
    _
  $region13: #{sfi_forward.17} parent=0 // pred_fallthru
    _
  %p15 = scmp.eq.s32.totalorder 0, 0
  // Predicated region
  $region14: #{sfi_forward.17} parent=0 // pred_check
    %p16 = pneg %p15
  $region15: #{sfi_forward.17} parent=0 // pred_check_branch
    %18 = sbr.rel (%p16) target = $region17
  $region16: #{sfi_forward.17} parent=0 // pred_region
    %19 = vst [vmem:[#allocation2] sm:$0xff] 0.0
    %20 = vst [vmem:[#allocation2 + $0x8] sm:$0xff] 0.0
    %21 = vst [vmem:[#allocation2 + $0x10] sm:$0xff] 0.0
    %22 = vst [vmem:[#allocation2 + $0x18] sm:$0xff] 0.0
    %23 = vst [vmem:[#allocation2 + $0x20] sm:$0xff] 0.0
    %24 = vst [vmem:[#allocation2 + $0x28] sm:$0xff] 0.0
    %25 = vst [vmem:[#allocation2 + $0x30] sm:$0xff] 0.0
    %26 = vst [vmem:[#allocation2 + $0x38] sm:$0xff] 0.0
    %27 = vst [vmem:[#allocation2 + $0x40] sm:$0xff] 0.0
    %28 = vst [vmem:[#allocation2 + $0x48] sm:$0xff] 0.0
    %29 = vst [vmem:[#allocation2 + $0x50] sm:$0xff] 0.0
    %30 = vst [vmem:[#allocation2 + $0x58] sm:$0xff] 0.0
    %31 = vst [vmem:[#allocation2 + $0x60] sm:$0xff] 0.0
    %32 = vst [vmem:[#allocation2 + $0x68] sm:$0xff] 0.0
    %33 = vst [vmem:[#allocation2 + $0x70] sm:$0xff] 0.0
    %34 = vst [vmem:[#allocation2 + $0x78] sm:$0xff] 0.0
    %35 = vst [vmem:[#allocation2 + $0x80] sm:$0xff] 0.0
    %36 = vst [vmem:[#allocation2 + $0x88] sm:$0xff] 0.0
    %37 = vst [vmem:[#allocation2 + $0x90] sm:$0xff] 0.0
    %38 = vst [vmem:[#allocation2 + $0x98] sm:$0xff] 0.0
    %39 = vst [vmem:[#allocation2 + $0xa0] sm:$0xff] 0.0
    %40 = vst [vmem:[#allocation2 + $0xa8] sm:$0xff] 0.0
    %41 = vst [vmem:[#allocation2 + $0xb0] sm:$0xff] 0.0
    %42 = vst [vmem:[#allocation2 + $0xb8] sm:$0xff] 0.0
    %43 = vst [vmem:[#allocation2 + $0xc0] sm:$0xff] 0.0
    %44 = vst [vmem:[#allocation2 + $0xc8] sm:$0xff] 0.0
    %45 = vst [vmem:[#allocation2 + $0xd0] sm:$0xff] 0.0
    %46 = vst [vmem:[#allocation2 + $0xd8] sm:$0xff] 0.0
    %47 = vst [vmem:[#allocation2 + $0xe0] sm:$0xff] 0.0
    %48 = vst [vmem:[#allocation2 + $0xe8] sm:$0xff] 0.0
    %49 = vst [vmem:[#allocation2 + $0xf0] sm:$0xff] 0.0
    %50 = vst [vmem:[#allocation2 + $0xf8] sm:$0xff] 0.0
    %51 = vst [vmem:[#allocation2 + $0x100] sm:$0xff] 0.0
    %52 = vst [vmem:[#allocation2 + $0x108] sm:$0xff] 0.0
    %53 = vst [vmem:[#allocation2 + $0x110] sm:$0xff] 0.0
    %54 = vst [vmem:[#allocation2 + $0x118] sm:$0xff] 0.0
    %55 = vst [vmem:[#allocation2 + $0x120] sm:$0xff] 0.0
    %56 = vst [vmem:[#allocation2 + $0x128] sm:$0xff] 0.0
    %57 = vst [vmem:[#allocation2 + $0x130] sm:$0xff] 0.0
    %58 = vst [vmem:[#allocation2 + $0x138] sm:$0xff] 0.0
    %59 = vst [vmem:[#allocation2 + $0x140] sm:$0xff] 0.0
    %60 = vst [vmem:[#allocation2 + $0x148] sm:$0xff] 0.0
    %61 = vst [vmem:[#allocation2 + $0x150] sm:$0xff] 0.0
    %62 = vst [vmem:[#allocation2 + $0x158] sm:$0xff] 0.0
    %63 = vst [vmem:[#allocation2 + $0x160] sm:$0xff] 0.0
    %64 = vst [vmem:[#allocation2 + $0x168] sm:$0xff] 0.0
    %65 = vst [vmem:[#allocation2 + $0x170] sm:$0xff] 0.0
    %66 = vst [vmem:[#allocation2 + $0x178] sm:$0xff] 0.0
    %67 = vst [vmem:[#allocation2 + $0x180] sm:$0xff] 0.0
    %68 = vst [vmem:[#allocation2 + $0x188] sm:$0xff] 0.0
    %69 = vst [vmem:[#allocation2 + $0x190] sm:$0xff] 0.0
    %70 = vst [vmem:[#allocation2 + $0x198] sm:$0xff] 0.0
    %71 = vst [vmem:[#allocation2 + $0x1a0] sm:$0xff] 0.0
    %72 = vst [vmem:[#allocation2 + $0x1a8] sm:$0xff] 0.0
    %73 = vst [vmem:[#allocation2 + $0x1b0] sm:$0xff] 0.0
    %74 = vst [vmem:[#allocation2 + $0x1b8] sm:$0xff] 0.0
    %75 = vst [vmem:[#allocation2 + $0x1c0] sm:$0xff] 0.0
    %76 = vst [vmem:[#allocation2 + $0x1c8] sm:$0xff] 0.0
    %77 = vst [vmem:[#allocation2 + $0x1d0] sm:$0xff] 0.0
    %78 = vst [vmem:[#allocation2 + $0x1d8] sm:$0xff] 0.0
    %79 = vst [vmem:[#allocation2 + $0x1e0] sm:$0xff] 0.0
    %80 = vst [vmem:[#allocation2 + $0x1e8] sm:$0xff] 0.0
    %81 = vst [vmem:[#allocation2 + $0x1f0] sm:$0xff] 0.0
    %82 = vst [vmem:[#allocation2 + $0x1f8] sm:$0xff] 0.0
  $region17: #{sfi_forward.17} parent=0 // pred_fallthru
    _
  %v83 = vld [vmem:[#allocation2] sm:$0xff]
  %v84 = vld [vmem:[#allocation2 + $0x8] sm:$0xff]
  %v85 = vld [vmem:[#allocation2 + $0x10] sm:$0xff]
  %v86 = vld [vmem:[#allocation2 + $0x18] sm:$0xff]
  %v87 = vld [vmem:[#allocation2 + $0x20] sm:$0xff]
  %v88 = vld [vmem:[#allocation2 + $0x28] sm:$0xff]
  %v89 = vld [vmem:[#allocation2 + $0x30] sm:$0xff]
  %v90 = vld [vmem:[#allocation2 + $0x38] sm:$0xff]
  %v91 = vld [vmem:[#allocation2 + $0x40] sm:$0xff]
  %v92 = vld [vmem:[#allocation2 + $0x48] sm:$0xff]
  %v93 = vld [vmem:[#allocation2 + $0x50] sm:$0xff]
  %v94 = vld [vmem:[#allocation2 + $0x58] sm:$0xff]
  %v95 = vld [vmem:[#allocation2 + $0x60] sm:$0xff]
  %v96 = vld [vmem:[#allocation2 + $0x68] sm:$0xff]
  %v97 = vld [vmem:[#allocation2 + $0x70] sm:$0xff]
  %v98 = vld [vmem:[#allocation2 + $0x78] sm:$0xff]
  %v99 = vld [vmem:[#allocation2 + $0x80] sm:$0xff]
  %v100 = vld [vmem:[#allocation2 + $0x88] sm:$0xff]
  %v101 = vld [vmem:[#allocation2 + $0x90] sm:$0xff]
  %v102 = vld [vmem:[#allocation2 + $0x98] sm:$0xff]
  %v103 = vld [vmem:[#allocation2 + $0xa0] sm:$0xff]
  %v104 = vld [vmem:[#allocation2 + $0xa8] sm:$0xff]
  %v105 = vld [vmem:[#allocation2 + $0xb0] sm:$0xff]
  %v106 = vld [vmem:[#allocation2 + $0xb8] sm:$0xff]
  %v107 = vld [vmem:[#allocation2 + $0xc0] sm:$0xff]
  %v108 = vld [vmem:[#allocation2 + $0xc8] sm:$0xff]
  %v109 = vld [vmem:[#allocation2 + $0xd0] sm:$0xff]
  %v110 = vld [vmem:[#allocation2 + $0xd8] sm:$0xff]
  %v111 = vld [vmem:[#allocation2 + $0xe0] sm:$0xff]
  %v112 = vld [vmem:[#allocation2 + $0xe8] sm:$0xff]
  %v113 = vld [vmem:[#allocation2 + $0xf0] sm:$0xff]
  %v114 = vld [vmem:[#allocation2 + $0xf8] sm:$0xff]
  %v115 = vld [vmem:[#allocation2 + $0x100] sm:$0xff]
  %v116 = vld [vmem:[#allocation2 + $0x108] sm:$0xff]
  %v117 = vld [vmem:[#allocation2 + $0x110] sm:$0xff]
  %v118 = vld [vmem:[#allocation2 + $0x118] sm:$0xff]
  %v119 = vld [vmem:[#allocation2 + $0x120] sm:$0xff]
  %v120 = vld [vmem:[#allocation2 + $0x128] sm:$0xff]
  %v121 = vld [vmem:[#allocation2 + $0x130] sm:$0xff]
  %v122 = vld [vmem:[#allocation2 + $0x138] sm:$0xff]
  %v123 = vld [vmem:[#allocation2 + $0x140] sm:$0xff]
  %v124 = vld [vmem:[#allocation2 + $0x148] sm:$0xff]
  %v125 = vld [vmem:[#allocation2 + $0x150] sm:$0xff]
  %v126 = vld [vmem:[#allocation2 + $0x158] sm:$0xff]
  %v127 = vld [vmem:[#allocation2 + $0x160] sm:$0xff]
  %v128 = vld [vmem:[#allocation2 + $0x168] sm:$0xff]
  %v129 = vld [vmem:[#allocation2 + $0x170] sm:$0xff]
  %v130 = vld [vmem:[#allocation2 + $0x178] sm:$0xff]
  %v131 = vld [vmem:[#allocation2 + $0x180] sm:$0xff]
  %v132 = vld [vmem:[#allocation2 + $0x188] sm:$0xff]
  %v133 = vld [vmem:[#allocation2 + $0x190] sm:$0xff]
  %v134 = vld [vmem:[#allocation2 + $0x198] sm:$0xff]
  %v135 = vld [vmem:[#allocation2 + $0x1a0] sm:$0xff]
  %v136 = vld [vmem:[#allocation2 + $0x1a8] sm:$0xff]
  %v137 = vld [vmem:[#allocation2 + $0x1b0] sm:$0xff]
  %v138 = vld [vmem:[#allocation2 + $0x1b8] sm:$0xff]
  %v139 = vld [vmem:[#allocation2 + $0x1c0] sm:$0xff]
  %v140 = vld [vmem:[#allocation2 + $0x1c8] sm:$0xff]
  %v141 = vld [vmem:[#allocation2 + $0x1d0] sm:$0xff]
  %v142 = vld [vmem:[#allocation2 + $0x1d8] sm:$0xff]
  %v143 = vld [vmem:[#allocation2 + $0x1e0] sm:$0xff]
  %v144 = vld [vmem:[#allocation2 + $0x1e8] sm:$0xff]
  %v145 = vld [vmem:[#allocation2 + $0x1f0] sm:$0xff]
  %v146 = vld [vmem:[#allocation2 + $0x1f8] sm:$0xff]
  %v147 = vld [vmem:[%s0] sm:$0xf]
  %v148 = vld [vmem:[%s0 + $0x4] sm:$0xf]
  %v149 = vld [vmem:[%s0 + $0x8] sm:$0xf]
  %v150 = vld [vmem:[%s0 + $0xc] sm:$0xf]
  %v151 = vld [vmem:[%s0 + $0x10] sm:$0xf]
  %v152 = vld [vmem:[%s0 + $0x14] sm:$0xf]
  %v153 = vld [vmem:[%s0 + $0x18] sm:$0xf]
  %v154 = vld [vmem:[%s0 + $0x1c] sm:$0xf]
  %v155 = vld [vmem:[%s0 + $0x20] sm:$0xf]
  %v156 = vld [vmem:[%s0 + $0x24] sm:$0xf]
  %v157 = vld [vmem:[%s0 + $0x28] sm:$0xf]
  %v158 = vld [vmem:[%s0 + $0x2c] sm:$0xf]
  %v159 = vld [vmem:[%s0 + $0x30] sm:$0xf]
  %v160 = vld [vmem:[%s0 + $0x34] sm:$0xf]
  %v161 = vld [vmem:[%s0 + $0x38] sm:$0xf]
  %v162 = vld [vmem:[%s0 + $0x3c] sm:$0xf]
  %v163 = vld [vmem:[%s0 + $0x40] sm:$0xf]
  %v164 = vld [vmem:[%s0 + $0x44] sm:$0xf]
  %v165 = vld [vmem:[%s0 + $0x48] sm:$0xf]
  %v166 = vld [vmem:[%s0 + $0x4c] sm:$0xf]
  %v167 = vld [vmem:[%s0 + $0x50] sm:$0xf]
  %v168 = vld [vmem:[%s0 + $0x54] sm:$0xf]
  %v169 = vld [vmem:[%s0 + $0x58] sm:$0xf]
  %v170 = vld [vmem:[%s0 + $0x5c] sm:$0xf]
  %v171 = vld [vmem:[%s0 + $0x60] sm:$0xf]
  %v172 = vld [vmem:[%s0 + $0x64] sm:$0xf]
  %v173 = vld [vmem:[%s0 + $0x68] sm:$0xf]
  %v174 = vld [vmem:[%s0 + $0x6c] sm:$0xf]
  %v175 = vld [vmem:[%s0 + $0x70] sm:$0xf]
  %v176 = vld [vmem:[%s0 + $0x74] sm:$0xf]
  %v177 = vld [vmem:[%s0 + $0x78] sm:$0xf]
  %v178 = vld [vmem:[%s0 + $0x7c] sm:$0xf]
  %v179 = vld [vmem:[%s0 + $0x80] sm:$0xf]
  %v180 = vld [vmem:[%s0 + $0x84] sm:$0xf]
  %v181 = vld [vmem:[%s0 + $0x88] sm:$0xf]
  %v182 = vld [vmem:[%s0 + $0x8c] sm:$0xf]
  %v183 = vld [vmem:[%s0 + $0x90] sm:$0xf]
  %v184 = vld [vmem:[%s0 + $0x94] sm:$0xf]
  %v185 = vld [vmem:[%s0 + $0x98] sm:$0xf]
  %v186 = vld [vmem:[%s0 + $0x9c] sm:$0xf]
  %v187 = vld [vmem:[%s0 + $0xa0] sm:$0xf]
  %v188 = vld [vmem:[%s0 + $0xa4] sm:$0xf]
  %v189 = vld [vmem:[%s0 + $0xa8] sm:$0xf]
  %v190 = vld [vmem:[%s0 + $0xac] sm:$0xf]
  %v191 = vld [vmem:[%s0 + $0xb0] sm:$0xf]
  %v192 = vld [vmem:[%s0 + $0xb4] sm:$0xf]
  %v193 = vld [vmem:[%s0 + $0xb8] sm:$0xf]
  %v194 = vld [vmem:[%s0 + $0xbc] sm:$0xf]
  %v195 = vld [vmem:[%s0 + $0xc0] sm:$0xf]
  %v196 = vld [vmem:[%s0 + $0xc4] sm:$0xf]
  %v197 = vld [vmem:[%s0 + $0xc8] sm:$0xf]
  %v198 = vld [vmem:[%s0 + $0xcc] sm:$0xf]
  %v199 = vld [vmem:[%s0 + $0xd0] sm:$0xf]
  %v200 = vld [vmem:[%s0 + $0xd4] sm:$0xf]
  %v201 = vld [vmem:[%s0 + $0xd8] sm:$0xf]
  %v202 = vld [vmem:[%s0 + $0xdc] sm:$0xf]
  %v203 = vld [vmem:[%s0 + $0xe0] sm:$0xf]
  %v204 = vld [vmem:[%s0 + $0xe4] sm:$0xf]
  %v205 = vld [vmem:[%s0 + $0xe8] sm:$0xf]
  %v206 = vld [vmem:[%s0 + $0xec] sm:$0xf]
  %v207 = vld [vmem:[%s0 + $0xf0] sm:$0xf]
  %v208 = vld [vmem:[%s0 + $0xf4] sm:$0xf]
  %v209 = vld [vmem:[%s0 + $0xf8] sm:$0xf]
  %v210 = vld [vmem:[%s0 + $0xfc] sm:$0xf]
  %v211 = vld [vmem:[%s1] sm:$0xf]
  %v212 = vld [vmem:[%s1 + $0x4] sm:$0xf]
  %v213 = vld [vmem:[%s1 + $0x8] sm:$0xf]
  %v214 = vld [vmem:[%s1 + $0xc] sm:$0xf]
  %v215 = vld [vmem:[%s1 + $0x10] sm:$0xf]
  %v216 = vld [vmem:[%s1 + $0x14] sm:$0xf]
  %v217 = vld [vmem:[%s1 + $0x18] sm:$0xf]
  %v218 = vld [vmem:[%s1 + $0x1c] sm:$0xf]
  %v219 = vld [vmem:[%s1 + $0x20] sm:$0xf]
  %v220 = vld [vmem:[%s1 + $0x24] sm:$0xf]
  %v221 = vld [vmem:[%s1 + $0x28] sm:$0xf]
  %v222 = vld [vmem:[%s1 + $0x2c] sm:$0xf]
  %v223 = vld [vmem:[%s1 + $0x30] sm:$0xf]
  %v224 = vld [vmem:[%s1 + $0x34] sm:$0xf]
  %v225 = vld [vmem:[%s1 + $0x38] sm:$0xf]
  %v226 = vld [vmem:[%s1 + $0x3c] sm:$0xf]
  %v291 = vunpack.c.l.b16 %v147
  %v292 = vunpack.c.l.b16 %v148
  %v293 = vunpack.c.l.b16 %v149
  %v294 = vunpack.c.l.b16 %v150
  %v295 = vunpack.c.l.b16 %v151
  %v296 = vunpack.c.l.b16 %v152
  %v297 = vunpack.c.l.b16 %v153
  %v298 = vunpack.c.l.b16 %v154
  %v299 = vunpack.c.l.b16 %v155
  %v300 = vunpack.c.l.b16 %v156
  %v301 = vunpack.c.l.b16 %v157
  %v302 = vunpack.c.l.b16 %v158
  %v303 = vunpack.c.l.b16 %v159
  %v304 = vunpack.c.l.b16 %v160
  %v305 = vunpack.c.l.b16 %v161
  %v306 = vunpack.c.l.b16 %v162
  %v307 = vunpack.c.l.b16 %v163
  %v308 = vunpack.c.l.b16 %v164
  %v309 = vunpack.c.l.b16 %v165
  %v310 = vunpack.c.l.b16 %v166
  %v311 = vunpack.c.l.b16 %v167
  %v312 = vunpack.c.l.b16 %v168
  %v313 = vunpack.c.l.b16 %v169
  %v314 = vunpack.c.l.b16 %v170
  %v315 = vunpack.c.l.b16 %v171
  %v316 = vunpack.c.l.b16 %v172
  %v317 = vunpack.c.l.b16 %v173
  %v318 = vunpack.c.l.b16 %v174
  %v319 = vunpack.c.l.b16 %v175
  %v320 = vunpack.c.l.b16 %v176
  %v321 = vunpack.c.l.b16 %v177
  %v322 = vunpack.c.l.b16 %v178
  %v323 = vunpack.c.l.b16 %v179
  %v324 = vunpack.c.l.b16 %v180
  %v325 = vunpack.c.l.b16 %v181
  %v326 = vunpack.c.l.b16 %v182
  %v327 = vunpack.c.l.b16 %v183
  %v328 = vunpack.c.l.b16 %v184
  %v329 = vunpack.c.l.b16 %v185
  %v330 = vunpack.c.l.b16 %v186
  %v331 = vunpack.c.l.b16 %v187
  %v332 = vunpack.c.l.b16 %v188
  %v333 = vunpack.c.l.b16 %v189
  %v334 = vunpack.c.l.b16 %v190
  %v335 = vunpack.c.l.b16 %v191
  %v336 = vunpack.c.l.b16 %v192
  %v337 = vunpack.c.l.b16 %v193
  %v338 = vunpack.c.l.b16 %v194
  %v339 = vunpack.c.l.b16 %v195
  %v340 = vunpack.c.l.b16 %v196
  %v341 = vunpack.c.l.b16 %v197
  %v342 = vunpack.c.l.b16 %v198
  %v343 = vunpack.c.l.b16 %v199
  %v344 = vunpack.c.l.b16 %v200
  %v345 = vunpack.c.l.b16 %v201
  %v346 = vunpack.c.l.b16 %v202
  %v347 = vunpack.c.l.b16 %v203
  %v348 = vunpack.c.l.b16 %v204
  %v349 = vunpack.c.l.b16 %v205
  %v350 = vunpack.c.l.b16 %v206
  %v351 = vunpack.c.l.b16 %v207
  %v352 = vunpack.c.l.b16 %v208
  %v353 = vunpack.c.l.b16 %v209
  %v354 = vunpack.c.l.b16 %v210
  %v355 = vpack.c.b16 %v292, %v291
  %v356 = vpack.c.b16 %v294, %v293
  %v357 = vpack.c.b16 %v296, %v295
  %v358 = vpack.c.b16 %v298, %v297
  %v359 = vpack.c.b16 %v300, %v299
  %v360 = vpack.c.b16 %v302, %v301
  %v361 = vpack.c.b16 %v304, %v303
  %v362 = vpack.c.b16 %v306, %v305
  %v363 = vpack.c.b16 %v308, %v307
  %v364 = vpack.c.b16 %v310, %v309
  %v365 = vpack.c.b16 %v312, %v311
  %v366 = vpack.c.b16 %v314, %v313
  %v367 = vpack.c.b16 %v316, %v315
  %v368 = vpack.c.b16 %v318, %v317
  %v369 = vpack.c.b16 %v320, %v319
  %v370 = vpack.c.b16 %v322, %v321
  %v371 = vpack.c.b16 %v324, %v323
  %v372 = vpack.c.b16 %v326, %v325
  %v373 = vpack.c.b16 %v328, %v327
  %v374 = vpack.c.b16 %v330, %v329
  %v375 = vpack.c.b16 %v332, %v331
  %v376 = vpack.c.b16 %v334, %v333
  %v377 = vpack.c.b16 %v336, %v335
  %v378 = vpack.c.b16 %v338, %v337
  %v379 = vpack.c.b16 %v340, %v339
  %v380 = vpack.c.b16 %v342, %v341
  %v381 = vpack.c.b16 %v344, %v343
  %v382 = vpack.c.b16 %v346, %v345
  %v383 = vpack.c.b16 %v348, %v347
  %v384 = vpack.c.b16 %v350, %v349
  %v385 = vpack.c.b16 %v352, %v351
  %v386 = vpack.c.b16 %v354, %v353
  %v435 = vunpack.c.l.b16 %v211
  %v436 = vunpack.c.l.b16 %v212
  %v437 = vunpack.c.l.b16 %v213
  %v438 = vunpack.c.l.b16 %v214
  %v439 = vunpack.c.l.b16 %v215
  %v440 = vunpack.c.l.b16 %v216
  %v441 = vunpack.c.l.b16 %v217
  %v442 = vunpack.c.l.b16 %v218
  %v443 = vunpack.c.l.b16 %v219
  %v444 = vunpack.c.l.b16 %v220
  %v445 = vunpack.c.l.b16 %v221
  %v446 = vunpack.c.l.b16 %v222
  %v447 = vunpack.c.l.b16 %v223
  %v448 = vunpack.c.l.b16 %v224
  %v449 = vunpack.c.l.b16 %v225
  %v450 = vunpack.c.l.b16 %v226
  %v451 = vpack.c.b16 %v436, %v435
  %v452 = vpack.c.b16 %v438, %v437
  %v453 = vpack.c.b16 %v440, %v439
  %v454 = vpack.c.b16 %v442, %v441
  %v455 = vpack.c.b16 %v444, %v443
  %v456 = vpack.c.b16 %v446, %v445
  %v457 = vpack.c.b16 %v448, %v447
  %v458 = vpack.c.b16 %v450, %v449
  %467 = vmatprep.subr.bf16.mxu0 0
  %468 = vmatpush1.bf16.msra.mxu0 %v458
  %469 = vmatprep.subr.bf16.mxu0 0
  %470 = vmatpush1.bf16.msra.mxu0 %v457
  %471 = vmatprep.subr.bf16.mxu0 0
  %472 = vmatpush1.bf16.msra.mxu0 %v456
  %473 = vmatprep.subr.bf16.mxu0 0
  %474 = vmatpush1.bf16.msra.mxu0 %v455
  %475 = vmatprep.subr.bf16.mxu0 0
  %476 = vmatpush1.bf16.msra.mxu0 %v454
  %477 = vmatprep.subr.bf16.mxu0 0
  %478 = vmatpush1.bf16.msra.mxu0 %v453
  %479 = vmatprep.subr.bf16.mxu0 0
  %480 = vmatpush1.bf16.msra.mxu0 %v452
  %481 = vmatprep.subr.bf16.mxu0 0
  %482 = vmatpush1.bf16.msra.mxu0 %v451
  %483 = vmatprep.subr.bf16.mxu0 0
  %484 = vmatpush2.bf16.msra.mxu0 0
  %485 = vmatprep.subr.bf16.mxu0 0
  %486 = vmatpush2.bf16.msra.mxu0 0
  %487 = vmatprep.subr.bf16.mxu0 0
  %488 = vmatpush2.bf16.msra.mxu0 0
  %489 = vmatprep.subr.bf16.mxu0 0
  %490 = vmatpush2.bf16.msra.mxu0 0
  %491 = vmatprep.subr.bf16.mxu0 0
  %492 = vmatpush2.bf16.msra.mxu0 0
  %493 = vmatprep.subr.bf16.mxu0 0
  %494 = vmatpush2.bf16.msra.mxu0 0
  %495 = vmatprep.subr.bf16.mxu0 0
  %496 = vmatpush2.bf16.msra.mxu0 0
  %497 = vmatprep.subr.bf16.mxu0 0
  %498 = vmatpush2.bf16.msra.mxu0 0
  %499 = vmatprep.mubr.bf16.mxu0 0
  %500 = vmatmul.mubr.bf16.gmra.mxu0 %v355
  %v501 = vpop.f32.mrf.mxu0
  %v502 = vadd.f32 0.0, %v501
  %v503 = vpop.f32.mrf.mxu0
  %v504 = vpop.f32.mrf.mxu0
  %v505 = vadd.f32 0.0, %v504
  %v506 = vpop.f32.mrf.mxu0
  %507 = vmatprep.mubr.bf16.mxu0 0
  %508 = vmatmul.mubr.bf16.gmra.mxu0 %v356
  %v509 = vpop.f32.mrf.mxu0
  %v510 = vadd.f32 0.0, %v509
  %v511 = vpop.f32.mrf.mxu0
  %v512 = vpop.f32.mrf.mxu0
  %v513 = vadd.f32 0.0, %v512
  %v514 = vpop.f32.mrf.mxu0
  %515 = vmatprep.mubr.bf16.mxu0 0
  %516 = vmatmul.mubr.bf16.gmra.mxu0 %v357
  %v517 = vpop.f32.mrf.mxu0
  %v518 = vadd.f32 0.0, %v517
  %v519 = vpop.f32.mrf.mxu0
  %v520 = vpop.f32.mrf.mxu0
  %v521 = vadd.f32 0.0, %v520
  %v522 = vpop.f32.mrf.mxu0
  %523 = vmatprep.mubr.bf16.mxu0 0
  %524 = vmatmul.mubr.bf16.gmra.mxu0 %v358
  %v525 = vpop.f32.mrf.mxu0
  %v526 = vadd.f32 0.0, %v525
  %v527 = vpop.f32.mrf.mxu0
  %v528 = vpop.f32.mrf.mxu0
  %v529 = vadd.f32 0.0, %v528
  %v530 = vpop.f32.mrf.mxu0
  %531 = vmatprep.mubr.bf16.mxu0 0
  %532 = vmatmul.mubr.bf16.gmra.mxu0 %v359
  %v533 = vpop.f32.mrf.mxu0
  %v534 = vadd.f32 0.0, %v533
  %v535 = vpop.f32.mrf.mxu0
  %v536 = vpop.f32.mrf.mxu0
  %v537 = vadd.f32 0.0, %v536
  %v538 = vpop.f32.mrf.mxu0
  %539 = vmatprep.mubr.bf16.mxu0 0
  %540 = vmatmul.mubr.bf16.gmra.mxu0 %v360
  %v541 = vpop.f32.mrf.mxu0
  %v542 = vadd.f32 0.0, %v541
  %v543 = vpop.f32.mrf.mxu0
  %v544 = vpop.f32.mrf.mxu0
  %v545 = vadd.f32 0.0, %v544
  %v546 = vpop.f32.mrf.mxu0
  %547 = vmatprep.mubr.bf16.mxu0 0
  %548 = vmatmul.mubr.bf16.gmra.mxu0 %v361
  %v549 = vpop.f32.mrf.mxu0
  %v550 = vadd.f32 0.0, %v549
  %v551 = vpop.f32.mrf.mxu0
  %v552 = vpop.f32.mrf.mxu0
  %v553 = vadd.f32 0.0, %v552
  %v554 = vpop.f32.mrf.mxu0
  %555 = vmatprep.mubr.bf16.mxu0 0
  %556 = vmatmul.mubr.bf16.gmra.mxu0 %v362
  %v557 = vpop.f32.mrf.mxu0
  %v558 = vadd.f32 0.0, %v557
  %v559 = vpop.f32.mrf.mxu0
  %v560 = vpop.f32.mrf.mxu0
  %v561 = vadd.f32 0.0, %v560
  %v562 = vpop.f32.mrf.mxu0
  %563 = vmatprep.mubr.bf16.mxu0 0
  %564 = vmatmul.mubr.bf16.gmra.mxu0 %v363
  %v565 = vpop.f32.mrf.mxu0
  %v566 = vadd.f32 0.0, %v565
  %v567 = vpop.f32.mrf.mxu0
  %v568 = vpop.f32.mrf.mxu0
  %v569 = vadd.f32 0.0, %v568
  %v570 = vpop.f32.mrf.mxu0
  %571 = vmatprep.mubr.bf16.mxu0 0
  %572 = vmatmul.mubr.bf16.gmra.mxu0 %v364
  %v573 = vpop.f32.mrf.mxu0
  %v574 = vadd.f32 0.0, %v573
  %v575 = vpop.f32.mrf.mxu0
  %v576 = vpop.f32.mrf.mxu0
  %v577 = vadd.f32 0.0, %v576
  %v578 = vpop.f32.mrf.mxu0
  %579 = vmatprep.mubr.bf16.mxu0 0
  %580 = vmatmul.mubr.bf16.gmra.mxu0 %v365
  %v581 = vpop.f32.mrf.mxu0
  %v582 = vadd.f32 0.0, %v581
  %v583 = vpop.f32.mrf.mxu0
  %v584 = vpop.f32.mrf.mxu0
  %v585 = vadd.f32 0.0, %v584
  %v586 = vpop.f32.mrf.mxu0
  %587 = vmatprep.mubr.bf16.mxu0 0
  %588 = vmatmul.mubr.bf16.gmra.mxu0 %v366
  %v589 = vpop.f32.mrf.mxu0
  %v590 = vadd.f32 0.0, %v589
  %v591 = vpop.f32.mrf.mxu0
  %v592 = vpop.f32.mrf.mxu0
  %v593 = vadd.f32 0.0, %v592
  %v594 = vpop.f32.mrf.mxu0
  %595 = vmatprep.mubr.bf16.mxu0 0
  %596 = vmatmul.mubr.bf16.gmra.mxu0 %v367
  %v597 = vpop.f32.mrf.mxu0
  %v598 = vadd.f32 0.0, %v597
  %v599 = vpop.f32.mrf.mxu0
  %v600 = vpop.f32.mrf.mxu0
  %v601 = vadd.f32 0.0, %v600
  %v602 = vpop.f32.mrf.mxu0
  %603 = vmatprep.mubr.bf16.mxu0 0
  %604 = vmatmul.mubr.bf16.gmra.mxu0 %v368
  %v605 = vpop.f32.mrf.mxu0
  %v606 = vadd.f32 0.0, %v605
  %v607 = vpop.f32.mrf.mxu0
  %v608 = vpop.f32.mrf.mxu0
  %v609 = vadd.f32 0.0, %v608
  %v610 = vpop.f32.mrf.mxu0
  %611 = vmatprep.mubr.bf16.mxu0 0
  %612 = vmatmul.mubr.bf16.gmra.mxu0 %v369
  %v613 = vpop.f32.mrf.mxu0
  %v614 = vadd.f32 0.0, %v613
  %v615 = vpop.f32.mrf.mxu0
  %v616 = vpop.f32.mrf.mxu0
  %v617 = vadd.f32 0.0, %v616
  %v618 = vpop.f32.mrf.mxu0
  %619 = vmatprep.mubr.bf16.mxu0 0
  %620 = vmatmul.mubr.bf16.gmra.mxu0 %v370
  %v621 = vpop.f32.mrf.mxu0
  %v622 = vadd.f32 0.0, %v621
  %v623 = vpop.f32.mrf.mxu0
  %v624 = vpop.f32.mrf.mxu0
  %v625 = vadd.f32 0.0, %v624
  %v626 = vpop.f32.mrf.mxu0
  %627 = vmatprep.mubr.bf16.mxu0 0
  %628 = vmatmul.mubr.bf16.gmra.mxu0 %v371
  %v629 = vpop.f32.mrf.mxu0
  %v630 = vadd.f32 0.0, %v629
  %v631 = vpop.f32.mrf.mxu0
  %v632 = vpop.f32.mrf.mxu0
  %v633 = vadd.f32 0.0, %v632
  %v634 = vpop.f32.mrf.mxu0
  %635 = vmatprep.mubr.bf16.mxu0 0
  %636 = vmatmul.mubr.bf16.gmra.mxu0 %v372
  %v637 = vpop.f32.mrf.mxu0
  %v638 = vadd.f32 0.0, %v637
  %v639 = vpop.f32.mrf.mxu0
  %v640 = vpop.f32.mrf.mxu0
  %v641 = vadd.f32 0.0, %v640
  %v642 = vpop.f32.mrf.mxu0
  %643 = vmatprep.mubr.bf16.mxu0 0
  %644 = vmatmul.mubr.bf16.gmra.mxu0 %v373
  %v645 = vpop.f32.mrf.mxu0
  %v646 = vadd.f32 0.0, %v645
  %v647 = vpop.f32.mrf.mxu0
  %v648 = vpop.f32.mrf.mxu0
  %v649 = vadd.f32 0.0, %v648
  %v650 = vpop.f32.mrf.mxu0
  %651 = vmatprep.mubr.bf16.mxu0 0
  %652 = vmatmul.mubr.bf16.gmra.mxu0 %v374
  %v653 = vpop.f32.mrf.mxu0
  %v654 = vadd.f32 0.0, %v653
  %v655 = vpop.f32.mrf.mxu0
  %v656 = vpop.f32.mrf.mxu0
  %v657 = vadd.f32 0.0, %v656
  %v658 = vpop.f32.mrf.mxu0
  %659 = vmatprep.mubr.bf16.mxu0 0
  %660 = vmatmul.mubr.bf16.gmra.mxu0 %v375
  %v661 = vpop.f32.mrf.mxu0
  %v662 = vadd.f32 0.0, %v661
  %v663 = vpop.f32.mrf.mxu0
  %v664 = vpop.f32.mrf.mxu0
  %v665 = vadd.f32 0.0, %v664
  %v666 = vpop.f32.mrf.mxu0
  %667 = vmatprep.mubr.bf16.mxu0 0
  %668 = vmatmul.mubr.bf16.gmra.mxu0 %v376
  %v669 = vpop.f32.mrf.mxu0
  %v670 = vadd.f32 0.0, %v669
  %v671 = vpop.f32.mrf.mxu0
  %v672 = vpop.f32.mrf.mxu0
  %v673 = vadd.f32 0.0, %v672
  %v674 = vpop.f32.mrf.mxu0
  %675 = vmatprep.mubr.bf16.mxu0 0
  %676 = vmatmul.mubr.bf16.gmra.mxu0 %v377
  %v677 = vpop.f32.mrf.mxu0
  %v678 = vadd.f32 0.0, %v677
  %v679 = vpop.f32.mrf.mxu0
  %v680 = vpop.f32.mrf.mxu0
  %v681 = vadd.f32 0.0, %v680
  %v682 = vpop.f32.mrf.mxu0
  %683 = vmatprep.mubr.bf16.mxu0 0
  %684 = vmatmul.mubr.bf16.gmra.mxu0 %v378
  %v685 = vpop.f32.mrf.mxu0
  %v686 = vadd.f32 0.0, %v685
  %v687 = vpop.f32.mrf.mxu0
  %v688 = vpop.f32.mrf.mxu0
  %v689 = vadd.f32 0.0, %v688
  %v690 = vpop.f32.mrf.mxu0
  %691 = vmatprep.mubr.bf16.mxu0 0
  %692 = vmatmul.mubr.bf16.gmra.mxu0 %v379
  %v693 = vpop.f32.mrf.mxu0
  %v694 = vadd.f32 0.0, %v693
  %v695 = vpop.f32.mrf.mxu0
  %v696 = vpop.f32.mrf.mxu0
  %v697 = vadd.f32 0.0, %v696
  %v698 = vpop.f32.mrf.mxu0
  %699 = vmatprep.mubr.bf16.mxu0 0
  %700 = vmatmul.mubr.bf16.gmra.mxu0 %v380
  %v701 = vpop.f32.mrf.mxu0
  %v702 = vadd.f32 0.0, %v701
  %v703 = vpop.f32.mrf.mxu0
  %v704 = vpop.f32.mrf.mxu0
  %v705 = vadd.f32 0.0, %v704
  %v706 = vpop.f32.mrf.mxu0
  %707 = vmatprep.mubr.bf16.mxu0 0
  %708 = vmatmul.mubr.bf16.gmra.mxu0 %v381
  %v709 = vpop.f32.mrf.mxu0
  %v710 = vadd.f32 0.0, %v709
  %v711 = vpop.f32.mrf.mxu0
  %v712 = vpop.f32.mrf.mxu0
  %v713 = vadd.f32 0.0, %v712
  %v714 = vpop.f32.mrf.mxu0
  %715 = vmatprep.mubr.bf16.mxu0 0
  %716 = vmatmul.mubr.bf16.gmra.mxu0 %v382
  %v717 = vpop.f32.mrf.mxu0
  %v718 = vadd.f32 0.0, %v717
  %v719 = vpop.f32.mrf.mxu0
  %v720 = vpop.f32.mrf.mxu0
  %v721 = vadd.f32 0.0, %v720
  %v722 = vpop.f32.mrf.mxu0
  %723 = vmatprep.mubr.bf16.mxu0 0
  %724 = vmatmul.mubr.bf16.gmra.mxu0 %v383
  %v725 = vpop.f32.mrf.mxu0
  %v726 = vadd.f32 0.0, %v725
  %v727 = vpop.f32.mrf.mxu0
  %v728 = vpop.f32.mrf.mxu0
  %v729 = vadd.f32 0.0, %v728
  %v730 = vpop.f32.mrf.mxu0
  %731 = vmatprep.mubr.bf16.mxu0 0
  %732 = vmatmul.mubr.bf16.gmra.mxu0 %v384
  %v733 = vpop.f32.mrf.mxu0
  %v734 = vadd.f32 0.0, %v733
  %v735 = vpop.f32.mrf.mxu0
  %v736 = vpop.f32.mrf.mxu0
  %v737 = vadd.f32 0.0, %v736
  %v738 = vpop.f32.mrf.mxu0
  %739 = vmatprep.mubr.bf16.mxu0 0
  %740 = vmatmul.mubr.bf16.gmra.mxu0 %v385
  %v741 = vpop.f32.mrf.mxu0
  %v742 = vadd.f32 0.0, %v741
  %v743 = vpop.f32.mrf.mxu0
  %v744 = vpop.f32.mrf.mxu0
  %v745 = vadd.f32 0.0, %v744
  %v746 = vpop.f32.mrf.mxu0
  %747 = vmatprep.mubr.bf16.mxu0 0
  %748 = vmatmul.mubr.bf16.gmra.mxu0 %v386
  %v749 = vpop.f32.mrf.mxu0
  %v750 = vadd.f32 0.0, %v749
  %v751 = vpop.f32.mrf.mxu0
  %v752 = vpop.f32.mrf.mxu0
  %v753 = vadd.f32 0.0, %v752
  %v754 = vpop.f32.mrf.mxu0
  %755 = vdwg.mxu0
  %v756 = vadd.f32 %v83, %v502
  %v757 = vadd.f32 %v84, %v505
  %v758 = vadd.f32 %v85, %v510
  %v759 = vadd.f32 %v86, %v513
  %v760 = vadd.f32 %v87, %v518
  %v761 = vadd.f32 %v88, %v521
  %v762 = vadd.f32 %v89, %v526
  %v763 = vadd.f32 %v90, %v529
  %v764 = vadd.f32 %v91, %v534
  %v765 = vadd.f32 %v92, %v537
  %v766 = vadd.f32 %v93, %v542
  %v767 = vadd.f32 %v94, %v545
  %v768 = vadd.f32 %v95, %v550
  %v769 = vadd.f32 %v96, %v553
  %v770 = vadd.f32 %v97, %v558
  %v771 = vadd.f32 %v98, %v561
  %v772 = vadd.f32 %v99, %v566
  %v773 = vadd.f32 %v100, %v569
  %v774 = vadd.f32 %v101, %v574
  %v775 = vadd.f32 %v102, %v577
  %v776 = vadd.f32 %v103, %v582
  %v777 = vadd.f32 %v104, %v585
  %v778 = vadd.f32 %v105, %v590
  %v779 = vadd.f32 %v106, %v593
  %v780 = vadd.f32 %v107, %v598
  %v781 = vadd.f32 %v108, %v601
  %v782 = vadd.f32 %v109, %v606
  %v783 = vadd.f32 %v110, %v609
  %v784 = vadd.f32 %v111, %v614
  %v785 = vadd.f32 %v112, %v617
  %v786 = vadd.f32 %v113, %v622
  %v787 = vadd.f32 %v114, %v625
  %v788 = vadd.f32 %v115, %v630
  %v789 = vadd.f32 %v116, %v633
  %v790 = vadd.f32 %v117, %v638
  %v791 = vadd.f32 %v118, %v641
  %v792 = vadd.f32 %v119, %v646
  %v793 = vadd.f32 %v120, %v649
  %v794 = vadd.f32 %v121, %v654
  %v795 = vadd.f32 %v122, %v657
  %v796 = vadd.f32 %v123, %v662
  %v797 = vadd.f32 %v124, %v665
  %v798 = vadd.f32 %v125, %v670
  %v799 = vadd.f32 %v126, %v673
  %v800 = vadd.f32 %v127, %v678
  %v801 = vadd.f32 %v128, %v681
  %v802 = vadd.f32 %v129, %v686
  %v803 = vadd.f32 %v130, %v689
  %v804 = vadd.f32 %v131, %v694
  %v805 = vadd.f32 %v132, %v697
  %v806 = vadd.f32 %v133, %v702
  %v807 = vadd.f32 %v134, %v705
  %v808 = vadd.f32 %v135, %v710
  %v809 = vadd.f32 %v136, %v713
  %v810 = vadd.f32 %v137, %v718
  %v811 = vadd.f32 %v138, %v721
  %v812 = vadd.f32 %v139, %v726
  %v813 = vadd.f32 %v140, %v729
  %v814 = vadd.f32 %v141, %v734
  %v815 = vadd.f32 %v142, %v737
  %v816 = vadd.f32 %v143, %v742
  %v817 = vadd.f32 %v144, %v745
  %v818 = vadd.f32 %v145, %v750
  %v819 = vadd.f32 %v146, %v753
  %820 = vst [vmem:[#allocation2] sm:$0xff] %v756
  %821 = vst [vmem:[#allocation2 + $0x8] sm:$0xff] %v757
  %822 = vst [vmem:[#allocation2 + $0x10] sm:$0xff] %v758
  %823 = vst [vmem:[#allocation2 + $0x18] sm:$0xff] %v759
  %824 = vst [vmem:[#allocation2 + $0x20] sm:$0xff] %v760
  %825 = vst [vmem:[#allocation2 + $0x28] sm:$0xff] %v761
  %826 = vst [vmem:[#allocation2 + $0x30] sm:$0xff] %v762
  %827 = vst [vmem:[#allocation2 + $0x38] sm:$0xff] %v763
  %828 = vst [vmem:[#allocation2 + $0x40] sm:$0xff] %v764
  %829 = vst [vmem:[#allocation2 + $0x48] sm:$0xff] %v765
  %830 = vst [vmem:[#allocation2 + $0x50] sm:$0xff] %v766
  %831 = vst [vmem:[#allocation2 + $0x58] sm:$0xff] %v767
  %832 = vst [vmem:[#allocation2 + $0x60] sm:$0xff] %v768
  %833 = vst [vmem:[#allocation2 + $0x68] sm:$0xff] %v769
  %834 = vst [vmem:[#allocation2 + $0x70] sm:$0xff] %v770
  %835 = vst [vmem:[#allocation2 + $0x78] sm:$0xff] %v771
  %836 = vst [vmem:[#allocation2 + $0x80] sm:$0xff] %v772
  %837 = vst [vmem:[#allocation2 + $0x88] sm:$0xff] %v773
  %838 = vst [vmem:[#allocation2 + $0x90] sm:$0xff] %v774
  %839 = vst [vmem:[#allocation2 + $0x98] sm:$0xff] %v775
  %840 = vst [vmem:[#allocation2 + $0xa0] sm:$0xff] %v776
  %841 = vst [vmem:[#allocation2 + $0xa8] sm:$0xff] %v777
  %842 = vst [vmem:[#allocation2 + $0xb0] sm:$0xff] %v778
  %843 = vst [vmem:[#allocation2 + $0xb8] sm:$0xff] %v779
  %844 = vst [vmem:[#allocation2 + $0xc0] sm:$0xff] %v780
  %845 = vst [vmem:[#allocation2 + $0xc8] sm:$0xff] %v781
  %846 = vst [vmem:[#allocation2 + $0xd0] sm:$0xff] %v782
  %847 = vst [vmem:[#allocation2 + $0xd8] sm:$0xff] %v783
  %848 = vst [vmem:[#allocation2 + $0xe0] sm:$0xff] %v784
  %849 = vst [vmem:[#allocation2 + $0xe8] sm:$0xff] %v785
  %850 = vst [vmem:[#allocation2 + $0xf0] sm:$0xff] %v786
  %851 = vst [vmem:[#allocation2 + $0xf8] sm:$0xff] %v787
  %852 = vst [vmem:[#allocation2 + $0x100] sm:$0xff] %v788
  %853 = vst [vmem:[#allocation2 + $0x108] sm:$0xff] %v789
  %854 = vst [vmem:[#allocation2 + $0x110] sm:$0xff] %v790
  %855 = vst [vmem:[#allocation2 + $0x118] sm:$0xff] %v791
  %856 = vst [vmem:[#allocation2 + $0x120] sm:$0xff] %v792
  %857 = vst [vmem:[#allocation2 + $0x128] sm:$0xff] %v793
  %858 = vst [vmem:[#allocation2 + $0x130] sm:$0xff] %v794
  %859 = vst [vmem:[#allocation2 + $0x138] sm:$0xff] %v795
  %860 = vst [vmem:[#allocation2 + $0x140] sm:$0xff] %v796
  %861 = vst [vmem:[#allocation2 + $0x148] sm:$0xff] %v797
  %862 = vst [vmem:[#allocation2 + $0x150] sm:$0xff] %v798
  %863 = vst [vmem:[#allocation2 + $0x158] sm:$0xff] %v799
  %864 = vst [vmem:[#allocation2 + $0x160] sm:$0xff] %v800
  %865 = vst [vmem:[#allocation2 + $0x168] sm:$0xff] %v801
  %866 = vst [vmem:[#allocation2 + $0x170] sm:$0xff] %v802
  %867 = vst [vmem:[#allocation2 + $0x178] sm:$0xff] %v803
  %868 = vst [vmem:[#allocation2 + $0x180] sm:$0xff] %v804
  %869 = vst [vmem:[#allocation2 + $0x188] sm:$0xff] %v805
  %870 = vst [vmem:[#allocation2 + $0x190] sm:$0xff] %v806
  %871 = vst [vmem:[#allocation2 + $0x198] sm:$0xff] %v807
  %872 = vst [vmem:[#allocation2 + $0x1a0] sm:$0xff] %v808
  %873 = vst [vmem:[#allocation2 + $0x1a8] sm:$0xff] %v809
  %874 = vst [vmem:[#allocation2 + $0x1b0] sm:$0xff] %v810
  %875 = vst [vmem:[#allocation2 + $0x1b8] sm:$0xff] %v811
  %876 = vst [vmem:[#allocation2 + $0x1c0] sm:$0xff] %v812
  %877 = vst [vmem:[#allocation2 + $0x1c8] sm:$0xff] %v813
  %878 = vst [vmem:[#allocation2 + $0x1d0] sm:$0xff] %v814
  %879 = vst [vmem:[#allocation2 + $0x1d8] sm:$0xff] %v815
  %880 = vst [vmem:[#allocation2 + $0x1e0] sm:$0xff] %v816
  %881 = vst [vmem:[#allocation2 + $0x1e8] sm:$0xff] %v817
  %882 = vst [vmem:[#allocation2 + $0x1f0] sm:$0xff] %v818
  %883 = vst [vmem:[#allocation2 + $0x1f8] sm:$0xff] %v819
  // Predicated region
  $region18: #{sfi_forward.17} parent=0 // pred_check
    %p884 = pneg %p15
  $region19: #{sfi_forward.17} parent=0 // pred_check_branch
    %886 = sbr.rel (%p884) target = $region21
  $region20: #{sfi_forward.17} parent=0 // pred_region
    %v887 = vld [vmem:[#allocation2] sm:$0xff]
    %v888 = vld [vmem:[#allocation2 + $0x8] sm:$0xff]
    %v889 = vld [vmem:[#allocation2 + $0x10] sm:$0xff]
    %v890 = vld [vmem:[#allocation2 + $0x18] sm:$0xff]
    %v891 = vld [vmem:[#allocation2 + $0x20] sm:$0xff]
    %v892 = vld [vmem:[#allocation2 + $0x28] sm:$0xff]
    %v893 = vld [vmem:[#allocation2 + $0x30] sm:$0xff]
    %v894 = vld [vmem:[#allocation2 + $0x38] sm:$0xff]
    %v895 = vld [vmem:[#allocation2 + $0x40] sm:$0xff]
    %v896 = vld [vmem:[#allocation2 + $0x48] sm:$0xff]
    %v897 = vld [vmem:[#allocation2 + $0x50] sm:$0xff]
    %v898 = vld [vmem:[#allocation2 + $0x58] sm:$0xff]
    %v899 = vld [vmem:[#allocation2 + $0x60] sm:$0xff]
    %v900 = vld [vmem:[#allocation2 + $0x68] sm:$0xff]
    %v901 = vld [vmem:[#allocation2 + $0x70] sm:$0xff]
    %v902 = vld [vmem:[#allocation2 + $0x78] sm:$0xff]
    %v903 = vld [vmem:[#allocation2 + $0x80] sm:$0xff]
    %v904 = vld [vmem:[#allocation2 + $0x88] sm:$0xff]
    %v905 = vld [vmem:[#allocation2 + $0x90] sm:$0xff]
    %v906 = vld [vmem:[#allocation2 + $0x98] sm:$0xff]
    %v907 = vld [vmem:[#allocation2 + $0xa0] sm:$0xff]
    %v908 = vld [vmem:[#allocation2 + $0xa8] sm:$0xff]
    %v909 = vld [vmem:[#allocation2 + $0xb0] sm:$0xff]
    %v910 = vld [vmem:[#allocation2 + $0xb8] sm:$0xff]
    %v911 = vld [vmem:[#allocation2 + $0xc0] sm:$0xff]
    %v912 = vld [vmem:[#allocation2 + $0xc8] sm:$0xff]
    %v913 = vld [vmem:[#allocation2 + $0xd0] sm:$0xff]
    %v914 = vld [vmem:[#allocation2 + $0xd8] sm:$0xff]
    %v915 = vld [vmem:[#allocation2 + $0xe0] sm:$0xff]
    %v916 = vld [vmem:[#allocation2 + $0xe8] sm:$0xff]
    %v917 = vld [vmem:[#allocation2 + $0xf0] sm:$0xff]
    %v918 = vld [vmem:[#allocation2 + $0xf8] sm:$0xff]
    %v919 = vld [vmem:[#allocation2 + $0x100] sm:$0xff]
    %v920 = vld [vmem:[#allocation2 + $0x108] sm:$0xff]
    %v921 = vld [vmem:[#allocation2 + $0x110] sm:$0xff]
    %v922 = vld [vmem:[#allocation2 + $0x118] sm:$0xff]
    %v923 = vld [vmem:[#allocation2 + $0x120] sm:$0xff]
    %v924 = vld [vmem:[#allocation2 + $0x128] sm:$0xff]
    %v925 = vld [vmem:[#allocation2 + $0x130] sm:$0xff]
    %v926 = vld [vmem:[#allocation2 + $0x138] sm:$0xff]
    %v927 = vld [vmem:[#allocation2 + $0x140] sm:$0xff]
    %v928 = vld [vmem:[#allocation2 + $0x148] sm:$0xff]
    %v929 = vld [vmem:[#allocation2 + $0x150] sm:$0xff]
    %v930 = vld [vmem:[#allocation2 + $0x158] sm:$0xff]
    %v931 = vld [vmem:[#allocation2 + $0x160] sm:$0xff]
    %v932 = vld [vmem:[#allocation2 + $0x168] sm:$0xff]
    %v933 = vld [vmem:[#allocation2 + $0x170] sm:$0xff]
    %v934 = vld [vmem:[#allocation2 + $0x178] sm:$0xff]
    %v935 = vld [vmem:[#allocation2 + $0x180] sm:$0xff]
    %v936 = vld [vmem:[#allocation2 + $0x188] sm:$0xff]
    %v937 = vld [vmem:[#allocation2 + $0x190] sm:$0xff]
    %v938 = vld [vmem:[#allocation2 + $0x198] sm:$0xff]
    %v939 = vld [vmem:[#allocation2 + $0x1a0] sm:$0xff]
    %v940 = vld [vmem:[#allocation2 + $0x1a8] sm:$0xff]
    %v941 = vld [vmem:[#allocation2 + $0x1b0] sm:$0xff]
    %v942 = vld [vmem:[#allocation2 + $0x1b8] sm:$0xff]
    %v943 = vld [vmem:[#allocation2 + $0x1c0] sm:$0xff]
    %v944 = vld [vmem:[#allocation2 + $0x1c8] sm:$0xff]
    %v945 = vld [vmem:[#allocation2 + $0x1d0] sm:$0xff]
    %v946 = vld [vmem:[#allocation2 + $0x1d8] sm:$0xff]
    %v947 = vld [vmem:[#allocation2 + $0x1e0] sm:$0xff]
    %v948 = vld [vmem:[#allocation2 + $0x1e8] sm:$0xff]
    %v949 = vld [vmem:[#allocation2 + $0x1f0] sm:$0xff]
    %v950 = vld [vmem:[#allocation2 + $0x1f8] sm:$0xff]
    %v951 = vld [vmem:[%s2] sm:$0x1]
    %v953 = vlaneseq
    %v954 = vshrl.u32 %v953, 7
    %v955 = vsub.s32 0, %v954
    %v956 = vrot.slane %v951, %v955
    %v958 = vadd.f32 %v887, %v956
    %v959 = vadd.f32 %v888, %v956
    %v960 = vadd.f32 %v889, %v956
    %v961 = vadd.f32 %v890, %v956
    %v962 = vadd.f32 %v891, %v956
    %v963 = vadd.f32 %v892, %v956
    %v964 = vadd.f32 %v893, %v956
    %v965 = vadd.f32 %v894, %v956
    %v966 = vadd.f32 %v895, %v956
    %v967 = vadd.f32 %v896, %v956
    %v968 = vadd.f32 %v897, %v956
    %v969 = vadd.f32 %v898, %v956
    %v970 = vadd.f32 %v899, %v956
    %v971 = vadd.f32 %v900, %v956
    %v972 = vadd.f32 %v901, %v956
    %v973 = vadd.f32 %v902, %v956
    %v974 = vadd.f32 %v903, %v956
    %v975 = vadd.f32 %v904, %v956
    %v976 = vadd.f32 %v905, %v956
    %v977 = vadd.f32 %v906, %v956
    %v978 = vadd.f32 %v907, %v956
    %v979 = vadd.f32 %v908, %v956
    %v980 = vadd.f32 %v909, %v956
    %v981 = vadd.f32 %v910, %v956
    %v982 = vadd.f32 %v911, %v956
    %v983 = vadd.f32 %v912, %v956
    %v984 = vadd.f32 %v913, %v956
    %v985 = vadd.f32 %v914, %v956
    %v986 = vadd.f32 %v915, %v956
    %v987 = vadd.f32 %v916, %v956
    %v988 = vadd.f32 %v917, %v956
    %v989 = vadd.f32 %v918, %v956
    %v990 = vadd.f32 %v919, %v956
    %v991 = vadd.f32 %v920, %v956
    %v992 = vadd.f32 %v921, %v956
    %v993 = vadd.f32 %v922, %v956
    %v994 = vadd.f32 %v923, %v956
    %v995 = vadd.f32 %v924, %v956
    %v996 = vadd.f32 %v925, %v956
    %v997 = vadd.f32 %v926, %v956
    %v998 = vadd.f32 %v927, %v956
    %v999 = vadd.f32 %v928, %v956
    %v1000 = vadd.f32 %v929, %v956
    %v1001 = vadd.f32 %v930, %v956
    %v1002 = vadd.f32 %v931, %v956
    %v1003 = vadd.f32 %v932, %v956
    %v1004 = vadd.f32 %v933, %v956
    %v1005 = vadd.f32 %v934, %v956
    %v1006 = vadd.f32 %v935, %v956
    %v1007 = vadd.f32 %v936, %v956
    %v1008 = vadd.f32 %v937, %v956
    %v1009 = vadd.f32 %v938, %v956
    %v1010 = vadd.f32 %v939, %v956
    %v1011 = vadd.f32 %v940, %v956
    %v1012 = vadd.f32 %v941, %v956
    %v1013 = vadd.f32 %v942, %v956
    %v1014 = vadd.f32 %v943, %v956
    %v1015 = vadd.f32 %v944, %v956
    %v1016 = vadd.f32 %v945, %v956
    %v1017 = vadd.f32 %v946, %v956
    %v1018 = vadd.f32 %v947, %v956
    %v1019 = vadd.f32 %v948, %v956
    %v1020 = vadd.f32 %v949, %v956
    %v1021 = vadd.f32 %v950, %v956
    %1022 = vst [vmem:[%s3] sm:$0xff] %v958
    %1023 = vst [vmem:[%s3 + $0x8] sm:$0xff] %v959
    %1024 = vst [vmem:[%s3 + $0x10] sm:$0xff] %v960
    %1025 = vst [vmem:[%s3 + $0x18] sm:$0xff] %v961
    %1026 = vst [vmem:[%s3 + $0x20] sm:$0xff] %v962
    %1027 = vst [vmem:[%s3 + $0x28] sm:$0xff] %v963
    %1028 = vst [vmem:[%s3 + $0x30] sm:$0xff] %v964
    %1029 = vst [vmem:[%s3 + $0x38] sm:$0xff] %v965
    %1030 = vst [vmem:[%s3 + $0x40] sm:$0xff] %v966
    %1031 = vst [vmem:[%s3 + $0x48] sm:$0xff] %v967
    %1032 = vst [vmem:[%s3 + $0x50] sm:$0xff] %v968
    %1033 = vst [vmem:[%s3 + $0x58] sm:$0xff] %v969
    %1034 = vst [vmem:[%s3 + $0x60] sm:$0xff] %v970
    %1035 = vst [vmem:[%s3 + $0x68] sm:$0xff] %v971
    %1036 = vst [vmem:[%s3 + $0x70] sm:$0xff] %v972
    %1037 = vst [vmem:[%s3 + $0x78] sm:$0xff] %v973
    %1038 = vst [vmem:[%s3 + $0x80] sm:$0xff] %v974
    %1039 = vst [vmem:[%s3 + $0x88] sm:$0xff] %v975
    %1040 = vst [vmem:[%s3 + $0x90] sm:$0xff] %v976
    %1041 = vst [vmem:[%s3 + $0x98] sm:$0xff] %v977
    %1042 = vst [vmem:[%s3 + $0xa0] sm:$0xff] %v978
    %1043 = vst [vmem:[%s3 + $0xa8] sm:$0xff] %v979
    %1044 = vst [vmem:[%s3 + $0xb0] sm:$0xff] %v980
    %1045 = vst [vmem:[%s3 + $0xb8] sm:$0xff] %v981
    %1046 = vst [vmem:[%s3 + $0xc0] sm:$0xff] %v982
    %1047 = vst [vmem:[%s3 + $0xc8] sm:$0xff] %v983
    %1048 = vst [vmem:[%s3 + $0xd0] sm:$0xff] %v984
    %1049 = vst [vmem:[%s3 + $0xd8] sm:$0xff] %v985
    %1050 = vst [vmem:[%s3 + $0xe0] sm:$0xff] %v986
    %1051 = vst [vmem:[%s3 + $0xe8] sm:$0xff] %v987
    %1052 = vst [vmem:[%s3 + $0xf0] sm:$0xff] %v988
    %1053 = vst [vmem:[%s3 + $0xf8] sm:$0xff] %v989
    %1054 = vst [vmem:[%s3 + $0x100] sm:$0xff] %v990
    %1055 = vst [vmem:[%s3 + $0x108] sm:$0xff] %v991
    %1056 = vst [vmem:[%s3 + $0x110] sm:$0xff] %v992
    %1057 = vst [vmem:[%s3 + $0x118] sm:$0xff] %v993
    %1058 = vst [vmem:[%s3 + $0x120] sm:$0xff] %v994
    %1059 = vst [vmem:[%s3 + $0x128] sm:$0xff] %v995
    %1060 = vst [vmem:[%s3 + $0x130] sm:$0xff] %v996
    %1061 = vst [vmem:[%s3 + $0x138] sm:$0xff] %v997
    %1062 = vst [vmem:[%s3 + $0x140] sm:$0xff] %v998
    %1063 = vst [vmem:[%s3 + $0x148] sm:$0xff] %v999
    %1064 = vst [vmem:[%s3 + $0x150] sm:$0xff] %v1000
    %1065 = vst [vmem:[%s3 + $0x158] sm:$0xff] %v1001
    %1066 = vst [vmem:[%s3 + $0x160] sm:$0xff] %v1002
    %1067 = vst [vmem:[%s3 + $0x168] sm:$0xff] %v1003
    %1068 = vst [vmem:[%s3 + $0x170] sm:$0xff] %v1004
    %1069 = vst [vmem:[%s3 + $0x178] sm:$0xff] %v1005
    %1070 = vst [vmem:[%s3 + $0x180] sm:$0xff] %v1006
    %1071 = vst [vmem:[%s3 + $0x188] sm:$0xff] %v1007
    %1072 = vst [vmem:[%s3 + $0x190] sm:$0xff] %v1008
    %1073 = vst [vmem:[%s3 + $0x198] sm:$0xff] %v1009
    %1074 = vst [vmem:[%s3 + $0x1a0] sm:$0xff] %v1010
    %1075 = vst [vmem:[%s3 + $0x1a8] sm:$0xff] %v1011
    %1076 = vst [vmem:[%s3 + $0x1b0] sm:$0xff] %v1012
    %1077 = vst [vmem:[%s3 + $0x1b8] sm:$0xff] %v1013
    %1078 = vst [vmem:[%s3 + $0x1c0] sm:$0xff] %v1014
    %1079 = vst [vmem:[%s3 + $0x1c8] sm:$0xff] %v1015
    %1080 = vst [vmem:[%s3 + $0x1d0] sm:$0xff] %v1016
    %1081 = vst [vmem:[%s3 + $0x1d8] sm:$0xff] %v1017
    %1082 = vst [vmem:[%s3 + $0x1e0] sm:$0xff] %v1018
    %1083 = vst [vmem:[%s3 + $0x1e8] sm:$0xff] %v1019
    %1084 = vst [vmem:[%s3 + $0x1f0] sm:$0xff] %v1020
    %1085 = vst [vmem:[%s3 + $0x1f8] sm:$0xff] %v1021
  $region21: #{sfi_forward.17} parent=0 // pred_fallthru
    _
  // Predicated region
  $region22: #{sfi_forward.17} parent=0 // pred_check
    _
  $region23: #{sfi_forward.17} parent=0 // pred_check_branch
    %1087 = sbr.rel (0) target = $region25
  $region24: #{sfi_forward.17} parent=0 // pred_region
    _
  $region25: #{sfi_forward.17} parent=0 // pred_fallthru
    _
  // Predicated region
  $region26: #{sfi_forward.17} parent=0 // pred_check
    _
  $region27: #{sfi_forward.17} parent=0 // pred_check_branch
    %1089 = sbr.rel (0) target = $region29
  $region28: #{sfi_forward.17} parent=0 // pred_region
    _
  $region29: #{sfi_forward.17} parent=0 // pred_fallthru
    _

// kernel: sfi_forward.12
$region0: #{sfi_forward.12}
  #allocation0 [shape = 'u32[]', space=smem, size = 0x4, offset = 0x4, fixed_abs, tag = 'smem constant byte address 0x4 - core index']
  #allocation1 [shape = 'u32[144,128]{1,0:T(1,128)}', space=vmem, size = 0x12000, scoped, tag = 'internal scratch']
  #allocation2 [shape = 'f32[288,128]{1,0:T(8,128)}', space=vmem, size = 0x24000, scoped, tag = 'scratch operand']
  %s0 = inlined_call_operand.vmem [shape: bf16[288,128], index: 0, kind: input, shape index: {}]
  %s1 = inlined_call_operand.vmem [shape: bf16[128,128], index: 1, kind: input, shape index: {}]
  %s2 = inlined_call_operand.vmem [shape: f32[1,128], index: 2, kind: input, shape index: {}]
  %s3 = inlined_call_operand.vmem [shape: f32[288,128], index: 3, kind: output, shape index: {}]
  %s4 = sld [smem:[#allocation0]]
  $region30: #{sfi_forward.12} parent=0
    _
  %s6 = ssub.s32 1, %s4
  %s7 = scalar_select 0, %s6, %s4
  // Predicated region
  $region2: #{sfi_forward.12} parent=0 // pred_check
    _
  $region3: #{sfi_forward.12} parent=0 // pred_check_branch
    %9 = sbr.rel (0) target = $region5
  $region4: #{sfi_forward.12} parent=0 // pred_region
    _
  $region5: #{sfi_forward.12} parent=0 // pred_fallthru
    _
  // Predicated region
  $region6: #{sfi_forward.12} parent=0 // pred_check
    _
  $region7: #{sfi_forward.12} parent=0 // pred_check_branch
    %11 = sbr.rel (0) target = $region9
  $region8: #{sfi_forward.12} parent=0 // pred_region
    _
  $region9: #{sfi_forward.12} parent=0 // pred_fallthru
    _
  // Predicated region
  $region10: #{sfi_forward.12} parent=0 // pred_check
    _
  $region11: #{sfi_forward.12} parent=0 // pred_check_branch
    %13 = sbr.rel (0) target = $region13
  $region12: #{sfi_forward.12} parent=0 // pred_region
    _
  $region13: #{sfi_forward.12} parent=0 // pred_fallthru
    _
  %p15 = scmp.eq.s32.totalorder 0, 0
  // Predicated region
  $region14: #{sfi_forward.12} parent=0 // pred_check
    %p16 = pneg %p15
  $region15: #{sfi_forward.12} parent=0 // pred_check_branch
    %18 = sbr.rel (%p16) target = $region17
  $region16: #{sfi_forward.12} parent=0 // pred_region
    %19 = vst [vmem:[#allocation2] sm:$0xff] 0.0
    %20 = vst [vmem:[#allocation2 + $0x8] sm:$0xff] 0.0
    %21 = vst [vmem:[#allocation2 + $0x10] sm:$0xff] 0.0
    %22 = vst [vmem:[#allocation2 + $0x18] sm:$0xff] 0.0
    %23 = vst [vmem:[#allocation2 + $0x20] sm:$0xff] 0.0
    %24 = vst [vmem:[#allocation2 + $0x28] sm:$0xff] 0.0
    %25 = vst [vmem:[#allocation2 + $0x30] sm:$0xff] 0.0
    %26 = vst [vmem:[#allocation2 + $0x38] sm:$0xff] 0.0
    %27 = vst [vmem:[#allocation2 + $0x40] sm:$0xff] 0.0
    %28 = vst [vmem:[#allocation2 + $0x48] sm:$0xff] 0.0
    %29 = vst [vmem:[#allocation2 + $0x50] sm:$0xff] 0.0
    %30 = vst [vmem:[#allocation2 + $0x58] sm:$0xff] 0.0
    %31 = vst [vmem:[#allocation2 + $0x60] sm:$0xff] 0.0
    %32 = vst [vmem:[#allocation2 + $0x68] sm:$0xff] 0.0
    %33 = vst [vmem:[#allocation2 + $0x70] sm:$0xff] 0.0
    %34 = vst [vmem:[#allocation2 + $0x78] sm:$0xff] 0.0
    %35 = vst [vmem:[#allocation2 + $0x80] sm:$0xff] 0.0
    %36 = vst [vmem:[#allocation2 + $0x88] sm:$0xff] 0.0
    %37 = vst [vmem:[#allocation2 + $0x90] sm:$0xff] 0.0
    %38 = vst [vmem:[#allocation2 + $0x98] sm:$0xff] 0.0
    %39 = vst [vmem:[#allocation2 + $0xa0] sm:$0xff] 0.0
    %40 = vst [vmem:[#allocation2 + $0xa8] sm:$0xff] 0.0
    %41 = vst [vmem:[#allocation2 + $0xb0] sm:$0xff] 0.0
    %42 = vst [vmem:[#allocation2 + $0xb8] sm:$0xff] 0.0
    %43 = vst [vmem:[#allocation2 + $0xc0] sm:$0xff] 0.0
    %44 = vst [vmem:[#allocation2 + $0xc8] sm:$0xff] 0.0
    %45 = vst [vmem:[#allocation2 + $0xd0] sm:$0xff] 0.0
    %46 = vst [vmem:[#allocation2 + $0xd8] sm:$0xff] 0.0
    %47 = vst [vmem:[#allocation2 + $0xe0] sm:$0xff] 0.0
    %48 = vst [vmem:[#allocation2 + $0xe8] sm:$0xff] 0.0
    %49 = vst [vmem:[#allocation2 + $0xf0] sm:$0xff] 0.0
    %50 = vst [vmem:[#allocation2 + $0xf8] sm:$0xff] 0.0
    %51 = vst [vmem:[#allocation2 + $0x100] sm:$0xff] 0.0
    %52 = vst [vmem:[#allocation2 + $0x108] sm:$0xff] 0.0
    %53 = vst [vmem:[#allocation2 + $0x110] sm:$0xff] 0.0
    %54 = vst [vmem:[#allocation2 + $0x118] sm:$0xff] 0.0
  $region17: #{sfi_forward.12} parent=0 // pred_fallthru
    _
  %v55 = vld [vmem:[#allocation2] sm:$0xff]
  %v56 = vld [vmem:[#allocation2 + $0x8] sm:$0xff]
  %v57 = vld [vmem:[#allocation2 + $0x10] sm:$0xff]
  %v58 = vld [vmem:[#allocation2 + $0x18] sm:$0xff]
  %v59 = vld [vmem:[#allocation2 + $0x20] sm:$0xff]
  %v60 = vld [vmem:[#allocation2 + $0x28] sm:$0xff]
  %v61 = vld [vmem:[#allocation2 + $0x30] sm:$0xff]
  %v62 = vld [vmem:[#allocation2 + $0x38] sm:$0xff]
  %v63 = vld [vmem:[#allocation2 + $0x40] sm:$0xff]
  %v64 = vld [vmem:[#allocation2 + $0x48] sm:$0xff]
  %v65 = vld [vmem:[#allocation2 + $0x50] sm:$0xff]
  %v66 = vld [vmem:[#allocation2 + $0x58] sm:$0xff]
  %v67 = vld [vmem:[#allocation2 + $0x60] sm:$0xff]
  %v68 = vld [vmem:[#allocation2 + $0x68] sm:$0xff]
  %v69 = vld [vmem:[#allocation2 + $0x70] sm:$0xff]
  %v70 = vld [vmem:[#allocation2 + $0x78] sm:$0xff]
  %v71 = vld [vmem:[#allocation2 + $0x80] sm:$0xff]
  %v72 = vld [vmem:[#allocation2 + $0x88] sm:$0xff]
  %v73 = vld [vmem:[#allocation2 + $0x90] sm:$0xff]
  %v74 = vld [vmem:[#allocation2 + $0x98] sm:$0xff]
  %v75 = vld [vmem:[#allocation2 + $0xa0] sm:$0xff]
  %v76 = vld [vmem:[#allocation2 + $0xa8] sm:$0xff]
  %v77 = vld [vmem:[#allocation2 + $0xb0] sm:$0xff]
  %v78 = vld [vmem:[#allocation2 + $0xb8] sm:$0xff]
  %v79 = vld [vmem:[#allocation2 + $0xc0] sm:$0xff]
  %v80 = vld [vmem:[#allocation2 + $0xc8] sm:$0xff]
  %v81 = vld [vmem:[#allocation2 + $0xd0] sm:$0xff]
  %v82 = vld [vmem:[#allocation2 + $0xd8] sm:$0xff]
  %v83 = vld [vmem:[#allocation2 + $0xe0] sm:$0xff]
  %v84 = vld [vmem:[#allocation2 + $0xe8] sm:$0xff]
  %v85 = vld [vmem:[#allocation2 + $0xf0] sm:$0xff]
  %v86 = vld [vmem:[#allocation2 + $0xf8] sm:$0xff]
  %v87 = vld [vmem:[#allocation2 + $0x100] sm:$0xff]
  %v88 = vld [vmem:[#allocation2 + $0x108] sm:$0xff]
  %v89 = vld [vmem:[#allocation2 + $0x110] sm:$0xff]
  %v90 = vld [vmem:[#allocation2 + $0x118] sm:$0xff]
  %v91 = vld [vmem:[%s0] sm:$0xf]
  %v92 = vld [vmem:[%s0 + $0x4] sm:$0xf]
  %v93 = vld [vmem:[%s0 + $0x8] sm:$0xf]
  %v94 = vld [vmem:[%s0 + $0xc] sm:$0xf]
  %v95 = vld [vmem:[%s0 + $0x10] sm:$0xf]
  %v96 = vld [vmem:[%s0 + $0x14] sm:$0xf]
  %v97 = vld [vmem:[%s0 + $0x18] sm:$0xf]
  %v98 = vld [vmem:[%s0 + $0x1c] sm:$0xf]
  %v99 = vld [vmem:[%s0 + $0x20] sm:$0xf]
  %v100 = vld [vmem:[%s0 + $0x24] sm:$0xf]
  %v101 = vld [vmem:[%s0 + $0x28] sm:$0xf]
  %v102 = vld [vmem:[%s0 + $0x2c] sm:$0xf]
  %v103 = vld [vmem:[%s0 + $0x30] sm:$0xf]
  %v104 = vld [vmem:[%s0 + $0x34] sm:$0xf]
  %v105 = vld [vmem:[%s0 + $0x38] sm:$0xf]
  %v106 = vld [vmem:[%s0 + $0x3c] sm:$0xf]
  %v107 = vld [vmem:[%s0 + $0x40] sm:$0xf]
  %v108 = vld [vmem:[%s0 + $0x44] sm:$0xf]
  %v109 = vld [vmem:[%s0 + $0x48] sm:$0xf]
  %v110 = vld [vmem:[%s0 + $0x4c] sm:$0xf]
  %v111 = vld [vmem:[%s0 + $0x50] sm:$0xf]
  %v112 = vld [vmem:[%s0 + $0x54] sm:$0xf]
  %v113 = vld [vmem:[%s0 + $0x58] sm:$0xf]
  %v114 = vld [vmem:[%s0 + $0x5c] sm:$0xf]
  %v115 = vld [vmem:[%s0 + $0x60] sm:$0xf]
  %v116 = vld [vmem:[%s0 + $0x64] sm:$0xf]
  %v117 = vld [vmem:[%s0 + $0x68] sm:$0xf]
  %v118 = vld [vmem:[%s0 + $0x6c] sm:$0xf]
  %v119 = vld [vmem:[%s0 + $0x70] sm:$0xf]
  %v120 = vld [vmem:[%s0 + $0x74] sm:$0xf]
  %v121 = vld [vmem:[%s0 + $0x78] sm:$0xf]
  %v122 = vld [vmem:[%s0 + $0x7c] sm:$0xf]
  %v123 = vld [vmem:[%s0 + $0x80] sm:$0xf]
  %v124 = vld [vmem:[%s0 + $0x84] sm:$0xf]
  %v125 = vld [vmem:[%s0 + $0x88] sm:$0xf]
  %v126 = vld [vmem:[%s0 + $0x8c] sm:$0xf]
  %v127 = vld [vmem:[%s1] sm:$0xf]
  %v128 = vld [vmem:[%s1 + $0x4] sm:$0xf]
  %v129 = vld [vmem:[%s1 + $0x8] sm:$0xf]
  %v130 = vld [vmem:[%s1 + $0xc] sm:$0xf]
  %v131 = vld [vmem:[%s1 + $0x10] sm:$0xf]
  %v132 = vld [vmem:[%s1 + $0x14] sm:$0xf]
  %v133 = vld [vmem:[%s1 + $0x18] sm:$0xf]
  %v134 = vld [vmem:[%s1 + $0x1c] sm:$0xf]
  %v135 = vld [vmem:[%s1 + $0x20] sm:$0xf]
  %v136 = vld [vmem:[%s1 + $0x24] sm:$0xf]
  %v137 = vld [vmem:[%s1 + $0x28] sm:$0xf]
  %v138 = vld [vmem:[%s1 + $0x2c] sm:$0xf]
  %v139 = vld [vmem:[%s1 + $0x30] sm:$0xf]
  %v140 = vld [vmem:[%s1 + $0x34] sm:$0xf]
  %v141 = vld [vmem:[%s1 + $0x38] sm:$0xf]
  %v142 = vld [vmem:[%s1 + $0x3c] sm:$0xf]
  %v179 = vunpack.c.l.b16 %v91
  %v180 = vunpack.c.l.b16 %v92
  %v181 = vunpack.c.l.b16 %v93
  %v182 = vunpack.c.l.b16 %v94
  %v183 = vunpack.c.l.b16 %v95
  %v184 = vunpack.c.l.b16 %v96
  %v185 = vunpack.c.l.b16 %v97
  %v186 = vunpack.c.l.b16 %v98
  %v187 = vunpack.c.l.b16 %v99
  %v188 = vunpack.c.l.b16 %v100
  %v189 = vunpack.c.l.b16 %v101
  %v190 = vunpack.c.l.b16 %v102
  %v191 = vunpack.c.l.b16 %v103
  %v192 = vunpack.c.l.b16 %v104
  %v193 = vunpack.c.l.b16 %v105
  %v194 = vunpack.c.l.b16 %v106
  %v195 = vunpack.c.l.b16 %v107
  %v196 = vunpack.c.l.b16 %v108
  %v197 = vunpack.c.l.b16 %v109
  %v198 = vunpack.c.l.b16 %v110
  %v199 = vunpack.c.l.b16 %v111
  %v200 = vunpack.c.l.b16 %v112
  %v201 = vunpack.c.l.b16 %v113
  %v202 = vunpack.c.l.b16 %v114
  %v203 = vunpack.c.l.b16 %v115
  %v204 = vunpack.c.l.b16 %v116
  %v205 = vunpack.c.l.b16 %v117
  %v206 = vunpack.c.l.b16 %v118
  %v207 = vunpack.c.l.b16 %v119
  %v208 = vunpack.c.l.b16 %v120
  %v209 = vunpack.c.l.b16 %v121
  %v210 = vunpack.c.l.b16 %v122
  %v211 = vunpack.c.l.b16 %v123
  %v212 = vunpack.c.l.b16 %v124
  %v213 = vunpack.c.l.b16 %v125
  %v214 = vunpack.c.l.b16 %v126
  %v215 = vpack.c.b16 %v180, %v179
  %v216 = vpack.c.b16 %v182, %v181
  %v217 = vpack.c.b16 %v184, %v183
  %v218 = vpack.c.b16 %v186, %v185
  %v219 = vpack.c.b16 %v188, %v187
  %v220 = vpack.c.b16 %v190, %v189
  %v221 = vpack.c.b16 %v192, %v191
  %v222 = vpack.c.b16 %v194, %v193
  %v223 = vpack.c.b16 %v196, %v195
  %v224 = vpack.c.b16 %v198, %v197
  %v225 = vpack.c.b16 %v200, %v199
  %v226 = vpack.c.b16 %v202, %v201
  %v227 = vpack.c.b16 %v204, %v203
  %v228 = vpack.c.b16 %v206, %v205
  %v229 = vpack.c.b16 %v208, %v207
  %v230 = vpack.c.b16 %v210, %v209
  %v231 = vpack.c.b16 %v212, %v211
  %v232 = vpack.c.b16 %v214, %v213
  %v267 = vunpack.c.l.b16 %v127
  %v268 = vunpack.c.l.b16 %v128
  %v269 = vunpack.c.l.b16 %v129
  %v270 = vunpack.c.l.b16 %v130
  %v271 = vunpack.c.l.b16 %v131
  %v272 = vunpack.c.l.b16 %v132
  %v273 = vunpack.c.l.b16 %v133
  %v274 = vunpack.c.l.b16 %v134
  %v275 = vunpack.c.l.b16 %v135
  %v276 = vunpack.c.l.b16 %v136
  %v277 = vunpack.c.l.b16 %v137
  %v278 = vunpack.c.l.b16 %v138
  %v279 = vunpack.c.l.b16 %v139
  %v280 = vunpack.c.l.b16 %v140
  %v281 = vunpack.c.l.b16 %v141
  %v282 = vunpack.c.l.b16 %v142
  %v283 = vpack.c.b16 %v268, %v267
  %v284 = vpack.c.b16 %v270, %v269
  %v285 = vpack.c.b16 %v272, %v271
  %v286 = vpack.c.b16 %v274, %v273
  %v287 = vpack.c.b16 %v276, %v275
  %v288 = vpack.c.b16 %v278, %v277
  %v289 = vpack.c.b16 %v280, %v279
  %v290 = vpack.c.b16 %v282, %v281
  %299 = vmatprep.subr.bf16.mxu0 0
  %300 = vmatpush1.bf16.msra.mxu0 %v290
  %301 = vmatprep.subr.bf16.mxu0 0
  %302 = vmatpush1.bf16.msra.mxu0 %v289
  %303 = vmatprep.subr.bf16.mxu0 0
  %304 = vmatpush1.bf16.msra.mxu0 %v288
  %305 = vmatprep.subr.bf16.mxu0 0
  %306 = vmatpush1.bf16.msra.mxu0 %v287
  %307 = vmatprep.subr.bf16.mxu0 0
  %308 = vmatpush1.bf16.msra.mxu0 %v286
  %309 = vmatprep.subr.bf16.mxu0 0
  %310 = vmatpush1.bf16.msra.mxu0 %v285
  %311 = vmatprep.subr.bf16.mxu0 0
  %312 = vmatpush1.bf16.msra.mxu0 %v284
  %313 = vmatprep.subr.bf16.mxu0 0
  %314 = vmatpush1.bf16.msra.mxu0 %v283
  %315 = vmatprep.subr.bf16.mxu0 0
  %316 = vmatpush2.bf16.msra.mxu0 0
  %317 = vmatprep.subr.bf16.mxu0 0
  %318 = vmatpush2.bf16.msra.mxu0 0
  %319 = vmatprep.subr.bf16.mxu0 0
  %320 = vmatpush2.bf16.msra.mxu0 0
  %321 = vmatprep.subr.bf16.mxu0 0
  %322 = vmatpush2.bf16.msra.mxu0 0
  %323 = vmatprep.subr.bf16.mxu0 0
  %324 = vmatpush2.bf16.msra.mxu0 0
  %325 = vmatprep.subr.bf16.mxu0 0
  %326 = vmatpush2.bf16.msra.mxu0 0
  %327 = vmatprep.subr.bf16.mxu0 0
  %328 = vmatpush2.bf16.msra.mxu0 0
  %329 = vmatprep.subr.bf16.mxu0 0
  %330 = vmatpush2.bf16.msra.mxu0 0
  %331 = vmatprep.mubr.bf16.mxu0 0
  %332 = vmatmul.mubr.bf16.gmra.mxu0 %v215
  %v333 = vpop.f32.mrf.mxu0
  %v334 = vadd.f32 0.0, %v333
  %v335 = vpop.f32.mrf.mxu0
  %v336 = vpop.f32.mrf.mxu0
  %v337 = vadd.f32 0.0, %v336
  %v338 = vpop.f32.mrf.mxu0
  %339 = vmatprep.mubr.bf16.mxu0 0
  %340 = vmatmul.mubr.bf16.gmra.mxu0 %v216
  %v341 = vpop.f32.mrf.mxu0
  %v342 = vadd.f32 0.0, %v341
  %v343 = vpop.f32.mrf.mxu0
  %v344 = vpop.f32.mrf.mxu0
  %v345 = vadd.f32 0.0, %v344
  %v346 = vpop.f32.mrf.mxu0
  %347 = vmatprep.mubr.bf16.mxu0 0
  %348 = vmatmul.mubr.bf16.gmra.mxu0 %v217
  %v349 = vpop.f32.mrf.mxu0
  %v350 = vadd.f32 0.0, %v349
  %v351 = vpop.f32.mrf.mxu0
  %v352 = vpop.f32.mrf.mxu0
  %v353 = vadd.f32 0.0, %v352
  %v354 = vpop.f32.mrf.mxu0
  %355 = vmatprep.mubr.bf16.mxu0 0
  %356 = vmatmul.mubr.bf16.gmra.mxu0 %v218
  %v357 = vpop.f32.mrf.mxu0
  %v358 = vadd.f32 0.0, %v357
  %v359 = vpop.f32.mrf.mxu0
  %v360 = vpop.f32.mrf.mxu0
  %v361 = vadd.f32 0.0, %v360
  %v362 = vpop.f32.mrf.mxu0
  %363 = vmatprep.mubr.bf16.mxu0 0
  %364 = vmatmul.mubr.bf16.gmra.mxu0 %v219
  %v365 = vpop.f32.mrf.mxu0
  %v366 = vadd.f32 0.0, %v365
  %v367 = vpop.f32.mrf.mxu0
  %v368 = vpop.f32.mrf.mxu0
  %v369 = vadd.f32 0.0, %v368
  %v370 = vpop.f32.mrf.mxu0
  %371 = vmatprep.mubr.bf16.mxu0 0
  %372 = vmatmul.mubr.bf16.gmra.mxu0 %v220
  %v373 = vpop.f32.mrf.mxu0
  %v374 = vadd.f32 0.0, %v373
  %v375 = vpop.f32.mrf.mxu0
  %v376 = vpop.f32.mrf.mxu0
  %v377 = vadd.f32 0.0, %v376
  %v378 = vpop.f32.mrf.mxu0
  %379 = vmatprep.mubr.bf16.mxu0 0
  %380 = vmatmul.mubr.bf16.gmra.mxu0 %v221
  %v381 = vpop.f32.mrf.mxu0
  %v382 = vadd.f32 0.0, %v381
  %v383 = vpop.f32.mrf.mxu0
  %v384 = vpop.f32.mrf.mxu0
  %v385 = vadd.f32 0.0, %v384
  %v386 = vpop.f32.mrf.mxu0
  %387 = vmatprep.mubr.bf16.mxu0 0
  %388 = vmatmul.mubr.bf16.gmra.mxu0 %v222
  %v389 = vpop.f32.mrf.mxu0
  %v390 = vadd.f32 0.0, %v389
  %v391 = vpop.f32.mrf.mxu0
  %v392 = vpop.f32.mrf.mxu0
  %v393 = vadd.f32 0.0, %v392
  %v394 = vpop.f32.mrf.mxu0
  %395 = vmatprep.mubr.bf16.mxu0 0
  %396 = vmatmul.mubr.bf16.gmra.mxu0 %v223
  %v397 = vpop.f32.mrf.mxu0
  %v398 = vadd.f32 0.0, %v397
  %v399 = vpop.f32.mrf.mxu0
  %v400 = vpop.f32.mrf.mxu0
  %v401 = vadd.f32 0.0, %v400
  %v402 = vpop.f32.mrf.mxu0
  %403 = vmatprep.mubr.bf16.mxu0 0
  %404 = vmatmul.mubr.bf16.gmra.mxu0 %v224
  %v405 = vpop.f32.mrf.mxu0
  %v406 = vadd.f32 0.0, %v405
  %v407 = vpop.f32.mrf.mxu0
  %v408 = vpop.f32.mrf.mxu0
  %v409 = vadd.f32 0.0, %v408
  %v410 = vpop.f32.mrf.mxu0
  %411 = vmatprep.mubr.bf16.mxu0 0
  %412 = vmatmul.mubr.bf16.gmra.mxu0 %v225
  %v413 = vpop.f32.mrf.mxu0
  %v414 = vadd.f32 0.0, %v413
  %v415 = vpop.f32.mrf.mxu0
  %v416 = vpop.f32.mrf.mxu0
  %v417 = vadd.f32 0.0, %v416
  %v418 = vpop.f32.mrf.mxu0
  %419 = vmatprep.mubr.bf16.mxu0 0
  %420 = vmatmul.mubr.bf16.gmra.mxu0 %v226
  %v421 = vpop.f32.mrf.mxu0
  %v422 = vadd.f32 0.0, %v421
  %v423 = vpop.f32.mrf.mxu0
  %v424 = vpop.f32.mrf.mxu0
  %v425 = vadd.f32 0.0, %v424
  %v426 = vpop.f32.mrf.mxu0
  %427 = vmatprep.mubr.bf16.mxu0 0
  %428 = vmatmul.mubr.bf16.gmra.mxu0 %v227
  %v429 = vpop.f32.mrf.mxu0
  %v430 = vadd.f32 0.0, %v429
  %v431 = vpop.f32.mrf.mxu0
  %v432 = vpop.f32.mrf.mxu0
  %v433 = vadd.f32 0.0, %v432
  %v434 = vpop.f32.mrf.mxu0
  %435 = vmatprep.mubr.bf16.mxu0 0
  %436 = vmatmul.mubr.bf16.gmra.mxu0 %v228
  %v437 = vpop.f32.mrf.mxu0
  %v438 = vadd.f32 0.0, %v437
  %v439 = vpop.f32.mrf.mxu0
  %v440 = vpop.f32.mrf.mxu0
  %v441 = vadd.f32 0.0, %v440
  %v442 = vpop.f32.mrf.mxu0
  %443 = vmatprep.mubr.bf16.mxu0 0
  %444 = vmatmul.mubr.bf16.gmra.mxu0 %v229
  %v445 = vpop.f32.mrf.mxu0
  %v446 = vadd.f32 0.0, %v445
  %v447 = vpop.f32.mrf.mxu0
  %v448 = vpop.f32.mrf.mxu0
  %v449 = vadd.f32 0.0, %v448
  %v450 = vpop.f32.mrf.mxu0
  %451 = vmatprep.mubr.bf16.mxu0 0
  %452 = vmatmul.mubr.bf16.gmra.mxu0 %v230
  %v453 = vpop.f32.mrf.mxu0
  %v454 = vadd.f32 0.0, %v453
  %v455 = vpop.f32.mrf.mxu0
  %v456 = vpop.f32.mrf.mxu0
  %v457 = vadd.f32 0.0, %v456
  %v458 = vpop.f32.mrf.mxu0
  %459 = vmatprep.mubr.bf16.mxu0 0
  %460 = vmatmul.mubr.bf16.gmra.mxu0 %v231
  %v461 = vpop.f32.mrf.mxu0
  %v462 = vadd.f32 0.0, %v461
  %v463 = vpop.f32.mrf.mxu0
  %v464 = vpop.f32.mrf.mxu0
  %v465 = vadd.f32 0.0, %v464
  %v466 = vpop.f32.mrf.mxu0
  %467 = vmatprep.mubr.bf16.mxu0 0
  %468 = vmatmul.mubr.bf16.gmra.mxu0 %v232
  %v469 = vpop.f32.mrf.mxu0
  %v470 = vadd.f32 0.0, %v469
  %v471 = vpop.f32.mrf.mxu0
  %v472 = vpop.f32.mrf.mxu0
  %v473 = vadd.f32 0.0, %v472
  %v474 = vpop.f32.mrf.mxu0
  %475 = vdwg.mxu0
  %v476 = vadd.f32 %v55, %v334
  %v477 = vadd.f32 %v56, %v337
  %v478 = vadd.f32 %v57, %v342
  %v479 = vadd.f32 %v58, %v345
  %v480 = vadd.f32 %v59, %v350
  %v481 = vadd.f32 %v60, %v353
  %v482 = vadd.f32 %v61, %v358
  %v483 = vadd.f32 %v62, %v361
  %v484 = vadd.f32 %v63, %v366
  %v485 = vadd.f32 %v64, %v369
  %v486 = vadd.f32 %v65, %v374
  %v487 = vadd.f32 %v66, %v377
  %v488 = vadd.f32 %v67, %v382
  %v489 = vadd.f32 %v68, %v385
  %v490 = vadd.f32 %v69, %v390
  %v491 = vadd.f32 %v70, %v393
  %v492 = vadd.f32 %v71, %v398
  %v493 = vadd.f32 %v72, %v401
  %v494 = vadd.f32 %v73, %v406
  %v495 = vadd.f32 %v74, %v409
  %v496 = vadd.f32 %v75, %v414
  %v497 = vadd.f32 %v76, %v417
  %v498 = vadd.f32 %v77, %v422
  %v499 = vadd.f32 %v78, %v425
  %v500 = vadd.f32 %v79, %v430
  %v501 = vadd.f32 %v80, %v433
  %v502 = vadd.f32 %v81, %v438
  %v503 = vadd.f32 %v82, %v441
  %v504 = vadd.f32 %v83, %v446
  %v505 = vadd.f32 %v84, %v449
  %v506 = vadd.f32 %v85, %v454
  %v507 = vadd.f32 %v86, %v457
  %v508 = vadd.f32 %v87, %v462
  %v509 = vadd.f32 %v88, %v465
  %v510 = vadd.f32 %v89, %v470
  %v511 = vadd.f32 %v90, %v473
  %512 = vst [vmem:[#allocation2] sm:$0xff] %v476
  %513 = vst [vmem:[#allocation2 + $0x8] sm:$0xff] %v477
  %514 = vst [vmem:[#allocation2 + $0x10] sm:$0xff] %v478
  %515 = vst [vmem:[#allocation2 + $0x18] sm:$0xff] %v479
  %516 = vst [vmem:[#allocation2 + $0x20] sm:$0xff] %v480
  %517 = vst [vmem:[#allocation2 + $0x28] sm:$0xff] %v481
  %518 = vst [vmem:[#allocation2 + $0x30] sm:$0xff] %v482
  %519 = vst [vmem:[#allocation2 + $0x38] sm:$0xff] %v483
  %520 = vst [vmem:[#allocation2 + $0x40] sm:$0xff] %v484
  %521 = vst [vmem:[#allocation2 + $0x48] sm:$0xff] %v485
  %522 = vst [vmem:[#allocation2 + $0x50] sm:$0xff] %v486
  %523 = vst [vmem:[#allocation2 + $0x58] sm:$0xff] %v487
  %524 = vst [vmem:[#allocation2 + $0x60] sm:$0xff] %v488
  %525 = vst [vmem:[#allocation2 + $0x68] sm:$0xff] %v489
  %526 = vst [vmem:[#allocation2 + $0x70] sm:$0xff] %v490
  %527 = vst [vmem:[#allocation2 + $0x78] sm:$0xff] %v491
  %528 = vst [vmem:[#allocation2 + $0x80] sm:$0xff] %v492
  %529 = vst [vmem:[#allocation2 + $0x88] sm:$0xff] %v493
  %530 = vst [vmem:[#allocation2 + $0x90] sm:$0xff] %v494
  %531 = vst [vmem:[#allocation2 + $0x98] sm:$0xff] %v495
  %532 = vst [vmem:[#allocation2 + $0xa0] sm:$0xff] %v496
  %533 = vst [vmem:[#allocation2 + $0xa8] sm:$0xff] %v497
  %534 = vst [vmem:[#allocation2 + $0xb0] sm:$0xff] %v498
  %535 = vst [vmem:[#allocation2 + $0xb8] sm:$0xff] %v499
  %536 = vst [vmem:[#allocation2 + $0xc0] sm:$0xff] %v500
  %537 = vst [vmem:[#allocation2 + $0xc8] sm:$0xff] %v501
  %538 = vst [vmem:[#allocation2 + $0xd0] sm:$0xff] %v502
  %539 = vst [vmem:[#allocation2 + $0xd8] sm:$0xff] %v503
  %540 = vst [vmem:[#allocation2 + $0xe0] sm:$0xff] %v504
  %541 = vst [vmem:[#allocation2 + $0xe8] sm:$0xff] %v505
  %542 = vst [vmem:[#allocation2 + $0xf0] sm:$0xff] %v506
  %543 = vst [vmem:[#allocation2 + $0xf8] sm:$0xff] %v507
  %544 = vst [vmem:[#allocation2 + $0x100] sm:$0xff] %v508
  %545 = vst [vmem:[#allocation2 + $0x108] sm:$0xff] %v509
  %546 = vst [vmem:[#allocation2 + $0x110] sm:$0xff] %v510
  %547 = vst [vmem:[#allocation2 + $0x118] sm:$0xff] %v511
  // Predicated region
  $region18: #{sfi_forward.12} parent=0 // pred_check
    %p548 = pneg %p15
  $region19: #{sfi_forward.12} parent=0 // pred_check_branch
    %550 = sbr.rel (%p548) target = $region21
  $region20: #{sfi_forward.12} parent=0 // pred_region
    %v551 = vld [vmem:[#allocation2] sm:$0xff]
    %v552 = vld [vmem:[#allocation2 + $0x8] sm:$0xff]
    %v553 = vld [vmem:[#allocation2 + $0x10] sm:$0xff]
    %v554 = vld [vmem:[#allocation2 + $0x18] sm:$0xff]
    %v555 = vld [vmem:[#allocation2 + $0x20] sm:$0xff]
    %v556 = vld [vmem:[#allocation2 + $0x28] sm:$0xff]
    %v557 = vld [vmem:[#allocation2 + $0x30] sm:$0xff]
    %v558 = vld [vmem:[#allocation2 + $0x38] sm:$0xff]
    %v559 = vld [vmem:[#allocation2 + $0x40] sm:$0xff]
    %v560 = vld [vmem:[#allocation2 + $0x48] sm:$0xff]
    %v561 = vld [vmem:[#allocation2 + $0x50] sm:$0xff]
    %v562 = vld [vmem:[#allocation2 + $0x58] sm:$0xff]
    %v563 = vld [vmem:[#allocation2 + $0x60] sm:$0xff]
    %v564 = vld [vmem:[#allocation2 + $0x68] sm:$0xff]
    %v565 = vld [vmem:[#allocation2 + $0x70] sm:$0xff]
    %v566 = vld [vmem:[#allocation2 + $0x78] sm:$0xff]
    %v567 = vld [vmem:[#allocation2 + $0x80] sm:$0xff]
    %v568 = vld [vmem:[#allocation2 + $0x88] sm:$0xff]
    %v569 = vld [vmem:[#allocation2 + $0x90] sm:$0xff]
    %v570 = vld [vmem:[#allocation2 + $0x98] sm:$0xff]
    %v571 = vld [vmem:[#allocation2 + $0xa0] sm:$0xff]
    %v572 = vld [vmem:[#allocation2 + $0xa8] sm:$0xff]
    %v573 = vld [vmem:[#allocation2 + $0xb0] sm:$0xff]
    %v574 = vld [vmem:[#allocation2 + $0xb8] sm:$0xff]
    %v575 = vld [vmem:[#allocation2 + $0xc0] sm:$0xff]
    %v576 = vld [vmem:[#allocation2 + $0xc8] sm:$0xff]
    %v577 = vld [vmem:[#allocation2 + $0xd0] sm:$0xff]
    %v578 = vld [vmem:[#allocation2 + $0xd8] sm:$0xff]
    %v579 = vld [vmem:[#allocation2 + $0xe0] sm:$0xff]
    %v580 = vld [vmem:[#allocation2 + $0xe8] sm:$0xff]
    %v581 = vld [vmem:[#allocation2 + $0xf0] sm:$0xff]
    %v582 = vld [vmem:[#allocation2 + $0xf8] sm:$0xff]
    %v583 = vld [vmem:[#allocation2 + $0x100] sm:$0xff]
    %v584 = vld [vmem:[#allocation2 + $0x108] sm:$0xff]
    %v585 = vld [vmem:[#allocation2 + $0x110] sm:$0xff]
    %v586 = vld [vmem:[#allocation2 + $0x118] sm:$0xff]
    %v587 = vld [vmem:[%s2] sm:$0x1]
    %v589 = vlaneseq
    %v590 = vshrl.u32 %v589, 7
    %v591 = vsub.s32 0, %v590
    %v592 = vrot.slane %v587, %v591
    %v594 = vadd.f32 %v551, %v592
    %v595 = vadd.f32 %v552, %v592
    %v596 = vadd.f32 %v553, %v592
    %v597 = vadd.f32 %v554, %v592
    %v598 = vadd.f32 %v555, %v592
    %v599 = vadd.f32 %v556, %v592
    %v600 = vadd.f32 %v557, %v592
    %v601 = vadd.f32 %v558, %v592
    %v602 = vadd.f32 %v559, %v592
    %v603 = vadd.f32 %v560, %v592
    %v604 = vadd.f32 %v561, %v592
    %v605 = vadd.f32 %v562, %v592
    %v606 = vadd.f32 %v563, %v592
    %v607 = vadd.f32 %v564, %v592
    %v608 = vadd.f32 %v565, %v592
    %v609 = vadd.f32 %v566, %v592
    %v610 = vadd.f32 %v567, %v592
    %v611 = vadd.f32 %v568, %v592
    %v612 = vadd.f32 %v569, %v592
    %v613 = vadd.f32 %v570, %v592
    %v614 = vadd.f32 %v571, %v592
    %v615 = vadd.f32 %v572, %v592
    %v616 = vadd.f32 %v573, %v592
    %v617 = vadd.f32 %v574, %v592
    %v618 = vadd.f32 %v575, %v592
    %v619 = vadd.f32 %v576, %v592
    %v620 = vadd.f32 %v577, %v592
    %v621 = vadd.f32 %v578, %v592
    %v622 = vadd.f32 %v579, %v592
    %v623 = vadd.f32 %v580, %v592
    %v624 = vadd.f32 %v581, %v592
    %v625 = vadd.f32 %v582, %v592
    %v626 = vadd.f32 %v583, %v592
    %v627 = vadd.f32 %v584, %v592
    %v628 = vadd.f32 %v585, %v592
    %v629 = vadd.f32 %v586, %v592
    %vm630 = vcmp.ge.f32.partialorder %v594, 0.0
    %vm631 = vcmp.ge.f32.partialorder %v595, 0.0
    %vm632 = vcmp.ge.f32.partialorder %v596, 0.0
    %vm633 = vcmp.ge.f32.partialorder %v597, 0.0
    %vm634 = vcmp.ge.f32.partialorder %v598, 0.0
    %vm635 = vcmp.ge.f32.partialorder %v599, 0.0
    %vm636 = vcmp.ge.f32.partialorder %v600, 0.0
    %vm637 = vcmp.ge.f32.partialorder %v601, 0.0
    %vm638 = vcmp.ge.f32.partialorder %v602, 0.0
    %vm639 = vcmp.ge.f32.partialorder %v603, 0.0
    %vm640 = vcmp.ge.f32.partialorder %v604, 0.0
    %vm641 = vcmp.ge.f32.partialorder %v605, 0.0
    %vm642 = vcmp.ge.f32.partialorder %v606, 0.0
    %vm643 = vcmp.ge.f32.partialorder %v607, 0.0
    %vm644 = vcmp.ge.f32.partialorder %v608, 0.0
    %vm645 = vcmp.ge.f32.partialorder %v609, 0.0
    %vm646 = vcmp.ge.f32.partialorder %v610, 0.0
    %vm647 = vcmp.ge.f32.partialorder %v611, 0.0
    %vm648 = vcmp.ge.f32.partialorder %v612, 0.0
    %vm649 = vcmp.ge.f32.partialorder %v613, 0.0
    %vm650 = vcmp.ge.f32.partialorder %v614, 0.0
    %vm651 = vcmp.ge.f32.partialorder %v615, 0.0
    %vm652 = vcmp.ge.f32.partialorder %v616, 0.0
    %vm653 = vcmp.ge.f32.partialorder %v617, 0.0
    %vm654 = vcmp.ge.f32.partialorder %v618, 0.0
    %vm655 = vcmp.ge.f32.partialorder %v619, 0.0
    %vm656 = vcmp.ge.f32.partialorder %v620, 0.0
    %vm657 = vcmp.ge.f32.partialorder %v621, 0.0
    %vm658 = vcmp.ge.f32.partialorder %v622, 0.0
    %vm659 = vcmp.ge.f32.partialorder %v623, 0.0
    %vm660 = vcmp.ge.f32.partialorder %v624, 0.0
    %vm661 = vcmp.ge.f32.partialorder %v625, 0.0
    %vm662 = vcmp.ge.f32.partialorder %v626, 0.0
    %vm663 = vcmp.ge.f32.partialorder %v627, 0.0
    %vm664 = vcmp.ge.f32.partialorder %v628, 0.0
    %vm665 = vcmp.ge.f32.partialorder %v629, 0.0
    %v666 = vmul.f32 %v594, 0.1
    %v667 = vmul.f32 %v595, 0.1
    %v668 = vmul.f32 %v596, 0.1
    %v669 = vmul.f32 %v597, 0.1
    %v670 = vmul.f32 %v598, 0.1
    %v671 = vmul.f32 %v599, 0.1
    %v672 = vmul.f32 %v600, 0.1
    %v673 = vmul.f32 %v601, 0.1
    %v674 = vmul.f32 %v602, 0.1
    %v675 = vmul.f32 %v603, 0.1
    %v676 = vmul.f32 %v604, 0.1
    %v677 = vmul.f32 %v605, 0.1
    %v678 = vmul.f32 %v606, 0.1
    %v679 = vmul.f32 %v607, 0.1
    %v680 = vmul.f32 %v608, 0.1
    %v681 = vmul.f32 %v609, 0.1
    %v682 = vmul.f32 %v610, 0.1
    %v683 = vmul.f32 %v611, 0.1
    %v684 = vmul.f32 %v612, 0.1
    %v685 = vmul.f32 %v613, 0.1
    %v686 = vmul.f32 %v614, 0.1
    %v687 = vmul.f32 %v615, 0.1
    %v688 = vmul.f32 %v616, 0.1
    %v689 = vmul.f32 %v617, 0.1
    %v690 = vmul.f32 %v618, 0.1
    %v691 = vmul.f32 %v619, 0.1
    %v692 = vmul.f32 %v620, 0.1
    %v693 = vmul.f32 %v621, 0.1
    %v694 = vmul.f32 %v622, 0.1
    %v695 = vmul.f32 %v623, 0.1
    %v696 = vmul.f32 %v624, 0.1
    %v697 = vmul.f32 %v625, 0.1
    %v698 = vmul.f32 %v626, 0.1
    %v699 = vmul.f32 %v627, 0.1
    %v700 = vmul.f32 %v628, 0.1
    %v701 = vmul.f32 %v629, 0.1
    %v702 = vsel %vm630, %v594, %v666
    %v703 = vsel %vm631, %v595, %v667
    %v704 = vsel %vm632, %v596, %v668
    %v705 = vsel %vm633, %v597, %v669
    %v706 = vsel %vm634, %v598, %v670
    %v707 = vsel %vm635, %v599, %v671
    %v708 = vsel %vm636, %v600, %v672
    %v709 = vsel %vm637, %v601, %v673
    %v710 = vsel %vm638, %v602, %v674
    %v711 = vsel %vm639, %v603, %v675
    %v712 = vsel %vm640, %v604, %v676
    %v713 = vsel %vm641, %v605, %v677
    %v714 = vsel %vm642, %v606, %v678
    %v715 = vsel %vm643, %v607, %v679
    %v716 = vsel %vm644, %v608, %v680
    %v717 = vsel %vm645, %v609, %v681
    %v718 = vsel %vm646, %v610, %v682
    %v719 = vsel %vm647, %v611, %v683
    %v720 = vsel %vm648, %v612, %v684
    %v721 = vsel %vm649, %v613, %v685
    %v722 = vsel %vm650, %v614, %v686
    %v723 = vsel %vm651, %v615, %v687
    %v724 = vsel %vm652, %v616, %v688
    %v725 = vsel %vm653, %v617, %v689
    %v726 = vsel %vm654, %v618, %v690
    %v727 = vsel %vm655, %v619, %v691
    %v728 = vsel %vm656, %v620, %v692
    %v729 = vsel %vm657, %v621, %v693
    %v730 = vsel %vm658, %v622, %v694
    %v731 = vsel %vm659, %v623, %v695
    %v732 = vsel %vm660, %v624, %v696
    %v733 = vsel %vm661, %v625, %v697
    %v734 = vsel %vm662, %v626, %v698
    %v735 = vsel %vm663, %v627, %v699
    %v736 = vsel %vm664, %v628, %v700
    %v737 = vsel %vm665, %v629, %v701
    %738 = vst [vmem:[%s3] sm:$0xff] %v702
    %739 = vst [vmem:[%s3 + $0x8] sm:$0xff] %v703
    %740 = vst [vmem:[%s3 + $0x10] sm:$0xff] %v704
    %741 = vst [vmem:[%s3 + $0x18] sm:$0xff] %v705
    %742 = vst [vmem:[%s3 + $0x20] sm:$0xff] %v706
    %743 = vst [vmem:[%s3 + $0x28] sm:$0xff] %v707
    %744 = vst [vmem:[%s3 + $0x30] sm:$0xff] %v708
    %745 = vst [vmem:[%s3 + $0x38] sm:$0xff] %v709
    %746 = vst [vmem:[%s3 + $0x40] sm:$0xff] %v710
    %747 = vst [vmem:[%s3 + $0x48] sm:$0xff] %v711
    %748 = vst [vmem:[%s3 + $0x50] sm:$0xff] %v712
    %749 = vst [vmem:[%s3 + $0x58] sm:$0xff] %v713
    %750 = vst [vmem:[%s3 + $0x60] sm:$0xff] %v714
    %751 = vst [vmem:[%s3 + $0x68] sm:$0xff] %v715
    %752 = vst [vmem:[%s3 + $0x70] sm:$0xff] %v716
    %753 = vst [vmem:[%s3 + $0x78] sm:$0xff] %v717
    %754 = vst [vmem:[%s3 + $0x80] sm:$0xff] %v718
    %755 = vst [vmem:[%s3 + $0x88] sm:$0xff] %v719
    %756 = vst [vmem:[%s3 + $0x90] sm:$0xff] %v720
    %757 = vst [vmem:[%s3 + $0x98] sm:$0xff] %v721
    %758 = vst [vmem:[%s3 + $0xa0] sm:$0xff] %v722
    %759 = vst [vmem:[%s3 + $0xa8] sm:$0xff] %v723
    %760 = vst [vmem:[%s3 + $0xb0] sm:$0xff] %v724
    %761 = vst [vmem:[%s3 + $0xb8] sm:$0xff] %v725
    %762 = vst [vmem:[%s3 + $0xc0] sm:$0xff] %v726
    %763 = vst [vmem:[%s3 + $0xc8] sm:$0xff] %v727
    %764 = vst [vmem:[%s3 + $0xd0] sm:$0xff] %v728
    %765 = vst [vmem:[%s3 + $0xd8] sm:$0xff] %v729
    %766 = vst [vmem:[%s3 + $0xe0] sm:$0xff] %v730
    %767 = vst [vmem:[%s3 + $0xe8] sm:$0xff] %v731
    %768 = vst [vmem:[%s3 + $0xf0] sm:$0xff] %v732
    %769 = vst [vmem:[%s3 + $0xf8] sm:$0xff] %v733
    %770 = vst [vmem:[%s3 + $0x100] sm:$0xff] %v734
    %771 = vst [vmem:[%s3 + $0x108] sm:$0xff] %v735
    %772 = vst [vmem:[%s3 + $0x110] sm:$0xff] %v736
    %773 = vst [vmem:[%s3 + $0x118] sm:$0xff] %v737
  $region21: #{sfi_forward.12} parent=0 // pred_fallthru
    _
  // Predicated region
  $region22: #{sfi_forward.12} parent=0 // pred_check
    _
  $region23: #{sfi_forward.12} parent=0 // pred_check_branch
    %775 = sbr.rel (0) target = $region25
  $region24: #{sfi_forward.12} parent=0 // pred_region
    _
  $region25: #{sfi_forward.12} parent=0 // pred_fallthru
    _
  // Predicated region
  $region26: #{sfi_forward.12} parent=0 // pred_check
    _
  $region27: #{sfi_forward.12} parent=0 // pred_check_branch
    %777 = sbr.rel (0) target = $region29
  $region28: #{sfi_forward.12} parent=0 // pred_region
    _
  $region29: #{sfi_forward.12} parent=0 // pred_fallthru
    _

// kernel: sfi_forward.13
$region0: #{sfi_forward.13}
  #allocation0 [shape = 'u32[]', space=smem, size = 0x4, offset = 0x4, fixed_abs, tag = 'smem constant byte address 0x4 - core index']
  #allocation1 [shape = 'u32[144,128]{1,0:T(1,128)}', space=vmem, size = 0x12000, scoped, tag = 'internal scratch']
  #allocation2 [shape = 'f32[288,128]{1,0:T(8,128)}', space=vmem, size = 0x24000, scoped, tag = 'scratch operand']
  %s0 = inlined_call_operand.vmem [shape: bf16[288,128], index: 0, kind: input, shape index: {}]
  %s1 = inlined_call_operand.vmem [shape: bf16[128,128], index: 1, kind: input, shape index: {}]
  %s2 = inlined_call_operand.vmem [shape: f32[1,128], index: 2, kind: input, shape index: {}]
  %s3 = inlined_call_operand.vmem [shape: f32[288,128], index: 3, kind: output, shape index: {}]
  %s4 = sld [smem:[#allocation0]]
  $region30: #{sfi_forward.13} parent=0
    _
  %s6 = ssub.s32 1, %s4
  %s7 = scalar_select 0, %s6, %s4
  // Predicated region
  $region2: #{sfi_forward.13} parent=0 // pred_check
    _
  $region3: #{sfi_forward.13} parent=0 // pred_check_branch
    %9 = sbr.rel (0) target = $region5
  $region4: #{sfi_forward.13} parent=0 // pred_region
    _
  $region5: #{sfi_forward.13} parent=0 // pred_fallthru
    _
  // Predicated region
  $region6: #{sfi_forward.13} parent=0 // pred_check
    _
  $region7: #{sfi_forward.13} parent=0 // pred_check_branch
    %11 = sbr.rel (0) target = $region9
  $region8: #{sfi_forward.13} parent=0 // pred_region
    _
  $region9: #{sfi_forward.13} parent=0 // pred_fallthru
    _
  // Predicated region
  $region10: #{sfi_forward.13} parent=0 // pred_check
    _
  $region11: #{sfi_forward.13} parent=0 // pred_check_branch
    %13 = sbr.rel (0) target = $region13
  $region12: #{sfi_forward.13} parent=0 // pred_region
    _
  $region13: #{sfi_forward.13} parent=0 // pred_fallthru
    _
  %p15 = scmp.eq.s32.totalorder 0, 0
  // Predicated region
  $region14: #{sfi_forward.13} parent=0 // pred_check
    %p16 = pneg %p15
  $region15: #{sfi_forward.13} parent=0 // pred_check_branch
    %18 = sbr.rel (%p16) target = $region17
  $region16: #{sfi_forward.13} parent=0 // pred_region
    %19 = vst [vmem:[#allocation2] sm:$0xff] 0.0
    %20 = vst [vmem:[#allocation2 + $0x8] sm:$0xff] 0.0
    %21 = vst [vmem:[#allocation2 + $0x10] sm:$0xff] 0.0
    %22 = vst [vmem:[#allocation2 + $0x18] sm:$0xff] 0.0
    %23 = vst [vmem:[#allocation2 + $0x20] sm:$0xff] 0.0
    %24 = vst [vmem:[#allocation2 + $0x28] sm:$0xff] 0.0
    %25 = vst [vmem:[#allocation2 + $0x30] sm:$0xff] 0.0
    %26 = vst [vmem:[#allocation2 + $0x38] sm:$0xff] 0.0
    %27 = vst [vmem:[#allocation2 + $0x40] sm:$0xff] 0.0
    %28 = vst [vmem:[#allocation2 + $0x48] sm:$0xff] 0.0
    %29 = vst [vmem:[#allocation2 + $0x50] sm:$0xff] 0.0
    %30 = vst [vmem:[#allocation2 + $0x58] sm:$0xff] 0.0
    %31 = vst [vmem:[#allocation2 + $0x60] sm:$0xff] 0.0
    %32 = vst [vmem:[#allocation2 + $0x68] sm:$0xff] 0.0
    %33 = vst [vmem:[#allocation2 + $0x70] sm:$0xff] 0.0
    %34 = vst [vmem:[#allocation2 + $0x78] sm:$0xff] 0.0
    %35 = vst [vmem:[#allocation2 + $0x80] sm:$0xff] 0.0
    %36 = vst [vmem:[#allocation2 + $0x88] sm:$0xff] 0.0
    %37 = vst [vmem:[#allocation2 + $0x90] sm:$0xff] 0.0
    %38 = vst [vmem:[#allocation2 + $0x98] sm:$0xff] 0.0
    %39 = vst [vmem:[#allocation2 + $0xa0] sm:$0xff] 0.0
    %40 = vst [vmem:[#allocation2 + $0xa8] sm:$0xff] 0.0
    %41 = vst [vmem:[#allocation2 + $0xb0] sm:$0xff] 0.0
    %42 = vst [vmem:[#allocation2 + $0xb8] sm:$0xff] 0.0
    %43 = vst [vmem:[#allocation2 + $0xc0] sm:$0xff] 0.0
    %44 = vst [vmem:[#allocation2 + $0xc8] sm:$0xff] 0.0
    %45 = vst [vmem:[#allocation2 + $0xd0] sm:$0xff] 0.0
    %46 = vst [vmem:[#allocation2 + $0xd8] sm:$0xff] 0.0
    %47 = vst [vmem:[#allocation2 + $0xe0] sm:$0xff] 0.0
    %48 = vst [vmem:[#allocation2 + $0xe8] sm:$0xff] 0.0
    %49 = vst [vmem:[#allocation2 + $0xf0] sm:$0xff] 0.0
    %50 = vst [vmem:[#allocation2 + $0xf8] sm:$0xff] 0.0
    %51 = vst [vmem:[#allocation2 + $0x100] sm:$0xff] 0.0
    %52 = vst [vmem:[#allocation2 + $0x108] sm:$0xff] 0.0
    %53 = vst [vmem:[#allocation2 + $0x110] sm:$0xff] 0.0
    %54 = vst [vmem:[#allocation2 + $0x118] sm:$0xff] 0.0
  $region17: #{sfi_forward.13} parent=0 // pred_fallthru
    _
  %v55 = vld [vmem:[#allocation2] sm:$0xff]
  %v56 = vld [vmem:[#allocation2 + $0x8] sm:$0xff]
  %v57 = vld [vmem:[#allocation2 + $0x10] sm:$0xff]
  %v58 = vld [vmem:[#allocation2 + $0x18] sm:$0xff]
  %v59 = vld [vmem:[#allocation2 + $0x20] sm:$0xff]
  %v60 = vld [vmem:[#allocation2 + $0x28] sm:$0xff]
  %v61 = vld [vmem:[#allocation2 + $0x30] sm:$0xff]
  %v62 = vld [vmem:[#allocation2 + $0x38] sm:$0xff]
  %v63 = vld [vmem:[#allocation2 + $0x40] sm:$0xff]
  %v64 = vld [vmem:[#allocation2 + $0x48] sm:$0xff]
  %v65 = vld [vmem:[#allocation2 + $0x50] sm:$0xff]
  %v66 = vld [vmem:[#allocation2 + $0x58] sm:$0xff]
  %v67 = vld [vmem:[#allocation2 + $0x60] sm:$0xff]
  %v68 = vld [vmem:[#allocation2 + $0x68] sm:$0xff]
  %v69 = vld [vmem:[#allocation2 + $0x70] sm:$0xff]
  %v70 = vld [vmem:[#allocation2 + $0x78] sm:$0xff]
  %v71 = vld [vmem:[#allocation2 + $0x80] sm:$0xff]
  %v72 = vld [vmem:[#allocation2 + $0x88] sm:$0xff]
  %v73 = vld [vmem:[#allocation2 + $0x90] sm:$0xff]
  %v74 = vld [vmem:[#allocation2 + $0x98] sm:$0xff]
  %v75 = vld [vmem:[#allocation2 + $0xa0] sm:$0xff]
  %v76 = vld [vmem:[#allocation2 + $0xa8] sm:$0xff]
  %v77 = vld [vmem:[#allocation2 + $0xb0] sm:$0xff]
  %v78 = vld [vmem:[#allocation2 + $0xb8] sm:$0xff]
  %v79 = vld [vmem:[#allocation2 + $0xc0] sm:$0xff]
  %v80 = vld [vmem:[#allocation2 + $0xc8] sm:$0xff]
  %v81 = vld [vmem:[#allocation2 + $0xd0] sm:$0xff]
  %v82 = vld [vmem:[#allocation2 + $0xd8] sm:$0xff]
  %v83 = vld [vmem:[#allocation2 + $0xe0] sm:$0xff]
  %v84 = vld [vmem:[#allocation2 + $0xe8] sm:$0xff]
  %v85 = vld [vmem:[#allocation2 + $0xf0] sm:$0xff]
  %v86 = vld [vmem:[#allocation2 + $0xf8] sm:$0xff]
  %v87 = vld [vmem:[#allocation2 + $0x100] sm:$0xff]
  %v88 = vld [vmem:[#allocation2 + $0x108] sm:$0xff]
  %v89 = vld [vmem:[#allocation2 + $0x110] sm:$0xff]
  %v90 = vld [vmem:[#allocation2 + $0x118] sm:$0xff]
  %v91 = vld [vmem:[%s0] sm:$0xf]
  %v92 = vld [vmem:[%s0 + $0x4] sm:$0xf]
  %v93 = vld [vmem:[%s0 + $0x8] sm:$0xf]
  %v94 = vld [vmem:[%s0 + $0xc] sm:$0xf]
  %v95 = vld [vmem:[%s0 + $0x10] sm:$0xf]
  %v96 = vld [vmem:[%s0 + $0x14] sm:$0xf]
  %v97 = vld [vmem:[%s0 + $0x18] sm:$0xf]
  %v98 = vld [vmem:[%s0 + $0x1c] sm:$0xf]
  %v99 = vld [vmem:[%s0 + $0x20] sm:$0xf]
  %v100 = vld [vmem:[%s0 + $0x24] sm:$0xf]
  %v101 = vld [vmem:[%s0 + $0x28] sm:$0xf]
  %v102 = vld [vmem:[%s0 + $0x2c] sm:$0xf]
  %v103 = vld [vmem:[%s0 + $0x30] sm:$0xf]
  %v104 = vld [vmem:[%s0 + $0x34] sm:$0xf]
  %v105 = vld [vmem:[%s0 + $0x38] sm:$0xf]
  %v106 = vld [vmem:[%s0 + $0x3c] sm:$0xf]
  %v107 = vld [vmem:[%s0 + $0x40] sm:$0xf]
  %v108 = vld [vmem:[%s0 + $0x44] sm:$0xf]
  %v109 = vld [vmem:[%s0 + $0x48] sm:$0xf]
  %v110 = vld [vmem:[%s0 + $0x4c] sm:$0xf]
  %v111 = vld [vmem:[%s0 + $0x50] sm:$0xf]
  %v112 = vld [vmem:[%s0 + $0x54] sm:$0xf]
  %v113 = vld [vmem:[%s0 + $0x58] sm:$0xf]
  %v114 = vld [vmem:[%s0 + $0x5c] sm:$0xf]
  %v115 = vld [vmem:[%s0 + $0x60] sm:$0xf]
  %v116 = vld [vmem:[%s0 + $0x64] sm:$0xf]
  %v117 = vld [vmem:[%s0 + $0x68] sm:$0xf]
  %v118 = vld [vmem:[%s0 + $0x6c] sm:$0xf]
  %v119 = vld [vmem:[%s0 + $0x70] sm:$0xf]
  %v120 = vld [vmem:[%s0 + $0x74] sm:$0xf]
  %v121 = vld [vmem:[%s0 + $0x78] sm:$0xf]
  %v122 = vld [vmem:[%s0 + $0x7c] sm:$0xf]
  %v123 = vld [vmem:[%s0 + $0x80] sm:$0xf]
  %v124 = vld [vmem:[%s0 + $0x84] sm:$0xf]
  %v125 = vld [vmem:[%s0 + $0x88] sm:$0xf]
  %v126 = vld [vmem:[%s0 + $0x8c] sm:$0xf]
  %v127 = vld [vmem:[%s1] sm:$0xf]
  %v128 = vld [vmem:[%s1 + $0x4] sm:$0xf]
  %v129 = vld [vmem:[%s1 + $0x8] sm:$0xf]
  %v130 = vld [vmem:[%s1 + $0xc] sm:$0xf]
  %v131 = vld [vmem:[%s1 + $0x10] sm:$0xf]
  %v132 = vld [vmem:[%s1 + $0x14] sm:$0xf]
  %v133 = vld [vmem:[%s1 + $0x18] sm:$0xf]
  %v134 = vld [vmem:[%s1 + $0x1c] sm:$0xf]
  %v135 = vld [vmem:[%s1 + $0x20] sm:$0xf]
  %v136 = vld [vmem:[%s1 + $0x24] sm:$0xf]
  %v137 = vld [vmem:[%s1 + $0x28] sm:$0xf]
  %v138 = vld [vmem:[%s1 + $0x2c] sm:$0xf]
  %v139 = vld [vmem:[%s1 + $0x30] sm:$0xf]
  %v140 = vld [vmem:[%s1 + $0x34] sm:$0xf]
  %v141 = vld [vmem:[%s1 + $0x38] sm:$0xf]
  %v142 = vld [vmem:[%s1 + $0x3c] sm:$0xf]
  %v179 = vunpack.c.l.b16 %v91
  %v180 = vunpack.c.l.b16 %v92
  %v181 = vunpack.c.l.b16 %v93
  %v182 = vunpack.c.l.b16 %v94
  %v183 = vunpack.c.l.b16 %v95
  %v184 = vunpack.c.l.b16 %v96
  %v185 = vunpack.c.l.b16 %v97
  %v186 = vunpack.c.l.b16 %v98
  %v187 = vunpack.c.l.b16 %v99
  %v188 = vunpack.c.l.b16 %v100
  %v189 = vunpack.c.l.b16 %v101
  %v190 = vunpack.c.l.b16 %v102
  %v191 = vunpack.c.l.b16 %v103
  %v192 = vunpack.c.l.b16 %v104
  %v193 = vunpack.c.l.b16 %v105
  %v194 = vunpack.c.l.b16 %v106
  %v195 = vunpack.c.l.b16 %v107
  %v196 = vunpack.c.l.b16 %v108
  %v197 = vunpack.c.l.b16 %v109
  %v198 = vunpack.c.l.b16 %v110
  %v199 = vunpack.c.l.b16 %v111
  %v200 = vunpack.c.l.b16 %v112
  %v201 = vunpack.c.l.b16 %v113
  %v202 = vunpack.c.l.b16 %v114
  %v203 = vunpack.c.l.b16 %v115
  %v204 = vunpack.c.l.b16 %v116
  %v205 = vunpack.c.l.b16 %v117
  %v206 = vunpack.c.l.b16 %v118
  %v207 = vunpack.c.l.b16 %v119
  %v208 = vunpack.c.l.b16 %v120
  %v209 = vunpack.c.l.b16 %v121
  %v210 = vunpack.c.l.b16 %v122
  %v211 = vunpack.c.l.b16 %v123
  %v212 = vunpack.c.l.b16 %v124
  %v213 = vunpack.c.l.b16 %v125
  %v214 = vunpack.c.l.b16 %v126
  %v215 = vpack.c.b16 %v180, %v179
  %v216 = vpack.c.b16 %v182, %v181
  %v217 = vpack.c.b16 %v184, %v183
  %v218 = vpack.c.b16 %v186, %v185
  %v219 = vpack.c.b16 %v188, %v187
  %v220 = vpack.c.b16 %v190, %v189
  %v221 = vpack.c.b16 %v192, %v191
  %v222 = vpack.c.b16 %v194, %v193
  %v223 = vpack.c.b16 %v196, %v195
  %v224 = vpack.c.b16 %v198, %v197
  %v225 = vpack.c.b16 %v200, %v199
  %v226 = vpack.c.b16 %v202, %v201
  %v227 = vpack.c.b16 %v204, %v203
  %v228 = vpack.c.b16 %v206, %v205
  %v229 = vpack.c.b16 %v208, %v207
  %v230 = vpack.c.b16 %v210, %v209
  %v231 = vpack.c.b16 %v212, %v211
  %v232 = vpack.c.b16 %v214, %v213
  %v267 = vunpack.c.l.b16 %v127
  %v268 = vunpack.c.l.b16 %v128
  %v269 = vunpack.c.l.b16 %v129
  %v270 = vunpack.c.l.b16 %v130
  %v271 = vunpack.c.l.b16 %v131
  %v272 = vunpack.c.l.b16 %v132
  %v273 = vunpack.c.l.b16 %v133
  %v274 = vunpack.c.l.b16 %v134
  %v275 = vunpack.c.l.b16 %v135
  %v276 = vunpack.c.l.b16 %v136
  %v277 = vunpack.c.l.b16 %v137
  %v278 = vunpack.c.l.b16 %v138
  %v279 = vunpack.c.l.b16 %v139
  %v280 = vunpack.c.l.b16 %v140
  %v281 = vunpack.c.l.b16 %v141
  %v282 = vunpack.c.l.b16 %v142
  %v283 = vpack.c.b16 %v268, %v267
  %v284 = vpack.c.b16 %v270, %v269
  %v285 = vpack.c.b16 %v272, %v271
  %v286 = vpack.c.b16 %v274, %v273
  %v287 = vpack.c.b16 %v276, %v275
  %v288 = vpack.c.b16 %v278, %v277
  %v289 = vpack.c.b16 %v280, %v279
  %v290 = vpack.c.b16 %v282, %v281
  %299 = vmatprep.subr.bf16.mxu0 0
  %300 = vmatpush1.bf16.msra.mxu0 %v290
  %301 = vmatprep.subr.bf16.mxu0 0
  %302 = vmatpush1.bf16.msra.mxu0 %v289
  %303 = vmatprep.subr.bf16.mxu0 0
  %304 = vmatpush1.bf16.msra.mxu0 %v288
  %305 = vmatprep.subr.bf16.mxu0 0
  %306 = vmatpush1.bf16.msra.mxu0 %v287
  %307 = vmatprep.subr.bf16.mxu0 0
  %308 = vmatpush1.bf16.msra.mxu0 %v286
  %309 = vmatprep.subr.bf16.mxu0 0
  %310 = vmatpush1.bf16.msra.mxu0 %v285
  %311 = vmatprep.subr.bf16.mxu0 0
  %312 = vmatpush1.bf16.msra.mxu0 %v284
  %313 = vmatprep.subr.bf16.mxu0 0
  %314 = vmatpush1.bf16.msra.mxu0 %v283
  %315 = vmatprep.subr.bf16.mxu0 0
  %316 = vmatpush2.bf16.msra.mxu0 0
  %317 = vmatprep.subr.bf16.mxu0 0
  %318 = vmatpush2.bf16.msra.mxu0 0
  %319 = vmatprep.subr.bf16.mxu0 0
  %320 = vmatpush2.bf16.msra.mxu0 0
  %321 = vmatprep.subr.bf16.mxu0 0
  %322 = vmatpush2.bf16.msra.mxu0 0
  %323 = vmatprep.subr.bf16.mxu0 0
  %324 = vmatpush2.bf16.msra.mxu0 0
  %325 = vmatprep.subr.bf16.mxu0 0
  %326 = vmatpush2.bf16.msra.mxu0 0
  %327 = vmatprep.subr.bf16.mxu0 0
  %328 = vmatpush2.bf16.msra.mxu0 0
  %329 = vmatprep.subr.bf16.mxu0 0
  %330 = vmatpush2.bf16.msra.mxu0 0
  %331 = vmatprep.mubr.bf16.mxu0 0
  %332 = vmatmul.mubr.bf16.gmra.mxu0 %v215
  %v333 = vpop.f32.mrf.mxu0
  %v334 = vadd.f32 0.0, %v333
  %v335 = vpop.f32.mrf.mxu0
  %v336 = vpop.f32.mrf.mxu0
  %v337 = vadd.f32 0.0, %v336
  %v338 = vpop.f32.mrf.mxu0
  %339 = vmatprep.mubr.bf16.mxu0 0
  %340 = vmatmul.mubr.bf16.gmra.mxu0 %v216
  %v341 = vpop.f32.mrf.mxu0
  %v342 = vadd.f32 0.0, %v341
  %v343 = vpop.f32.mrf.mxu0
  %v344 = vpop.f32.mrf.mxu0
  %v345 = vadd.f32 0.0, %v344
  %v346 = vpop.f32.mrf.mxu0
  %347 = vmatprep.mubr.bf16.mxu0 0
  %348 = vmatmul.mubr.bf16.gmra.mxu0 %v217
  %v349 = vpop.f32.mrf.mxu0
  %v350 = vadd.f32 0.0, %v349
  %v351 = vpop.f32.mrf.mxu0
  %v352 = vpop.f32.mrf.mxu0
  %v353 = vadd.f32 0.0, %v352
  %v354 = vpop.f32.mrf.mxu0
  %355 = vmatprep.mubr.bf16.mxu0 0
  %356 = vmatmul.mubr.bf16.gmra.mxu0 %v218
  %v357 = vpop.f32.mrf.mxu0
  %v358 = vadd.f32 0.0, %v357
  %v359 = vpop.f32.mrf.mxu0
  %v360 = vpop.f32.mrf.mxu0
  %v361 = vadd.f32 0.0, %v360
  %v362 = vpop.f32.mrf.mxu0
  %363 = vmatprep.mubr.bf16.mxu0 0
  %364 = vmatmul.mubr.bf16.gmra.mxu0 %v219
  %v365 = vpop.f32.mrf.mxu0
  %v366 = vadd.f32 0.0, %v365
  %v367 = vpop.f32.mrf.mxu0
  %v368 = vpop.f32.mrf.mxu0
  %v369 = vadd.f32 0.0, %v368
  %v370 = vpop.f32.mrf.mxu0
  %371 = vmatprep.mubr.bf16.mxu0 0
  %372 = vmatmul.mubr.bf16.gmra.mxu0 %v220
  %v373 = vpop.f32.mrf.mxu0
  %v374 = vadd.f32 0.0, %v373
  %v375 = vpop.f32.mrf.mxu0
  %v376 = vpop.f32.mrf.mxu0
  %v377 = vadd.f32 0.0, %v376
  %v378 = vpop.f32.mrf.mxu0
  %379 = vmatprep.mubr.bf16.mxu0 0
  %380 = vmatmul.mubr.bf16.gmra.mxu0 %v221
  %v381 = vpop.f32.mrf.mxu0
  %v382 = vadd.f32 0.0, %v381
  %v383 = vpop.f32.mrf.mxu0
  %v384 = vpop.f32.mrf.mxu0
  %v385 = vadd.f32 0.0, %v384
  %v386 = vpop.f32.mrf.mxu0
  %387 = vmatprep.mubr.bf16.mxu0 0
  %388 = vmatmul.mubr.bf16.gmra.mxu0 %v222
  %v389 = vpop.f32.mrf.mxu0
  %v390 = vadd.f32 0.0, %v389
  %v391 = vpop.f32.mrf.mxu0
  %v392 = vpop.f32.mrf.mxu0
  %v393 = vadd.f32 0.0, %v392
  %v394 = vpop.f32.mrf.mxu0
  %395 = vmatprep.mubr.bf16.mxu0 0
  %396 = vmatmul.mubr.bf16.gmra.mxu0 %v223
  %v397 = vpop.f32.mrf.mxu0
  %v398 = vadd.f32 0.0, %v397
  %v399 = vpop.f32.mrf.mxu0
  %v400 = vpop.f32.mrf.mxu0
  %v401 = vadd.f32 0.0, %v400
  %v402 = vpop.f32.mrf.mxu0
  %403 = vmatprep.mubr.bf16.mxu0 0
  %404 = vmatmul.mubr.bf16.gmra.mxu0 %v224
  %v405 = vpop.f32.mrf.mxu0
  %v406 = vadd.f32 0.0, %v405
  %v407 = vpop.f32.mrf.mxu0
  %v408 = vpop.f32.mrf.mxu0
  %v409 = vadd.f32 0.0, %v408
  %v410 = vpop.f32.mrf.mxu0
  %411 = vmatprep.mubr.bf16.mxu0 0
  %412 = vmatmul.mubr.bf16.gmra.mxu0 %v225
  %v413 = vpop.f32.mrf.mxu0
  %v414 = vadd.f32 0.0, %v413
  %v415 = vpop.f32.mrf.mxu0
  %v416 = vpop.f32.mrf.mxu0
  %v417 = vadd.f32 0.0, %v416
  %v418 = vpop.f32.mrf.mxu0
  %419 = vmatprep.mubr.bf16.mxu0 0
  %420 = vmatmul.mubr.bf16.gmra.mxu0 %v226
  %v421 = vpop.f32.mrf.mxu0
  %v422 = vadd.f32 0.0, %v421
  %v423 = vpop.f32.mrf.mxu0
  %v424 = vpop.f32.mrf.mxu0
  %v425 = vadd.f32 0.0, %v424
  %v426 = vpop.f32.mrf.mxu0
  %427 = vmatprep.mubr.bf16.mxu0 0
  %428 = vmatmul.mubr.bf16.gmra.mxu0 %v227
  %v429 = vpop.f32.mrf.mxu0
  %v430 = vadd.f32 0.0, %v429
  %v431 = vpop.f32.mrf.mxu0
  %v432 = vpop.f32.mrf.mxu0
  %v433 = vadd.f32 0.0, %v432
  %v434 = vpop.f32.mrf.mxu0
  %435 = vmatprep.mubr.bf16.mxu0 0
  %436 = vmatmul.mubr.bf16.gmra.mxu0 %v228
  %v437 = vpop.f32.mrf.mxu0
  %v438 = vadd.f32 0.0, %v437
  %v439 = vpop.f32.mrf.mxu0
  %v440 = vpop.f32.mrf.mxu0
  %v441 = vadd.f32 0.0, %v440
  %v442 = vpop.f32.mrf.mxu0
  %443 = vmatprep.mubr.bf16.mxu0 0
  %444 = vmatmul.mubr.bf16.gmra.mxu0 %v229
  %v445 = vpop.f32.mrf.mxu0
  %v446 = vadd.f32 0.0, %v445
  %v447 = vpop.f32.mrf.mxu0
  %v448 = vpop.f32.mrf.mxu0
  %v449 = vadd.f32 0.0, %v448
  %v450 = vpop.f32.mrf.mxu0
  %451 = vmatprep.mubr.bf16.mxu0 0
  %452 = vmatmul.mubr.bf16.gmra.mxu0 %v230
  %v453 = vpop.f32.mrf.mxu0
  %v454 = vadd.f32 0.0, %v453
  %v455 = vpop.f32.mrf.mxu0
  %v456 = vpop.f32.mrf.mxu0
  %v457 = vadd.f32 0.0, %v456
  %v458 = vpop.f32.mrf.mxu0
  %459 = vmatprep.mubr.bf16.mxu0 0
  %460 = vmatmul.mubr.bf16.gmra.mxu0 %v231
  %v461 = vpop.f32.mrf.mxu0
  %v462 = vadd.f32 0.0, %v461
  %v463 = vpop.f32.mrf.mxu0
  %v464 = vpop.f32.mrf.mxu0
  %v465 = vadd.f32 0.0, %v464
  %v466 = vpop.f32.mrf.mxu0
  %467 = vmatprep.mubr.bf16.mxu0 0
  %468 = vmatmul.mubr.bf16.gmra.mxu0 %v232
  %v469 = vpop.f32.mrf.mxu0
  %v470 = vadd.f32 0.0, %v469
  %v471 = vpop.f32.mrf.mxu0
  %v472 = vpop.f32.mrf.mxu0
  %v473 = vadd.f32 0.0, %v472
  %v474 = vpop.f32.mrf.mxu0
  %475 = vdwg.mxu0
  %v476 = vadd.f32 %v55, %v334
  %v477 = vadd.f32 %v56, %v337
  %v478 = vadd.f32 %v57, %v342
  %v479 = vadd.f32 %v58, %v345
  %v480 = vadd.f32 %v59, %v350
  %v481 = vadd.f32 %v60, %v353
  %v482 = vadd.f32 %v61, %v358
  %v483 = vadd.f32 %v62, %v361
  %v484 = vadd.f32 %v63, %v366
  %v485 = vadd.f32 %v64, %v369
  %v486 = vadd.f32 %v65, %v374
  %v487 = vadd.f32 %v66, %v377
  %v488 = vadd.f32 %v67, %v382
  %v489 = vadd.f32 %v68, %v385
  %v490 = vadd.f32 %v69, %v390
  %v491 = vadd.f32 %v70, %v393
  %v492 = vadd.f32 %v71, %v398
  %v493 = vadd.f32 %v72, %v401
  %v494 = vadd.f32 %v73, %v406
  %v495 = vadd.f32 %v74, %v409
  %v496 = vadd.f32 %v75, %v414
  %v497 = vadd.f32 %v76, %v417
  %v498 = vadd.f32 %v77, %v422
  %v499 = vadd.f32 %v78, %v425
  %v500 = vadd.f32 %v79, %v430
  %v501 = vadd.f32 %v80, %v433
  %v502 = vadd.f32 %v81, %v438
  %v503 = vadd.f32 %v82, %v441
  %v504 = vadd.f32 %v83, %v446
  %v505 = vadd.f32 %v84, %v449
  %v506 = vadd.f32 %v85, %v454
  %v507 = vadd.f32 %v86, %v457
  %v508 = vadd.f32 %v87, %v462
  %v509 = vadd.f32 %v88, %v465
  %v510 = vadd.f32 %v89, %v470
  %v511 = vadd.f32 %v90, %v473
  %512 = vst [vmem:[#allocation2] sm:$0xff] %v476
  %513 = vst [vmem:[#allocation2 + $0x8] sm:$0xff] %v477
  %514 = vst [vmem:[#allocation2 + $0x10] sm:$0xff] %v478
  %515 = vst [vmem:[#allocation2 + $0x18] sm:$0xff] %v479
  %516 = vst [vmem:[#allocation2 + $0x20] sm:$0xff] %v480
  %517 = vst [vmem:[#allocation2 + $0x28] sm:$0xff] %v481
  %518 = vst [vmem:[#allocation2 + $0x30] sm:$0xff] %v482
  %519 = vst [vmem:[#allocation2 + $0x38] sm:$0xff] %v483
  %520 = vst [vmem:[#allocation2 + $0x40] sm:$0xff] %v484
  %521 = vst [vmem:[#allocation2 + $0x48] sm:$0xff] %v485
  %522 = vst [vmem:[#allocation2 + $0x50] sm:$0xff] %v486
  %523 = vst [vmem:[#allocation2 + $0x58] sm:$0xff] %v487
  %524 = vst [vmem:[#allocation2 + $0x60] sm:$0xff] %v488
  %525 = vst [vmem:[#allocation2 + $0x68] sm:$0xff] %v489
  %526 = vst [vmem:[#allocation2 + $0x70] sm:$0xff] %v490
  %527 = vst [vmem:[#allocation2 + $0x78] sm:$0xff] %v491
  %528 = vst [vmem:[#allocation2 + $0x80] sm:$0xff] %v492
  %529 = vst [vmem:[#allocation2 + $0x88] sm:$0xff] %v493
  %530 = vst [vmem:[#allocation2 + $0x90] sm:$0xff] %v494
  %531 = vst [vmem:[#allocation2 + $0x98] sm:$0xff] %v495
  %532 = vst [vmem:[#allocation2 + $0xa0] sm:$0xff] %v496
  %533 = vst [vmem:[#allocation2 + $0xa8] sm:$0xff] %v497
  %534 = vst [vmem:[#allocation2 + $0xb0] sm:$0xff] %v498
  %535 = vst [vmem:[#allocation2 + $0xb8] sm:$0xff] %v499
  %536 = vst [vmem:[#allocation2 + $0xc0] sm:$0xff] %v500
  %537 = vst [vmem:[#allocation2 + $0xc8] sm:$0xff] %v501
  %538 = vst [vmem:[#allocation2 + $0xd0] sm:$0xff] %v502
  %539 = vst [vmem:[#allocation2 + $0xd8] sm:$0xff] %v503
  %540 = vst [vmem:[#allocation2 + $0xe0] sm:$0xff] %v504
  %541 = vst [vmem:[#allocation2 + $0xe8] sm:$0xff] %v505
  %542 = vst [vmem:[#allocation2 + $0xf0] sm:$0xff] %v506
  %543 = vst [vmem:[#allocation2 + $0xf8] sm:$0xff] %v507
  %544 = vst [vmem:[#allocation2 + $0x100] sm:$0xff] %v508
  %545 = vst [vmem:[#allocation2 + $0x108] sm:$0xff] %v509
  %546 = vst [vmem:[#allocation2 + $0x110] sm:$0xff] %v510
  %547 = vst [vmem:[#allocation2 + $0x118] sm:$0xff] %v511
  // Predicated region
  $region18: #{sfi_forward.13} parent=0 // pred_check
    %p548 = pneg %p15
  $region19: #{sfi_forward.13} parent=0 // pred_check_branch
    %550 = sbr.rel (%p548) target = $region21
  $region20: #{sfi_forward.13} parent=0 // pred_region
    %v551 = vld [vmem:[#allocation2] sm:$0xff]
    %v552 = vld [vmem:[#allocation2 + $0x8] sm:$0xff]
    %v553 = vld [vmem:[#allocation2 + $0x10] sm:$0xff]
    %v554 = vld [vmem:[#allocation2 + $0x18] sm:$0xff]
    %v555 = vld [vmem:[#allocation2 + $0x20] sm:$0xff]
    %v556 = vld [vmem:[#allocation2 + $0x28] sm:$0xff]
    %v557 = vld [vmem:[#allocation2 + $0x30] sm:$0xff]
    %v558 = vld [vmem:[#allocation2 + $0x38] sm:$0xff]
    %v559 = vld [vmem:[#allocation2 + $0x40] sm:$0xff]
    %v560 = vld [vmem:[#allocation2 + $0x48] sm:$0xff]
    %v561 = vld [vmem:[#allocation2 + $0x50] sm:$0xff]
    %v562 = vld [vmem:[#allocation2 + $0x58] sm:$0xff]
    %v563 = vld [vmem:[#allocation2 + $0x60] sm:$0xff]
    %v564 = vld [vmem:[#allocation2 + $0x68] sm:$0xff]
    %v565 = vld [vmem:[#allocation2 + $0x70] sm:$0xff]
    %v566 = vld [vmem:[#allocation2 + $0x78] sm:$0xff]
    %v567 = vld [vmem:[#allocation2 + $0x80] sm:$0xff]
    %v568 = vld [vmem:[#allocation2 + $0x88] sm:$0xff]
    %v569 = vld [vmem:[#allocation2 + $0x90] sm:$0xff]
    %v570 = vld [vmem:[#allocation2 + $0x98] sm:$0xff]
    %v571 = vld [vmem:[#allocation2 + $0xa0] sm:$0xff]
    %v572 = vld [vmem:[#allocation2 + $0xa8] sm:$0xff]
    %v573 = vld [vmem:[#allocation2 + $0xb0] sm:$0xff]
    %v574 = vld [vmem:[#allocation2 + $0xb8] sm:$0xff]
    %v575 = vld [vmem:[#allocation2 + $0xc0] sm:$0xff]
    %v576 = vld [vmem:[#allocation2 + $0xc8] sm:$0xff]
    %v577 = vld [vmem:[#allocation2 + $0xd0] sm:$0xff]
    %v578 = vld [vmem:[#allocation2 + $0xd8] sm:$0xff]
    %v579 = vld [vmem:[#allocation2 + $0xe0] sm:$0xff]
    %v580 = vld [vmem:[#allocation2 + $0xe8] sm:$0xff]
    %v581 = vld [vmem:[#allocation2 + $0xf0] sm:$0xff]
    %v582 = vld [vmem:[#allocation2 + $0xf8] sm:$0xff]
    %v583 = vld [vmem:[#allocation2 + $0x100] sm:$0xff]
    %v584 = vld [vmem:[#allocation2 + $0x108] sm:$0xff]
    %v585 = vld [vmem:[#allocation2 + $0x110] sm:$0xff]
    %v586 = vld [vmem:[#allocation2 + $0x118] sm:$0xff]
    %v587 = vld [vmem:[%s2] sm:$0x1]
    %v589 = vlaneseq
    %v590 = vshrl.u32 %v589, 7
    %v591 = vsub.s32 0, %v590
    %v592 = vrot.slane %v587, %v591
    %v594 = vadd.f32 %v551, %v592
    %v595 = vadd.f32 %v552, %v592
    %v596 = vadd.f32 %v553, %v592
    %v597 = vadd.f32 %v554, %v592
    %v598 = vadd.f32 %v555, %v592
    %v599 = vadd.f32 %v556, %v592
    %v600 = vadd.f32 %v557, %v592
    %v601 = vadd.f32 %v558, %v592
    %v602 = vadd.f32 %v559, %v592
    %v603 = vadd.f32 %v560, %v592
    %v604 = vadd.f32 %v561, %v592
    %v605 = vadd.f32 %v562, %v592
    %v606 = vadd.f32 %v563, %v592
    %v607 = vadd.f32 %v564, %v592
    %v608 = vadd.f32 %v565, %v592
    %v609 = vadd.f32 %v566, %v592
    %v610 = vadd.f32 %v567, %v592
    %v611 = vadd.f32 %v568, %v592
    %v612 = vadd.f32 %v569, %v592
    %v613 = vadd.f32 %v570, %v592
    %v614 = vadd.f32 %v571, %v592
    %v615 = vadd.f32 %v572, %v592
    %v616 = vadd.f32 %v573, %v592
    %v617 = vadd.f32 %v574, %v592
    %v618 = vadd.f32 %v575, %v592
    %v619 = vadd.f32 %v576, %v592
    %v620 = vadd.f32 %v577, %v592
    %v621 = vadd.f32 %v578, %v592
    %v622 = vadd.f32 %v579, %v592
    %v623 = vadd.f32 %v580, %v592
    %v624 = vadd.f32 %v581, %v592
    %v625 = vadd.f32 %v582, %v592
    %v626 = vadd.f32 %v583, %v592
    %v627 = vadd.f32 %v584, %v592
    %v628 = vadd.f32 %v585, %v592
    %v629 = vadd.f32 %v586, %v592
    %630 = vst [vmem:[%s3] sm:$0xff] %v594
    %631 = vst [vmem:[%s3 + $0x8] sm:$0xff] %v595
    %632 = vst [vmem:[%s3 + $0x10] sm:$0xff] %v596
    %633 = vst [vmem:[%s3 + $0x18] sm:$0xff] %v597
    %634 = vst [vmem:[%s3 + $0x20] sm:$0xff] %v598
    %635 = vst [vmem:[%s3 + $0x28] sm:$0xff] %v599
    %636 = vst [vmem:[%s3 + $0x30] sm:$0xff] %v600
    %637 = vst [vmem:[%s3 + $0x38] sm:$0xff] %v601
    %638 = vst [vmem:[%s3 + $0x40] sm:$0xff] %v602
    %639 = vst [vmem:[%s3 + $0x48] sm:$0xff] %v603
    %640 = vst [vmem:[%s3 + $0x50] sm:$0xff] %v604
    %641 = vst [vmem:[%s3 + $0x58] sm:$0xff] %v605
    %642 = vst [vmem:[%s3 + $0x60] sm:$0xff] %v606
    %643 = vst [vmem:[%s3 + $0x68] sm:$0xff] %v607
    %644 = vst [vmem:[%s3 + $0x70] sm:$0xff] %v608
    %645 = vst [vmem:[%s3 + $0x78] sm:$0xff] %v609
    %646 = vst [vmem:[%s3 + $0x80] sm:$0xff] %v610
    %647 = vst [vmem:[%s3 + $0x88] sm:$0xff] %v611
    %648 = vst [vmem:[%s3 + $0x90] sm:$0xff] %v612
    %649 = vst [vmem:[%s3 + $0x98] sm:$0xff] %v613
    %650 = vst [vmem:[%s3 + $0xa0] sm:$0xff] %v614
    %651 = vst [vmem:[%s3 + $0xa8] sm:$0xff] %v615
    %652 = vst [vmem:[%s3 + $0xb0] sm:$0xff] %v616
    %653 = vst [vmem:[%s3 + $0xb8] sm:$0xff] %v617
    %654 = vst [vmem:[%s3 + $0xc0] sm:$0xff] %v618
    %655 = vst [vmem:[%s3 + $0xc8] sm:$0xff] %v619
    %656 = vst [vmem:[%s3 + $0xd0] sm:$0xff] %v620
    %657 = vst [vmem:[%s3 + $0xd8] sm:$0xff] %v621
    %658 = vst [vmem:[%s3 + $0xe0] sm:$0xff] %v622
    %659 = vst [vmem:[%s3 + $0xe8] sm:$0xff] %v623
    %660 = vst [vmem:[%s3 + $0xf0] sm:$0xff] %v624
    %661 = vst [vmem:[%s3 + $0xf8] sm:$0xff] %v625
    %662 = vst [vmem:[%s3 + $0x100] sm:$0xff] %v626
    %663 = vst [vmem:[%s3 + $0x108] sm:$0xff] %v627
    %664 = vst [vmem:[%s3 + $0x110] sm:$0xff] %v628
    %665 = vst [vmem:[%s3 + $0x118] sm:$0xff] %v629
  $region21: #{sfi_forward.13} parent=0 // pred_fallthru
    _
  // Predicated region
  $region22: #{sfi_forward.13} parent=0 // pred_check
    _
  $region23: #{sfi_forward.13} parent=0 // pred_check_branch
    %667 = sbr.rel (0) target = $region25
  $region24: #{sfi_forward.13} parent=0 // pred_region
    _
  $region25: #{sfi_forward.13} parent=0 // pred_fallthru
    _
  // Predicated region
  $region26: #{sfi_forward.13} parent=0 // pred_check
    _
  $region27: #{sfi_forward.13} parent=0 // pred_check_branch
    %669 = sbr.rel (0) target = $region29
  $region28: #{sfi_forward.13} parent=0 // pred_region
    _
  $region29: #{sfi_forward.13} parent=0 // pred_fallthru
    _

// kernel: reverse.1
$region0: #{reverse.1}
  %s0 = inlined_call_operand.vmem [shape: f32[2,4,16,7], index: 0, kind: input, shape index: {}]
  %s1 = inlined_call_operand.vmem [shape: f32[2,4,16,7], index: 1, kind: output, shape index: {}]
  $region1: #{reverse.1} parent=0
    #allocation0 [shape = 'u8[65536]{0}', space=vmem, size = 0x10000, scoped, tag = 'operand span for operand 0']
    #allocation1 [shape = 'u8[32768]{0}', space=vmem, size = 0x8000, scoped, tag = 'operand span for operand 1']
    %s2 = scalar_lea.vmem [#allocation0], 8
    // Predicated region
    $region2: #{reverse.1} parent=1 // pred_check
      _
    $region3: #{reverse.1} parent=1 // pred_check_branch
      %4 = sbr.rel (0) target = $region5
    $region4: #{reverse.1} parent=1 // pred_region
      // Predicated region
      $region6: #{reverse.1} parent=4 // pred_check
        _
      $region7: #{reverse.1} parent=4 // pred_check_branch
        %6 = sbr.rel (0) target = $region9
      $region8: #{reverse.1} parent=4 // pred_region
        // Predicated region
        $region21: #{reverse.1} parent=8 // pred_check
          _
        $region22: #{reverse.1} parent=8 // pred_check_branch
          %36 = sbr.rel (0) target = $region24
        $region23: #{reverse.1} parent=8 // pred_region
          loop: start=0, step=1, limit=1
          $region25: #{reverse.1} parent=23 // loop_pre_header
            _
          $region26: #{reverse.1} parent=23 // loop_header
            %s38 = sphi 0, %s42
            %p39 = scmp.ge.s32.totalorder %s38, 1
            %s43 = sphi %s0, %s0
            %s44 = sphi %s2, %s2
          $region27: #{reverse.1} parent=23 // loop_header_branch
            %41 = sbr.rel (%p39) target = $region31
          $region28: #{reverse.1} parent=23 // loop_body
            %v45 = vld [vmem:[%s43] sm:$0xff]
            %46 = vst [vmem:[%s44] sm:$0xff] %v45
            %v47 = vld [vmem:[%s43 + $0x8] sm:$0xff]
            %48 = vst [vmem:[%s44 + $0x10] sm:$0xff] %v47
            %v49 = vld [vmem:[%s43 + $0x10] sm:$0xff]
            %50 = vst [vmem:[%s44 + $0x20] sm:$0xff] %v49
            %v51 = vld [vmem:[%s43 + $0x18] sm:$0xff]
            %52 = vst [vmem:[%s44 + $0x30] sm:$0xff] %v51
            %v53 = vld [vmem:[%s43 + $0x20] sm:$0xff]
            %54 = vst [vmem:[%s44 + $0x40] sm:$0xff] %v53
            %v55 = vld [vmem:[%s43 + $0x28] sm:$0xff]
            %56 = vst [vmem:[%s44 + $0x50] sm:$0xff] %v55
            %v57 = vld [vmem:[%s43 + $0x30] sm:$0xff]
            %58 = vst [vmem:[%s44 + $0x60] sm:$0xff] %v57
            %v59 = vld [vmem:[%s43 + $0x38] sm:$0xff]
            %60 = vst [vmem:[%s44 + $0x70] sm:$0xff] %v59
          $region29: #{reverse.1} parent=23 // loop_footer
            %s42 = sadd.s32 1, %s38
          $region30: #{reverse.1} parent=23 // loop_footer_branch
            %37 = sbr.rel target = $region26
          $region31: #{reverse.1} parent=23 // loop_exit
            _
        $region24: #{reverse.1} parent=8 // pred_fallthru
          _
        // Predicated region
        $region32: #{reverse.1} parent=8 // pred_check
          _
        $region33: #{reverse.1} parent=8 // pred_check_branch
          %62 = sbr.rel target = $region35
        $region34: #{reverse.1} parent=8 // pred_region
          _
        $region35: #{reverse.1} parent=8 // pred_fallthru
          _
      $region9: #{reverse.1} parent=4 // pred_fallthru
        _
      // Predicated region
      $region10: #{reverse.1} parent=4 // pred_check
        _
      $region11: #{reverse.1} parent=4 // pred_check_branch
        %8 = sbr.rel target = $region13
      $region12: #{reverse.1} parent=4 // pred_region
        %s10 = ssub.s32 256, 1
        loop: start=0, step=1, limit=1
        $region14: #{reverse.1} parent=12 // loop_pre_header
          _
        $region15: #{reverse.1} parent=12 // loop_header
          %s12 = sphi 0, %s16
          %p13 = scmp.ge.s32.totalorder %s12, 1
          %s17 = sphi %s0, %s0
          %s18 = sphi %s2, %s2
        $region16: #{reverse.1} parent=12 // loop_header_branch
          %15 = sbr.rel (%p13) target = $region20
        $region17: #{reverse.1} parent=12 // loop_body
          %v19 = vld [vmem:[%s17] sm:%s10]
          %20 = vst [vmem:[%s18] sm:%s10] %v19
          %v21 = vld [vmem:[%s17 + $0x8] sm:%s10]
          %22 = vst [vmem:[%s18 + $0x10] sm:%s10] %v21
          %v23 = vld [vmem:[%s17 + $0x10] sm:%s10]
          %24 = vst [vmem:[%s18 + $0x20] sm:%s10] %v23
          %v25 = vld [vmem:[%s17 + $0x18] sm:%s10]
          %26 = vst [vmem:[%s18 + $0x30] sm:%s10] %v25
          %v27 = vld [vmem:[%s17 + $0x20] sm:%s10]
          %28 = vst [vmem:[%s18 + $0x40] sm:%s10] %v27
          %v29 = vld [vmem:[%s17 + $0x28] sm:%s10]
          %30 = vst [vmem:[%s18 + $0x50] sm:%s10] %v29
          %v31 = vld [vmem:[%s17 + $0x30] sm:%s10]
          %32 = vst [vmem:[%s18 + $0x60] sm:%s10] %v31
          %v33 = vld [vmem:[%s17 + $0x38] sm:%s10]
          %34 = vst [vmem:[%s18 + $0x70] sm:%s10] %v33
        $region18: #{reverse.1} parent=12 // loop_footer
          %s16 = sadd.s32 1, %s12
        $region19: #{reverse.1} parent=12 // loop_footer_branch
          %11 = sbr.rel target = $region15
        $region20: #{reverse.1} parent=12 // loop_exit
          _
      $region13: #{reverse.1} parent=4 // pred_fallthru
        _
    $region5: #{reverse.1} parent=1 // pred_fallthru
      _
    %63 = vnop
    %s64 = scalar_lea.vmem [#allocation0], 7
    %v65 = vld [vmem:[%s64] ss:$-1 sm:$0xff]
    %v66 = vrot.slane %v65, 1
    %67 = vst [vmem:[#allocation1] sm:$0xff] %v66
    %s68 = scalar_lea.vmem [#allocation0], 8
    %s69 = scalar_lea.vmem %s68, 7 [#allocation0]
    %v70 = vld [vmem:[%s69] ss:$-1 sm:$0xff]
    %v71 = vrot.slane %v70, 1
    %v72 = vlaneseq
    %v73 = vshrl.u32 %v72, 7
    %vm74 = vcmp.lt.s32.totalorder %v73, 7
    %75 = vst.msk [vmem:[#allocation1] sm:$0xff] %vm74, %v71
    %s76 = scalar_lea.vmem [#allocation1], 8
    %s77 = scalar_lea.vmem [#allocation0], 16
    %s78 = scalar_lea.vmem %s77, 7 [#allocation0]
    %v79 = vld [vmem:[%s78] ss:$-1 sm:$0xff]
    %v80 = vrot.slane %v79, 1
    %81 = vst [vmem:[%s76] sm:$0xff] %v80
    %s82 = scalar_lea.vmem %s77, 8 [#allocation0]
    %s83 = scalar_lea.vmem %s82, 7 [#allocation0]
    %v84 = vld [vmem:[%s83] ss:$-1 sm:$0xff]
    %v85 = vrot.slane %v84, 1
    %v86 = vlaneseq
    %v87 = vshrl.u32 %v86, 7
    %vm88 = vcmp.lt.s32.totalorder %v87, 7
    %89 = vst.msk [vmem:[%s76] sm:$0xff] %vm88, %v85
    %s90 = scalar_lea.vmem [#allocation1], 16
    %s91 = scalar_lea.vmem [#allocation0], 32
    %s92 = scalar_lea.vmem %s91, 7 [#allocation0]
    %v93 = vld [vmem:[%s92] ss:$-1 sm:$0xff]
    %v94 = vrot.slane %v93, 1
    %95 = vst [vmem:[%s90] sm:$0xff] %v94
    %s96 = scalar_lea.vmem %s91, 8 [#allocation0]
    %s97 = scalar_lea.vmem %s96, 7 [#allocation0]
    %v98 = vld [vmem:[%s97] ss:$-1 sm:$0xff]
    %v99 = vrot.slane %v98, 1
    %v100 = vlaneseq
    %v101 = vshrl.u32 %v100, 7
    %vm102 = vcmp.lt.s32.totalorder %v101, 7
    %103 = vst.msk [vmem:[%s90] sm:$0xff] %vm102, %v99
    %s104 = scalar_lea.vmem [#allocation1], 24
    %s105 = scalar_lea.vmem [#allocation0], 48
    %s106 = scalar_lea.vmem %s105, 7 [#allocation0]
    %v107 = vld [vmem:[%s106] ss:$-1 sm:$0xff]
    %v108 = vrot.slane %v107, 1
    %109 = vst [vmem:[%s104] sm:$0xff] %v108
    %s110 = scalar_lea.vmem %s105, 8 [#allocation0]
    %s111 = scalar_lea.vmem %s110, 7 [#allocation0]
    %v112 = vld [vmem:[%s111] ss:$-1 sm:$0xff]
    %v113 = vrot.slane %v112, 1
    %v114 = vlaneseq
    %v115 = vshrl.u32 %v114, 7
    %vm116 = vcmp.lt.s32.totalorder %v115, 7
    %117 = vst.msk [vmem:[%s104] sm:$0xff] %vm116, %v113
    %s118 = scalar_lea.vmem [#allocation1], 32
    %s119 = scalar_lea.vmem [#allocation0], 64
    %s120 = scalar_lea.vmem %s119, 7 [#allocation0]
    %v121 = vld [vmem:[%s120] ss:$-1 sm:$0xff]
    %v122 = vrot.slane %v121, 1
    %123 = vst [vmem:[%s118] sm:$0xff] %v122
    %s124 = scalar_lea.vmem %s119, 8 [#allocation0]
    %s125 = scalar_lea.vmem %s124, 7 [#allocation0]
    %v126 = vld [vmem:[%s125] ss:$-1 sm:$0xff]
    %v127 = vrot.slane %v126, 1
    %v128 = vlaneseq
    %v129 = vshrl.u32 %v128, 7
    %vm130 = vcmp.lt.s32.totalorder %v129, 7
    %131 = vst.msk [vmem:[%s118] sm:$0xff] %vm130, %v127
    %s132 = scalar_lea.vmem [#allocation1], 40
    %s133 = scalar_lea.vmem [#allocation0], 80
    %s134 = scalar_lea.vmem %s133, 7 [#allocation0]
    %v135 = vld [vmem:[%s134] ss:$-1 sm:$0xff]
    %v136 = vrot.slane %v135, 1
    %137 = vst [vmem:[%s132] sm:$0xff] %v136
    %s138 = scalar_lea.vmem %s133, 8 [#allocation0]
    %s139 = scalar_lea.vmem %s138, 7 [#allocation0]
    %v140 = vld [vmem:[%s139] ss:$-1 sm:$0xff]
    %v141 = vrot.slane %v140, 1
    %v142 = vlaneseq
    %v143 = vshrl.u32 %v142, 7
    %vm144 = vcmp.lt.s32.totalorder %v143, 7
    %145 = vst.msk [vmem:[%s132] sm:$0xff] %vm144, %v141
    %s146 = scalar_lea.vmem [#allocation1], 48
    %s147 = scalar_lea.vmem [#allocation0], 96
    %s148 = scalar_lea.vmem %s147, 7 [#allocation0]
    %v149 = vld [vmem:[%s148] ss:$-1 sm:$0xff]
    %v150 = vrot.slane %v149, 1
    %151 = vst [vmem:[%s146] sm:$0xff] %v150
    %s152 = scalar_lea.vmem %s147, 8 [#allocation0]
    %s153 = scalar_lea.vmem %s152, 7 [#allocation0]
    %v154 = vld [vmem:[%s153] ss:$-1 sm:$0xff]
    %v155 = vrot.slane %v154, 1
    %v156 = vlaneseq
    %v157 = vshrl.u32 %v156, 7
    %vm158 = vcmp.lt.s32.totalorder %v157, 7
    %159 = vst.msk [vmem:[%s146] sm:$0xff] %vm158, %v155
    %s160 = scalar_lea.vmem [#allocation1], 56
    %s161 = scalar_lea.vmem [#allocation0], 112
    %s162 = scalar_lea.vmem %s161, 7 [#allocation0]
    %v163 = vld [vmem:[%s162] ss:$-1 sm:$0xff]
    %v164 = vrot.slane %v163, 1
    %165 = vst [vmem:[%s160] sm:$0xff] %v164
    %s166 = scalar_lea.vmem %s161, 8 [#allocation0]
    %s167 = scalar_lea.vmem %s166, 7 [#allocation0]
    %v168 = vld [vmem:[%s167] ss:$-1 sm:$0xff]
    %v169 = vrot.slane %v168, 1
    %v170 = vlaneseq
    %v171 = vshrl.u32 %v170, 7
    %vm172 = vcmp.lt.s32.totalorder %v171, 7
    %173 = vst.msk [vmem:[%s160] sm:$0xff] %vm172, %v169
    // Predicated region
    $region36: #{reverse.1} parent=1 // pred_check
      _
    $region37: #{reverse.1} parent=1 // pred_check_branch
      %175 = sbr.rel (0) target = $region39
    $region38: #{reverse.1} parent=1 // pred_region
      // Predicated region
      $region40: #{reverse.1} parent=38 // pred_check
        _
      $region41: #{reverse.1} parent=38 // pred_check_branch
        %177 = sbr.rel (0) target = $region43
      $region42: #{reverse.1} parent=38 // pred_region
        // Predicated region
        $region55: #{reverse.1} parent=42 // pred_check
          _
        $region56: #{reverse.1} parent=42 // pred_check_branch
          %207 = sbr.rel (0) target = $region58
        $region57: #{reverse.1} parent=42 // pred_region
          loop: start=0, step=1, limit=1
          $region59: #{reverse.1} parent=57 // loop_pre_header
            _
          $region60: #{reverse.1} parent=57 // loop_header
            %s209 = sphi 0, %s213
            %p210 = scmp.ge.s32.totalorder %s209, 1
            %s214 = sphi [#allocation1], [#allocation1]
            %s215 = sphi %s1, %s1
          $region61: #{reverse.1} parent=57 // loop_header_branch
            %212 = sbr.rel (%p210) target = $region65
          $region62: #{reverse.1} parent=57 // loop_body
            %v216 = vld [vmem:[%s214] sm:$0xff]
            %217 = vst [vmem:[%s215] sm:$0xff] %v216
            %v218 = vld [vmem:[%s214 + $0x8] sm:$0xff]
            %219 = vst [vmem:[%s215 + $0x8] sm:$0xff] %v218
            %v220 = vld [vmem:[%s214 + $0x10] sm:$0xff]
            %221 = vst [vmem:[%s215 + $0x10] sm:$0xff] %v220
            %v222 = vld [vmem:[%s214 + $0x18] sm:$0xff]
            %223 = vst [vmem:[%s215 + $0x18] sm:$0xff] %v222
            %v224 = vld [vmem:[%s214 + $0x20] sm:$0xff]
            %225 = vst [vmem:[%s215 + $0x20] sm:$0xff] %v224
            %v226 = vld [vmem:[%s214 + $0x28] sm:$0xff]
            %227 = vst [vmem:[%s215 + $0x28] sm:$0xff] %v226
            %v228 = vld [vmem:[%s214 + $0x30] sm:$0xff]
            %229 = vst [vmem:[%s215 + $0x30] sm:$0xff] %v228
            %v230 = vld [vmem:[%s214 + $0x38] sm:$0xff]
            %231 = vst [vmem:[%s215 + $0x38] sm:$0xff] %v230
          $region63: #{reverse.1} parent=57 // loop_footer
            %s213 = sadd.s32 1, %s209
          $region64: #{reverse.1} parent=57 // loop_footer_branch
            %208 = sbr.rel target = $region60
          $region65: #{reverse.1} parent=57 // loop_exit
            _
        $region58: #{reverse.1} parent=42 // pred_fallthru
          _
        // Predicated region
        $region66: #{reverse.1} parent=42 // pred_check
          _
        $region67: #{reverse.1} parent=42 // pred_check_branch
          %233 = sbr.rel target = $region69
        $region68: #{reverse.1} parent=42 // pred_region
          _
        $region69: #{reverse.1} parent=42 // pred_fallthru
          _
      $region43: #{reverse.1} parent=38 // pred_fallthru
        _
      // Predicated region
      $region44: #{reverse.1} parent=38 // pred_check
        _
      $region45: #{reverse.1} parent=38 // pred_check_branch
        %179 = sbr.rel target = $region47
      $region46: #{reverse.1} parent=38 // pred_region
        %s181 = ssub.s32 256, 1
        loop: start=0, step=1, limit=1
        $region48: #{reverse.1} parent=46 // loop_pre_header
          _
        $region49: #{reverse.1} parent=46 // loop_header
          %s183 = sphi 0, %s187
          %p184 = scmp.ge.s32.totalorder %s183, 1
          %s188 = sphi [#allocation1], [#allocation1]
          %s189 = sphi %s1, %s1
        $region50: #{reverse.1} parent=46 // loop_header_branch
          %186 = sbr.rel (%p184) target = $region54
        $region51: #{reverse.1} parent=46 // loop_body
          %v190 = vld [vmem:[%s188] sm:%s181]
          %191 = vst [vmem:[%s189] sm:%s181] %v190
          %v192 = vld [vmem:[%s188 + $0x8] sm:%s181]
          %193 = vst [vmem:[%s189 + $0x8] sm:%s181] %v192
          %v194 = vld [vmem:[%s188 + $0x10] sm:%s181]
          %195 = vst [vmem:[%s189 + $0x10] sm:%s181] %v194
          %v196 = vld [vmem:[%s188 + $0x18] sm:%s181]
          %197 = vst [vmem:[%s189 + $0x18] sm:%s181] %v196
          %v198 = vld [vmem:[%s188 + $0x20] sm:%s181]
          %199 = vst [vmem:[%s189 + $0x20] sm:%s181] %v198
          %v200 = vld [vmem:[%s188 + $0x28] sm:%s181]
          %201 = vst [vmem:[%s189 + $0x28] sm:%s181] %v200
          %v202 = vld [vmem:[%s188 + $0x30] sm:%s181]
          %203 = vst [vmem:[%s189 + $0x30] sm:%s181] %v202
          %v204 = vld [vmem:[%s188 + $0x38] sm:%s181]
          %205 = vst [vmem:[%s189 + $0x38] sm:%s181] %v204
        $region52: #{reverse.1} parent=46 // loop_footer
          %s187 = sadd.s32 1, %s183
        $region53: #{reverse.1} parent=46 // loop_footer_branch
          %182 = sbr.rel target = $region49
        $region54: #{reverse.1} parent=46 // loop_exit
          _
      $region47: #{reverse.1} parent=38 // pred_fallthru
        _
    $region39: #{reverse.1} parent=1 // pred_fallthru
      _
    %234 = vnop

// kernel: sfi_forward.18
$region0: #{sfi_forward.18}
  #allocation0 [shape = 'u32[]', space=smem, size = 0x4, offset = 0x4, fixed_abs, tag = 'smem constant byte address 0x4 - core index']
  #allocation1 [shape = 'u32[144,128]{1,0:T(1,128)}', space=vmem, size = 0x12000, scoped, tag = 'internal scratch']
  %s0 = inlined_call_operand.vmem [shape: f32[512,8], index: 0, kind: input, shape index: {}]
  %s1 = inlined_call_operand.vmem [shape: f32[1,8], index: 1, kind: input, shape index: {}]
  %s2 = inlined_call_operand.vmem [shape: f32[1,8], index: 2, kind: input, shape index: {}]
  %s3 = inlined_call_operand.vmem [shape: f32[512,8], index: 3, kind: output, shape index: {}]
  %s4 = sld [smem:[#allocation0]]
  $region22: #{sfi_forward.18} parent=0
    _
  %s6 = ssub.s32 1, %s4
  %s7 = scalar_select 0, %s6, %s4
  // Predicated region
  $region2: #{sfi_forward.18} parent=0 // pred_check
    _
  $region3: #{sfi_forward.18} parent=0 // pred_check_branch
    %9 = sbr.rel (0) target = $region5
  $region4: #{sfi_forward.18} parent=0 // pred_region
    _
  $region5: #{sfi_forward.18} parent=0 // pred_fallthru
    _
  // Predicated region
  $region6: #{sfi_forward.18} parent=0 // pred_check
    _
  $region7: #{sfi_forward.18} parent=0 // pred_check_branch
    %11 = sbr.rel (0) target = $region9
  $region8: #{sfi_forward.18} parent=0 // pred_region
    _
  $region9: #{sfi_forward.18} parent=0 // pred_fallthru
    _
  // Predicated region
  $region10: #{sfi_forward.18} parent=0 // pred_check
    _
  $region11: #{sfi_forward.18} parent=0 // pred_check_branch
    %13 = sbr.rel (0) target = $region13
  $region12: #{sfi_forward.18} parent=0 // pred_region
    _
  $region13: #{sfi_forward.18} parent=0 // pred_fallthru
    _
  %v14 = vld [vmem:[%s0] sm:$0xff]
  %v15 = vld [vmem:[%s0 + $0x8] sm:$0xff]
  %v16 = vld [vmem:[%s0 + $0x10] sm:$0xff]
  %v17 = vld [vmem:[%s0 + $0x18] sm:$0xff]
  %v18 = vld [vmem:[%s0 + $0x20] sm:$0xff]
  %v19 = vld [vmem:[%s0 + $0x28] sm:$0xff]
  %v20 = vld [vmem:[%s0 + $0x30] sm:$0xff]
  %v21 = vld [vmem:[%s0 + $0x38] sm:$0xff]
  %v22 = vld [vmem:[%s0 + $0x40] sm:$0xff]
  %v23 = vld [vmem:[%s0 + $0x48] sm:$0xff]
  %v24 = vld [vmem:[%s0 + $0x50] sm:$0xff]
  %v25 = vld [vmem:[%s0 + $0x58] sm:$0xff]
  %v26 = vld [vmem:[%s0 + $0x60] sm:$0xff]
  %v27 = vld [vmem:[%s0 + $0x68] sm:$0xff]
  %v28 = vld [vmem:[%s0 + $0x70] sm:$0xff]
  %v29 = vld [vmem:[%s0 + $0x78] sm:$0xff]
  %v30 = vld [vmem:[%s0 + $0x80] sm:$0xff]
  %v31 = vld [vmem:[%s0 + $0x88] sm:$0xff]
  %v32 = vld [vmem:[%s0 + $0x90] sm:$0xff]
  %v33 = vld [vmem:[%s0 + $0x98] sm:$0xff]
  %v34 = vld [vmem:[%s0 + $0xa0] sm:$0xff]
  %v35 = vld [vmem:[%s0 + $0xa8] sm:$0xff]
  %v36 = vld [vmem:[%s0 + $0xb0] sm:$0xff]
  %v37 = vld [vmem:[%s0 + $0xb8] sm:$0xff]
  %v38 = vld [vmem:[%s0 + $0xc0] sm:$0xff]
  %v39 = vld [vmem:[%s0 + $0xc8] sm:$0xff]
  %v40 = vld [vmem:[%s0 + $0xd0] sm:$0xff]
  %v41 = vld [vmem:[%s0 + $0xd8] sm:$0xff]
  %v42 = vld [vmem:[%s0 + $0xe0] sm:$0xff]
  %v43 = vld [vmem:[%s0 + $0xe8] sm:$0xff]
  %v44 = vld [vmem:[%s0 + $0xf0] sm:$0xff]
  %v45 = vld [vmem:[%s0 + $0xf8] sm:$0xff]
  %v46 = vld [vmem:[%s0 + $0x100] sm:$0xff]
  %v47 = vld [vmem:[%s0 + $0x108] sm:$0xff]
  %v48 = vld [vmem:[%s0 + $0x110] sm:$0xff]
  %v49 = vld [vmem:[%s0 + $0x118] sm:$0xff]
  %v50 = vld [vmem:[%s0 + $0x120] sm:$0xff]
  %v51 = vld [vmem:[%s0 + $0x128] sm:$0xff]
  %v52 = vld [vmem:[%s0 + $0x130] sm:$0xff]
  %v53 = vld [vmem:[%s0 + $0x138] sm:$0xff]
  %v54 = vld [vmem:[%s0 + $0x140] sm:$0xff]
  %v55 = vld [vmem:[%s0 + $0x148] sm:$0xff]
  %v56 = vld [vmem:[%s0 + $0x150] sm:$0xff]
  %v57 = vld [vmem:[%s0 + $0x158] sm:$0xff]
  %v58 = vld [vmem:[%s0 + $0x160] sm:$0xff]
  %v59 = vld [vmem:[%s0 + $0x168] sm:$0xff]
  %v60 = vld [vmem:[%s0 + $0x170] sm:$0xff]
  %v61 = vld [vmem:[%s0 + $0x178] sm:$0xff]
  %v62 = vld [vmem:[%s0 + $0x180] sm:$0xff]
  %v63 = vld [vmem:[%s0 + $0x188] sm:$0xff]
  %v64 = vld [vmem:[%s0 + $0x190] sm:$0xff]
  %v65 = vld [vmem:[%s0 + $0x198] sm:$0xff]
  %v66 = vld [vmem:[%s0 + $0x1a0] sm:$0xff]
  %v67 = vld [vmem:[%s0 + $0x1a8] sm:$0xff]
  %v68 = vld [vmem:[%s0 + $0x1b0] sm:$0xff]
  %v69 = vld [vmem:[%s0 + $0x1b8] sm:$0xff]
  %v70 = vld [vmem:[%s0 + $0x1c0] sm:$0xff]
  %v71 = vld [vmem:[%s0 + $0x1c8] sm:$0xff]
  %v72 = vld [vmem:[%s0 + $0x1d0] sm:$0xff]
  %v73 = vld [vmem:[%s0 + $0x1d8] sm:$0xff]
  %v74 = vld [vmem:[%s0 + $0x1e0] sm:$0xff]
  %v75 = vld [vmem:[%s0 + $0x1e8] sm:$0xff]
  %v76 = vld [vmem:[%s0 + $0x1f0] sm:$0xff]
  %v77 = vld [vmem:[%s0 + $0x1f8] sm:$0xff]
  %vm78 = vcmask 64512
  %v79 = vsel %vm78, %v14, 0.0
  %80 = vadd.xlane.f32.xlu0 %v79
  %v81 = vpop.xlane.xlu0 %80
  %v82 = vsel %vm78, %v15, 0.0
  %83 = vadd.xlane.f32.xlu0 %v82
  %v84 = vpop.xlane.xlu0 %83
  %v85 = vsel %vm78, %v16, 0.0
  %86 = vadd.xlane.f32.xlu0 %v85
  %v87 = vpop.xlane.xlu0 %86
  %v88 = vsel %vm78, %v17, 0.0
  %89 = vadd.xlane.f32.xlu0 %v88
  %v90 = vpop.xlane.xlu0 %89
  %v91 = vsel %vm78, %v18, 0.0
  %92 = vadd.xlane.f32.xlu0 %v91
  %v93 = vpop.xlane.xlu0 %92
  %v94 = vsel %vm78, %v19, 0.0
  %95 = vadd.xlane.f32.xlu0 %v94
  %v96 = vpop.xlane.xlu0 %95
  %v97 = vsel %vm78, %v20, 0.0
  %98 = vadd.xlane.f32.xlu0 %v97
  %v99 = vpop.xlane.xlu0 %98
  %v100 = vsel %vm78, %v21, 0.0
  %101 = vadd.xlane.f32.xlu0 %v100
  %v102 = vpop.xlane.xlu0 %101
  %v103 = vsel %vm78, %v22, 0.0
  %104 = vadd.xlane.f32.xlu0 %v103
  %v105 = vpop.xlane.xlu0 %104
  %v106 = vsel %vm78, %v23, 0.0
  %107 = vadd.xlane.f32.xlu0 %v106
  %v108 = vpop.xlane.xlu0 %107
  %v109 = vsel %vm78, %v24, 0.0
  %110 = vadd.xlane.f32.xlu0 %v109
  %v111 = vpop.xlane.xlu0 %110
  %v112 = vsel %vm78, %v25, 0.0
  %113 = vadd.xlane.f32.xlu0 %v112
  %v114 = vpop.xlane.xlu0 %113
  %v115 = vsel %vm78, %v26, 0.0
  %116 = vadd.xlane.f32.xlu0 %v115
  %v117 = vpop.xlane.xlu0 %116
  %v118 = vsel %vm78, %v27, 0.0
  %119 = vadd.xlane.f32.xlu0 %v118
  %v120 = vpop.xlane.xlu0 %119
  %v121 = vsel %vm78, %v28, 0.0
  %122 = vadd.xlane.f32.xlu0 %v121
  %v123 = vpop.xlane.xlu0 %122
  %v124 = vsel %vm78, %v29, 0.0
  %125 = vadd.xlane.f32.xlu0 %v124
  %v126 = vpop.xlane.xlu0 %125
  %v127 = vsel %vm78, %v30, 0.0
  %128 = vadd.xlane.f32.xlu0 %v127
  %v129 = vpop.xlane.xlu0 %128
  %v130 = vsel %vm78, %v31, 0.0
  %131 = vadd.xlane.f32.xlu0 %v130
  %v132 = vpop.xlane.xlu0 %131
  %v133 = vsel %vm78, %v32, 0.0
  %134 = vadd.xlane.f32.xlu0 %v133
  %v135 = vpop.xlane.xlu0 %134
  %v136 = vsel %vm78, %v33, 0.0
  %137 = vadd.xlane.f32.xlu0 %v136
  %v138 = vpop.xlane.xlu0 %137
  %v139 = vsel %vm78, %v34, 0.0
  %140 = vadd.xlane.f32.xlu0 %v139
  %v141 = vpop.xlane.xlu0 %140
  %v142 = vsel %vm78, %v35, 0.0
  %143 = vadd.xlane.f32.xlu0 %v142
  %v144 = vpop.xlane.xlu0 %143
  %v145 = vsel %vm78, %v36, 0.0
  %146 = vadd.xlane.f32.xlu0 %v145
  %v147 = vpop.xlane.xlu0 %146
  %v148 = vsel %vm78, %v37, 0.0
  %149 = vadd.xlane.f32.xlu0 %v148
  %v150 = vpop.xlane.xlu0 %149
  %v151 = vsel %vm78, %v38, 0.0
  %152 = vadd.xlane.f32.xlu0 %v151
  %v153 = vpop.xlane.xlu0 %152
  %v154 = vsel %vm78, %v39, 0.0
  %155 = vadd.xlane.f32.xlu0 %v154
  %v156 = vpop.xlane.xlu0 %155
  %v157 = vsel %vm78, %v40, 0.0
  %158 = vadd.xlane.f32.xlu0 %v157
  %v159 = vpop.xlane.xlu0 %158
  %v160 = vsel %vm78, %v41, 0.0
  %161 = vadd.xlane.f32.xlu0 %v160
  %v162 = vpop.xlane.xlu0 %161
  %v163 = vsel %vm78, %v42, 0.0
  %164 = vadd.xlane.f32.xlu0 %v163
  %v165 = vpop.xlane.xlu0 %164
  %v166 = vsel %vm78, %v43, 0.0
  %167 = vadd.xlane.f32.xlu0 %v166
  %v168 = vpop.xlane.xlu0 %167
  %v169 = vsel %vm78, %v44, 0.0
  %170 = vadd.xlane.f32.xlu0 %v169
  %v171 = vpop.xlane.xlu0 %170
  %v172 = vsel %vm78, %v45, 0.0
  %173 = vadd.xlane.f32.xlu0 %v172
  %v174 = vpop.xlane.xlu0 %173
  %v175 = vsel %vm78, %v46, 0.0
  %176 = vadd.xlane.f32.xlu0 %v175
  %v177 = vpop.xlane.xlu0 %176
  %v178 = vsel %vm78, %v47, 0.0
  %179 = vadd.xlane.f32.xlu0 %v178
  %v180 = vpop.xlane.xlu0 %179
  %v181 = vsel %vm78, %v48, 0.0
  %182 = vadd.xlane.f32.xlu0 %v181
  %v183 = vpop.xlane.xlu0 %182
  %v184 = vsel %vm78, %v49, 0.0
  %185 = vadd.xlane.f32.xlu0 %v184
  %v186 = vpop.xlane.xlu0 %185
  %v187 = vsel %vm78, %v50, 0.0
  %188 = vadd.xlane.f32.xlu0 %v187
  %v189 = vpop.xlane.xlu0 %188
  %v190 = vsel %vm78, %v51, 0.0
  %191 = vadd.xlane.f32.xlu0 %v190
  %v192 = vpop.xlane.xlu0 %191
  %v193 = vsel %vm78, %v52, 0.0
  %194 = vadd.xlane.f32.xlu0 %v193
  %v195 = vpop.xlane.xlu0 %194
  %v196 = vsel %vm78, %v53, 0.0
  %197 = vadd.xlane.f32.xlu0 %v196
  %v198 = vpop.xlane.xlu0 %197
  %v199 = vsel %vm78, %v54, 0.0
  %200 = vadd.xlane.f32.xlu0 %v199
  %v201 = vpop.xlane.xlu0 %200
  %v202 = vsel %vm78, %v55, 0.0
  %203 = vadd.xlane.f32.xlu0 %v202
  %v204 = vpop.xlane.xlu0 %203
  %v205 = vsel %vm78, %v56, 0.0
  %206 = vadd.xlane.f32.xlu0 %v205
  %v207 = vpop.xlane.xlu0 %206
  %v208 = vsel %vm78, %v57, 0.0
  %209 = vadd.xlane.f32.xlu0 %v208
  %v210 = vpop.xlane.xlu0 %209
  %v211 = vsel %vm78, %v58, 0.0
  %212 = vadd.xlane.f32.xlu0 %v211
  %v213 = vpop.xlane.xlu0 %212
  %v214 = vsel %vm78, %v59, 0.0
  %215 = vadd.xlane.f32.xlu0 %v214
  %v216 = vpop.xlane.xlu0 %215
  %v217 = vsel %vm78, %v60, 0.0
  %218 = vadd.xlane.f32.xlu0 %v217
  %v219 = vpop.xlane.xlu0 %218
  %v220 = vsel %vm78, %v61, 0.0
  %221 = vadd.xlane.f32.xlu0 %v220
  %v222 = vpop.xlane.xlu0 %221
  %v223 = vsel %vm78, %v62, 0.0
  %224 = vadd.xlane.f32.xlu0 %v223
  %v225 = vpop.xlane.xlu0 %224
  %v226 = vsel %vm78, %v63, 0.0
  %227 = vadd.xlane.f32.xlu0 %v226
  %v228 = vpop.xlane.xlu0 %227
  %v229 = vsel %vm78, %v64, 0.0
  %230 = vadd.xlane.f32.xlu0 %v229
  %v231 = vpop.xlane.xlu0 %230
  %v232 = vsel %vm78, %v65, 0.0
  %233 = vadd.xlane.f32.xlu0 %v232
  %v234 = vpop.xlane.xlu0 %233
  %v235 = vsel %vm78, %v66, 0.0
  %236 = vadd.xlane.f32.xlu0 %v235
  %v237 = vpop.xlane.xlu0 %236
  %v238 = vsel %vm78, %v67, 0.0
  %239 = vadd.xlane.f32.xlu0 %v238
  %v240 = vpop.xlane.xlu0 %239
  %v241 = vsel %vm78, %v68, 0.0
  %242 = vadd.xlane.f32.xlu0 %v241
  %v243 = vpop.xlane.xlu0 %242
  %v244 = vsel %vm78, %v69, 0.0
  %245 = vadd.xlane.f32.xlu0 %v244
  %v246 = vpop.xlane.xlu0 %245
  %v247 = vsel %vm78, %v70, 0.0
  %248 = vadd.xlane.f32.xlu0 %v247
  %v249 = vpop.xlane.xlu0 %248
  %v250 = vsel %vm78, %v71, 0.0
  %251 = vadd.xlane.f32.xlu0 %v250
  %v252 = vpop.xlane.xlu0 %251
  %v253 = vsel %vm78, %v72, 0.0
  %254 = vadd.xlane.f32.xlu0 %v253
  %v255 = vpop.xlane.xlu0 %254
  %v256 = vsel %vm78, %v73, 0.0
  %257 = vadd.xlane.f32.xlu0 %v256
  %v258 = vpop.xlane.xlu0 %257
  %v259 = vsel %vm78, %v74, 0.0
  %260 = vadd.xlane.f32.xlu0 %v259
  %v261 = vpop.xlane.xlu0 %260
  %v262 = vsel %vm78, %v75, 0.0
  %263 = vadd.xlane.f32.xlu0 %v262
  %v264 = vpop.xlane.xlu0 %263
  %v265 = vsel %vm78, %v76, 0.0
  %266 = vadd.xlane.f32.xlu0 %v265
  %v267 = vpop.xlane.xlu0 %266
  %v268 = vsel %vm78, %v77, 0.0
  %269 = vadd.xlane.f32.xlu0 %v268
  %v270 = vpop.xlane.xlu0 %269
  %v271 = vrcp.pop 8.0
  %v272 = vmul.f32 %v81, %v271
  %v273 = vmul.f32 %v84, %v271
  %v274 = vmul.f32 %v87, %v271
  %v275 = vmul.f32 %v90, %v271
  %v276 = vmul.f32 %v93, %v271
  %v277 = vmul.f32 %v96, %v271
  %v278 = vmul.f32 %v99, %v271
  %v279 = vmul.f32 %v102, %v271
  %v280 = vmul.f32 %v105, %v271
  %v281 = vmul.f32 %v108, %v271
  %v282 = vmul.f32 %v111, %v271
  %v283 = vmul.f32 %v114, %v271
  %v284 = vmul.f32 %v117, %v271
  %v285 = vmul.f32 %v120, %v271
  %v286 = vmul.f32 %v123, %v271
  %v287 = vmul.f32 %v126, %v271
  %v288 = vmul.f32 %v129, %v271
  %v289 = vmul.f32 %v132, %v271
  %v290 = vmul.f32 %v135, %v271
  %v291 = vmul.f32 %v138, %v271
  %v292 = vmul.f32 %v141, %v271
  %v293 = vmul.f32 %v144, %v271
  %v294 = vmul.f32 %v147, %v271
  %v295 = vmul.f32 %v150, %v271
  %v296 = vmul.f32 %v153, %v271
  %v297 = vmul.f32 %v156, %v271
  %v298 = vmul.f32 %v159, %v271
  %v299 = vmul.f32 %v162, %v271
  %v300 = vmul.f32 %v165, %v271
  %v301 = vmul.f32 %v168, %v271
  %v302 = vmul.f32 %v171, %v271
  %v303 = vmul.f32 %v174, %v271
  %v304 = vmul.f32 %v177, %v271
  %v305 = vmul.f32 %v180, %v271
  %v306 = vmul.f32 %v183, %v271
  %v307 = vmul.f32 %v186, %v271
  %v308 = vmul.f32 %v189, %v271
  %v309 = vmul.f32 %v192, %v271
  %v310 = vmul.f32 %v195, %v271
  %v311 = vmul.f32 %v198, %v271
  %v312 = vmul.f32 %v201, %v271
  %v313 = vmul.f32 %v204, %v271
  %v314 = vmul.f32 %v207, %v271
  %v315 = vmul.f32 %v210, %v271
  %v316 = vmul.f32 %v213, %v271
  %v317 = vmul.f32 %v216, %v271
  %v318 = vmul.f32 %v219, %v271
  %v319 = vmul.f32 %v222, %v271
  %v320 = vmul.f32 %v225, %v271
  %v321 = vmul.f32 %v228, %v271
  %v322 = vmul.f32 %v231, %v271
  %v323 = vmul.f32 %v234, %v271
  %v324 = vmul.f32 %v237, %v271
  %v325 = vmul.f32 %v240, %v271
  %v326 = vmul.f32 %v243, %v271
  %v327 = vmul.f32 %v246, %v271
  %v328 = vmul.f32 %v249, %v271
  %v329 = vmul.f32 %v252, %v271
  %v330 = vmul.f32 %v255, %v271
  %v331 = vmul.f32 %v258, %v271
  %v332 = vmul.f32 %v261, %v271
  %v333 = vmul.f32 %v264, %v271
  %v334 = vmul.f32 %v267, %v271
  %v335 = vmul.f32 %v270, %v271
  %v336 = vsub.f32 %v14, %v272
  %v337 = vsub.f32 %v15, %v273
  %v338 = vsub.f32 %v16, %v274
  %v339 = vsub.f32 %v17, %v275
  %v340 = vsub.f32 %v18, %v276
  %v341 = vsub.f32 %v19, %v277
  %v342 = vsub.f32 %v20, %v278
  %v343 = vsub.f32 %v21, %v279
  %v344 = vsub.f32 %v22, %v280
  %v345 = vsub.f32 %v23, %v281
  %v346 = vsub.f32 %v24, %v282
  %v347 = vsub.f32 %v25, %v283
  %v348 = vsub.f32 %v26, %v284
  %v349 = vsub.f32 %v27, %v285
  %v350 = vsub.f32 %v28, %v286
  %v351 = vsub.f32 %v29, %v287
  %v352 = vsub.f32 %v30, %v288
  %v353 = vsub.f32 %v31, %v289
  %v354 = vsub.f32 %v32, %v290
  %v355 = vsub.f32 %v33, %v291
  %v356 = vsub.f32 %v34, %v292
  %v357 = vsub.f32 %v35, %v293
  %v358 = vsub.f32 %v36, %v294
  %v359 = vsub.f32 %v37, %v295
  %v360 = vsub.f32 %v38, %v296
  %v361 = vsub.f32 %v39, %v297
  %v362 = vsub.f32 %v40, %v298
  %v363 = vsub.f32 %v41, %v299
  %v364 = vsub.f32 %v42, %v300
  %v365 = vsub.f32 %v43, %v301
  %v366 = vsub.f32 %v44, %v302
  %v367 = vsub.f32 %v45, %v303
  %v368 = vsub.f32 %v46, %v304
  %v369 = vsub.f32 %v47, %v305
  %v370 = vsub.f32 %v48, %v306
  %v371 = vsub.f32 %v49, %v307
  %v372 = vsub.f32 %v50, %v308
  %v373 = vsub.f32 %v51, %v309
  %v374 = vsub.f32 %v52, %v310
  %v375 = vsub.f32 %v53, %v311
  %v376 = vsub.f32 %v54, %v312
  %v377 = vsub.f32 %v55, %v313
  %v378 = vsub.f32 %v56, %v314
  %v379 = vsub.f32 %v57, %v315
  %v380 = vsub.f32 %v58, %v316
  %v381 = vsub.f32 %v59, %v317
  %v382 = vsub.f32 %v60, %v318
  %v383 = vsub.f32 %v61, %v319
  %v384 = vsub.f32 %v62, %v320
  %v385 = vsub.f32 %v63, %v321
  %v386 = vsub.f32 %v64, %v322
  %v387 = vsub.f32 %v65, %v323
  %v388 = vsub.f32 %v66, %v324
  %v389 = vsub.f32 %v67, %v325
  %v390 = vsub.f32 %v68, %v326
  %v391 = vsub.f32 %v69, %v327
  %v392 = vsub.f32 %v70, %v328
  %v393 = vsub.f32 %v71, %v329
  %v394 = vsub.f32 %v72, %v330
  %v395 = vsub.f32 %v73, %v331
  %v396 = vsub.f32 %v74, %v332
  %v397 = vsub.f32 %v75, %v333
  %v398 = vsub.f32 %v76, %v334
  %v399 = vsub.f32 %v77, %v335
  %v400 = vmul.f32 %v336, %v336
  %v401 = vmul.f32 %v337, %v337
  %v402 = vmul.f32 %v338, %v338
  %v403 = vmul.f32 %v339, %v339
  %v404 = vmul.f32 %v340, %v340
  %v405 = vmul.f32 %v341, %v341
  %v406 = vmul.f32 %v342, %v342
  %v407 = vmul.f32 %v343, %v343
  %v408 = vmul.f32 %v344, %v344
  %v409 = vmul.f32 %v345, %v345
  %v410 = vmul.f32 %v346, %v346
  %v411 = vmul.f32 %v347, %v347
  %v412 = vmul.f32 %v348, %v348
  %v413 = vmul.f32 %v349, %v349
  %v414 = vmul.f32 %v350, %v350
  %v415 = vmul.f32 %v351, %v351
  %v416 = vmul.f32 %v352, %v352
  %v417 = vmul.f32 %v353, %v353
  %v418 = vmul.f32 %v354, %v354
  %v419 = vmul.f32 %v355, %v355
  %v420 = vmul.f32 %v356, %v356
  %v421 = vmul.f32 %v357, %v357
  %v422 = vmul.f32 %v358, %v358
  %v423 = vmul.f32 %v359, %v359
  %v424 = vmul.f32 %v360, %v360
  %v425 = vmul.f32 %v361, %v361
  %v426 = vmul.f32 %v362, %v362
  %v427 = vmul.f32 %v363, %v363
  %v428 = vmul.f32 %v364, %v364
  %v429 = vmul.f32 %v365, %v365
  %v430 = vmul.f32 %v366, %v366
  %v431 = vmul.f32 %v367, %v367
  %v432 = vmul.f32 %v368, %v368
  %v433 = vmul.f32 %v369, %v369
  %v434 = vmul.f32 %v370, %v370
  %v435 = vmul.f32 %v371, %v371
  %v436 = vmul.f32 %v372, %v372
  %v437 = vmul.f32 %v373, %v373
  %v438 = vmul.f32 %v374, %v374
  %v439 = vmul.f32 %v375, %v375
  %v440 = vmul.f32 %v376, %v376
  %v441 = vmul.f32 %v377, %v377
  %v442 = vmul.f32 %v378, %v378
  %v443 = vmul.f32 %v379, %v379
  %v444 = vmul.f32 %v380, %v380
  %v445 = vmul.f32 %v381, %v381
  %v446 = vmul.f32 %v382, %v382
  %v447 = vmul.f32 %v383, %v383
  %v448 = vmul.f32 %v384, %v384
  %v449 = vmul.f32 %v385, %v385
  %v450 = vmul.f32 %v386, %v386
  %v451 = vmul.f32 %v387, %v387
  %v452 = vmul.f32 %v388, %v388
  %v453 = vmul.f32 %v389, %v389
  %v454 = vmul.f32 %v390, %v390
  %v455 = vmul.f32 %v391, %v391
  %v456 = vmul.f32 %v392, %v392
  %v457 = vmul.f32 %v393, %v393
  %v458 = vmul.f32 %v394, %v394
  %v459 = vmul.f32 %v395, %v395
  %v460 = vmul.f32 %v396, %v396
  %v461 = vmul.f32 %v397, %v397
  %v462 = vmul.f32 %v398, %v398
  %v463 = vmul.f32 %v399, %v399
  %v464 = vsel %vm78, %v400, 0.0
  %465 = vadd.xlane.f32.xlu0 %v464
  %v466 = vpop.xlane.xlu0 %465
  %v467 = vsel %vm78, %v401, 0.0
  %468 = vadd.xlane.f32.xlu0 %v467
  %v469 = vpop.xlane.xlu0 %468
  %v470 = vsel %vm78, %v402, 0.0
  %471 = vadd.xlane.f32.xlu0 %v470
  %v472 = vpop.xlane.xlu0 %471
  %v473 = vsel %vm78, %v403, 0.0
  %474 = vadd.xlane.f32.xlu0 %v473
  %v475 = vpop.xlane.xlu0 %474
  %v476 = vsel %vm78, %v404, 0.0
  %477 = vadd.xlane.f32.xlu0 %v476
  %v478 = vpop.xlane.xlu0 %477
  %v479 = vsel %vm78, %v405, 0.0
  %480 = vadd.xlane.f32.xlu0 %v479
  %v481 = vpop.xlane.xlu0 %480
  %v482 = vsel %vm78, %v406, 0.0
  %483 = vadd.xlane.f32.xlu0 %v482
  %v484 = vpop.xlane.xlu0 %483
  %v485 = vsel %vm78, %v407, 0.0
  %486 = vadd.xlane.f32.xlu0 %v485
  %v487 = vpop.xlane.xlu0 %486
  %v488 = vsel %vm78, %v408, 0.0
  %489 = vadd.xlane.f32.xlu0 %v488
  %v490 = vpop.xlane.xlu0 %489
  %v491 = vsel %vm78, %v409, 0.0
  %492 = vadd.xlane.f32.xlu0 %v491
  %v493 = vpop.xlane.xlu0 %492
  %v494 = vsel %vm78, %v410, 0.0
  %495 = vadd.xlane.f32.xlu0 %v494
  %v496 = vpop.xlane.xlu0 %495
  %v497 = vsel %vm78, %v411, 0.0
  %498 = vadd.xlane.f32.xlu0 %v497
  %v499 = vpop.xlane.xlu0 %498
  %v500 = vsel %vm78, %v412, 0.0
  %501 = vadd.xlane.f32.xlu0 %v500
  %v502 = vpop.xlane.xlu0 %501
  %v503 = vsel %vm78, %v413, 0.0
  %504 = vadd.xlane.f32.xlu0 %v503
  %v505 = vpop.xlane.xlu0 %504
  %v506 = vsel %vm78, %v414, 0.0
  %507 = vadd.xlane.f32.xlu0 %v506
  %v508 = vpop.xlane.xlu0 %507
  %v509 = vsel %vm78, %v415, 0.0
  %510 = vadd.xlane.f32.xlu0 %v509
  %v511 = vpop.xlane.xlu0 %510
  %v512 = vsel %vm78, %v416, 0.0
  %513 = vadd.xlane.f32.xlu0 %v512
  %v514 = vpop.xlane.xlu0 %513
  %v515 = vsel %vm78, %v417, 0.0
  %516 = vadd.xlane.f32.xlu0 %v515
  %v517 = vpop.xlane.xlu0 %516
  %v518 = vsel %vm78, %v418, 0.0
  %519 = vadd.xlane.f32.xlu0 %v518
  %v520 = vpop.xlane.xlu0 %519
  %v521 = vsel %vm78, %v419, 0.0
  %522 = vadd.xlane.f32.xlu0 %v521
  %v523 = vpop.xlane.xlu0 %522
  %v524 = vsel %vm78, %v420, 0.0
  %525 = vadd.xlane.f32.xlu0 %v524
  %v526 = vpop.xlane.xlu0 %525
  %v527 = vsel %vm78, %v421, 0.0
  %528 = vadd.xlane.f32.xlu0 %v527
  %v529 = vpop.xlane.xlu0 %528
  %v530 = vsel %vm78, %v422, 0.0
  %531 = vadd.xlane.f32.xlu0 %v530
  %v532 = vpop.xlane.xlu0 %531
  %v533 = vsel %vm78, %v423, 0.0
  %534 = vadd.xlane.f32.xlu0 %v533
  %v535 = vpop.xlane.xlu0 %534
  %v536 = vsel %vm78, %v424, 0.0
  %537 = vadd.xlane.f32.xlu0 %v536
  %v538 = vpop.xlane.xlu0 %537
  %v539 = vsel %vm78, %v425, 0.0
  %540 = vadd.xlane.f32.xlu0 %v539
  %v541 = vpop.xlane.xlu0 %540
  %v542 = vsel %vm78, %v426, 0.0
  %543 = vadd.xlane.f32.xlu0 %v542
  %v544 = vpop.xlane.xlu0 %543
  %v545 = vsel %vm78, %v427, 0.0
  %546 = vadd.xlane.f32.xlu0 %v545
  %v547 = vpop.xlane.xlu0 %546
  %v548 = vsel %vm78, %v428, 0.0
  %549 = vadd.xlane.f32.xlu0 %v548
  %v550 = vpop.xlane.xlu0 %549
  %v551 = vsel %vm78, %v429, 0.0
  %552 = vadd.xlane.f32.xlu0 %v551
  %v553 = vpop.xlane.xlu0 %552
  %v554 = vsel %vm78, %v430, 0.0
  %555 = vadd.xlane.f32.xlu0 %v554
  %v556 = vpop.xlane.xlu0 %555
  %v557 = vsel %vm78, %v431, 0.0
  %558 = vadd.xlane.f32.xlu0 %v557
  %v559 = vpop.xlane.xlu0 %558
  %v560 = vsel %vm78, %v432, 0.0
  %561 = vadd.xlane.f32.xlu0 %v560
  %v562 = vpop.xlane.xlu0 %561
  %v563 = vsel %vm78, %v433, 0.0
  %564 = vadd.xlane.f32.xlu0 %v563
  %v565 = vpop.xlane.xlu0 %564
  %v566 = vsel %vm78, %v434, 0.0
  %567 = vadd.xlane.f32.xlu0 %v566
  %v568 = vpop.xlane.xlu0 %567
  %v569 = vsel %vm78, %v435, 0.0
  %570 = vadd.xlane.f32.xlu0 %v569
  %v571 = vpop.xlane.xlu0 %570
  %v572 = vsel %vm78, %v436, 0.0
  %573 = vadd.xlane.f32.xlu0 %v572
  %v574 = vpop.xlane.xlu0 %573
  %v575 = vsel %vm78, %v437, 0.0
  %576 = vadd.xlane.f32.xlu0 %v575
  %v577 = vpop.xlane.xlu0 %576
  %v578 = vsel %vm78, %v438, 0.0
  %579 = vadd.xlane.f32.xlu0 %v578
  %v580 = vpop.xlane.xlu0 %579
  %v581 = vsel %vm78, %v439, 0.0
  %582 = vadd.xlane.f32.xlu0 %v581
  %v583 = vpop.xlane.xlu0 %582
  %v584 = vsel %vm78, %v440, 0.0
  %585 = vadd.xlane.f32.xlu0 %v584
  %v586 = vpop.xlane.xlu0 %585
  %v587 = vsel %vm78, %v441, 0.0
  %588 = vadd.xlane.f32.xlu0 %v587
  %v589 = vpop.xlane.xlu0 %588
  %v590 = vsel %vm78, %v442, 0.0
  %591 = vadd.xlane.f32.xlu0 %v590
  %v592 = vpop.xlane.xlu0 %591
  %v593 = vsel %vm78, %v443, 0.0
  %594 = vadd.xlane.f32.xlu0 %v593
  %v595 = vpop.xlane.xlu0 %594
  %v596 = vsel %vm78, %v444, 0.0
  %597 = vadd.xlane.f32.xlu0 %v596
  %v598 = vpop.xlane.xlu0 %597
  %v599 = vsel %vm78, %v445, 0.0
  %600 = vadd.xlane.f32.xlu0 %v599
  %v601 = vpop.xlane.xlu0 %600
  %v602 = vsel %vm78, %v446, 0.0
  %603 = vadd.xlane.f32.xlu0 %v602
  %v604 = vpop.xlane.xlu0 %603
  %v605 = vsel %vm78, %v447, 0.0
  %606 = vadd.xlane.f32.xlu0 %v605
  %v607 = vpop.xlane.xlu0 %606
  %v608 = vsel %vm78, %v448, 0.0
  %609 = vadd.xlane.f32.xlu0 %v608
  %v610 = vpop.xlane.xlu0 %609
  %v611 = vsel %vm78, %v449, 0.0
  %612 = vadd.xlane.f32.xlu0 %v611
  %v613 = vpop.xlane.xlu0 %612
  %v614 = vsel %vm78, %v450, 0.0
  %615 = vadd.xlane.f32.xlu0 %v614
  %v616 = vpop.xlane.xlu0 %615
  %v617 = vsel %vm78, %v451, 0.0
  %618 = vadd.xlane.f32.xlu0 %v617
  %v619 = vpop.xlane.xlu0 %618
  %v620 = vsel %vm78, %v452, 0.0
  %621 = vadd.xlane.f32.xlu0 %v620
  %v622 = vpop.xlane.xlu0 %621
  %v623 = vsel %vm78, %v453, 0.0
  %624 = vadd.xlane.f32.xlu0 %v623
  %v625 = vpop.xlane.xlu0 %624
  %v626 = vsel %vm78, %v454, 0.0
  %627 = vadd.xlane.f32.xlu0 %v626
  %v628 = vpop.xlane.xlu0 %627
  %v629 = vsel %vm78, %v455, 0.0
  %630 = vadd.xlane.f32.xlu0 %v629
  %v631 = vpop.xlane.xlu0 %630
  %v632 = vsel %vm78, %v456, 0.0
  %633 = vadd.xlane.f32.xlu0 %v632
  %v634 = vpop.xlane.xlu0 %633
  %v635 = vsel %vm78, %v457, 0.0
  %636 = vadd.xlane.f32.xlu0 %v635
  %v637 = vpop.xlane.xlu0 %636
  %v638 = vsel %vm78, %v458, 0.0
  %639 = vadd.xlane.f32.xlu0 %v638
  %v640 = vpop.xlane.xlu0 %639
  %v641 = vsel %vm78, %v459, 0.0
  %642 = vadd.xlane.f32.xlu0 %v641
  %v643 = vpop.xlane.xlu0 %642
  %v644 = vsel %vm78, %v460, 0.0
  %645 = vadd.xlane.f32.xlu0 %v644
  %v646 = vpop.xlane.xlu0 %645
  %v647 = vsel %vm78, %v461, 0.0
  %648 = vadd.xlane.f32.xlu0 %v647
  %v649 = vpop.xlane.xlu0 %648
  %v650 = vsel %vm78, %v462, 0.0
  %651 = vadd.xlane.f32.xlu0 %v650
  %v652 = vpop.xlane.xlu0 %651
  %v653 = vsel %vm78, %v463, 0.0
  %654 = vadd.xlane.f32.xlu0 %v653
  %v655 = vpop.xlane.xlu0 %654
  %v656 = vmul.f32 %v466, %v271
  %v657 = vmul.f32 %v469, %v271
  %v658 = vmul.f32 %v472, %v271
  %v659 = vmul.f32 %v475, %v271
  %v660 = vmul.f32 %v478, %v271
  %v661 = vmul.f32 %v481, %v271
  %v662 = vmul.f32 %v484, %v271
  %v663 = vmul.f32 %v487, %v271
  %v664 = vmul.f32 %v490, %v271
  %v665 = vmul.f32 %v493, %v271
  %v666 = vmul.f32 %v496, %v271
  %v667 = vmul.f32 %v499, %v271
  %v668 = vmul.f32 %v502, %v271
  %v669 = vmul.f32 %v505, %v271
  %v670 = vmul.f32 %v508, %v271
  %v671 = vmul.f32 %v511, %v271
  %v672 = vmul.f32 %v514, %v271
  %v673 = vmul.f32 %v517, %v271
  %v674 = vmul.f32 %v520, %v271
  %v675 = vmul.f32 %v523, %v271
  %v676 = vmul.f32 %v526, %v271
  %v677 = vmul.f32 %v529, %v271
  %v678 = vmul.f32 %v532, %v271
  %v679 = vmul.f32 %v535, %v271
  %v680 = vmul.f32 %v538, %v271
  %v681 = vmul.f32 %v541, %v271
  %v682 = vmul.f32 %v544, %v271
  %v683 = vmul.f32 %v547, %v271
  %v684 = vmul.f32 %v550, %v271
  %v685 = vmul.f32 %v553, %v271
  %v686 = vmul.f32 %v556, %v271
  %v687 = vmul.f32 %v559, %v271
  %v688 = vmul.f32 %v562, %v271
  %v689 = vmul.f32 %v565, %v271
  %v690 = vmul.f32 %v568, %v271
  %v691 = vmul.f32 %v571, %v271
  %v692 = vmul.f32 %v574, %v271
  %v693 = vmul.f32 %v577, %v271
  %v694 = vmul.f32 %v580, %v271
  %v695 = vmul.f32 %v583, %v271
  %v696 = vmul.f32 %v586, %v271
  %v697 = vmul.f32 %v589, %v271
  %v698 = vmul.f32 %v592, %v271
  %v699 = vmul.f32 %v595, %v271
  %v700 = vmul.f32 %v598, %v271
  %v701 = vmul.f32 %v601, %v271
  %v702 = vmul.f32 %v604, %v271
  %v703 = vmul.f32 %v607, %v271
  %v704 = vmul.f32 %v610, %v271
  %v705 = vmul.f32 %v613, %v271
  %v706 = vmul.f32 %v616, %v271
  %v707 = vmul.f32 %v619, %v271
  %v708 = vmul.f32 %v622, %v271
  %v709 = vmul.f32 %v625, %v271
  %v710 = vmul.f32 %v628, %v271
  %v711 = vmul.f32 %v631, %v271
  %v712 = vmul.f32 %v634, %v271
  %v713 = vmul.f32 %v637, %v271
  %v714 = vmul.f32 %v640, %v271
  %v715 = vmul.f32 %v643, %v271
  %v716 = vmul.f32 %v646, %v271
  %v717 = vmul.f32 %v649, %v271
  %v718 = vmul.f32 %v652, %v271
  %v719 = vmul.f32 %v655, %v271
  %v720 = vadd.f32 %v656, 1e-05
  %v721 = vadd.f32 %v657, 1e-05
  %v722 = vadd.f32 %v658, 1e-05
  %v723 = vadd.f32 %v659, 1e-05
  %v724 = vadd.f32 %v660, 1e-05
  %v725 = vadd.f32 %v661, 1e-05
  %v726 = vadd.f32 %v662, 1e-05
  %v727 = vadd.f32 %v663, 1e-05
  %v728 = vadd.f32 %v664, 1e-05
  %v729 = vadd.f32 %v665, 1e-05
  %v730 = vadd.f32 %v666, 1e-05
  %v731 = vadd.f32 %v667, 1e-05
  %v732 = vadd.f32 %v668, 1e-05
  %v733 = vadd.f32 %v669, 1e-05
  %v734 = vadd.f32 %v670, 1e-05
  %v735 = vadd.f32 %v671, 1e-05
  %v736 = vadd.f32 %v672, 1e-05
  %v737 = vadd.f32 %v673, 1e-05
  %v738 = vadd.f32 %v674, 1e-05
  %v739 = vadd.f32 %v675, 1e-05
  %v740 = vadd.f32 %v676, 1e-05
  %v741 = vadd.f32 %v677, 1e-05
  %v742 = vadd.f32 %v678, 1e-05
  %v743 = vadd.f32 %v679, 1e-05
  %v744 = vadd.f32 %v680, 1e-05
  %v745 = vadd.f32 %v681, 1e-05
  %v746 = vadd.f32 %v682, 1e-05
  %v747 = vadd.f32 %v683, 1e-05
  %v748 = vadd.f32 %v684, 1e-05
  %v749 = vadd.f32 %v685, 1e-05
  %v750 = vadd.f32 %v686, 1e-05
  %v751 = vadd.f32 %v687, 1e-05
  %v752 = vadd.f32 %v688, 1e-05
  %v753 = vadd.f32 %v689, 1e-05
  %v754 = vadd.f32 %v690, 1e-05
  %v755 = vadd.f32 %v691, 1e-05
  %v756 = vadd.f32 %v692, 1e-05
  %v757 = vadd.f32 %v693, 1e-05
  %v758 = vadd.f32 %v694, 1e-05
  %v759 = vadd.f32 %v695, 1e-05
  %v760 = vadd.f32 %v696, 1e-05
  %v761 = vadd.f32 %v697, 1e-05
  %v762 = vadd.f32 %v698, 1e-05
  %v763 = vadd.f32 %v699, 1e-05
  %v764 = vadd.f32 %v700, 1e-05
  %v765 = vadd.f32 %v701, 1e-05
  %v766 = vadd.f32 %v702, 1e-05
  %v767 = vadd.f32 %v703, 1e-05
  %v768 = vadd.f32 %v704, 1e-05
  %v769 = vadd.f32 %v705, 1e-05
  %v770 = vadd.f32 %v706, 1e-05
  %v771 = vadd.f32 %v707, 1e-05
  %v772 = vadd.f32 %v708, 1e-05
  %v773 = vadd.f32 %v709, 1e-05
  %v774 = vadd.f32 %v710, 1e-05
  %v775 = vadd.f32 %v711, 1e-05
  %v776 = vadd.f32 %v712, 1e-05
  %v777 = vadd.f32 %v713, 1e-05
  %v778 = vadd.f32 %v714, 1e-05
  %v779 = vadd.f32 %v715, 1e-05
  %v780 = vadd.f32 %v716, 1e-05
  %v781 = vadd.f32 %v717, 1e-05
  %v782 = vadd.f32 %v718, 1e-05
  %v783 = vadd.f32 %v719, 1e-05
  %v784 = vrsqrt.pop %v720
  %v785 = vrsqrt.pop %v721
  %v786 = vrsqrt.pop %v722
  %v787 = vrsqrt.pop %v723
  %v788 = vrsqrt.pop %v724
  %v789 = vrsqrt.pop %v725
  %v790 = vrsqrt.pop %v726
  %v791 = vrsqrt.pop %v727
  %v792 = vrsqrt.pop %v728
  %v793 = vrsqrt.pop %v729
  %v794 = vrsqrt.pop %v730
  %v795 = vrsqrt.pop %v731
  %v796 = vrsqrt.pop %v732
  %v797 = vrsqrt.pop %v733
  %v798 = vrsqrt.pop %v734
  %v799 = vrsqrt.pop %v735
  %v800 = vrsqrt.pop %v736
  %v801 = vrsqrt.pop %v737
  %v802 = vrsqrt.pop %v738
  %v803 = vrsqrt.pop %v739
  %v804 = vrsqrt.pop %v740
  %v805 = vrsqrt.pop %v741
  %v806 = vrsqrt.pop %v742
  %v807 = vrsqrt.pop %v743
  %v808 = vrsqrt.pop %v744
  %v809 = vrsqrt.pop %v745
  %v810 = vrsqrt.pop %v746
  %v811 = vrsqrt.pop %v747
  %v812 = vrsqrt.pop %v748
  %v813 = vrsqrt.pop %v749
  %v814 = vrsqrt.pop %v750
  %v815 = vrsqrt.pop %v751
  %v816 = vrsqrt.pop %v752
  %v817 = vrsqrt.pop %v753
  %v818 = vrsqrt.pop %v754
  %v819 = vrsqrt.pop %v755
  %v820 = vrsqrt.pop %v756
  %v821 = vrsqrt.pop %v757
  %v822 = vrsqrt.pop %v758
  %v823 = vrsqrt.pop %v759
  %v824 = vrsqrt.pop %v760
  %v825 = vrsqrt.pop %v761
  %v826 = vrsqrt.pop %v762
  %v827 = vrsqrt.pop %v763
  %v828 = vrsqrt.pop %v764
  %v829 = vrsqrt.pop %v765
  %v830 = vrsqrt.pop %v766
  %v831 = vrsqrt.pop %v767
  %v832 = vrsqrt.pop %v768
  %v833 = vrsqrt.pop %v769
  %v834 = vrsqrt.pop %v770
  %v835 = vrsqrt.pop %v771
  %v836 = vrsqrt.pop %v772
  %v837 = vrsqrt.pop %v773
  %v838 = vrsqrt.pop %v774
  %v839 = vrsqrt.pop %v775
  %v840 = vrsqrt.pop %v776
  %v841 = vrsqrt.pop %v777
  %v842 = vrsqrt.pop %v778
  %v843 = vrsqrt.pop %v779
  %v844 = vrsqrt.pop %v780
  %v845 = vrsqrt.pop %v781
  %v846 = vrsqrt.pop %v782
  %v847 = vrsqrt.pop %v783
  %v848 = vmul.f32 %v336, %v784
  %v849 = vmul.f32 %v337, %v785
  %v850 = vmul.f32 %v338, %v786
  %v851 = vmul.f32 %v339, %v787
  %v852 = vmul.f32 %v340, %v788
  %v853 = vmul.f32 %v341, %v789
  %v854 = vmul.f32 %v342, %v790
  %v855 = vmul.f32 %v343, %v791
  %v856 = vmul.f32 %v344, %v792
  %v857 = vmul.f32 %v345, %v793
  %v858 = vmul.f32 %v346, %v794
  %v859 = vmul.f32 %v347, %v795
  %v860 = vmul.f32 %v348, %v796
  %v861 = vmul.f32 %v349, %v797
  %v862 = vmul.f32 %v350, %v798
  %v863 = vmul.f32 %v351, %v799
  %v864 = vmul.f32 %v352, %v800
  %v865 = vmul.f32 %v353, %v801
  %v866 = vmul.f32 %v354, %v802
  %v867 = vmul.f32 %v355, %v803
  %v868 = vmul.f32 %v356, %v804
  %v869 = vmul.f32 %v357, %v805
  %v870 = vmul.f32 %v358, %v806
  %v871 = vmul.f32 %v359, %v807
  %v872 = vmul.f32 %v360, %v808
  %v873 = vmul.f32 %v361, %v809
  %v874 = vmul.f32 %v362, %v810
  %v875 = vmul.f32 %v363, %v811
  %v876 = vmul.f32 %v364, %v812
  %v877 = vmul.f32 %v365, %v813
  %v878 = vmul.f32 %v366, %v814
  %v879 = vmul.f32 %v367, %v815
  %v880 = vmul.f32 %v368, %v816
  %v881 = vmul.f32 %v369, %v817
  %v882 = vmul.f32 %v370, %v818
  %v883 = vmul.f32 %v371, %v819
  %v884 = vmul.f32 %v372, %v820
  %v885 = vmul.f32 %v373, %v821
  %v886 = vmul.f32 %v374, %v822
  %v887 = vmul.f32 %v375, %v823
  %v888 = vmul.f32 %v376, %v824
  %v889 = vmul.f32 %v377, %v825
  %v890 = vmul.f32 %v378, %v826
  %v891 = vmul.f32 %v379, %v827
  %v892 = vmul.f32 %v380, %v828
  %v893 = vmul.f32 %v381, %v829
  %v894 = vmul.f32 %v382, %v830
  %v895 = vmul.f32 %v383, %v831
  %v896 = vmul.f32 %v384, %v832
  %v897 = vmul.f32 %v385, %v833
  %v898 = vmul.f32 %v386, %v834
  %v899 = vmul.f32 %v387, %v835
  %v900 = vmul.f32 %v388, %v836
  %v901 = vmul.f32 %v389, %v837
  %v902 = vmul.f32 %v390, %v838
  %v903 = vmul.f32 %v391, %v839
  %v904 = vmul.f32 %v392, %v840
  %v905 = vmul.f32 %v393, %v841
  %v906 = vmul.f32 %v394, %v842
  %v907 = vmul.f32 %v395, %v843
  %v908 = vmul.f32 %v396, %v844
  %v909 = vmul.f32 %v397, %v845
  %v910 = vmul.f32 %v398, %v846
  %v911 = vmul.f32 %v399, %v847
  %v912 = vld [vmem:[%s1] sm:$0x1]
  %v914 = vlaneseq
  %v915 = vshrl.u32 %v914, 7
  %v916 = vsub.s32 0, %v915
  %v917 = vrot.slane %v912, %v916
  %v919 = vmul.f32 %v848, %v917
  %v920 = vmul.f32 %v849, %v917
  %v921 = vmul.f32 %v850, %v917
  %v922 = vmul.f32 %v851, %v917
  %v923 = vmul.f32 %v852, %v917
  %v924 = vmul.f32 %v853, %v917
  %v925 = vmul.f32 %v854, %v917
  %v926 = vmul.f32 %v855, %v917
  %v927 = vmul.f32 %v856, %v917
  %v928 = vmul.f32 %v857, %v917
  %v929 = vmul.f32 %v858, %v917
  %v930 = vmul.f32 %v859, %v917
  %v931 = vmul.f32 %v860, %v917
  %v932 = vmul.f32 %v861, %v917
  %v933 = vmul.f32 %v862, %v917
  %v934 = vmul.f32 %v863, %v917
  %v935 = vmul.f32 %v864, %v917
  %v936 = vmul.f32 %v865, %v917
  %v937 = vmul.f32 %v866, %v917
  %v938 = vmul.f32 %v867, %v917
  %v939 = vmul.f32 %v868, %v917
  %v940 = vmul.f32 %v869, %v917
  %v941 = vmul.f32 %v870, %v917
  %v942 = vmul.f32 %v871, %v917
  %v943 = vmul.f32 %v872, %v917
  %v944 = vmul.f32 %v873, %v917
  %v945 = vmul.f32 %v874, %v917
  %v946 = vmul.f32 %v875, %v917
  %v947 = vmul.f32 %v876, %v917
  %v948 = vmul.f32 %v877, %v917
  %v949 = vmul.f32 %v878, %v917
  %v950 = vmul.f32 %v879, %v917
  %v951 = vmul.f32 %v880, %v917
  %v952 = vmul.f32 %v881, %v917
  %v953 = vmul.f32 %v882, %v917
  %v954 = vmul.f32 %v883, %v917
  %v955 = vmul.f32 %v884, %v917
  %v956 = vmul.f32 %v885, %v917
  %v957 = vmul.f32 %v886, %v917
  %v958 = vmul.f32 %v887, %v917
  %v959 = vmul.f32 %v888, %v917
  %v960 = vmul.f32 %v889, %v917
  %v961 = vmul.f32 %v890, %v917
  %v962 = vmul.f32 %v891, %v917
  %v963 = vmul.f32 %v892, %v917
  %v964 = vmul.f32 %v893, %v917
  %v965 = vmul.f32 %v894, %v917
  %v966 = vmul.f32 %v895, %v917
  %v967 = vmul.f32 %v896, %v917
  %v968 = vmul.f32 %v897, %v917
  %v969 = vmul.f32 %v898, %v917
  %v970 = vmul.f32 %v899, %v917
  %v971 = vmul.f32 %v900, %v917
  %v972 = vmul.f32 %v901, %v917
  %v973 = vmul.f32 %v902, %v917
  %v974 = vmul.f32 %v903, %v917
  %v975 = vmul.f32 %v904, %v917
  %v976 = vmul.f32 %v905, %v917
  %v977 = vmul.f32 %v906, %v917
  %v978 = vmul.f32 %v907, %v917
  %v979 = vmul.f32 %v908, %v917
  %v980 = vmul.f32 %v909, %v917
  %v981 = vmul.f32 %v910, %v917
  %v982 = vmul.f32 %v911, %v917
  %v983 = vld [vmem:[%s2] sm:$0x1]
  %v985 = vlaneseq
  %v986 = vshrl.u32 %v985, 7
  %v987 = vsub.s32 0, %v986
  %v988 = vrot.slane %v983, %v987
  %v990 = vadd.f32 %v919, %v988
  %v991 = vadd.f32 %v920, %v988
  %v992 = vadd.f32 %v921, %v988
  %v993 = vadd.f32 %v922, %v988
  %v994 = vadd.f32 %v923, %v988
  %v995 = vadd.f32 %v924, %v988
  %v996 = vadd.f32 %v925, %v988
  %v997 = vadd.f32 %v926, %v988
  %v998 = vadd.f32 %v927, %v988
  %v999 = vadd.f32 %v928, %v988
  %v1000 = vadd.f32 %v929, %v988
  %v1001 = vadd.f32 %v930, %v988
  %v1002 = vadd.f32 %v931, %v988
  %v1003 = vadd.f32 %v932, %v988
  %v1004 = vadd.f32 %v933, %v988
  %v1005 = vadd.f32 %v934, %v988
  %v1006 = vadd.f32 %v935, %v988
  %v1007 = vadd.f32 %v936, %v988
  %v1008 = vadd.f32 %v937, %v988
  %v1009 = vadd.f32 %v938, %v988
  %v1010 = vadd.f32 %v939, %v988
  %v1011 = vadd.f32 %v940, %v988
  %v1012 = vadd.f32 %v941, %v988
  %v1013 = vadd.f32 %v942, %v988
  %v1014 = vadd.f32 %v943, %v988
  %v1015 = vadd.f32 %v944, %v988
  %v1016 = vadd.f32 %v945, %v988
  %v1017 = vadd.f32 %v946, %v988
  %v1018 = vadd.f32 %v947, %v988
  %v1019 = vadd.f32 %v948, %v988
  %v1020 = vadd.f32 %v949, %v988
  %v1021 = vadd.f32 %v950, %v988
  %v1022 = vadd.f32 %v951, %v988
  %v1023 = vadd.f32 %v952, %v988
  %v1024 = vadd.f32 %v953, %v988
  %v1025 = vadd.f32 %v954, %v988
  %v1026 = vadd.f32 %v955, %v988
  %v1027 = vadd.f32 %v956, %v988
  %v1028 = vadd.f32 %v957, %v988
  %v1029 = vadd.f32 %v958, %v988
  %v1030 = vadd.f32 %v959, %v988
  %v1031 = vadd.f32 %v960, %v988
  %v1032 = vadd.f32 %v961, %v988
  %v1033 = vadd.f32 %v962, %v988
  %v1034 = vadd.f32 %v963, %v988
  %v1035 = vadd.f32 %v964, %v988
  %v1036 = vadd.f32 %v965, %v988
  %v1037 = vadd.f32 %v966, %v988
  %v1038 = vadd.f32 %v967, %v988
  %v1039 = vadd.f32 %v968, %v988
  %v1040 = vadd.f32 %v969, %v988
  %v1041 = vadd.f32 %v970, %v988
  %v1042 = vadd.f32 %v971, %v988
  %v1043 = vadd.f32 %v972, %v988
  %v1044 = vadd.f32 %v973, %v988
  %v1045 = vadd.f32 %v974, %v988
  %v1046 = vadd.f32 %v975, %v988
  %v1047 = vadd.f32 %v976, %v988
  %v1048 = vadd.f32 %v977, %v988
  %v1049 = vadd.f32 %v978, %v988
  %v1050 = vadd.f32 %v979, %v988
  %v1051 = vadd.f32 %v980, %v988
  %v1052 = vadd.f32 %v981, %v988
  %v1053 = vadd.f32 %v982, %v988
  %1054 = vst.msk [vmem:[%s3] sm:$0xff] %vm78, %v990
  %1055 = vst.msk [vmem:[%s3 + $0x8] sm:$0xff] %vm78, %v991
  %1056 = vst.msk [vmem:[%s3 + $0x10] sm:$0xff] %vm78, %v992
  %1057 = vst.msk [vmem:[%s3 + $0x18] sm:$0xff] %vm78, %v993
  %1058 = vst.msk [vmem:[%s3 + $0x20] sm:$0xff] %vm78, %v994
  %1059 = vst.msk [vmem:[%s3 + $0x28] sm:$0xff] %vm78, %v995
  %1060 = vst.msk [vmem:[%s3 + $0x30] sm:$0xff] %vm78, %v996
  %1061 = vst.msk [vmem:[%s3 + $0x38] sm:$0xff] %vm78, %v997
  %1062 = vst.msk [vmem:[%s3 + $0x40] sm:$0xff] %vm78, %v998
  %1063 = vst.msk [vmem:[%s3 + $0x48] sm:$0xff] %vm78, %v999
  %1064 = vst.msk [vmem:[%s3 + $0x50] sm:$0xff] %vm78, %v1000
  %1065 = vst.msk [vmem:[%s3 + $0x58] sm:$0xff] %vm78, %v1001
  %1066 = vst.msk [vmem:[%s3 + $0x60] sm:$0xff] %vm78, %v1002
  %1067 = vst.msk [vmem:[%s3 + $0x68] sm:$0xff] %vm78, %v1003
  %1068 = vst.msk [vmem:[%s3 + $0x70] sm:$0xff] %vm78, %v1004
  %1069 = vst.msk [vmem:[%s3 + $0x78] sm:$0xff] %vm78, %v1005
  %1070 = vst.msk [vmem:[%s3 + $0x80] sm:$0xff] %vm78, %v1006
  %1071 = vst.msk [vmem:[%s3 + $0x88] sm:$0xff] %vm78, %v1007
  %1072 = vst.msk [vmem:[%s3 + $0x90] sm:$0xff] %vm78, %v1008
  %1073 = vst.msk [vmem:[%s3 + $0x98] sm:$0xff] %vm78, %v1009
  %1074 = vst.msk [vmem:[%s3 + $0xa0] sm:$0xff] %vm78, %v1010
  %1075 = vst.msk [vmem:[%s3 + $0xa8] sm:$0xff] %vm78, %v1011
  %1076 = vst.msk [vmem:[%s3 + $0xb0] sm:$0xff] %vm78, %v1012
  %1077 = vst.msk [vmem:[%s3 + $0xb8] sm:$0xff] %vm78, %v1013
  %1078 = vst.msk [vmem:[%s3 + $0xc0] sm:$0xff] %vm78, %v1014
  %1079 = vst.msk [vmem:[%s3 + $0xc8] sm:$0xff] %vm78, %v1015
  %1080 = vst.msk [vmem:[%s3 + $0xd0] sm:$0xff] %vm78, %v1016
  %1081 = vst.msk [vmem:[%s3 + $0xd8] sm:$0xff] %vm78, %v1017
  %1082 = vst.msk [vmem:[%s3 + $0xe0] sm:$0xff] %vm78, %v1018
  %1083 = vst.msk [vmem:[%s3 + $0xe8] sm:$0xff] %vm78, %v1019
  %1084 = vst.msk [vmem:[%s3 + $0xf0] sm:$0xff] %vm78, %v1020
  %1085 = vst.msk [vmem:[%s3 + $0xf8] sm:$0xff] %vm78, %v1021
  %1086 = vst.msk [vmem:[%s3 + $0x100] sm:$0xff] %vm78, %v1022
  %1087 = vst.msk [vmem:[%s3 + $0x108] sm:$0xff] %vm78, %v1023
  %1088 = vst.msk [vmem:[%s3 + $0x110] sm:$0xff] %vm78, %v1024
  %1089 = vst.msk [vmem:[%s3 + $0x118] sm:$0xff] %vm78, %v1025
  %1090 = vst.msk [vmem:[%s3 + $0x120] sm:$0xff] %vm78, %v1026
  %1091 = vst.msk [vmem:[%s3 + $0x128] sm:$0xff] %vm78, %v1027
  %1092 = vst.msk [vmem:[%s3 + $0x130] sm:$0xff] %vm78, %v1028
  %1093 = vst.msk [vmem:[%s3 + $0x138] sm:$0xff] %vm78, %v1029
  %1094 = vst.msk [vmem:[%s3 + $0x140] sm:$0xff] %vm78, %v1030
  %1095 = vst.msk [vmem:[%s3 + $0x148] sm:$0xff] %vm78, %v1031
  %1096 = vst.msk [vmem:[%s3 + $0x150] sm:$0xff] %vm78, %v1032
  %1097 = vst.msk [vmem:[%s3 + $0x158] sm:$0xff] %vm78, %v1033
  %1098 = vst.msk [vmem:[%s3 + $0x160] sm:$0xff] %vm78, %v1034
  %1099 = vst.msk [vmem:[%s3 + $0x168] sm:$0xff] %vm78, %v1035
  %1100 = vst.msk [vmem:[%s3 + $0x170] sm:$0xff] %vm78, %v1036
  %1101 = vst.msk [vmem:[%s3 + $0x178] sm:$0xff] %vm78, %v1037
  %1102 = vst.msk [vmem:[%s3 + $0x180] sm:$0xff] %vm78, %v1038
  %1103 = vst.msk [vmem:[%s3 + $0x188] sm:$0xff] %vm78, %v1039
  %1104 = vst.msk [vmem:[%s3 + $0x190] sm:$0xff] %vm78, %v1040
  %1105 = vst.msk [vmem:[%s3 + $0x198] sm:$0xff] %vm78, %v1041
  %1106 = vst.msk [vmem:[%s3 + $0x1a0] sm:$0xff] %vm78, %v1042
  %1107 = vst.msk [vmem:[%s3 + $0x1a8] sm:$0xff] %vm78, %v1043
  %1108 = vst.msk [vmem:[%s3 + $0x1b0] sm:$0xff] %vm78, %v1044
  %1109 = vst.msk [vmem:[%s3 + $0x1b8] sm:$0xff] %vm78, %v1045
  %1110 = vst.msk [vmem:[%s3 + $0x1c0] sm:$0xff] %vm78, %v1046
  %1111 = vst.msk [vmem:[%s3 + $0x1c8] sm:$0xff] %vm78, %v1047
  %1112 = vst.msk [vmem:[%s3 + $0x1d0] sm:$0xff] %vm78, %v1048
  %1113 = vst.msk [vmem:[%s3 + $0x1d8] sm:$0xff] %vm78, %v1049
  %1114 = vst.msk [vmem:[%s3 + $0x1e0] sm:$0xff] %vm78, %v1050
  %1115 = vst.msk [vmem:[%s3 + $0x1e8] sm:$0xff] %vm78, %v1051
  %1116 = vst.msk [vmem:[%s3 + $0x1f0] sm:$0xff] %vm78, %v1052
  %1117 = vst.msk [vmem:[%s3 + $0x1f8] sm:$0xff] %vm78, %v1053
  // Predicated region
  $region14: #{sfi_forward.18} parent=0 // pred_check
    _
  $region15: #{sfi_forward.18} parent=0 // pred_check_branch
    %1119 = sbr.rel (0) target = $region17
  $region16: #{sfi_forward.18} parent=0 // pred_region
    _
  $region17: #{sfi_forward.18} parent=0 // pred_fallthru
    _
  // Predicated region
  $region18: #{sfi_forward.18} parent=0 // pred_check
    _
  $region19: #{sfi_forward.18} parent=0 // pred_check_branch
    %1121 = sbr.rel (0) target = $region21
  $region20: #{sfi_forward.18} parent=0 // pred_region
    _
  $region21: #{sfi_forward.18} parent=0 // pred_fallthru
    _

// kernel: sfi_forward.19
$region0: #{sfi_forward.19}
  #allocation0 [shape = 'u32[]', space=smem, size = 0x4, offset = 0x4, fixed_abs, tag = 'smem constant byte address 0x4 - core index']
  #allocation1 [shape = 'u32[144,128]{1,0:T(1,128)}', space=vmem, size = 0x12000, scoped, tag = 'internal scratch']
  #allocation2 [shape = 'f32[512,128]{1,0:T(8,128)}', space=vmem, size = 0x40000, scoped, tag = 'scratch operand']
  %s0 = inlined_call_operand.vmem [shape: bf16[2048,128], index: 0, kind: input, shape index: {}]
  %s1 = inlined_call_operand.vmem [shape: bf16[128,128], index: 1, kind: input, shape index: {}]
  %s2 = inlined_call_operand.vmem [shape: f32[1,128], index: 2, kind: input, shape index: {}]
  %s3 = inlined_call_operand.vmem [shape: f32[2048,128], index: 3, kind: output, shape index: {}]
  %s4 = sld [smem:[#allocation0]]
  $region53: #{sfi_forward.19} parent=0
    _
  %s6 = ssub.s32 1, %s4
  %s7 = scalar_select 0, %s6, %s4
  loop: start=0, step=1, limit=6
  $region2: #{sfi_forward.19} parent=0 // loop_pre_header
    _
  $region3: #{sfi_forward.19} parent=0 // loop_header
    %s9 = sphi 0, %s13
    %p10 = scmp.ge.s32.totalorder %s9, 6
    %s16 = sphi 0, %s35
    %s17 = sphi 0, %s31
    %s18 = sphi 0, %s27
    %s19 = sphi 0, %s16
    %s20 = sphi 0, %s17
    %s21 = sphi 0, %s18
    %s22 = sphi 0, %s19
    %s23 = sphi 0, %s20
    %s24 = sphi 0, %s21
    %s40 = sphi 0, %s42
    %s43 = sphi 0, %s40
    %s44 = sphi 0, %s43
    %s60 = sphi 0, %s44
    %s68 = sphi 0, %s70
    %s71 = sphi 0, %s68
    %s72 = sphi 0, %s71
    %s88 = sphi 0, %s72
    %s94 = sphi 0, %s96
    %s97 = sphi 0, %s94
    %s98 = sphi 0, %s97
    %s114 = sphi 0, %s98
    %s122 = sphi 0, %s124
    %s125 = sphi 0, %s122
    %s126 = sphi 0, %s125
    %s142 = sphi 0, %s126
  $region4: #{sfi_forward.19} parent=0 // loop_header_branch
    %12 = sbr.rel (%p10) target = $region8
  $region5: #{sfi_forward.19} parent=0 // loop_body
    %s14 = ssub.s32 %s9, 1
    %s15 = ssub.s32 %s9, 2
    %s25 = sadd.s32 1, %s18
    %p26 = scmp.ge.s32.totalorder %s25, 1
    %s27 = scalar_select %p26, 0, %s25
    %s28 = sadd.s32 1, %s17
    %s29 = scalar_select %p26, %s28, %s17
    %p30 = scmp.ge.s32.totalorder %s29, 1
    %s31 = scalar_select %p30, 0, %s29
    %s32 = sadd.s32 1, %s16
    %s33 = scalar_select %p30, %s32, %s16
    %p34 = scmp.ge.s32.totalorder %s33, 4
    %s35 = scalar_select %p34, 0, %s33
    %s36 = ssub.s32 %s16, %s35
    %s37 = ssub.s32 %s18, %s27
    %s38 = sor.u32 %s36, %s37
    %p39 = scmp.eq.s32.totalorder %s38, 0
    %s41 = sadd.s32 %s40, 1
    %s42 = scalar_select %p39, %s40, %s41
    %p45 = pneg %p39
    %p46 = scmp.eq.s32.totalorder %s9, 3
    %p47 = por %p45, %p46
    %p48 = scmp.ne.s32.totalorder %s40, %s43
    %p49 = scmp.eq.s32.totalorder %s9, 0
    %p50 = por %p48, %p49
    %p51 = scmp.ne.s32.totalorder %s40, %s43
    %p52 = scmp.eq.s32.totalorder %s14, 3
    %p53 = por %p51, %p52
    %p54 = scmp.ne.s32.totalorder %s43, %s44
    %p55 = scmp.eq.s32.totalorder %s14, 0
    %p56 = por %p54, %p55
    %p57 = scmp.ne.s32.totalorder %s43, %s44
    %p58 = scmp.eq.s32.totalorder %s15, 3
    %p59 = por %p57, %p58
    %p61 = scmp.ne.s32.totalorder %s44, %s60
    %p62 = scmp.eq.s32.totalorder %s15, 0
    %p63 = por %p61, %p62
    %s64 = ssub.s32 %s18, %s27
    %s65 = ssub.s32 %s17, %s31
    %s66 = sor.u32 %s64, %s65
    %p67 = scmp.eq.s32.totalorder %s66, 0
    %s69 = sadd.s32 %s68, 1
    %s70 = scalar_select %p67, %s68, %s69
    %p73 = pneg %p67
    %p74 = scmp.eq.s32.totalorder %s9, 3
    %p75 = por %p73, %p74
    %p76 = scmp.ne.s32.totalorder %s68, %s71
    %p77 = scmp.eq.s32.totalorder %s9, 0
    %p78 = por %p76, %p77
    %p79 = scmp.ne.s32.totalorder %s68, %s71
    %p80 = scmp.eq.s32.totalorder %s14, 3
    %p81 = por %p79, %p80
    %p82 = scmp.ne.s32.totalorder %s71, %s72
    %p83 = scmp.eq.s32.totalorder %s14, 0
    %p84 = por %p82, %p83
    %p85 = scmp.ne.s32.totalorder %s71, %s72
    %p86 = scmp.eq.s32.totalorder %s15, 3
    %p87 = por %p85, %p86
    %p89 = scmp.ne.s32.totalorder %s72, %s88
    %p90 = scmp.eq.s32.totalorder %s15, 0
    %p91 = por %p89, %p90
    %s92 = ssub.s32 %s17, %s31
    %p93 = scmp.eq.s32.totalorder %s92, 0
    %s95 = sadd.s32 %s94, 1
    %s96 = scalar_select %p93, %s94, %s95
    %p99 = pneg %p93
    %p100 = scmp.eq.s32.totalorder %s9, 3
    %p101 = por %p99, %p100
    %p102 = scmp.ne.s32.totalorder %s94, %s97
    %p103 = scmp.eq.s32.totalorder %s9, 0
    %p104 = por %p102, %p103
    %p105 = scmp.ne.s32.totalorder %s94, %s97
    %p106 = scmp.eq.s32.totalorder %s14, 3
    %p107 = por %p105, %p106
    %p108 = scmp.ne.s32.totalorder %s97, %s98
    %p109 = scmp.eq.s32.totalorder %s14, 0
    %p110 = por %p108, %p109
    %p111 = scmp.ne.s32.totalorder %s97, %s98
    %p112 = scmp.eq.s32.totalorder %s15, 3
    %p113 = por %p111, %p112
    %p115 = scmp.ne.s32.totalorder %s98, %s114
    %p116 = scmp.eq.s32.totalorder %s15, 0
    %p117 = por %p115, %p116
    %s118 = ssub.s32 %s16, %s35
    %s119 = ssub.s32 %s17, %s31
    %s120 = sor.u32 %s118, %s119
    %p121 = scmp.eq.s32.totalorder %s120, 0
    %s123 = sadd.s32 %s122, 1
    %s124 = scalar_select %p121, %s122, %s123
    %p127 = pneg %p121
    %p128 = scmp.eq.s32.totalorder %s9, 3
    %p129 = por %p127, %p128
    %p130 = scmp.ne.s32.totalorder %s122, %s125
    %p131 = scmp.eq.s32.totalorder %s9, 0
    %p132 = por %p130, %p131
    %p133 = scmp.ne.s32.totalorder %s122, %s125
    %p134 = scmp.eq.s32.totalorder %s14, 3
    %p135 = por %p133, %p134
    %p136 = scmp.ne.s32.totalorder %s125, %s126
    %p137 = scmp.eq.s32.totalorder %s14, 0
    %p138 = por %p136, %p137
    %p139 = scmp.ne.s32.totalorder %s125, %s126
    %p140 = scmp.eq.s32.totalorder %s15, 3
    %p141 = por %p139, %p140
    %p143 = scmp.ne.s32.totalorder %s126, %s142
    %p144 = scmp.eq.s32.totalorder %s15, 0
    %p145 = por %p143, %p144
    %p146 = scmp.le.s32.totalorder 1, %s9
    %p147 = scmp.lt.s32.totalorder %s9, 5
    %p148 = pnand %p146, %p147
    %p149 = pneg %p148
    // Predicated region
    $region9: #{sfi_forward.19} parent=5 // pred_check
      _
    $region10: #{sfi_forward.19} parent=5 // pred_check_branch
      %151 = sbr.rel (%p148) target = $region12
    $region11: #{sfi_forward.19} parent=5 // pred_region
      %s152 = ssub.s32 %s9, 1
      // Predicated region
      $region13: #{sfi_forward.19} parent=11 // pred_check
        %p153 = pneg %p84
      $region14: #{sfi_forward.19} parent=11 // pred_check_branch
        %155 = sbr.rel (%p153) target = $region16
      $region15: #{sfi_forward.19} parent=11 // pred_region
        %s156 = smul.u32 16, %s21
        %p157 = scmp.lt.s32.totalorder %s156, 15
        %s158 = scalar_select %p157, %s156, 15
        %p159 = scmp.lt.s32.totalorder %s20, 0
        %s160 = scalar_select %p159, %s20, 0
        %s161 = sadd.s32 %s160, %s158
        %s162 = smul.addr %s161, 4
        %s163 = scalar_lea.vmem %s1, %s162
        %s164 = smul.u32 16, %s21
      $region16: #{sfi_forward.19} parent=11 // pred_fallthru
        _
      // Predicated region
      $region17: #{sfi_forward.19} parent=11 // pred_check
        %p165 = pneg %p110
      $region18: #{sfi_forward.19} parent=11 // pred_check_branch
        %167 = sbr.rel (%p165) target = $region20
      $region19: #{sfi_forward.19} parent=11 // pred_region
        %p168 = scmp.lt.s32.totalorder %s20, 0
        %s169 = scalar_select %p168, %s20, 0
        %s170 = scalar_lea.vmem %s2, %s169
      $region20: #{sfi_forward.19} parent=11 // pred_fallthru
        _
    $region12: #{sfi_forward.19} parent=5 // pred_fallthru
      _
    %p171 = scmp.lt.s32.totalorder %s9, 4
    // Predicated region
    $region21: #{sfi_forward.19} parent=5 // pred_check
      %p172 = pneg %p171
    $region22: #{sfi_forward.19} parent=5 // pred_check_branch
      %174 = sbr.rel (%p172) target = $region24
    $region23: #{sfi_forward.19} parent=5 // pred_region
      // Predicated region
      $region25: #{sfi_forward.19} parent=23 // pred_check
        %p175 = pneg %p50
      $region26: #{sfi_forward.19} parent=23 // pred_check_branch
        %177 = sbr.rel (%p175) target = $region28
      $region27: #{sfi_forward.19} parent=23 // pred_region
        %s178 = smul.u32 64, %s16
        %p179 = scmp.lt.s32.totalorder %s178, 255
        %s180 = scalar_select %p179, %s178, 255
        %p181 = scmp.lt.s32.totalorder %s18, 0
        %s182 = scalar_select %p181, %s18, 0
        %s183 = sadd.s32 %s182, %s180
        %s184 = smul.addr %s183, 4
        %s185 = scalar_lea.vmem %s0, %s184
        %s186 = smul.u32 64, %s16
      $region28: #{sfi_forward.19} parent=23 // pred_fallthru
        _
    $region24: #{sfi_forward.19} parent=5 // pred_fallthru
      _
    %p187 = scmp.le.s32.totalorder 1, %s9
    %p188 = scmp.lt.s32.totalorder %s9, 5
    %p189 = pnand %p187, %p188
    %p190 = pneg %p189
    // Predicated region
    $region29: #{sfi_forward.19} parent=5 // pred_check
      _
    $region30: #{sfi_forward.19} parent=5 // pred_check_branch
      %192 = sbr.rel (%p189) target = $region32
    $region31: #{sfi_forward.19} parent=5 // pred_region
      %s193 = ssub.s32 %s9, 1
      %s194 = smul.u32 64, %s19
      %p195 = scmp.lt.s32.totalorder %s194, 255
      %s196 = scalar_select %p195, %s194, 255
      %p197 = scmp.lt.s32.totalorder %s21, 0
      %s198 = scalar_select %p197, %s21, 0
      %s199 = sadd.s32 %s198, %s196
      %s200 = smul.addr %s199, 4
      %s201 = scalar_lea.vmem %s0, %s200
      %p202 = pneg %p56
      %p203 = pneg %p53
      %s204 = smul.u32 16, %s21
      %p205 = scmp.lt.s32.totalorder %s204, 15
      %s206 = scalar_select %p205, %s204, 15
      %p207 = scmp.lt.s32.totalorder %s20, 0
      %s208 = scalar_select %p207, %s20, 0
      %s209 = sadd.s32 %s208, %s206
      %s210 = smul.addr %s209, 4
      %s211 = scalar_lea.vmem %s1, %s210
      %p212 = pneg %p84
      %p213 = pneg %p81
      %p214 = scmp.lt.s32.totalorder %s20, 0
      %s215 = scalar_select %p214, %s20, 0
      %s216 = scalar_lea.vmem %s2, %s215
      %p217 = pneg %p110
      %p218 = pneg %p107
      %p219 = pneg %p138
      %p220 = pneg %p135
      %s221 = smul.u32 64, %s19
      %p222 = scmp.lt.s32.totalorder %s221, 255
      %s223 = scalar_select %p222, %s221, 255
      %p224 = scmp.lt.s32.totalorder %s20, 0
      %s225 = scalar_select %p224, %s20, 0
      %s226 = sadd.s32 %s225, %s223
      %s227 = smul.addr %s226, 8
      %s228 = scalar_lea.vmem %s3, %s227
      %s229 = smul.u32 64, %s19
      %p230 = scmp.lt.s32.totalorder %s229, 255
      %s231 = scalar_select %p230, %s229, 255
      %p232 = scmp.lt.s32.totalorder %s21, 0
      %s233 = scalar_select %p232, %s21, 0
      %s234 = sadd.s32 %s233, %s231
      %s235 = smul.addr %s234, 4
      %s236 = scalar_lea.vmem %s0, %s235
      %s237 = smul.u32 64, %s19
      %s238 = smul.u32 16, %s21
      %p239 = scmp.lt.s32.totalorder %s238, 15
      %s240 = scalar_select %p239, %s238, 15
      %p241 = scmp.lt.s32.totalorder %s20, 0
      %s242 = scalar_select %p241, %s20, 0
      %s243 = sadd.s32 %s242, %s240
      %s244 = smul.addr %s243, 4
      %s245 = scalar_lea.vmem %s1, %s244
      %s246 = smul.u32 16, %s21
      %p247 = scmp.lt.s32.totalorder %s20, 0
      %s248 = scalar_select %p247, %s20, 0
      %s249 = scalar_lea.vmem %s2, %s248
      %s250 = smul.u32 64, %s19
      %p251 = scmp.lt.s32.totalorder %s250, 255
      %s252 = scalar_select %p251, %s250, 255
      %p253 = scmp.lt.s32.totalorder %s20, 0
      %s254 = scalar_select %p253, %s20, 0
      %s255 = sadd.s32 %s254, %s252
      %s256 = smul.addr %s255, 8
      %s257 = scalar_lea.vmem %s3, %s256
      %s258 = smul.u32 64, %s19
      %p260 = scmp.eq.s32.totalorder %s21, 0
      // Predicated region
      $region33: #{sfi_forward.19} parent=31 // pred_check
        %p261 = pneg %p260
      $region34: #{sfi_forward.19} parent=31 // pred_check_branch
        %263 = sbr.rel (%p261) target = $region36
      $region35: #{sfi_forward.19} parent=31 // pred_region
        %264 = vst [vmem:[#allocation2] sm:$0xff] 0.0
        %265 = vst [vmem:[#allocation2 + $0x8] sm:$0xff] 0.0
        %266 = vst [vmem:[#allocation2 + $0x10] sm:$0xff] 0.0
        %267 = vst [vmem:[#allocation2 + $0x18] sm:$0xff] 0.0
        %268 = vst [vmem:[#allocation2 + $0x20] sm:$0xff] 0.0
        %269 = vst [vmem:[#allocation2 + $0x28] sm:$0xff] 0.0
        %270 = vst [vmem:[#allocation2 + $0x30] sm:$0xff] 0.0
        %271 = vst [vmem:[#allocation2 + $0x38] sm:$0xff] 0.0
        %272 = vst [vmem:[#allocation2 + $0x40] sm:$0xff] 0.0
        %273 = vst [vmem:[#allocation2 + $0x48] sm:$0xff] 0.0
        %274 = vst [vmem:[#allocation2 + $0x50] sm:$0xff] 0.0
        %275 = vst [vmem:[#allocation2 + $0x58] sm:$0xff] 0.0
        %276 = vst [vmem:[#allocation2 + $0x60] sm:$0xff] 0.0
        %277 = vst [vmem:[#allocation2 + $0x68] sm:$0xff] 0.0
        %278 = vst [vmem:[#allocation2 + $0x70] sm:$0xff] 0.0
        %279 = vst [vmem:[#allocation2 + $0x78] sm:$0xff] 0.0
        %280 = vst [vmem:[#allocation2 + $0x80] sm:$0xff] 0.0
        %281 = vst [vmem:[#allocation2 + $0x88] sm:$0xff] 0.0
        %282 = vst [vmem:[#allocation2 + $0x90] sm:$0xff] 0.0
        %283 = vst [vmem:[#allocation2 + $0x98] sm:$0xff] 0.0
        %284 = vst [vmem:[#allocation2 + $0xa0] sm:$0xff] 0.0
        %285 = vst [vmem:[#allocation2 + $0xa8] sm:$0xff] 0.0
        %286 = vst [vmem:[#allocation2 + $0xb0] sm:$0xff] 0.0
        %287 = vst [vmem:[#allocation2 + $0xb8] sm:$0xff] 0.0
        %288 = vst [vmem:[#allocation2 + $0xc0] sm:$0xff] 0.0
        %289 = vst [vmem:[#allocation2 + $0xc8] sm:$0xff] 0.0
        %290 = vst [vmem:[#allocation2 + $0xd0] sm:$0xff] 0.0
        %291 = vst [vmem:[#allocation2 + $0xd8] sm:$0xff] 0.0
        %292 = vst [vmem:[#allocation2 + $0xe0] sm:$0xff] 0.0
        %293 = vst [vmem:[#allocation2 + $0xe8] sm:$0xff] 0.0
        %294 = vst [vmem:[#allocation2 + $0xf0] sm:$0xff] 0.0
        %295 = vst [vmem:[#allocation2 + $0xf8] sm:$0xff] 0.0
        %296 = vst [vmem:[#allocation2 + $0x100] sm:$0xff] 0.0
        %297 = vst [vmem:[#allocation2 + $0x108] sm:$0xff] 0.0
        %298 = vst [vmem:[#allocation2 + $0x110] sm:$0xff] 0.0
        %299 = vst [vmem:[#allocation2 + $0x118] sm:$0xff] 0.0
        %300 = vst [vmem:[#allocation2 + $0x120] sm:$0xff] 0.0
        %301 = vst [vmem:[#allocation2 + $0x128] sm:$0xff] 0.0
        %302 = vst [vmem:[#allocation2 + $0x130] sm:$0xff] 0.0
        %303 = vst [vmem:[#allocation2 + $0x138] sm:$0xff] 0.0
        %304 = vst [vmem:[#allocation2 + $0x140] sm:$0xff] 0.0
        %305 = vst [vmem:[#allocation2 + $0x148] sm:$0xff] 0.0
        %306 = vst [vmem:[#allocation2 + $0x150] sm:$0xff] 0.0
        %307 = vst [vmem:[#allocation2 + $0x158] sm:$0xff] 0.0
        %308 = vst [vmem:[#allocation2 + $0x160] sm:$0xff] 0.0
        %309 = vst [vmem:[#allocation2 + $0x168] sm:$0xff] 0.0
        %310 = vst [vmem:[#allocation2 + $0x170] sm:$0xff] 0.0
        %311 = vst [vmem:[#allocation2 + $0x178] sm:$0xff] 0.0
        %312 = vst [vmem:[#allocation2 + $0x180] sm:$0xff] 0.0
        %313 = vst [vmem:[#allocation2 + $0x188] sm:$0xff] 0.0
        %314 = vst [vmem:[#allocation2 + $0x190] sm:$0xff] 0.0
        %315 = vst [vmem:[#allocation2 + $0x198] sm:$0xff] 0.0
        %316 = vst [vmem:[#allocation2 + $0x1a0] sm:$0xff] 0.0
        %317 = vst [vmem:[#allocation2 + $0x1a8] sm:$0xff] 0.0
        %318 = vst [vmem:[#allocation2 + $0x1b0] sm:$0xff] 0.0
        %319 = vst [vmem:[#allocation2 + $0x1b8] sm:$0xff] 0.0
        %320 = vst [vmem:[#allocation2 + $0x1c0] sm:$0xff] 0.0
        %321 = vst [vmem:[#allocation2 + $0x1c8] sm:$0xff] 0.0
        %322 = vst [vmem:[#allocation2 + $0x1d0] sm:$0xff] 0.0
        %323 = vst [vmem:[#allocation2 + $0x1d8] sm:$0xff] 0.0
        %324 = vst [vmem:[#allocation2 + $0x1e0] sm:$0xff] 0.0
        %325 = vst [vmem:[#allocation2 + $0x1e8] sm:$0xff] 0.0
        %326 = vst [vmem:[#allocation2 + $0x1f0] sm:$0xff] 0.0
        %327 = vst [vmem:[#allocation2 + $0x1f8] sm:$0xff] 0.0
      $region36: #{sfi_forward.19} parent=31 // pred_fallthru
        _
      %v328 = vld [vmem:[#allocation2] sm:$0xff]
      %v329 = vld [vmem:[#allocation2 + $0x8] sm:$0xff]
      %v330 = vld [vmem:[#allocation2 + $0x10] sm:$0xff]
      %v331 = vld [vmem:[#allocation2 + $0x18] sm:$0xff]
      %v332 = vld [vmem:[#allocation2 + $0x20] sm:$0xff]
      %v333 = vld [vmem:[#allocation2 + $0x28] sm:$0xff]
      %v334 = vld [vmem:[#allocation2 + $0x30] sm:$0xff]
      %v335 = vld [vmem:[#allocation2 + $0x38] sm:$0xff]
      %v336 = vld [vmem:[#allocation2 + $0x40] sm:$0xff]
      %v337 = vld [vmem:[#allocation2 + $0x48] sm:$0xff]
      %v338 = vld [vmem:[#allocation2 + $0x50] sm:$0xff]
      %v339 = vld [vmem:[#allocation2 + $0x58] sm:$0xff]
      %v340 = vld [vmem:[#allocation2 + $0x60] sm:$0xff]
      %v341 = vld [vmem:[#allocation2 + $0x68] sm:$0xff]
      %v342 = vld [vmem:[#allocation2 + $0x70] sm:$0xff]
      %v343 = vld [vmem:[#allocation2 + $0x78] sm:$0xff]
      %v344 = vld [vmem:[#allocation2 + $0x80] sm:$0xff]
      %v345 = vld [vmem:[#allocation2 + $0x88] sm:$0xff]
      %v346 = vld [vmem:[#allocation2 + $0x90] sm:$0xff]
      %v347 = vld [vmem:[#allocation2 + $0x98] sm:$0xff]
      %v348 = vld [vmem:[#allocation2 + $0xa0] sm:$0xff]
      %v349 = vld [vmem:[#allocation2 + $0xa8] sm:$0xff]
      %v350 = vld [vmem:[#allocation2 + $0xb0] sm:$0xff]
      %v351 = vld [vmem:[#allocation2 + $0xb8] sm:$0xff]
      %v352 = vld [vmem:[#allocation2 + $0xc0] sm:$0xff]
      %v353 = vld [vmem:[#allocation2 + $0xc8] sm:$0xff]
      %v354 = vld [vmem:[#allocation2 + $0xd0] sm:$0xff]
      %v355 = vld [vmem:[#allocation2 + $0xd8] sm:$0xff]
      %v356 = vld [vmem:[#allocation2 + $0xe0] sm:$0xff]
      %v357 = vld [vmem:[#allocation2 + $0xe8] sm:$0xff]
      %v358 = vld [vmem:[#allocation2 + $0xf0] sm:$0xff]
      %v359 = vld [vmem:[#allocation2 + $0xf8] sm:$0xff]
      %v360 = vld [vmem:[#allocation2 + $0x100] sm:$0xff]
      %v361 = vld [vmem:[#allocation2 + $0x108] sm:$0xff]
      %v362 = vld [vmem:[#allocation2 + $0x110] sm:$0xff]
      %v363 = vld [vmem:[#allocation2 + $0x118] sm:$0xff]
      %v364 = vld [vmem:[#allocation2 + $0x120] sm:$0xff]
      %v365 = vld [vmem:[#allocation2 + $0x128] sm:$0xff]
      %v366 = vld [vmem:[#allocation2 + $0x130] sm:$0xff]
      %v367 = vld [vmem:[#allocation2 + $0x138] sm:$0xff]
      %v368 = vld [vmem:[#allocation2 + $0x140] sm:$0xff]
      %v369 = vld [vmem:[#allocation2 + $0x148] sm:$0xff]
      %v370 = vld [vmem:[#allocation2 + $0x150] sm:$0xff]
      %v371 = vld [vmem:[#allocation2 + $0x158] sm:$0xff]
      %v372 = vld [vmem:[#allocation2 + $0x160] sm:$0xff]
      %v373 = vld [vmem:[#allocation2 + $0x168] sm:$0xff]
      %v374 = vld [vmem:[#allocation2 + $0x170] sm:$0xff]
      %v375 = vld [vmem:[#allocation2 + $0x178] sm:$0xff]
      %v376 = vld [vmem:[#allocation2 + $0x180] sm:$0xff]
      %v377 = vld [vmem:[#allocation2 + $0x188] sm:$0xff]
      %v378 = vld [vmem:[#allocation2 + $0x190] sm:$0xff]
      %v379 = vld [vmem:[#allocation2 + $0x198] sm:$0xff]
      %v380 = vld [vmem:[#allocation2 + $0x1a0] sm:$0xff]
      %v381 = vld [vmem:[#allocation2 + $0x1a8] sm:$0xff]
      %v382 = vld [vmem:[#allocation2 + $0x1b0] sm:$0xff]
      %v383 = vld [vmem:[#allocation2 + $0x1b8] sm:$0xff]
      %v384 = vld [vmem:[#allocation2 + $0x1c0] sm:$0xff]
      %v385 = vld [vmem:[#allocation2 + $0x1c8] sm:$0xff]
      %v386 = vld [vmem:[#allocation2 + $0x1d0] sm:$0xff]
      %v387 = vld [vmem:[#allocation2 + $0x1d8] sm:$0xff]
      %v388 = vld [vmem:[#allocation2 + $0x1e0] sm:$0xff]
      %v389 = vld [vmem:[#allocation2 + $0x1e8] sm:$0xff]
      %v390 = vld [vmem:[#allocation2 + $0x1f0] sm:$0xff]
      %v391 = vld [vmem:[#allocation2 + $0x1f8] sm:$0xff]
      %v392 = vld [vmem:[%s236] sm:$0xf]
      %v393 = vld [vmem:[%s236 + $0x4] sm:$0xf]
      %v394 = vld [vmem:[%s236 + $0x8] sm:$0xf]
      %v395 = vld [vmem:[%s236 + $0xc] sm:$0xf]
      %v396 = vld [vmem:[%s236 + $0x10] sm:$0xf]
      %v397 = vld [vmem:[%s236 + $0x14] sm:$0xf]
      %v398 = vld [vmem:[%s236 + $0x18] sm:$0xf]
      %v399 = vld [vmem:[%s236 + $0x1c] sm:$0xf]
      %v400 = vld [vmem:[%s236 + $0x20] sm:$0xf]
      %v401 = vld [vmem:[%s236 + $0x24] sm:$0xf]
      %v402 = vld [vmem:[%s236 + $0x28] sm:$0xf]
      %v403 = vld [vmem:[%s236 + $0x2c] sm:$0xf]
      %v404 = vld [vmem:[%s236 + $0x30] sm:$0xf]
      %v405 = vld [vmem:[%s236 + $0x34] sm:$0xf]
      %v406 = vld [vmem:[%s236 + $0x38] sm:$0xf]
      %v407 = vld [vmem:[%s236 + $0x3c] sm:$0xf]
      %v408 = vld [vmem:[%s236 + $0x40] sm:$0xf]
      %v409 = vld [vmem:[%s236 + $0x44] sm:$0xf]
      %v410 = vld [vmem:[%s236 + $0x48] sm:$0xf]
      %v411 = vld [vmem:[%s236 + $0x4c] sm:$0xf]
      %v412 = vld [vmem:[%s236 + $0x50] sm:$0xf]
      %v413 = vld [vmem:[%s236 + $0x54] sm:$0xf]
      %v414 = vld [vmem:[%s236 + $0x58] sm:$0xf]
      %v415 = vld [vmem:[%s236 + $0x5c] sm:$0xf]
      %v416 = vld [vmem:[%s236 + $0x60] sm:$0xf]
      %v417 = vld [vmem:[%s236 + $0x64] sm:$0xf]
      %v418 = vld [vmem:[%s236 + $0x68] sm:$0xf]
      %v419 = vld [vmem:[%s236 + $0x6c] sm:$0xf]
      %v420 = vld [vmem:[%s236 + $0x70] sm:$0xf]
      %v421 = vld [vmem:[%s236 + $0x74] sm:$0xf]
      %v422 = vld [vmem:[%s236 + $0x78] sm:$0xf]
      %v423 = vld [vmem:[%s236 + $0x7c] sm:$0xf]
      %v424 = vld [vmem:[%s236 + $0x80] sm:$0xf]
      %v425 = vld [vmem:[%s236 + $0x84] sm:$0xf]
      %v426 = vld [vmem:[%s236 + $0x88] sm:$0xf]
      %v427 = vld [vmem:[%s236 + $0x8c] sm:$0xf]
      %v428 = vld [vmem:[%s236 + $0x90] sm:$0xf]
      %v429 = vld [vmem:[%s236 + $0x94] sm:$0xf]
      %v430 = vld [vmem:[%s236 + $0x98] sm:$0xf]
      %v431 = vld [vmem:[%s236 + $0x9c] sm:$0xf]
      %v432 = vld [vmem:[%s236 + $0xa0] sm:$0xf]
      %v433 = vld [vmem:[%s236 + $0xa4] sm:$0xf]
      %v434 = vld [vmem:[%s236 + $0xa8] sm:$0xf]
      %v435 = vld [vmem:[%s236 + $0xac] sm:$0xf]
      %v436 = vld [vmem:[%s236 + $0xb0] sm:$0xf]
      %v437 = vld [vmem:[%s236 + $0xb4] sm:$0xf]
      %v438 = vld [vmem:[%s236 + $0xb8] sm:$0xf]
      %v439 = vld [vmem:[%s236 + $0xbc] sm:$0xf]
      %v440 = vld [vmem:[%s236 + $0xc0] sm:$0xf]
      %v441 = vld [vmem:[%s236 + $0xc4] sm:$0xf]
      %v442 = vld [vmem:[%s236 + $0xc8] sm:$0xf]
      %v443 = vld [vmem:[%s236 + $0xcc] sm:$0xf]
      %v444 = vld [vmem:[%s236 + $0xd0] sm:$0xf]
      %v445 = vld [vmem:[%s236 + $0xd4] sm:$0xf]
      %v446 = vld [vmem:[%s236 + $0xd8] sm:$0xf]
      %v447 = vld [vmem:[%s236 + $0xdc] sm:$0xf]
      %v448 = vld [vmem:[%s236 + $0xe0] sm:$0xf]
      %v449 = vld [vmem:[%s236 + $0xe4] sm:$0xf]
      %v450 = vld [vmem:[%s236 + $0xe8] sm:$0xf]
      %v451 = vld [vmem:[%s236 + $0xec] sm:$0xf]
      %v452 = vld [vmem:[%s236 + $0xf0] sm:$0xf]
      %v453 = vld [vmem:[%s236 + $0xf4] sm:$0xf]
      %v454 = vld [vmem:[%s236 + $0xf8] sm:$0xf]
      %v455 = vld [vmem:[%s236 + $0xfc] sm:$0xf]
      %v456 = vld [vmem:[%s245] sm:$0xf]
      %v457 = vld [vmem:[%s245 + $0x4] sm:$0xf]
      %v458 = vld [vmem:[%s245 + $0x8] sm:$0xf]
      %v459 = vld [vmem:[%s245 + $0xc] sm:$0xf]
      %v460 = vld [vmem:[%s245 + $0x10] sm:$0xf]
      %v461 = vld [vmem:[%s245 + $0x14] sm:$0xf]
      %v462 = vld [vmem:[%s245 + $0x18] sm:$0xf]
      %v463 = vld [vmem:[%s245 + $0x1c] sm:$0xf]
      %v464 = vld [vmem:[%s245 + $0x20] sm:$0xf]
      %v465 = vld [vmem:[%s245 + $0x24] sm:$0xf]
      %v466 = vld [vmem:[%s245 + $0x28] sm:$0xf]
      %v467 = vld [vmem:[%s245 + $0x2c] sm:$0xf]
      %v468 = vld [vmem:[%s245 + $0x30] sm:$0xf]
      %v469 = vld [vmem:[%s245 + $0x34] sm:$0xf]
      %v470 = vld [vmem:[%s245 + $0x38] sm:$0xf]
      %v471 = vld [vmem:[%s245 + $0x3c] sm:$0xf]
      %v536 = vunpack.c.l.b16 %v392
      %v537 = vunpack.c.l.b16 %v393
      %v538 = vunpack.c.l.b16 %v394
      %v539 = vunpack.c.l.b16 %v395
      %v540 = vunpack.c.l.b16 %v396
      %v541 = vunpack.c.l.b16 %v397
      %v542 = vunpack.c.l.b16 %v398
      %v543 = vunpack.c.l.b16 %v399
      %v544 = vunpack.c.l.b16 %v400
      %v545 = vunpack.c.l.b16 %v401
      %v546 = vunpack.c.l.b16 %v402
      %v547 = vunpack.c.l.b16 %v403
      %v548 = vunpack.c.l.b16 %v404
      %v549 = vunpack.c.l.b16 %v405
      %v550 = vunpack.c.l.b16 %v406
      %v551 = vunpack.c.l.b16 %v407
      %v552 = vunpack.c.l.b16 %v408
      %v553 = vunpack.c.l.b16 %v409
      %v554 = vunpack.c.l.b16 %v410
      %v555 = vunpack.c.l.b16 %v411
      %v556 = vunpack.c.l.b16 %v412
      %v557 = vunpack.c.l.b16 %v413
      %v558 = vunpack.c.l.b16 %v414
      %v559 = vunpack.c.l.b16 %v415
      %v560 = vunpack.c.l.b16 %v416
      %v561 = vunpack.c.l.b16 %v417
      %v562 = vunpack.c.l.b16 %v418
      %v563 = vunpack.c.l.b16 %v419
      %v564 = vunpack.c.l.b16 %v420
      %v565 = vunpack.c.l.b16 %v421
      %v566 = vunpack.c.l.b16 %v422
      %v567 = vunpack.c.l.b16 %v423
      %v568 = vunpack.c.l.b16 %v424
      %v569 = vunpack.c.l.b16 %v425
      %v570 = vunpack.c.l.b16 %v426
      %v571 = vunpack.c.l.b16 %v427
      %v572 = vunpack.c.l.b16 %v428
      %v573 = vunpack.c.l.b16 %v429
      %v574 = vunpack.c.l.b16 %v430
      %v575 = vunpack.c.l.b16 %v431
      %v576 = vunpack.c.l.b16 %v432
      %v577 = vunpack.c.l.b16 %v433
      %v578 = vunpack.c.l.b16 %v434
      %v579 = vunpack.c.l.b16 %v435
      %v580 = vunpack.c.l.b16 %v436
      %v581 = vunpack.c.l.b16 %v437
      %v582 = vunpack.c.l.b16 %v438
      %v583 = vunpack.c.l.b16 %v439
      %v584 = vunpack.c.l.b16 %v440
      %v585 = vunpack.c.l.b16 %v441
      %v586 = vunpack.c.l.b16 %v442
      %v587 = vunpack.c.l.b16 %v443
      %v588 = vunpack.c.l.b16 %v444
      %v589 = vunpack.c.l.b16 %v445
      %v590 = vunpack.c.l.b16 %v446
      %v591 = vunpack.c.l.b16 %v447
      %v592 = vunpack.c.l.b16 %v448
      %v593 = vunpack.c.l.b16 %v449
      %v594 = vunpack.c.l.b16 %v450
      %v595 = vunpack.c.l.b16 %v451
      %v596 = vunpack.c.l.b16 %v452
      %v597 = vunpack.c.l.b16 %v453
      %v598 = vunpack.c.l.b16 %v454
      %v599 = vunpack.c.l.b16 %v455
      %v600 = vpack.c.b16 %v537, %v536
      %v601 = vpack.c.b16 %v539, %v538
      %v602 = vpack.c.b16 %v541, %v540
      %v603 = vpack.c.b16 %v543, %v542
      %v604 = vpack.c.b16 %v545, %v544
      %v605 = vpack.c.b16 %v547, %v546
      %v606 = vpack.c.b16 %v549, %v548
      %v607 = vpack.c.b16 %v551, %v550
      %v608 = vpack.c.b16 %v553, %v552
      %v609 = vpack.c.b16 %v555, %v554
      %v610 = vpack.c.b16 %v557, %v556
      %v611 = vpack.c.b16 %v559, %v558
      %v612 = vpack.c.b16 %v561, %v560
      %v613 = vpack.c.b16 %v563, %v562
      %v614 = vpack.c.b16 %v565, %v564
      %v615 = vpack.c.b16 %v567, %v566
      %v616 = vpack.c.b16 %v569, %v568
      %v617 = vpack.c.b16 %v571, %v570
      %v618 = vpack.c.b16 %v573, %v572
      %v619 = vpack.c.b16 %v575, %v574
      %v620 = vpack.c.b16 %v577, %v576
      %v621 = vpack.c.b16 %v579, %v578
      %v622 = vpack.c.b16 %v581, %v580
      %v623 = vpack.c.b16 %v583, %v582
      %v624 = vpack.c.b16 %v585, %v584
      %v625 = vpack.c.b16 %v587, %v586
      %v626 = vpack.c.b16 %v589, %v588
      %v627 = vpack.c.b16 %v591, %v590
      %v628 = vpack.c.b16 %v593, %v592
      %v629 = vpack.c.b16 %v595, %v594
      %v630 = vpack.c.b16 %v597, %v596
      %v631 = vpack.c.b16 %v599, %v598
      %v680 = vunpack.c.l.b16 %v456
      %v681 = vunpack.c.l.b16 %v457
      %v682 = vunpack.c.l.b16 %v458
      %v683 = vunpack.c.l.b16 %v459
      %v684 = vunpack.c.l.b16 %v460
      %v685 = vunpack.c.l.b16 %v461
      %v686 = vunpack.c.l.b16 %v462
      %v687 = vunpack.c.l.b16 %v463
      %v688 = vunpack.c.l.b16 %v464
      %v689 = vunpack.c.l.b16 %v465
      %v690 = vunpack.c.l.b16 %v466
      %v691 = vunpack.c.l.b16 %v467
      %v692 = vunpack.c.l.b16 %v468
      %v693 = vunpack.c.l.b16 %v469
      %v694 = vunpack.c.l.b16 %v470
      %v695 = vunpack.c.l.b16 %v471
      %v696 = vpack.c.b16 %v681, %v680
      %v697 = vpack.c.b16 %v683, %v682
      %v698 = vpack.c.b16 %v685, %v684
      %v699 = vpack.c.b16 %v687, %v686
      %v700 = vpack.c.b16 %v689, %v688
      %v701 = vpack.c.b16 %v691, %v690
      %v702 = vpack.c.b16 %v693, %v692
      %v703 = vpack.c.b16 %v695, %v694
      %712 = vmatprep.subr.bf16.mxu0 0
      %713 = vmatpush1.bf16.msra.mxu0 %v703
      %714 = vmatprep.subr.bf16.mxu0 0
      %715 = vmatpush1.bf16.msra.mxu0 %v702
      %716 = vmatprep.subr.bf16.mxu0 0
      %717 = vmatpush1.bf16.msra.mxu0 %v701
      %718 = vmatprep.subr.bf16.mxu0 0
      %719 = vmatpush1.bf16.msra.mxu0 %v700
      %720 = vmatprep.subr.bf16.mxu0 0
      %721 = vmatpush1.bf16.msra.mxu0 %v699
      %722 = vmatprep.subr.bf16.mxu0 0
      %723 = vmatpush1.bf16.msra.mxu0 %v698
      %724 = vmatprep.subr.bf16.mxu0 0
      %725 = vmatpush1.bf16.msra.mxu0 %v697
      %726 = vmatprep.subr.bf16.mxu0 0
      %727 = vmatpush1.bf16.msra.mxu0 %v696
      %728 = vmatprep.subr.bf16.mxu0 0
      %729 = vmatpush2.bf16.msra.mxu0 0
      %730 = vmatprep.subr.bf16.mxu0 0
      %731 = vmatpush2.bf16.msra.mxu0 0
      %732 = vmatprep.subr.bf16.mxu0 0
      %733 = vmatpush2.bf16.msra.mxu0 0
      %734 = vmatprep.subr.bf16.mxu0 0
      %735 = vmatpush2.bf16.msra.mxu0 0
      %736 = vmatprep.subr.bf16.mxu0 0
      %737 = vmatpush2.bf16.msra.mxu0 0
      %738 = vmatprep.subr.bf16.mxu0 0
      %739 = vmatpush2.bf16.msra.mxu0 0
      %740 = vmatprep.subr.bf16.mxu0 0
      %741 = vmatpush2.bf16.msra.mxu0 0
      %742 = vmatprep.subr.bf16.mxu0 0
      %743 = vmatpush2.bf16.msra.mxu0 0
      %744 = vmatprep.mubr.bf16.mxu0 0
      %745 = vmatmul.mubr.bf16.gmra.mxu0 %v600
      %v746 = vpop.f32.mrf.mxu0
      %v747 = vadd.f32 0.0, %v746
      %v748 = vpop.f32.mrf.mxu0
      %v749 = vpop.f32.mrf.mxu0
      %v750 = vadd.f32 0.0, %v749
      %v751 = vpop.f32.mrf.mxu0
      %752 = vmatprep.mubr.bf16.mxu0 0
      %753 = vmatmul.mubr.bf16.gmra.mxu0 %v601
      %v754 = vpop.f32.mrf.mxu0
      %v755 = vadd.f32 0.0, %v754
      %v756 = vpop.f32.mrf.mxu0
      %v757 = vpop.f32.mrf.mxu0
      %v758 = vadd.f32 0.0, %v757
      %v759 = vpop.f32.mrf.mxu0
      %760 = vmatprep.mubr.bf16.mxu0 0
      %761 = vmatmul.mubr.bf16.gmra.mxu0 %v602
      %v762 = vpop.f32.mrf.mxu0
      %v763 = vadd.f32 0.0, %v762
      %v764 = vpop.f32.mrf.mxu0
      %v765 = vpop.f32.mrf.mxu0
      %v766 = vadd.f32 0.0, %v765
      %v767 = vpop.f32.mrf.mxu0
      %768 = vmatprep.mubr.bf16.mxu0 0
      %769 = vmatmul.mubr.bf16.gmra.mxu0 %v603
      %v770 = vpop.f32.mrf.mxu0
      %v771 = vadd.f32 0.0, %v770
      %v772 = vpop.f32.mrf.mxu0
      %v773 = vpop.f32.mrf.mxu0
      %v774 = vadd.f32 0.0, %v773
      %v775 = vpop.f32.mrf.mxu0
      %776 = vmatprep.mubr.bf16.mxu0 0
      %777 = vmatmul.mubr.bf16.gmra.mxu0 %v604
      %v778 = vpop.f32.mrf.mxu0
      %v779 = vadd.f32 0.0, %v778
      %v780 = vpop.f32.mrf.mxu0
      %v781 = vpop.f32.mrf.mxu0
      %v782 = vadd.f32 0.0, %v781
      %v783 = vpop.f32.mrf.mxu0
      %784 = vmatprep.mubr.bf16.mxu0 0
      %785 = vmatmul.mubr.bf16.gmra.mxu0 %v605
      %v786 = vpop.f32.mrf.mxu0
      %v787 = vadd.f32 0.0, %v786
      %v788 = vpop.f32.mrf.mxu0
      %v789 = vpop.f32.mrf.mxu0
      %v790 = vadd.f32 0.0, %v789
      %v791 = vpop.f32.mrf.mxu0
      %792 = vmatprep.mubr.bf16.mxu0 0
      %793 = vmatmul.mubr.bf16.gmra.mxu0 %v606
      %v794 = vpop.f32.mrf.mxu0
      %v795 = vadd.f32 0.0, %v794
      %v796 = vpop.f32.mrf.mxu0
      %v797 = vpop.f32.mrf.mxu0
      %v798 = vadd.f32 0.0, %v797
      %v799 = vpop.f32.mrf.mxu0
      %800 = vmatprep.mubr.bf16.mxu0 0
      %801 = vmatmul.mubr.bf16.gmra.mxu0 %v607
      %v802 = vpop.f32.mrf.mxu0
      %v803 = vadd.f32 0.0, %v802
      %v804 = vpop.f32.mrf.mxu0
      %v805 = vpop.f32.mrf.mxu0
      %v806 = vadd.f32 0.0, %v805
      %v807 = vpop.f32.mrf.mxu0
      %808 = vmatprep.mubr.bf16.mxu0 0
      %809 = vmatmul.mubr.bf16.gmra.mxu0 %v608
      %v810 = vpop.f32.mrf.mxu0
      %v811 = vadd.f32 0.0, %v810
      %v812 = vpop.f32.mrf.mxu0
      %v813 = vpop.f32.mrf.mxu0
      %v814 = vadd.f32 0.0, %v813
      %v815 = vpop.f32.mrf.mxu0
      %816 = vmatprep.mubr.bf16.mxu0 0
      %817 = vmatmul.mubr.bf16.gmra.mxu0 %v609
      %v818 = vpop.f32.mrf.mxu0
      %v819 = vadd.f32 0.0, %v818
      %v820 = vpop.f32.mrf.mxu0
      %v821 = vpop.f32.mrf.mxu0
      %v822 = vadd.f32 0.0, %v821
      %v823 = vpop.f32.mrf.mxu0
      %824 = vmatprep.mubr.bf16.mxu0 0
      %825 = vmatmul.mubr.bf16.gmra.mxu0 %v610
      %v826 = vpop.f32.mrf.mxu0
      %v827 = vadd.f32 0.0, %v826
      %v828 = vpop.f32.mrf.mxu0
      %v829 = vpop.f32.mrf.mxu0
      %v830 = vadd.f32 0.0, %v829
      %v831 = vpop.f32.mrf.mxu0
      %832 = vmatprep.mubr.bf16.mxu0 0
      %833 = vmatmul.mubr.bf16.gmra.mxu0 %v611
      %v834 = vpop.f32.mrf.mxu0
      %v835 = vadd.f32 0.0, %v834
      %v836 = vpop.f32.mrf.mxu0
      %v837 = vpop.f32.mrf.mxu0
      %v838 = vadd.f32 0.0, %v837
      %v839 = vpop.f32.mrf.mxu0
      %840 = vmatprep.mubr.bf16.mxu0 0
      %841 = vmatmul.mubr.bf16.gmra.mxu0 %v612
      %v842 = vpop.f32.mrf.mxu0
      %v843 = vadd.f32 0.0, %v842
      %v844 = vpop.f32.mrf.mxu0
      %v845 = vpop.f32.mrf.mxu0
      %v846 = vadd.f32 0.0, %v845
      %v847 = vpop.f32.mrf.mxu0
      %848 = vmatprep.mubr.bf16.mxu0 0
      %849 = vmatmul.mubr.bf16.gmra.mxu0 %v613
      %v850 = vpop.f32.mrf.mxu0
      %v851 = vadd.f32 0.0, %v850
      %v852 = vpop.f32.mrf.mxu0
      %v853 = vpop.f32.mrf.mxu0
      %v854 = vadd.f32 0.0, %v853
      %v855 = vpop.f32.mrf.mxu0
      %856 = vmatprep.mubr.bf16.mxu0 0
      %857 = vmatmul.mubr.bf16.gmra.mxu0 %v614
      %v858 = vpop.f32.mrf.mxu0
      %v859 = vadd.f32 0.0, %v858
      %v860 = vpop.f32.mrf.mxu0
      %v861 = vpop.f32.mrf.mxu0
      %v862 = vadd.f32 0.0, %v861
      %v863 = vpop.f32.mrf.mxu0
      %864 = vmatprep.mubr.bf16.mxu0 0
      %865 = vmatmul.mubr.bf16.gmra.mxu0 %v615
      %v866 = vpop.f32.mrf.mxu0
      %v867 = vadd.f32 0.0, %v866
      %v868 = vpop.f32.mrf.mxu0
      %v869 = vpop.f32.mrf.mxu0
      %v870 = vadd.f32 0.0, %v869
      %v871 = vpop.f32.mrf.mxu0
      %872 = vmatprep.mubr.bf16.mxu0 0
      %873 = vmatmul.mubr.bf16.gmra.mxu0 %v616
      %v874 = vpop.f32.mrf.mxu0
      %v875 = vadd.f32 0.0, %v874
      %v876 = vpop.f32.mrf.mxu0
      %v877 = vpop.f32.mrf.mxu0
      %v878 = vadd.f32 0.0, %v877
      %v879 = vpop.f32.mrf.mxu0
      %880 = vmatprep.mubr.bf16.mxu0 0
      %881 = vmatmul.mubr.bf16.gmra.mxu0 %v617
      %v882 = vpop.f32.mrf.mxu0
      %v883 = vadd.f32 0.0, %v882
      %v884 = vpop.f32.mrf.mxu0
      %v885 = vpop.f32.mrf.mxu0
      %v886 = vadd.f32 0.0, %v885
      %v887 = vpop.f32.mrf.mxu0
      %888 = vmatprep.mubr.bf16.mxu0 0
      %889 = vmatmul.mubr.bf16.gmra.mxu0 %v618
      %v890 = vpop.f32.mrf.mxu0
      %v891 = vadd.f32 0.0, %v890
      %v892 = vpop.f32.mrf.mxu0
      %v893 = vpop.f32.mrf.mxu0
      %v894 = vadd.f32 0.0, %v893
      %v895 = vpop.f32.mrf.mxu0
      %896 = vmatprep.mubr.bf16.mxu0 0
      %897 = vmatmul.mubr.bf16.gmra.mxu0 %v619
      %v898 = vpop.f32.mrf.mxu0
      %v899 = vadd.f32 0.0, %v898
      %v900 = vpop.f32.mrf.mxu0
      %v901 = vpop.f32.mrf.mxu0
      %v902 = vadd.f32 0.0, %v901
      %v903 = vpop.f32.mrf.mxu0
      %904 = vmatprep.mubr.bf16.mxu0 0
      %905 = vmatmul.mubr.bf16.gmra.mxu0 %v620
      %v906 = vpop.f32.mrf.mxu0
      %v907 = vadd.f32 0.0, %v906
      %v908 = vpop.f32.mrf.mxu0
      %v909 = vpop.f32.mrf.mxu0
      %v910 = vadd.f32 0.0, %v909
      %v911 = vpop.f32.mrf.mxu0
      %912 = vmatprep.mubr.bf16.mxu0 0
      %913 = vmatmul.mubr.bf16.gmra.mxu0 %v621
      %v914 = vpop.f32.mrf.mxu0
      %v915 = vadd.f32 0.0, %v914
      %v916 = vpop.f32.mrf.mxu0
      %v917 = vpop.f32.mrf.mxu0
      %v918 = vadd.f32 0.0, %v917
      %v919 = vpop.f32.mrf.mxu0
      %920 = vmatprep.mubr.bf16.mxu0 0
      %921 = vmatmul.mubr.bf16.gmra.mxu0 %v622
      %v922 = vpop.f32.mrf.mxu0
      %v923 = vadd.f32 0.0, %v922
      %v924 = vpop.f32.mrf.mxu0
      %v925 = vpop.f32.mrf.mxu0
      %v926 = vadd.f32 0.0, %v925
      %v927 = vpop.f32.mrf.mxu0
      %928 = vmatprep.mubr.bf16.mxu0 0
      %929 = vmatmul.mubr.bf16.gmra.mxu0 %v623
      %v930 = vpop.f32.mrf.mxu0
      %v931 = vadd.f32 0.0, %v930
      %v932 = vpop.f32.mrf.mxu0
      %v933 = vpop.f32.mrf.mxu0
      %v934 = vadd.f32 0.0, %v933
      %v935 = vpop.f32.mrf.mxu0
      %936 = vmatprep.mubr.bf16.mxu0 0
      %937 = vmatmul.mubr.bf16.gmra.mxu0 %v624
      %v938 = vpop.f32.mrf.mxu0
      %v939 = vadd.f32 0.0, %v938
      %v940 = vpop.f32.mrf.mxu0
      %v941 = vpop.f32.mrf.mxu0
      %v942 = vadd.f32 0.0, %v941
      %v943 = vpop.f32.mrf.mxu0
      %944 = vmatprep.mubr.bf16.mxu0 0
      %945 = vmatmul.mubr.bf16.gmra.mxu0 %v625
      %v946 = vpop.f32.mrf.mxu0
      %v947 = vadd.f32 0.0, %v946
      %v948 = vpop.f32.mrf.mxu0
      %v949 = vpop.f32.mrf.mxu0
      %v950 = vadd.f32 0.0, %v949
      %v951 = vpop.f32.mrf.mxu0
      %952 = vmatprep.mubr.bf16.mxu0 0
      %953 = vmatmul.mubr.bf16.gmra.mxu0 %v626
      %v954 = vpop.f32.mrf.mxu0
      %v955 = vadd.f32 0.0, %v954
      %v956 = vpop.f32.mrf.mxu0
      %v957 = vpop.f32.mrf.mxu0
      %v958 = vadd.f32 0.0, %v957
      %v959 = vpop.f32.mrf.mxu0
      %960 = vmatprep.mubr.bf16.mxu0 0
      %961 = vmatmul.mubr.bf16.gmra.mxu0 %v627
      %v962 = vpop.f32.mrf.mxu0
      %v963 = vadd.f32 0.0, %v962
      %v964 = vpop.f32.mrf.mxu0
      %v965 = vpop.f32.mrf.mxu0
      %v966 = vadd.f32 0.0, %v965
      %v967 = vpop.f32.mrf.mxu0
      %968 = vmatprep.mubr.bf16.mxu0 0
      %969 = vmatmul.mubr.bf16.gmra.mxu0 %v628
      %v970 = vpop.f32.mrf.mxu0
      %v971 = vadd.f32 0.0, %v970
      %v972 = vpop.f32.mrf.mxu0
      %v973 = vpop.f32.mrf.mxu0
      %v974 = vadd.f32 0.0, %v973
      %v975 = vpop.f32.mrf.mxu0
      %976 = vmatprep.mubr.bf16.mxu0 0
      %977 = vmatmul.mubr.bf16.gmra.mxu0 %v629
      %v978 = vpop.f32.mrf.mxu0
      %v979 = vadd.f32 0.0, %v978
      %v980 = vpop.f32.mrf.mxu0
      %v981 = vpop.f32.mrf.mxu0
      %v982 = vadd.f32 0.0, %v981
      %v983 = vpop.f32.mrf.mxu0
      %984 = vmatprep.mubr.bf16.mxu0 0
      %985 = vmatmul.mubr.bf16.gmra.mxu0 %v630
      %v986 = vpop.f32.mrf.mxu0
      %v987 = vadd.f32 0.0, %v986
      %v988 = vpop.f32.mrf.mxu0
      %v989 = vpop.f32.mrf.mxu0
      %v990 = vadd.f32 0.0, %v989
      %v991 = vpop.f32.mrf.mxu0
      %992 = vmatprep.mubr.bf16.mxu0 0
      %993 = vmatmul.mubr.bf16.gmra.mxu0 %v631
      %v994 = vpop.f32.mrf.mxu0
      %v995 = vadd.f32 0.0, %v994
      %v996 = vpop.f32.mrf.mxu0
      %v997 = vpop.f32.mrf.mxu0
      %v998 = vadd.f32 0.0, %v997
      %v999 = vpop.f32.mrf.mxu0
      %1000 = vdwg.mxu0
      %v1001 = vadd.f32 %v328, %v747
      %v1002 = vadd.f32 %v329, %v750
      %v1003 = vadd.f32 %v330, %v755
      %v1004 = vadd.f32 %v331, %v758
      %v1005 = vadd.f32 %v332, %v763
      %v1006 = vadd.f32 %v333, %v766
      %v1007 = vadd.f32 %v334, %v771
      %v1008 = vadd.f32 %v335, %v774
      %v1009 = vadd.f32 %v336, %v779
      %v1010 = vadd.f32 %v337, %v782
      %v1011 = vadd.f32 %v338, %v787
      %v1012 = vadd.f32 %v339, %v790
      %v1013 = vadd.f32 %v340, %v795
      %v1014 = vadd.f32 %v341, %v798
      %v1015 = vadd.f32 %v342, %v803
      %v1016 = vadd.f32 %v343, %v806
      %v1017 = vadd.f32 %v344, %v811
      %v1018 = vadd.f32 %v345, %v814
      %v1019 = vadd.f32 %v346, %v819
      %v1020 = vadd.f32 %v347, %v822
      %v1021 = vadd.f32 %v348, %v827
      %v1022 = vadd.f32 %v349, %v830
      %v1023 = vadd.f32 %v350, %v835
      %v1024 = vadd.f32 %v351, %v838
      %v1025 = vadd.f32 %v352, %v843
      %v1026 = vadd.f32 %v353, %v846
      %v1027 = vadd.f32 %v354, %v851
      %v1028 = vadd.f32 %v355, %v854
      %v1029 = vadd.f32 %v356, %v859
      %v1030 = vadd.f32 %v357, %v862
      %v1031 = vadd.f32 %v358, %v867
      %v1032 = vadd.f32 %v359, %v870
      %v1033 = vadd.f32 %v360, %v875
      %v1034 = vadd.f32 %v361, %v878
      %v1035 = vadd.f32 %v362, %v883
      %v1036 = vadd.f32 %v363, %v886
      %v1037 = vadd.f32 %v364, %v891
      %v1038 = vadd.f32 %v365, %v894
      %v1039 = vadd.f32 %v366, %v899
      %v1040 = vadd.f32 %v367, %v902
      %v1041 = vadd.f32 %v368, %v907
      %v1042 = vadd.f32 %v369, %v910
      %v1043 = vadd.f32 %v370, %v915
      %v1044 = vadd.f32 %v371, %v918
      %v1045 = vadd.f32 %v372, %v923
      %v1046 = vadd.f32 %v373, %v926
      %v1047 = vadd.f32 %v374, %v931
      %v1048 = vadd.f32 %v375, %v934
      %v1049 = vadd.f32 %v376, %v939
      %v1050 = vadd.f32 %v377, %v942
      %v1051 = vadd.f32 %v378, %v947
      %v1052 = vadd.f32 %v379, %v950
      %v1053 = vadd.f32 %v380, %v955
      %v1054 = vadd.f32 %v381, %v958
      %v1055 = vadd.f32 %v382, %v963
      %v1056 = vadd.f32 %v383, %v966
      %v1057 = vadd.f32 %v384, %v971
      %v1058 = vadd.f32 %v385, %v974
      %v1059 = vadd.f32 %v386, %v979
      %v1060 = vadd.f32 %v387, %v982
      %v1061 = vadd.f32 %v388, %v987
      %v1062 = vadd.f32 %v389, %v990
      %v1063 = vadd.f32 %v390, %v995
      %v1064 = vadd.f32 %v391, %v998
      %1065 = vst [vmem:[#allocation2] sm:$0xff] %v1001
      %1066 = vst [vmem:[#allocation2 + $0x8] sm:$0xff] %v1002
      %1067 = vst [vmem:[#allocation2 + $0x10] sm:$0xff] %v1003
      %1068 = vst [vmem:[#allocation2 + $0x18] sm:$0xff] %v1004
      %1069 = vst [vmem:[#allocation2 + $0x20] sm:$0xff] %v1005
      %1070 = vst [vmem:[#allocation2 + $0x28] sm:$0xff] %v1006
      %1071 = vst [vmem:[#allocation2 + $0x30] sm:$0xff] %v1007
      %1072 = vst [vmem:[#allocation2 + $0x38] sm:$0xff] %v1008
      %1073 = vst [vmem:[#allocation2 + $0x40] sm:$0xff] %v1009
      %1074 = vst [vmem:[#allocation2 + $0x48] sm:$0xff] %v1010
      %1075 = vst [vmem:[#allocation2 + $0x50] sm:$0xff] %v1011
      %1076 = vst [vmem:[#allocation2 + $0x58] sm:$0xff] %v1012
      %1077 = vst [vmem:[#allocation2 + $0x60] sm:$0xff] %v1013
      %1078 = vst [vmem:[#allocation2 + $0x68] sm:$0xff] %v1014
      %1079 = vst [vmem:[#allocation2 + $0x70] sm:$0xff] %v1015
      %1080 = vst [vmem:[#allocation2 + $0x78] sm:$0xff] %v1016
      %1081 = vst [vmem:[#allocation2 + $0x80] sm:$0xff] %v1017
      %1082 = vst [vmem:[#allocation2 + $0x88] sm:$0xff] %v1018
      %1083 = vst [vmem:[#allocation2 + $0x90] sm:$0xff] %v1019
      %1084 = vst [vmem:[#allocation2 + $0x98] sm:$0xff] %v1020
      %1085 = vst [vmem:[#allocation2 + $0xa0] sm:$0xff] %v1021
      %1086 = vst [vmem:[#allocation2 + $0xa8] sm:$0xff] %v1022
      %1087 = vst [vmem:[#allocation2 + $0xb0] sm:$0xff] %v1023
      %1088 = vst [vmem:[#allocation2 + $0xb8] sm:$0xff] %v1024
      %1089 = vst [vmem:[#allocation2 + $0xc0] sm:$0xff] %v1025
      %1090 = vst [vmem:[#allocation2 + $0xc8] sm:$0xff] %v1026
      %1091 = vst [vmem:[#allocation2 + $0xd0] sm:$0xff] %v1027
      %1092 = vst [vmem:[#allocation2 + $0xd8] sm:$0xff] %v1028
      %1093 = vst [vmem:[#allocation2 + $0xe0] sm:$0xff] %v1029
      %1094 = vst [vmem:[#allocation2 + $0xe8] sm:$0xff] %v1030
      %1095 = vst [vmem:[#allocation2 + $0xf0] sm:$0xff] %v1031
      %1096 = vst [vmem:[#allocation2 + $0xf8] sm:$0xff] %v1032
      %1097 = vst [vmem:[#allocation2 + $0x100] sm:$0xff] %v1033
      %1098 = vst [vmem:[#allocation2 + $0x108] sm:$0xff] %v1034
      %1099 = vst [vmem:[#allocation2 + $0x110] sm:$0xff] %v1035
      %1100 = vst [vmem:[#allocation2 + $0x118] sm:$0xff] %v1036
      %1101 = vst [vmem:[#allocation2 + $0x120] sm:$0xff] %v1037
      %1102 = vst [vmem:[#allocation2 + $0x128] sm:$0xff] %v1038
      %1103 = vst [vmem:[#allocation2 + $0x130] sm:$0xff] %v1039
      %1104 = vst [vmem:[#allocation2 + $0x138] sm:$0xff] %v1040
      %1105 = vst [vmem:[#allocation2 + $0x140] sm:$0xff] %v1041
      %1106 = vst [vmem:[#allocation2 + $0x148] sm:$0xff] %v1042
      %1107 = vst [vmem:[#allocation2 + $0x150] sm:$0xff] %v1043
      %1108 = vst [vmem:[#allocation2 + $0x158] sm:$0xff] %v1044
      %1109 = vst [vmem:[#allocation2 + $0x160] sm:$0xff] %v1045
      %1110 = vst [vmem:[#allocation2 + $0x168] sm:$0xff] %v1046
      %1111 = vst [vmem:[#allocation2 + $0x170] sm:$0xff] %v1047
      %1112 = vst [vmem:[#allocation2 + $0x178] sm:$0xff] %v1048
      %1113 = vst [vmem:[#allocation2 + $0x180] sm:$0xff] %v1049
      %1114 = vst [vmem:[#allocation2 + $0x188] sm:$0xff] %v1050
      %1115 = vst [vmem:[#allocation2 + $0x190] sm:$0xff] %v1051
      %1116 = vst [vmem:[#allocation2 + $0x198] sm:$0xff] %v1052
      %1117 = vst [vmem:[#allocation2 + $0x1a0] sm:$0xff] %v1053
      %1118 = vst [vmem:[#allocation2 + $0x1a8] sm:$0xff] %v1054
      %1119 = vst [vmem:[#allocation2 + $0x1b0] sm:$0xff] %v1055
      %1120 = vst [vmem:[#allocation2 + $0x1b8] sm:$0xff] %v1056
      %1121 = vst [vmem:[#allocation2 + $0x1c0] sm:$0xff] %v1057
      %1122 = vst [vmem:[#allocation2 + $0x1c8] sm:$0xff] %v1058
      %1123 = vst [vmem:[#allocation2 + $0x1d0] sm:$0xff] %v1059
      %1124 = vst [vmem:[#allocation2 + $0x1d8] sm:$0xff] %v1060
      %1125 = vst [vmem:[#allocation2 + $0x1e0] sm:$0xff] %v1061
      %1126 = vst [vmem:[#allocation2 + $0x1e8] sm:$0xff] %v1062
      %1127 = vst [vmem:[#allocation2 + $0x1f0] sm:$0xff] %v1063
      %1128 = vst [vmem:[#allocation2 + $0x1f8] sm:$0xff] %v1064
      // Predicated region
      $region37: #{sfi_forward.19} parent=31 // pred_check
        %p1129 = pneg %p260
      $region38: #{sfi_forward.19} parent=31 // pred_check_branch
        %1131 = sbr.rel (%p1129) target = $region40
      $region39: #{sfi_forward.19} parent=31 // pred_region
        %v1132 = vld [vmem:[#allocation2] sm:$0xff]
        %v1133 = vld [vmem:[#allocation2 + $0x8] sm:$0xff]
        %v1134 = vld [vmem:[#allocation2 + $0x10] sm:$0xff]
        %v1135 = vld [vmem:[#allocation2 + $0x18] sm:$0xff]
        %v1136 = vld [vmem:[#allocation2 + $0x20] sm:$0xff]
        %v1137 = vld [vmem:[#allocation2 + $0x28] sm:$0xff]
        %v1138 = vld [vmem:[#allocation2 + $0x30] sm:$0xff]
        %v1139 = vld [vmem:[#allocation2 + $0x38] sm:$0xff]
        %v1140 = vld [vmem:[#allocation2 + $0x40] sm:$0xff]
        %v1141 = vld [vmem:[#allocation2 + $0x48] sm:$0xff]
        %v1142 = vld [vmem:[#allocation2 + $0x50] sm:$0xff]
        %v1143 = vld [vmem:[#allocation2 + $0x58] sm:$0xff]
        %v1144 = vld [vmem:[#allocation2 + $0x60] sm:$0xff]
        %v1145 = vld [vmem:[#allocation2 + $0x68] sm:$0xff]
        %v1146 = vld [vmem:[#allocation2 + $0x70] sm:$0xff]
        %v1147 = vld [vmem:[#allocation2 + $0x78] sm:$0xff]
        %v1148 = vld [vmem:[#allocation2 + $0x80] sm:$0xff]
        %v1149 = vld [vmem:[#allocation2 + $0x88] sm:$0xff]
        %v1150 = vld [vmem:[#allocation2 + $0x90] sm:$0xff]
        %v1151 = vld [vmem:[#allocation2 + $0x98] sm:$0xff]
        %v1152 = vld [vmem:[#allocation2 + $0xa0] sm:$0xff]
        %v1153 = vld [vmem:[#allocation2 + $0xa8] sm:$0xff]
        %v1154 = vld [vmem:[#allocation2 + $0xb0] sm:$0xff]
        %v1155 = vld [vmem:[#allocation2 + $0xb8] sm:$0xff]
        %v1156 = vld [vmem:[#allocation2 + $0xc0] sm:$0xff]
        %v1157 = vld [vmem:[#allocation2 + $0xc8] sm:$0xff]
        %v1158 = vld [vmem:[#allocation2 + $0xd0] sm:$0xff]
        %v1159 = vld [vmem:[#allocation2 + $0xd8] sm:$0xff]
        %v1160 = vld [vmem:[#allocation2 + $0xe0] sm:$0xff]
        %v1161 = vld [vmem:[#allocation2 + $0xe8] sm:$0xff]
        %v1162 = vld [vmem:[#allocation2 + $0xf0] sm:$0xff]
        %v1163 = vld [vmem:[#allocation2 + $0xf8] sm:$0xff]
        %v1164 = vld [vmem:[#allocation2 + $0x100] sm:$0xff]
        %v1165 = vld [vmem:[#allocation2 + $0x108] sm:$0xff]
        %v1166 = vld [vmem:[#allocation2 + $0x110] sm:$0xff]
        %v1167 = vld [vmem:[#allocation2 + $0x118] sm:$0xff]
        %v1168 = vld [vmem:[#allocation2 + $0x120] sm:$0xff]
        %v1169 = vld [vmem:[#allocation2 + $0x128] sm:$0xff]
        %v1170 = vld [vmem:[#allocation2 + $0x130] sm:$0xff]
        %v1171 = vld [vmem:[#allocation2 + $0x138] sm:$0xff]
        %v1172 = vld [vmem:[#allocation2 + $0x140] sm:$0xff]
        %v1173 = vld [vmem:[#allocation2 + $0x148] sm:$0xff]
        %v1174 = vld [vmem:[#allocation2 + $0x150] sm:$0xff]
        %v1175 = vld [vmem:[#allocation2 + $0x158] sm:$0xff]
        %v1176 = vld [vmem:[#allocation2 + $0x160] sm:$0xff]
        %v1177 = vld [vmem:[#allocation2 + $0x168] sm:$0xff]
        %v1178 = vld [vmem:[#allocation2 + $0x170] sm:$0xff]
        %v1179 = vld [vmem:[#allocation2 + $0x178] sm:$0xff]
        %v1180 = vld [vmem:[#allocation2 + $0x180] sm:$0xff]
        %v1181 = vld [vmem:[#allocation2 + $0x188] sm:$0xff]
        %v1182 = vld [vmem:[#allocation2 + $0x190] sm:$0xff]
        %v1183 = vld [vmem:[#allocation2 + $0x198] sm:$0xff]
        %v1184 = vld [vmem:[#allocation2 + $0x1a0] sm:$0xff]
        %v1185 = vld [vmem:[#allocation2 + $0x1a8] sm:$0xff]
        %v1186 = vld [vmem:[#allocation2 + $0x1b0] sm:$0xff]
        %v1187 = vld [vmem:[#allocation2 + $0x1b8] sm:$0xff]
        %v1188 = vld [vmem:[#allocation2 + $0x1c0] sm:$0xff]
        %v1189 = vld [vmem:[#allocation2 + $0x1c8] sm:$0xff]
        %v1190 = vld [vmem:[#allocation2 + $0x1d0] sm:$0xff]
        %v1191 = vld [vmem:[#allocation2 + $0x1d8] sm:$0xff]
        %v1192 = vld [vmem:[#allocation2 + $0x1e0] sm:$0xff]
        %v1193 = vld [vmem:[#allocation2 + $0x1e8] sm:$0xff]
        %v1194 = vld [vmem:[#allocation2 + $0x1f0] sm:$0xff]
        %v1195 = vld [vmem:[#allocation2 + $0x1f8] sm:$0xff]
        %v1196 = vld [vmem:[%s249] sm:$0x1]
        %v1198 = vlaneseq
        %v1199 = vshrl.u32 %v1198, 7
        %v1200 = vsub.s32 0, %v1199
        %v1201 = vrot.slane %v1196, %v1200
        %v1203 = vadd.f32 %v1132, %v1201
        %v1204 = vadd.f32 %v1133, %v1201
        %v1205 = vadd.f32 %v1134, %v1201
        %v1206 = vadd.f32 %v1135, %v1201
        %v1207 = vadd.f32 %v1136, %v1201
        %v1208 = vadd.f32 %v1137, %v1201
        %v1209 = vadd.f32 %v1138, %v1201
        %v1210 = vadd.f32 %v1139, %v1201
        %v1211 = vadd.f32 %v1140, %v1201
        %v1212 = vadd.f32 %v1141, %v1201
        %v1213 = vadd.f32 %v1142, %v1201
        %v1214 = vadd.f32 %v1143, %v1201
        %v1215 = vadd.f32 %v1144, %v1201
        %v1216 = vadd.f32 %v1145, %v1201
        %v1217 = vadd.f32 %v1146, %v1201
        %v1218 = vadd.f32 %v1147, %v1201
        %v1219 = vadd.f32 %v1148, %v1201
        %v1220 = vadd.f32 %v1149, %v1201
        %v1221 = vadd.f32 %v1150, %v1201
        %v1222 = vadd.f32 %v1151, %v1201
        %v1223 = vadd.f32 %v1152, %v1201
        %v1224 = vadd.f32 %v1153, %v1201
        %v1225 = vadd.f32 %v1154, %v1201
        %v1226 = vadd.f32 %v1155, %v1201
        %v1227 = vadd.f32 %v1156, %v1201
        %v1228 = vadd.f32 %v1157, %v1201
        %v1229 = vadd.f32 %v1158, %v1201
        %v1230 = vadd.f32 %v1159, %v1201
        %v1231 = vadd.f32 %v1160, %v1201
        %v1232 = vadd.f32 %v1161, %v1201
        %v1233 = vadd.f32 %v1162, %v1201
        %v1234 = vadd.f32 %v1163, %v1201
        %v1235 = vadd.f32 %v1164, %v1201
        %v1236 = vadd.f32 %v1165, %v1201
        %v1237 = vadd.f32 %v1166, %v1201
        %v1238 = vadd.f32 %v1167, %v1201
        %v1239 = vadd.f32 %v1168, %v1201
        %v1240 = vadd.f32 %v1169, %v1201
        %v1241 = vadd.f32 %v1170, %v1201
        %v1242 = vadd.f32 %v1171, %v1201
        %v1243 = vadd.f32 %v1172, %v1201
        %v1244 = vadd.f32 %v1173, %v1201
        %v1245 = vadd.f32 %v1174, %v1201
        %v1246 = vadd.f32 %v1175, %v1201
        %v1247 = vadd.f32 %v1176, %v1201
        %v1248 = vadd.f32 %v1177, %v1201
        %v1249 = vadd.f32 %v1178, %v1201
        %v1250 = vadd.f32 %v1179, %v1201
        %v1251 = vadd.f32 %v1180, %v1201
        %v1252 = vadd.f32 %v1181, %v1201
        %v1253 = vadd.f32 %v1182, %v1201
        %v1254 = vadd.f32 %v1183, %v1201
        %v1255 = vadd.f32 %v1184, %v1201
        %v1256 = vadd.f32 %v1185, %v1201
        %v1257 = vadd.f32 %v1186, %v1201
        %v1258 = vadd.f32 %v1187, %v1201
        %v1259 = vadd.f32 %v1188, %v1201
        %v1260 = vadd.f32 %v1189, %v1201
        %v1261 = vadd.f32 %v1190, %v1201
        %v1262 = vadd.f32 %v1191, %v1201
        %v1263 = vadd.f32 %v1192, %v1201
        %v1264 = vadd.f32 %v1193, %v1201
        %v1265 = vadd.f32 %v1194, %v1201
        %v1266 = vadd.f32 %v1195, %v1201
        %1267 = vst [vmem:[%s257] sm:$0xff] %v1203
        %1268 = vst [vmem:[%s257 + $0x8] sm:$0xff] %v1204
        %1269 = vst [vmem:[%s257 + $0x10] sm:$0xff] %v1205
        %1270 = vst [vmem:[%s257 + $0x18] sm:$0xff] %v1206
        %1271 = vst [vmem:[%s257 + $0x20] sm:$0xff] %v1207
        %1272 = vst [vmem:[%s257 + $0x28] sm:$0xff] %v1208
        %1273 = vst [vmem:[%s257 + $0x30] sm:$0xff] %v1209
        %1274 = vst [vmem:[%s257 + $0x38] sm:$0xff] %v1210
        %1275 = vst [vmem:[%s257 + $0x40] sm:$0xff] %v1211
        %1276 = vst [vmem:[%s257 + $0x48] sm:$0xff] %v1212
        %1277 = vst [vmem:[%s257 + $0x50] sm:$0xff] %v1213
        %1278 = vst [vmem:[%s257 + $0x58] sm:$0xff] %v1214
        %1279 = vst [vmem:[%s257 + $0x60] sm:$0xff] %v1215
        %1280 = vst [vmem:[%s257 + $0x68] sm:$0xff] %v1216
        %1281 = vst [vmem:[%s257 + $0x70] sm:$0xff] %v1217
        %1282 = vst [vmem:[%s257 + $0x78] sm:$0xff] %v1218
        %1283 = vst [vmem:[%s257 + $0x80] sm:$0xff] %v1219
        %1284 = vst [vmem:[%s257 + $0x88] sm:$0xff] %v1220
        %1285 = vst [vmem:[%s257 + $0x90] sm:$0xff] %v1221
        %1286 = vst [vmem:[%s257 + $0x98] sm:$0xff] %v1222
        %1287 = vst [vmem:[%s257 + $0xa0] sm:$0xff] %v1223
        %1288 = vst [vmem:[%s257 + $0xa8] sm:$0xff] %v1224
        %1289 = vst [vmem:[%s257 + $0xb0] sm:$0xff] %v1225
        %1290 = vst [vmem:[%s257 + $0xb8] sm:$0xff] %v1226
        %1291 = vst [vmem:[%s257 + $0xc0] sm:$0xff] %v1227
        %1292 = vst [vmem:[%s257 + $0xc8] sm:$0xff] %v1228
        %1293 = vst [vmem:[%s257 + $0xd0] sm:$0xff] %v1229
        %1294 = vst [vmem:[%s257 + $0xd8] sm:$0xff] %v1230
        %1295 = vst [vmem:[%s257 + $0xe0] sm:$0xff] %v1231
        %1296 = vst [vmem:[%s257 + $0xe8] sm:$0xff] %v1232
        %1297 = vst [vmem:[%s257 + $0xf0] sm:$0xff] %v1233
        %1298 = vst [vmem:[%s257 + $0xf8] sm:$0xff] %v1234
        %1299 = vst [vmem:[%s257 + $0x100] sm:$0xff] %v1235
        %1300 = vst [vmem:[%s257 + $0x108] sm:$0xff] %v1236
        %1301 = vst [vmem:[%s257 + $0x110] sm:$0xff] %v1237
        %1302 = vst [vmem:[%s257 + $0x118] sm:$0xff] %v1238
        %1303 = vst [vmem:[%s257 + $0x120] sm:$0xff] %v1239
        %1304 = vst [vmem:[%s257 + $0x128] sm:$0xff] %v1240
        %1305 = vst [vmem:[%s257 + $0x130] sm:$0xff] %v1241
        %1306 = vst [vmem:[%s257 + $0x138] sm:$0xff] %v1242
        %1307 = vst [vmem:[%s257 + $0x140] sm:$0xff] %v1243
        %1308 = vst [vmem:[%s257 + $0x148] sm:$0xff] %v1244
        %1309 = vst [vmem:[%s257 + $0x150] sm:$0xff] %v1245
        %1310 = vst [vmem:[%s257 + $0x158] sm:$0xff] %v1246
        %1311 = vst [vmem:[%s257 + $0x160] sm:$0xff] %v1247
        %1312 = vst [vmem:[%s257 + $0x168] sm:$0xff] %v1248
        %1313 = vst [vmem:[%s257 + $0x170] sm:$0xff] %v1249
        %1314 = vst [vmem:[%s257 + $0x178] sm:$0xff] %v1250
        %1315 = vst [vmem:[%s257 + $0x180] sm:$0xff] %v1251
        %1316 = vst [vmem:[%s257 + $0x188] sm:$0xff] %v1252
        %1317 = vst [vmem:[%s257 + $0x190] sm:$0xff] %v1253
        %1318 = vst [vmem:[%s257 + $0x198] sm:$0xff] %v1254
        %1319 = vst [vmem:[%s257 + $0x1a0] sm:$0xff] %v1255
        %1320 = vst [vmem:[%s257 + $0x1a8] sm:$0xff] %v1256
        %1321 = vst [vmem:[%s257 + $0x1b0] sm:$0xff] %v1257
        %1322 = vst [vmem:[%s257 + $0x1b8] sm:$0xff] %v1258
        %1323 = vst [vmem:[%s257 + $0x1c0] sm:$0xff] %v1259
        %1324 = vst [vmem:[%s257 + $0x1c8] sm:$0xff] %v1260
        %1325 = vst [vmem:[%s257 + $0x1d0] sm:$0xff] %v1261
        %1326 = vst [vmem:[%s257 + $0x1d8] sm:$0xff] %v1262
        %1327 = vst [vmem:[%s257 + $0x1e0] sm:$0xff] %v1263
        %1328 = vst [vmem:[%s257 + $0x1e8] sm:$0xff] %v1264
        %1329 = vst [vmem:[%s257 + $0x1f0] sm:$0xff] %v1265
        %1330 = vst [vmem:[%s257 + $0x1f8] sm:$0xff] %v1266
      $region40: #{sfi_forward.19} parent=31 // pred_fallthru
        _
      %s1331 = smul.u32 64, %s19
      %p1332 = scmp.lt.s32.totalorder %s1331, 255
      %s1333 = scalar_select %p1332, %s1331, 255
      %p1334 = scmp.lt.s32.totalorder %s20, 0
      %s1335 = scalar_select %p1334, %s20, 0
      %s1336 = sadd.s32 %s1335, %s1333
      %s1337 = smul.addr %s1336, 8
      %s1338 = scalar_lea.vmem %s3, %s1337
      // Predicated region
      $region41: #{sfi_forward.19} parent=31 // pred_check
        %p1339 = pneg %p135
      $region42: #{sfi_forward.19} parent=31 // pred_check_branch
        %1341 = sbr.rel (%p1339) target = $region44
      $region43: #{sfi_forward.19} parent=31 // pred_region
        %s1342 = smul.u32 64, %s19
      $region44: #{sfi_forward.19} parent=31 // pred_fallthru
        _
    $region32: #{sfi_forward.19} parent=5 // pred_fallthru
      _
    %p1343 = scmp.le.s32.totalorder 2, %s9
    // Predicated region
    $region45: #{sfi_forward.19} parent=5 // pred_check
      %p1344 = pneg %p1343
    $region46: #{sfi_forward.19} parent=5 // pred_check_branch
      %1346 = sbr.rel (%p1344) target = $region48
    $region47: #{sfi_forward.19} parent=5 // pred_region
      %s1347 = ssub.s32 %s9, 2
      // Predicated region
      $region49: #{sfi_forward.19} parent=47 // pred_check
        %p1348 = pneg %p141
      $region50: #{sfi_forward.19} parent=47 // pred_check_branch
        %1350 = sbr.rel (%p1348) target = $region52
      $region51: #{sfi_forward.19} parent=47 // pred_region
        %s1351 = smul.u32 64, %s22
        %p1352 = scmp.lt.s32.totalorder %s1351, 255
        %s1353 = scalar_select %p1352, %s1351, 255
        %p1354 = scmp.lt.s32.totalorder %s23, 0
        %s1355 = scalar_select %p1354, %s23, 0
        %s1356 = sadd.s32 %s1355, %s1353
        %s1357 = smul.addr %s1356, 8
        %s1358 = scalar_lea.vmem %s3, %s1357
      $region52: #{sfi_forward.19} parent=47 // pred_fallthru
        _
    $region48: #{sfi_forward.19} parent=5 // pred_fallthru
      _
  $region6: #{sfi_forward.19} parent=0 // loop_footer
    %s13 = sadd.s32 1, %s9
  $region7: #{sfi_forward.19} parent=0 // loop_footer_branch
    %8 = sbr.rel target = $region3
  $region8: #{sfi_forward.19} parent=0 // loop_exit
    _

// kernel: sfi_forward.21
$region0: #{sfi_forward.21}
  #allocation0 [shape = 'u32[]', space=smem, size = 0x4, offset = 0x4, fixed_abs, tag = 'smem constant byte address 0x4 - core index']
  #allocation1 [shape = 'u32[144,128]{1,0:T(1,128)}', space=vmem, size = 0x12000, scoped, tag = 'internal scratch']
  #allocation2 [shape = 'f32[16,32]{1,0:T(8,128)}', space=vmem, size = 0x2000, scoped, tag = 'scratch operand']
  %s0 = inlined_call_operand.vmem [shape: f32[256,32], index: 0, kind: input, shape index: {}]
  %s1 = inlined_call_operand.vmem [shape: f32[256,32], index: 1, kind: input, shape index: {}]
  %s2 = inlined_call_operand.vmem [shape: f32[256,16,32], index: 2, kind: input, shape index: {}]
  %s3 = inlined_call_operand.vmem [shape: f32[256,16,32], index: 3, kind: input, shape index: {}]
  %s4 = inlined_call_operand.vmem [shape: f32[16,32], index: 4, kind: input, shape index: {}]
  %s5 = inlined_call_operand.vmem [shape: f32[1,32], index: 5, kind: input, shape index: {}]
  %s6 = inlined_call_operand.vmem [shape: f32[256,32], index: 6, kind: output, shape index: {}]
  %s7 = sld [smem:[#allocation0]]
  $region68: #{sfi_forward.21} parent=0
    _
  %s9 = ssub.s32 1, %s7
  %s10 = scalar_select 0, %s9, %s7
  loop: start=0, step=1, limit=4
  $region2: #{sfi_forward.21} parent=0 // loop_pre_header
    _
  $region3: #{sfi_forward.21} parent=0 // loop_header
    %s12 = sphi 0, %s16
    %p13 = scmp.ge.s32.totalorder %s12, 4
    %s22 = sphi 0, %s24
    %s25 = sphi 0, %s22
    %s26 = sphi 0, %s25
    %s42 = sphi 0, %s26
    %s48 = sphi 0, %s50
    %s51 = sphi 0, %s48
    %s52 = sphi 0, %s51
    %s68 = sphi 0, %s52
    %s74 = sphi 0, %s76
    %s77 = sphi 0, %s74
    %s78 = sphi 0, %s77
    %s94 = sphi 0, %s78
    %s100 = sphi 0, %s102
    %s103 = sphi 0, %s100
    %s104 = sphi 0, %s103
    %s120 = sphi 0, %s104
    %s124 = sphi 0, %s124
    %s126 = sphi 0, %s124
    %s127 = sphi 0, %s126
    %s141 = sphi 0, %s127
    %s145 = sphi 0, %s145
    %s147 = sphi 0, %s145
    %s148 = sphi 0, %s147
    %s162 = sphi 0, %s148
    %s168 = sphi 0, %s170
    %s171 = sphi 0, %s168
    %s172 = sphi 0, %s171
    %s188 = sphi 0, %s172
  $region4: #{sfi_forward.21} parent=0 // loop_header_branch
    %15 = sbr.rel (%p13) target = $region8
  $region5: #{sfi_forward.21} parent=0 // loop_body
    %s17 = ssub.s32 %s12, 1
    %s18 = ssub.s32 %s12, 2
    %s19 = sadd.s32 %s12, 1
    %s20 = ssub.s32 %s12, %s19
    %p21 = scmp.eq.s32.totalorder %s20, 0
    %s23 = sadd.s32 %s22, 1
    %s24 = scalar_select %p21, %s22, %s23
    %p27 = pneg %p21
    %p28 = scmp.eq.s32.totalorder %s12, 1
    %p29 = por %p27, %p28
    %p30 = scmp.ne.s32.totalorder %s22, %s25
    %p31 = scmp.eq.s32.totalorder %s12, 0
    %p32 = por %p30, %p31
    %p33 = scmp.ne.s32.totalorder %s22, %s25
    %p34 = scmp.eq.s32.totalorder %s17, 1
    %p35 = por %p33, %p34
    %p36 = scmp.ne.s32.totalorder %s25, %s26
    %p37 = scmp.eq.s32.totalorder %s17, 0
    %p38 = por %p36, %p37
    %p39 = scmp.ne.s32.totalorder %s25, %s26
    %p40 = scmp.eq.s32.totalorder %s18, 1
    %p41 = por %p39, %p40
    %p43 = scmp.ne.s32.totalorder %s26, %s42
    %p44 = scmp.eq.s32.totalorder %s18, 0
    %p45 = por %p43, %p44
    %s46 = ssub.s32 %s12, %s19
    %p47 = scmp.eq.s32.totalorder %s46, 0
    %s49 = sadd.s32 %s48, 1
    %s50 = scalar_select %p47, %s48, %s49
    %p53 = pneg %p47
    %p54 = scmp.eq.s32.totalorder %s12, 1
    %p55 = por %p53, %p54
    %p56 = scmp.ne.s32.totalorder %s48, %s51
    %p57 = scmp.eq.s32.totalorder %s12, 0
    %p58 = por %p56, %p57
    %p59 = scmp.ne.s32.totalorder %s48, %s51
    %p60 = scmp.eq.s32.totalorder %s17, 1
    %p61 = por %p59, %p60
    %p62 = scmp.ne.s32.totalorder %s51, %s52
    %p63 = scmp.eq.s32.totalorder %s17, 0
    %p64 = por %p62, %p63
    %p65 = scmp.ne.s32.totalorder %s51, %s52
    %p66 = scmp.eq.s32.totalorder %s18, 1
    %p67 = por %p65, %p66
    %p69 = scmp.ne.s32.totalorder %s52, %s68
    %p70 = scmp.eq.s32.totalorder %s18, 0
    %p71 = por %p69, %p70
    %s72 = ssub.s32 %s12, %s19
    %p73 = scmp.eq.s32.totalorder %s72, 0
    %s75 = sadd.s32 %s74, 1
    %s76 = scalar_select %p73, %s74, %s75
    %p79 = pneg %p73
    %p80 = scmp.eq.s32.totalorder %s12, 1
    %p81 = por %p79, %p80
    %p82 = scmp.ne.s32.totalorder %s74, %s77
    %p83 = scmp.eq.s32.totalorder %s12, 0
    %p84 = por %p82, %p83
    %p85 = scmp.ne.s32.totalorder %s74, %s77
    %p86 = scmp.eq.s32.totalorder %s17, 1
    %p87 = por %p85, %p86
    %p88 = scmp.ne.s32.totalorder %s77, %s78
    %p89 = scmp.eq.s32.totalorder %s17, 0
    %p90 = por %p88, %p89
    %p91 = scmp.ne.s32.totalorder %s77, %s78
    %p92 = scmp.eq.s32.totalorder %s18, 1
    %p93 = por %p91, %p92
    %p95 = scmp.ne.s32.totalorder %s78, %s94
    %p96 = scmp.eq.s32.totalorder %s18, 0
    %p97 = por %p95, %p96
    %s98 = ssub.s32 %s12, %s19
    %p99 = scmp.eq.s32.totalorder %s98, 0
    %s101 = sadd.s32 %s100, 1
    %s102 = scalar_select %p99, %s100, %s101
    %p105 = pneg %p99
    %p106 = scmp.eq.s32.totalorder %s12, 1
    %p107 = por %p105, %p106
    %p108 = scmp.ne.s32.totalorder %s100, %s103
    %p109 = scmp.eq.s32.totalorder %s12, 0
    %p110 = por %p108, %p109
    %p111 = scmp.ne.s32.totalorder %s100, %s103
    %p112 = scmp.eq.s32.totalorder %s17, 1
    %p113 = por %p111, %p112
    %p114 = scmp.ne.s32.totalorder %s103, %s104
    %p115 = scmp.eq.s32.totalorder %s17, 0
    %p116 = por %p114, %p115
    %p117 = scmp.ne.s32.totalorder %s103, %s104
    %p118 = scmp.eq.s32.totalorder %s18, 1
    %p119 = por %p117, %p118
    %p121 = scmp.ne.s32.totalorder %s104, %s120
    %p122 = scmp.eq.s32.totalorder %s18, 0
    %p123 = por %p121, %p122
    %s125 = sadd.s32 %s124, 1
    %p128 = scmp.eq.s32.totalorder %s12, 1
    %p129 = scmp.ne.s32.totalorder %s124, %s126
    %p130 = scmp.eq.s32.totalorder %s12, 0
    %p131 = por %p129, %p130
    %p132 = scmp.ne.s32.totalorder %s124, %s126
    %p133 = scmp.eq.s32.totalorder %s17, 1
    %p134 = por %p132, %p133
    %p135 = scmp.ne.s32.totalorder %s126, %s127
    %p136 = scmp.eq.s32.totalorder %s17, 0
    %p137 = por %p135, %p136
    %p138 = scmp.ne.s32.totalorder %s126, %s127
    %p139 = scmp.eq.s32.totalorder %s18, 1
    %p140 = por %p138, %p139
    %p142 = scmp.ne.s32.totalorder %s127, %s141
    %p143 = scmp.eq.s32.totalorder %s18, 0
    %p144 = por %p142, %p143
    %s146 = sadd.s32 %s145, 1
    %p149 = scmp.eq.s32.totalorder %s12, 1
    %p150 = scmp.ne.s32.totalorder %s145, %s147
    %p151 = scmp.eq.s32.totalorder %s12, 0
    %p152 = por %p150, %p151
    %p153 = scmp.ne.s32.totalorder %s145, %s147
    %p154 = scmp.eq.s32.totalorder %s17, 1
    %p155 = por %p153, %p154
    %p156 = scmp.ne.s32.totalorder %s147, %s148
    %p157 = scmp.eq.s32.totalorder %s17, 0
    %p158 = por %p156, %p157
    %p159 = scmp.ne.s32.totalorder %s147, %s148
    %p160 = scmp.eq.s32.totalorder %s18, 1
    %p161 = por %p159, %p160
    %p163 = scmp.ne.s32.totalorder %s148, %s162
    %p164 = scmp.eq.s32.totalorder %s18, 0
    %p165 = por %p163, %p164
    %s166 = ssub.s32 %s12, %s19
    %p167 = scmp.eq.s32.totalorder %s166, 0
    %s169 = sadd.s32 %s168, 1
    %s170 = scalar_select %p167, %s168, %s169
    %p173 = pneg %p167
    %p174 = scmp.eq.s32.totalorder %s12, 1
    %p175 = por %p173, %p174
    %p176 = scmp.ne.s32.totalorder %s168, %s171
    %p177 = scmp.eq.s32.totalorder %s12, 0
    %p178 = por %p176, %p177
    %p179 = scmp.ne.s32.totalorder %s168, %s171
    %p180 = scmp.eq.s32.totalorder %s17, 1
    %p181 = por %p179, %p180
    %p182 = scmp.ne.s32.totalorder %s171, %s172
    %p183 = scmp.eq.s32.totalorder %s17, 0
    %p184 = por %p182, %p183
    %p185 = scmp.ne.s32.totalorder %s171, %s172
    %p186 = scmp.eq.s32.totalorder %s18, 1
    %p187 = por %p185, %p186
    %p189 = scmp.ne.s32.totalorder %s172, %s188
    %p190 = scmp.eq.s32.totalorder %s18, 0
    %p191 = por %p189, %p190
    %p192 = scmp.le.s32.totalorder 1, %s12
    %p193 = scmp.lt.s32.totalorder %s12, 3
    %p194 = pnand %p192, %p193
    %p195 = pneg %p194
    // Predicated region
    $region9: #{sfi_forward.21} parent=5 // pred_check
      _
    $region10: #{sfi_forward.21} parent=5 // pred_check_branch
      %197 = sbr.rel (%p194) target = $region12
    $region11: #{sfi_forward.21} parent=5 // pred_region
      %s198 = ssub.s32 %s12, 1
      // Predicated region
      $region13: #{sfi_forward.21} parent=11 // pred_check
        %p199 = pneg %p137
      $region14: #{sfi_forward.21} parent=11 // pred_check_branch
        %201 = sbr.rel (%p199) target = $region16
      $region15: #{sfi_forward.21} parent=11 // pred_region
        _
      $region16: #{sfi_forward.21} parent=11 // pred_fallthru
        _
      // Predicated region
      $region17: #{sfi_forward.21} parent=11 // pred_check
        %p202 = pneg %p158
      $region18: #{sfi_forward.21} parent=11 // pred_check_branch
        %204 = sbr.rel (%p202) target = $region20
      $region19: #{sfi_forward.21} parent=11 // pred_region
        _
      $region20: #{sfi_forward.21} parent=11 // pred_fallthru
        _
    $region12: #{sfi_forward.21} parent=5 // pred_fallthru
      _
    %p205 = scmp.lt.s32.totalorder %s12, 2
    // Predicated region
    $region21: #{sfi_forward.21} parent=5 // pred_check
      %p206 = pneg %p205
    $region22: #{sfi_forward.21} parent=5 // pred_check_branch
      %208 = sbr.rel (%p206) target = $region24
    $region23: #{sfi_forward.21} parent=5 // pred_region
      // Predicated region
      $region25: #{sfi_forward.21} parent=23 // pred_check
        %p209 = pneg %p32
      $region26: #{sfi_forward.21} parent=23 // pred_check_branch
        %211 = sbr.rel (%p209) target = $region28
      $region27: #{sfi_forward.21} parent=23 // pred_region
        %s212 = smul.u32 16, %s12
        %p213 = scmp.lt.s32.totalorder %s212, 31
        %s214 = scalar_select %p213, %s212, 31
        %s215 = smul.addr %s214, 8
        %s216 = scalar_lea.vmem %s0, %s215
        %s217 = smul.u32 16, %s12
      $region28: #{sfi_forward.21} parent=23 // pred_fallthru
        _
      // Predicated region
      $region29: #{sfi_forward.21} parent=23 // pred_check
        %p218 = pneg %p58
      $region30: #{sfi_forward.21} parent=23 // pred_check_branch
        %220 = sbr.rel (%p218) target = $region32
      $region31: #{sfi_forward.21} parent=23 // pred_region
        %s221 = smul.u32 16, %s12
        %p222 = scmp.lt.s32.totalorder %s221, 31
        %s223 = scalar_select %p222, %s221, 31
        %s224 = smul.addr %s223, 8
        %s225 = scalar_lea.vmem %s1, %s224
        %s226 = smul.u32 16, %s12
      $region32: #{sfi_forward.21} parent=23 // pred_fallthru
        _
      // Predicated region
      $region33: #{sfi_forward.21} parent=23 // pred_check
        %p227 = pneg %p84
      $region34: #{sfi_forward.21} parent=23 // pred_check_branch
        %229 = sbr.rel (%p227) target = $region36
      $region35: #{sfi_forward.21} parent=23 // pred_region
        %s230 = smul.u32 128, %s12
        %p231 = scmp.lt.s32.totalorder %s230, 255
        %s232 = scalar_select %p231, %s230, 255
        %s233 = smul.addr %s232, 2
        %s234 = smul.addr %s233, 8
        %s235 = scalar_lea.vmem %s2, %s234
        %s236 = smul.u32 128, %s12
      $region36: #{sfi_forward.21} parent=23 // pred_fallthru
        _
      // Predicated region
      $region37: #{sfi_forward.21} parent=23 // pred_check
        %p237 = pneg %p110
      $region38: #{sfi_forward.21} parent=23 // pred_check_branch
        %239 = sbr.rel (%p237) target = $region40
      $region39: #{sfi_forward.21} parent=23 // pred_region
        %s240 = smul.u32 128, %s12
        %p241 = scmp.lt.s32.totalorder %s240, 255
        %s242 = scalar_select %p241, %s240, 255
        %s243 = smul.addr %s242, 2
        %s244 = smul.addr %s243, 8
        %s245 = scalar_lea.vmem %s3, %s244
        %s246 = smul.u32 128, %s12
      $region40: #{sfi_forward.21} parent=23 // pred_fallthru
        _
    $region24: #{sfi_forward.21} parent=5 // pred_fallthru
      _
    %p247 = scmp.le.s32.totalorder 1, %s12
    %p248 = scmp.lt.s32.totalorder %s12, 3
    %p249 = pnand %p247, %p248
    %p250 = pneg %p249
    // Predicated region
    $region41: #{sfi_forward.21} parent=5 // pred_check
      _
    $region42: #{sfi_forward.21} parent=5 // pred_check_branch
      %252 = sbr.rel (%p249) target = $region44
    $region43: #{sfi_forward.21} parent=5 // pred_region
      %s253 = ssub.s32 %s12, 1
      %s254 = smul.u32 16, %s17
      %p255 = scmp.lt.s32.totalorder %s254, 31
      %s256 = scalar_select %p255, %s254, 31
      %s257 = smul.addr %s256, 8
      %s258 = scalar_lea.vmem %s0, %s257
      %p259 = pneg %p38
      %p260 = pneg %p35
      %s261 = smul.u32 16, %s17
      %p262 = scmp.lt.s32.totalorder %s261, 31
      %s263 = scalar_select %p262, %s261, 31
      %s264 = smul.addr %s263, 8
      %s265 = scalar_lea.vmem %s1, %s264
      %p266 = pneg %p64
      %p267 = pneg %p61
      %s268 = smul.u32 128, %s17
      %p269 = scmp.lt.s32.totalorder %s268, 255
      %s270 = scalar_select %p269, %s268, 255
      %s271 = smul.addr %s270, 2
      %s272 = smul.addr %s271, 8
      %s273 = scalar_lea.vmem %s2, %s272
      %p274 = pneg %p90
      %p275 = pneg %p87
      %s276 = smul.u32 128, %s17
      %p277 = scmp.lt.s32.totalorder %s276, 255
      %s278 = scalar_select %p277, %s276, 255
      %s279 = smul.addr %s278, 2
      %s280 = smul.addr %s279, 8
      %s281 = scalar_lea.vmem %s3, %s280
      %p282 = pneg %p116
      %p283 = pneg %p113
      %p284 = pneg %p137
      %p285 = pneg %p134
      %p286 = pneg %p158
      %p287 = pneg %p155
      %p288 = pneg %p184
      %p289 = pneg %p181
      %s290 = smul.u32 16, %s17
      %p291 = scmp.lt.s32.totalorder %s290, 31
      %s292 = scalar_select %p291, %s290, 31
      %s293 = smul.addr %s292, 8
      %s294 = scalar_lea.vmem %s6, %s293
      %s295 = smul.u32 16, %s17
      %p296 = scmp.lt.s32.totalorder %s295, 31
      %s297 = scalar_select %p296, %s295, 31
      %s298 = smul.addr %s297, 8
      %s299 = scalar_lea.vmem %s0, %s298
      %s300 = smul.u32 16, %s17
      %s301 = smul.u32 16, %s17
      %p302 = scmp.lt.s32.totalorder %s301, 31
      %s303 = scalar_select %p302, %s301, 31
      %s304 = smul.addr %s303, 8
      %s305 = scalar_lea.vmem %s1, %s304
      %s306 = smul.u32 16, %s17
      %s307 = smul.u32 128, %s17
      %p308 = scmp.lt.s32.totalorder %s307, 255
      %s309 = scalar_select %p308, %s307, 255
      %s310 = smul.addr %s309, 2
      %s311 = smul.addr %s310, 8
      %s312 = scalar_lea.vmem %s2, %s311
      %s313 = smul.u32 128, %s17
      %s314 = smul.u32 128, %s17
      %p315 = scmp.lt.s32.totalorder %s314, 255
      %s316 = scalar_select %p315, %s314, 255
      %s317 = smul.addr %s316, 2
      %s318 = smul.addr %s317, 8
      %s319 = scalar_lea.vmem %s3, %s318
      %s320 = smul.u32 128, %s17
      %s321 = smul.u32 16, %s17
      %p322 = scmp.lt.s32.totalorder %s321, 31
      %s323 = scalar_select %p322, %s321, 31
      %s324 = smul.addr %s323, 8
      %s325 = scalar_lea.vmem %s6, %s324
      %s326 = smul.u32 16, %s17
      %p327 = scmp.eq.s32.totalorder %s17, 0
      // Predicated region
      $region45: #{sfi_forward.21} parent=43 // pred_check
        %p328 = pneg %p327
      $region46: #{sfi_forward.21} parent=43 // pred_check_branch
        %330 = sbr.rel (%p328) target = $region48
      $region47: #{sfi_forward.21} parent=43 // pred_region
        %vm331 = vcmask 261120
        %332 = vst.msk [vmem:[#allocation2] sm:$0xff] %vm331, 0.0
        %333 = vst.msk [vmem:[#allocation2 + $0x8] sm:$0xff] %vm331, 0.0
      $region48: #{sfi_forward.21} parent=43 // pred_fallthru
        _
      %v334 = vld [vmem:[%s4] sm:$0xff]
      %v335 = vld [vmem:[%s4 + $0x8] sm:$0xff]
      %v336 = vld [vmem:[%s5] sm:$0x1]
      %v337 = vld [vmem:[#allocation2] sm:$0xff]
      %v338 = vld [vmem:[#allocation2 + $0x8] sm:$0xff]
      loop: start=0, step=1, limit=128
      $region49: #{sfi_forward.21} parent=43 // loop_pre_header
        _
      $region50: #{sfi_forward.21} parent=43 // loop_header
        %s340 = sphi 0, %s344
        %p341 = scmp.ge.s32.totalorder %s340, 128
        %v345 = vphi %v337, %v377
        %v346 = vphi %v338, %v378
      $region51: #{sfi_forward.21} parent=43 // loop_header_branch
        %343 = sbr.rel (%p341) target = $region55
      $region52: #{sfi_forward.21} parent=43 // loop_body
        %s347 = scalar_lea.vmem %s299, %s340
        %v348 = vld [vmem:[%s347] sm:$0x1]
        %s349 = scalar_lea.vmem %s305, %s340
        %v350 = vld [vmem:[%s349] sm:$0x1]
        %s351 = smul.u32 %s340, 16
        %s352 = scalar_lea.vmem %s312, %s351
        %v353 = vld [vmem:[%s352] sm:$0xff]
        %v354 = vld [vmem:[%s352 + $0x8] sm:$0xff]
        %s355 = scalar_lea.vmem %s319, %s351
        %v356 = vld [vmem:[%s355] sm:$0xff]
        %v357 = vld [vmem:[%s355 + $0x8] sm:$0xff]
        %v358 = vlaneseq
        %v359 = vshrl.u32 %v358, 7
        %v360 = vsub.s32 0, %v359
        %v361 = vrot.slane %v348, %v360
        %v362 = vmul.f32 %v361, %v334
        %v363 = vmul.f32 %v361, %v335
        %v364 = vmul.f32 %v362, 1.442695
        %v365 = vpow.pop %v364
        %v366 = vmul.f32 %v363, 1.442695
        %v367 = vpow.pop %v366
        %v368 = vmul.f32 %v365, %v345
        %v369 = vmul.f32 %v367, %v346
        %v370 = vmul.f32 %v348, %v350
        %v371 = vlaneseq
        %v372 = vshrl.u32 %v371, 7
        %v373 = vsub.s32 0, %v372
        %v374 = vrot.slane %v370, %v373
        %v375 = vmul.f32 %v374, %v353
        %v376 = vmul.f32 %v374, %v354
        %v377 = vadd.f32 %v368, %v375
        %v378 = vadd.f32 %v369, %v376
        %v379 = vmul.f32 %v377, %v356
        %v380 = vmul.f32 %v378, %v357
        %vm381 = vcmask 261120
        %v382 = vsel %vm381, %v379, 0.0
        %v383 = vsel %vm381, %v380, 0.0
        %v384 = vadd.f32 %v382, %v383
        %v385 = vrot.slane %v384, 4
        %v386 = vadd.f32 %v384, %v385
        %v387 = vrot.slane %v386, 2
        %v388 = vadd.f32 %v386, %v387
        %v389 = vrot.slane %v388, 1
        %v390 = vadd.f32 %v388, %v389
        %v391 = vmul.f32 %v336, %v350
        %v392 = vadd.f32 %v390, %v391
        %s393 = scalar_lea.vmem %s325, %s340
        %vm394 = vcmask 253952
        %395 = vst.msk [vmem:[%s393] sm:$0x1] %vm394, %v392
      $region53: #{sfi_forward.21} parent=43 // loop_footer
        %s344 = sadd.s32 1, %s340
      $region54: #{sfi_forward.21} parent=43 // loop_footer_branch
        %339 = sbr.rel target = $region50
      $region55: #{sfi_forward.21} parent=43 // loop_exit
        _
      %vm396 = vcmask 261120
      %397 = vst.msk [vmem:[#allocation2] sm:$0xff] %vm396, %v345
      %398 = vst.msk [vmem:[#allocation2 + $0x8] sm:$0xff] %vm396, %v346
      %s399 = smul.u32 16, %s17
      %p400 = scmp.lt.s32.totalorder %s399, 31
      %s401 = scalar_select %p400, %s399, 31
      %s402 = smul.addr %s401, 8
      %s403 = scalar_lea.vmem %s6, %s402
      // Predicated region
      $region56: #{sfi_forward.21} parent=43 // pred_check
        %p404 = pneg %p181
      $region57: #{sfi_forward.21} parent=43 // pred_check_branch
        %406 = sbr.rel (%p404) target = $region59
      $region58: #{sfi_forward.21} parent=43 // pred_region
        %s407 = smul.u32 16, %s17
      $region59: #{sfi_forward.21} parent=43 // pred_fallthru
        _
    $region44: #{sfi_forward.21} parent=5 // pred_fallthru
      _
    %p408 = scmp.le.s32.totalorder 2, %s12
    // Predicated region
    $region60: #{sfi_forward.21} parent=5 // pred_check
      %p409 = pneg %p408
    $region61: #{sfi_forward.21} parent=5 // pred_check_branch
      %411 = sbr.rel (%p409) target = $region63
    $region62: #{sfi_forward.21} parent=5 // pred_region
      %s412 = ssub.s32 %s12, 2
      // Predicated region
      $region64: #{sfi_forward.21} parent=62 // pred_check
        %p413 = pneg %p187
      $region65: #{sfi_forward.21} parent=62 // pred_check_branch
        %415 = sbr.rel (%p413) target = $region67
      $region66: #{sfi_forward.21} parent=62 // pred_region
        %s416 = smul.u32 16, %s18
        %p417 = scmp.lt.s32.totalorder %s416, 31
        %s418 = scalar_select %p417, %s416, 31
        %s419 = smul.addr %s418, 8
        %s420 = scalar_lea.vmem %s6, %s419
      $region67: #{sfi_forward.21} parent=62 // pred_fallthru
        _
    $region63: #{sfi_forward.21} parent=5 // pred_fallthru
      _
  $region6: #{sfi_forward.21} parent=0 // loop_footer
    %s16 = sadd.s32 1, %s12
  $region7: #{sfi_forward.21} parent=0 // loop_footer_branch
    %11 = sbr.rel target = $region3
  $region8: #{sfi_forward.21} parent=0 // loop_exit
    _

// kernel: sfi_forward.23
$region0: #{sfi_forward.23}
  #allocation0 [shape = 'u32[]', space=smem, size = 0x4, offset = 0x4, fixed_abs, tag = 'smem constant byte address 0x4 - core index']
  #allocation1 [shape = 'u32[144,128]{1,0:T(1,128)}', space=vmem, size = 0x12000, scoped, tag = 'internal scratch']
  %s0 = inlined_call_operand.vmem [shape: f32[512,128], index: 0, kind: input, shape index: {}]
  %s1 = inlined_call_operand.vmem [shape: f32[1,128], index: 1, kind: input, shape index: {}]
  %s2 = inlined_call_operand.vmem [shape: f32[1,128], index: 2, kind: input, shape index: {}]
  %s3 = inlined_call_operand.vmem [shape: bf16[128,128], index: 3, kind: input, shape index: {}]
  %s4 = inlined_call_operand.vmem [shape: f32[1,128], index: 4, kind: input, shape index: {}]
  %s5 = inlined_call_operand.vmem [shape: f32[512,128], index: 5, kind: output, shape index: {}]
  %s6 = sld [smem:[#allocation0]]
  $region30: #{sfi_forward.23} parent=0
    _
  %s8 = ssub.s32 1, %s6
  %s9 = scalar_select 0, %s8, %s6
  // Predicated region
  $region2: #{sfi_forward.23} parent=0 // pred_check
    _
  $region3: #{sfi_forward.23} parent=0 // pred_check_branch
    %11 = sbr.rel (0) target = $region5
  $region4: #{sfi_forward.23} parent=0 // pred_region
    _
  $region5: #{sfi_forward.23} parent=0 // pred_fallthru
    _
  // Predicated region
  $region6: #{sfi_forward.23} parent=0 // pred_check
    _
  $region7: #{sfi_forward.23} parent=0 // pred_check_branch
    %13 = sbr.rel (0) target = $region9
  $region8: #{sfi_forward.23} parent=0 // pred_region
    _
  $region9: #{sfi_forward.23} parent=0 // pred_fallthru
    _
  // Predicated region
  $region10: #{sfi_forward.23} parent=0 // pred_check
    _
  $region11: #{sfi_forward.23} parent=0 // pred_check_branch
    %15 = sbr.rel (0) target = $region13
  $region12: #{sfi_forward.23} parent=0 // pred_region
    _
  $region13: #{sfi_forward.23} parent=0 // pred_fallthru
    _
  // Predicated region
  $region14: #{sfi_forward.23} parent=0 // pred_check
    _
  $region15: #{sfi_forward.23} parent=0 // pred_check_branch
    %17 = sbr.rel (0) target = $region17
  $region16: #{sfi_forward.23} parent=0 // pred_region
    _
  $region17: #{sfi_forward.23} parent=0 // pred_fallthru
    _
  // Predicated region
  $region18: #{sfi_forward.23} parent=0 // pred_check
    _
  $region19: #{sfi_forward.23} parent=0 // pred_check_branch
    %19 = sbr.rel (0) target = $region21
  $region20: #{sfi_forward.23} parent=0 // pred_region
    _
  $region21: #{sfi_forward.23} parent=0 // pred_fallthru
    _
  %v21 = vld [vmem:[%s0] sm:$0xff]
  %v22 = vld [vmem:[%s0 + $0x8] sm:$0xff]
  %v23 = vld [vmem:[%s0 + $0x10] sm:$0xff]
  %v24 = vld [vmem:[%s0 + $0x18] sm:$0xff]
  %v25 = vld [vmem:[%s0 + $0x20] sm:$0xff]
  %v26 = vld [vmem:[%s0 + $0x28] sm:$0xff]
  %v27 = vld [vmem:[%s0 + $0x30] sm:$0xff]
  %v28 = vld [vmem:[%s0 + $0x38] sm:$0xff]
  %v29 = vld [vmem:[%s0 + $0x40] sm:$0xff]
  %v30 = vld [vmem:[%s0 + $0x48] sm:$0xff]
  %v31 = vld [vmem:[%s0 + $0x50] sm:$0xff]
  %v32 = vld [vmem:[%s0 + $0x58] sm:$0xff]
  %v33 = vld [vmem:[%s0 + $0x60] sm:$0xff]
  %v34 = vld [vmem:[%s0 + $0x68] sm:$0xff]
  %v35 = vld [vmem:[%s0 + $0x70] sm:$0xff]
  %v36 = vld [vmem:[%s0 + $0x78] sm:$0xff]
  %v37 = vld [vmem:[%s0 + $0x80] sm:$0xff]
  %v38 = vld [vmem:[%s0 + $0x88] sm:$0xff]
  %v39 = vld [vmem:[%s0 + $0x90] sm:$0xff]
  %v40 = vld [vmem:[%s0 + $0x98] sm:$0xff]
  %v41 = vld [vmem:[%s0 + $0xa0] sm:$0xff]
  %v42 = vld [vmem:[%s0 + $0xa8] sm:$0xff]
  %v43 = vld [vmem:[%s0 + $0xb0] sm:$0xff]
  %v44 = vld [vmem:[%s0 + $0xb8] sm:$0xff]
  %v45 = vld [vmem:[%s0 + $0xc0] sm:$0xff]
  %v46 = vld [vmem:[%s0 + $0xc8] sm:$0xff]
  %v47 = vld [vmem:[%s0 + $0xd0] sm:$0xff]
  %v48 = vld [vmem:[%s0 + $0xd8] sm:$0xff]
  %v49 = vld [vmem:[%s0 + $0xe0] sm:$0xff]
  %v50 = vld [vmem:[%s0 + $0xe8] sm:$0xff]
  %v51 = vld [vmem:[%s0 + $0xf0] sm:$0xff]
  %v52 = vld [vmem:[%s0 + $0xf8] sm:$0xff]
  %v53 = vld [vmem:[%s0 + $0x100] sm:$0xff]
  %v54 = vld [vmem:[%s0 + $0x108] sm:$0xff]
  %v55 = vld [vmem:[%s0 + $0x110] sm:$0xff]
  %v56 = vld [vmem:[%s0 + $0x118] sm:$0xff]
  %v57 = vld [vmem:[%s0 + $0x120] sm:$0xff]
  %v58 = vld [vmem:[%s0 + $0x128] sm:$0xff]
  %v59 = vld [vmem:[%s0 + $0x130] sm:$0xff]
  %v60 = vld [vmem:[%s0 + $0x138] sm:$0xff]
  %v61 = vld [vmem:[%s0 + $0x140] sm:$0xff]
  %v62 = vld [vmem:[%s0 + $0x148] sm:$0xff]
  %v63 = vld [vmem:[%s0 + $0x150] sm:$0xff]
  %v64 = vld [vmem:[%s0 + $0x158] sm:$0xff]
  %v65 = vld [vmem:[%s0 + $0x160] sm:$0xff]
  %v66 = vld [vmem:[%s0 + $0x168] sm:$0xff]
  %v67 = vld [vmem:[%s0 + $0x170] sm:$0xff]
  %v68 = vld [vmem:[%s0 + $0x178] sm:$0xff]
  %v69 = vld [vmem:[%s0 + $0x180] sm:$0xff]
  %v70 = vld [vmem:[%s0 + $0x188] sm:$0xff]
  %v71 = vld [vmem:[%s0 + $0x190] sm:$0xff]
  %v72 = vld [vmem:[%s0 + $0x198] sm:$0xff]
  %v73 = vld [vmem:[%s0 + $0x1a0] sm:$0xff]
  %v74 = vld [vmem:[%s0 + $0x1a8] sm:$0xff]
  %v75 = vld [vmem:[%s0 + $0x1b0] sm:$0xff]
  %v76 = vld [vmem:[%s0 + $0x1b8] sm:$0xff]
  %v77 = vld [vmem:[%s0 + $0x1c0] sm:$0xff]
  %v78 = vld [vmem:[%s0 + $0x1c8] sm:$0xff]
  %v79 = vld [vmem:[%s0 + $0x1d0] sm:$0xff]
  %v80 = vld [vmem:[%s0 + $0x1d8] sm:$0xff]
  %v81 = vld [vmem:[%s0 + $0x1e0] sm:$0xff]
  %v82 = vld [vmem:[%s0 + $0x1e8] sm:$0xff]
  %v83 = vld [vmem:[%s0 + $0x1f0] sm:$0xff]
  %v84 = vld [vmem:[%s0 + $0x1f8] sm:$0xff]
  %v85 = vlaneseq
  %v86 = vand.u32 %v85, 127
  %vm87 = vcmp.lt.s32.totalorder %v86, 8
  %v88 = vsel %vm87, 1, 0
  %v89 = vcvt.s32.f32 %v88
  %90 = vadd.xlane.f32.xlu0 %v21
  %v91 = vpop.xlane.xlu0 %90
  %92 = vadd.xlane.f32.xlu0 %v22
  %v93 = vpop.xlane.xlu0 %92
  %94 = vadd.xlane.f32.xlu0 %v23
  %v95 = vpop.xlane.xlu0 %94
  %96 = vadd.xlane.f32.xlu0 %v24
  %v97 = vpop.xlane.xlu0 %96
  %98 = vadd.xlane.f32.xlu0 %v25
  %v99 = vpop.xlane.xlu0 %98
  %100 = vadd.xlane.f32.xlu0 %v26
  %v101 = vpop.xlane.xlu0 %100
  %102 = vadd.xlane.f32.xlu0 %v27
  %v103 = vpop.xlane.xlu0 %102
  %104 = vadd.xlane.f32.xlu0 %v28
  %v105 = vpop.xlane.xlu0 %104
  %106 = vadd.xlane.f32.xlu0 %v29
  %v107 = vpop.xlane.xlu0 %106
  %108 = vadd.xlane.f32.xlu0 %v30
  %v109 = vpop.xlane.xlu0 %108
  %110 = vadd.xlane.f32.xlu0 %v31
  %v111 = vpop.xlane.xlu0 %110
  %112 = vadd.xlane.f32.xlu0 %v32
  %v113 = vpop.xlane.xlu0 %112
  %114 = vadd.xlane.f32.xlu0 %v33
  %v115 = vpop.xlane.xlu0 %114
  %116 = vadd.xlane.f32.xlu0 %v34
  %v117 = vpop.xlane.xlu0 %116
  %118 = vadd.xlane.f32.xlu0 %v35
  %v119 = vpop.xlane.xlu0 %118
  %120 = vadd.xlane.f32.xlu0 %v36
  %v121 = vpop.xlane.xlu0 %120
  %122 = vadd.xlane.f32.xlu0 %v37
  %v123 = vpop.xlane.xlu0 %122
  %124 = vadd.xlane.f32.xlu0 %v38
  %v125 = vpop.xlane.xlu0 %124
  %126 = vadd.xlane.f32.xlu0 %v39
  %v127 = vpop.xlane.xlu0 %126
  %128 = vadd.xlane.f32.xlu0 %v40
  %v129 = vpop.xlane.xlu0 %128
  %130 = vadd.xlane.f32.xlu0 %v41
  %v131 = vpop.xlane.xlu0 %130
  %132 = vadd.xlane.f32.xlu0 %v42
  %v133 = vpop.xlane.xlu0 %132
  %134 = vadd.xlane.f32.xlu0 %v43
  %v135 = vpop.xlane.xlu0 %134
  %136 = vadd.xlane.f32.xlu0 %v44
  %v137 = vpop.xlane.xlu0 %136
  %138 = vadd.xlane.f32.xlu0 %v45
  %v139 = vpop.xlane.xlu0 %138
  %140 = vadd.xlane.f32.xlu0 %v46
  %v141 = vpop.xlane.xlu0 %140
  %142 = vadd.xlane.f32.xlu0 %v47
  %v143 = vpop.xlane.xlu0 %142
  %144 = vadd.xlane.f32.xlu0 %v48
  %v145 = vpop.xlane.xlu0 %144
  %146 = vadd.xlane.f32.xlu0 %v49
  %v147 = vpop.xlane.xlu0 %146
  %148 = vadd.xlane.f32.xlu0 %v50
  %v149 = vpop.xlane.xlu0 %148
  %150 = vadd.xlane.f32.xlu0 %v51
  %v151 = vpop.xlane.xlu0 %150
  %152 = vadd.xlane.f32.xlu0 %v52
  %v153 = vpop.xlane.xlu0 %152
  %154 = vadd.xlane.f32.xlu0 %v53
  %v155 = vpop.xlane.xlu0 %154
  %156 = vadd.xlane.f32.xlu0 %v54
  %v157 = vpop.xlane.xlu0 %156
  %158 = vadd.xlane.f32.xlu0 %v55
  %v159 = vpop.xlane.xlu0 %158
  %160 = vadd.xlane.f32.xlu0 %v56
  %v161 = vpop.xlane.xlu0 %160
  %162 = vadd.xlane.f32.xlu0 %v57
  %v163 = vpop.xlane.xlu0 %162
  %164 = vadd.xlane.f32.xlu0 %v58
  %v165 = vpop.xlane.xlu0 %164
  %166 = vadd.xlane.f32.xlu0 %v59
  %v167 = vpop.xlane.xlu0 %166
  %168 = vadd.xlane.f32.xlu0 %v60
  %v169 = vpop.xlane.xlu0 %168
  %170 = vadd.xlane.f32.xlu0 %v61
  %v171 = vpop.xlane.xlu0 %170
  %172 = vadd.xlane.f32.xlu0 %v62
  %v173 = vpop.xlane.xlu0 %172
  %174 = vadd.xlane.f32.xlu0 %v63
  %v175 = vpop.xlane.xlu0 %174
  %176 = vadd.xlane.f32.xlu0 %v64
  %v177 = vpop.xlane.xlu0 %176
  %178 = vadd.xlane.f32.xlu0 %v65
  %v179 = vpop.xlane.xlu0 %178
  %180 = vadd.xlane.f32.xlu0 %v66
  %v181 = vpop.xlane.xlu0 %180
  %182 = vadd.xlane.f32.xlu0 %v67
  %v183 = vpop.xlane.xlu0 %182
  %184 = vadd.xlane.f32.xlu0 %v68
  %v185 = vpop.xlane.xlu0 %184
  %186 = vadd.xlane.f32.xlu0 %v69
  %v187 = vpop.xlane.xlu0 %186
  %188 = vadd.xlane.f32.xlu0 %v70
  %v189 = vpop.xlane.xlu0 %188
  %190 = vadd.xlane.f32.xlu0 %v71
  %v191 = vpop.xlane.xlu0 %190
  %192 = vadd.xlane.f32.xlu0 %v72
  %v193 = vpop.xlane.xlu0 %192
  %194 = vadd.xlane.f32.xlu0 %v73
  %v195 = vpop.xlane.xlu0 %194
  %196 = vadd.xlane.f32.xlu0 %v74
  %v197 = vpop.xlane.xlu0 %196
  %198 = vadd.xlane.f32.xlu0 %v75
  %v199 = vpop.xlane.xlu0 %198
  %200 = vadd.xlane.f32.xlu0 %v76
  %v201 = vpop.xlane.xlu0 %200
  %202 = vadd.xlane.f32.xlu0 %v77
  %v203 = vpop.xlane.xlu0 %202
  %204 = vadd.xlane.f32.xlu0 %v78
  %v205 = vpop.xlane.xlu0 %204
  %206 = vadd.xlane.f32.xlu0 %v79
  %v207 = vpop.xlane.xlu0 %206
  %208 = vadd.xlane.f32.xlu0 %v80
  %v209 = vpop.xlane.xlu0 %208
  %210 = vadd.xlane.f32.xlu0 %v81
  %v211 = vpop.xlane.xlu0 %210
  %212 = vadd.xlane.f32.xlu0 %v82
  %v213 = vpop.xlane.xlu0 %212
  %214 = vadd.xlane.f32.xlu0 %v83
  %v215 = vpop.xlane.xlu0 %214
  %216 = vadd.xlane.f32.xlu0 %v84
  %v217 = vpop.xlane.xlu0 %216
  %v218 = vmul.f32 %v91, 0.125
  %v219 = vmul.f32 %v93, 0.125
  %v220 = vmul.f32 %v95, 0.125
  %v221 = vmul.f32 %v97, 0.125
  %v222 = vmul.f32 %v99, 0.125
  %v223 = vmul.f32 %v101, 0.125
  %v224 = vmul.f32 %v103, 0.125
  %v225 = vmul.f32 %v105, 0.125
  %v226 = vmul.f32 %v107, 0.125
  %v227 = vmul.f32 %v109, 0.125
  %v228 = vmul.f32 %v111, 0.125
  %v229 = vmul.f32 %v113, 0.125
  %v230 = vmul.f32 %v115, 0.125
  %v231 = vmul.f32 %v117, 0.125
  %v232 = vmul.f32 %v119, 0.125
  %v233 = vmul.f32 %v121, 0.125
  %v234 = vmul.f32 %v123, 0.125
  %v235 = vmul.f32 %v125, 0.125
  %v236 = vmul.f32 %v127, 0.125
  %v237 = vmul.f32 %v129, 0.125
  %v238 = vmul.f32 %v131, 0.125
  %v239 = vmul.f32 %v133, 0.125
  %v240 = vmul.f32 %v135, 0.125
  %v241 = vmul.f32 %v137, 0.125
  %v242 = vmul.f32 %v139, 0.125
  %v243 = vmul.f32 %v141, 0.125
  %v244 = vmul.f32 %v143, 0.125
  %v245 = vmul.f32 %v145, 0.125
  %v246 = vmul.f32 %v147, 0.125
  %v247 = vmul.f32 %v149, 0.125
  %v248 = vmul.f32 %v151, 0.125
  %v249 = vmul.f32 %v153, 0.125
  %v250 = vmul.f32 %v155, 0.125
  %v251 = vmul.f32 %v157, 0.125
  %v252 = vmul.f32 %v159, 0.125
  %v253 = vmul.f32 %v161, 0.125
  %v254 = vmul.f32 %v163, 0.125
  %v255 = vmul.f32 %v165, 0.125
  %v256 = vmul.f32 %v167, 0.125
  %v257 = vmul.f32 %v169, 0.125
  %v258 = vmul.f32 %v171, 0.125
  %v259 = vmul.f32 %v173, 0.125
  %v260 = vmul.f32 %v175, 0.125
  %v261 = vmul.f32 %v177, 0.125
  %v262 = vmul.f32 %v179, 0.125
  %v263 = vmul.f32 %v181, 0.125
  %v264 = vmul.f32 %v183, 0.125
  %v265 = vmul.f32 %v185, 0.125
  %v266 = vmul.f32 %v187, 0.125
  %v267 = vmul.f32 %v189, 0.125
  %v268 = vmul.f32 %v191, 0.125
  %v269 = vmul.f32 %v193, 0.125
  %v270 = vmul.f32 %v195, 0.125
  %v271 = vmul.f32 %v197, 0.125
  %v272 = vmul.f32 %v199, 0.125
  %v273 = vmul.f32 %v201, 0.125
  %v274 = vmul.f32 %v203, 0.125
  %v275 = vmul.f32 %v205, 0.125
  %v276 = vmul.f32 %v207, 0.125
  %v277 = vmul.f32 %v209, 0.125
  %v278 = vmul.f32 %v211, 0.125
  %v279 = vmul.f32 %v213, 0.125
  %v280 = vmul.f32 %v215, 0.125
  %v281 = vmul.f32 %v217, 0.125
  %v282 = vsub.f32 %v21, %v218
  %v283 = vsub.f32 %v22, %v219
  %v284 = vsub.f32 %v23, %v220
  %v285 = vsub.f32 %v24, %v221
  %v286 = vsub.f32 %v25, %v222
  %v287 = vsub.f32 %v26, %v223
  %v288 = vsub.f32 %v27, %v224
  %v289 = vsub.f32 %v28, %v225
  %v290 = vsub.f32 %v29, %v226
  %v291 = vsub.f32 %v30, %v227
  %v292 = vsub.f32 %v31, %v228
  %v293 = vsub.f32 %v32, %v229
  %v294 = vsub.f32 %v33, %v230
  %v295 = vsub.f32 %v34, %v231
  %v296 = vsub.f32 %v35, %v232
  %v297 = vsub.f32 %v36, %v233
  %v298 = vsub.f32 %v37, %v234
  %v299 = vsub.f32 %v38, %v235
  %v300 = vsub.f32 %v39, %v236
  %v301 = vsub.f32 %v40, %v237
  %v302 = vsub.f32 %v41, %v238
  %v303 = vsub.f32 %v42, %v239
  %v304 = vsub.f32 %v43, %v240
  %v305 = vsub.f32 %v44, %v241
  %v306 = vsub.f32 %v45, %v242
  %v307 = vsub.f32 %v46, %v243
  %v308 = vsub.f32 %v47, %v244
  %v309 = vsub.f32 %v48, %v245
  %v310 = vsub.f32 %v49, %v246
  %v311 = vsub.f32 %v50, %v247
  %v312 = vsub.f32 %v51, %v248
  %v313 = vsub.f32 %v52, %v249
  %v314 = vsub.f32 %v53, %v250
  %v315 = vsub.f32 %v54, %v251
  %v316 = vsub.f32 %v55, %v252
  %v317 = vsub.f32 %v56, %v253
  %v318 = vsub.f32 %v57, %v254
  %v319 = vsub.f32 %v58, %v255
  %v320 = vsub.f32 %v59, %v256
  %v321 = vsub.f32 %v60, %v257
  %v322 = vsub.f32 %v61, %v258
  %v323 = vsub.f32 %v62, %v259
  %v324 = vsub.f32 %v63, %v260
  %v325 = vsub.f32 %v64, %v261
  %v326 = vsub.f32 %v65, %v262
  %v327 = vsub.f32 %v66, %v263
  %v328 = vsub.f32 %v67, %v264
  %v329 = vsub.f32 %v68, %v265
  %v330 = vsub.f32 %v69, %v266
  %v331 = vsub.f32 %v70, %v267
  %v332 = vsub.f32 %v71, %v268
  %v333 = vsub.f32 %v72, %v269
  %v334 = vsub.f32 %v73, %v270
  %v335 = vsub.f32 %v74, %v271
  %v336 = vsub.f32 %v75, %v272
  %v337 = vsub.f32 %v76, %v273
  %v338 = vsub.f32 %v77, %v274
  %v339 = vsub.f32 %v78, %v275
  %v340 = vsub.f32 %v79, %v276
  %v341 = vsub.f32 %v80, %v277
  %v342 = vsub.f32 %v81, %v278
  %v343 = vsub.f32 %v82, %v279
  %v344 = vsub.f32 %v83, %v280
  %v345 = vsub.f32 %v84, %v281
  %v346 = vmul.f32 %v282, %v89
  %v347 = vmul.f32 %v283, %v89
  %v348 = vmul.f32 %v284, %v89
  %v349 = vmul.f32 %v285, %v89
  %v350 = vmul.f32 %v286, %v89
  %v351 = vmul.f32 %v287, %v89
  %v352 = vmul.f32 %v288, %v89
  %v353 = vmul.f32 %v289, %v89
  %v354 = vmul.f32 %v290, %v89
  %v355 = vmul.f32 %v291, %v89
  %v356 = vmul.f32 %v292, %v89
  %v357 = vmul.f32 %v293, %v89
  %v358 = vmul.f32 %v294, %v89
  %v359 = vmul.f32 %v295, %v89
  %v360 = vmul.f32 %v296, %v89
  %v361 = vmul.f32 %v297, %v89
  %v362 = vmul.f32 %v298, %v89
  %v363 = vmul.f32 %v299, %v89
  %v364 = vmul.f32 %v300, %v89
  %v365 = vmul.f32 %v301, %v89
  %v366 = vmul.f32 %v302, %v89
  %v367 = vmul.f32 %v303, %v89
  %v368 = vmul.f32 %v304, %v89
  %v369 = vmul.f32 %v305, %v89
  %v370 = vmul.f32 %v306, %v89
  %v371 = vmul.f32 %v307, %v89
  %v372 = vmul.f32 %v308, %v89
  %v373 = vmul.f32 %v309, %v89
  %v374 = vmul.f32 %v310, %v89
  %v375 = vmul.f32 %v311, %v89
  %v376 = vmul.f32 %v312, %v89
  %v377 = vmul.f32 %v313, %v89
  %v378 = vmul.f32 %v314, %v89
  %v379 = vmul.f32 %v315, %v89
  %v380 = vmul.f32 %v316, %v89
  %v381 = vmul.f32 %v317, %v89
  %v382 = vmul.f32 %v318, %v89
  %v383 = vmul.f32 %v319, %v89
  %v384 = vmul.f32 %v320, %v89
  %v385 = vmul.f32 %v321, %v89
  %v386 = vmul.f32 %v322, %v89
  %v387 = vmul.f32 %v323, %v89
  %v388 = vmul.f32 %v324, %v89
  %v389 = vmul.f32 %v325, %v89
  %v390 = vmul.f32 %v326, %v89
  %v391 = vmul.f32 %v327, %v89
  %v392 = vmul.f32 %v328, %v89
  %v393 = vmul.f32 %v329, %v89
  %v394 = vmul.f32 %v330, %v89
  %v395 = vmul.f32 %v331, %v89
  %v396 = vmul.f32 %v332, %v89
  %v397 = vmul.f32 %v333, %v89
  %v398 = vmul.f32 %v334, %v89
  %v399 = vmul.f32 %v335, %v89
  %v400 = vmul.f32 %v336, %v89
  %v401 = vmul.f32 %v337, %v89
  %v402 = vmul.f32 %v338, %v89
  %v403 = vmul.f32 %v339, %v89
  %v404 = vmul.f32 %v340, %v89
  %v405 = vmul.f32 %v341, %v89
  %v406 = vmul.f32 %v342, %v89
  %v407 = vmul.f32 %v343, %v89
  %v408 = vmul.f32 %v344, %v89
  %v409 = vmul.f32 %v345, %v89
  %v410 = vmul.f32 %v346, %v346
  %v411 = vmul.f32 %v347, %v347
  %v412 = vmul.f32 %v348, %v348
  %v413 = vmul.f32 %v349, %v349
  %v414 = vmul.f32 %v350, %v350
  %v415 = vmul.f32 %v351, %v351
  %v416 = vmul.f32 %v352, %v352
  %v417 = vmul.f32 %v353, %v353
  %v418 = vmul.f32 %v354, %v354
  %v419 = vmul.f32 %v355, %v355
  %v420 = vmul.f32 %v356, %v356
  %v421 = vmul.f32 %v357, %v357
  %v422 = vmul.f32 %v358, %v358
  %v423 = vmul.f32 %v359, %v359
  %v424 = vmul.f32 %v360, %v360
  %v425 = vmul.f32 %v361, %v361
  %v426 = vmul.f32 %v362, %v362
  %v427 = vmul.f32 %v363, %v363
  %v428 = vmul.f32 %v364, %v364
  %v429 = vmul.f32 %v365, %v365
  %v430 = vmul.f32 %v366, %v366
  %v431 = vmul.f32 %v367, %v367
  %v432 = vmul.f32 %v368, %v368
  %v433 = vmul.f32 %v369, %v369
  %v434 = vmul.f32 %v370, %v370
  %v435 = vmul.f32 %v371, %v371
  %v436 = vmul.f32 %v372, %v372
  %v437 = vmul.f32 %v373, %v373
  %v438 = vmul.f32 %v374, %v374
  %v439 = vmul.f32 %v375, %v375
  %v440 = vmul.f32 %v376, %v376
  %v441 = vmul.f32 %v377, %v377
  %v442 = vmul.f32 %v378, %v378
  %v443 = vmul.f32 %v379, %v379
  %v444 = vmul.f32 %v380, %v380
  %v445 = vmul.f32 %v381, %v381
  %v446 = vmul.f32 %v382, %v382
  %v447 = vmul.f32 %v383, %v383
  %v448 = vmul.f32 %v384, %v384
  %v449 = vmul.f32 %v385, %v385
  %v450 = vmul.f32 %v386, %v386
  %v451 = vmul.f32 %v387, %v387
  %v452 = vmul.f32 %v388, %v388
  %v453 = vmul.f32 %v389, %v389
  %v454 = vmul.f32 %v390, %v390
  %v455 = vmul.f32 %v391, %v391
  %v456 = vmul.f32 %v392, %v392
  %v457 = vmul.f32 %v393, %v393
  %v458 = vmul.f32 %v394, %v394
  %v459 = vmul.f32 %v395, %v395
  %v460 = vmul.f32 %v396, %v396
  %v461 = vmul.f32 %v397, %v397
  %v462 = vmul.f32 %v398, %v398
  %v463 = vmul.f32 %v399, %v399
  %v464 = vmul.f32 %v400, %v400
  %v465 = vmul.f32 %v401, %v401
  %v466 = vmul.f32 %v402, %v402
  %v467 = vmul.f32 %v403, %v403
  %v468 = vmul.f32 %v404, %v404
  %v469 = vmul.f32 %v405, %v405
  %v470 = vmul.f32 %v406, %v406
  %v471 = vmul.f32 %v407, %v407
  %v472 = vmul.f32 %v408, %v408
  %v473 = vmul.f32 %v409, %v409
  %474 = vadd.xlane.f32.xlu0 %v410
  %v475 = vpop.xlane.xlu0 %474
  %476 = vadd.xlane.f32.xlu0 %v411
  %v477 = vpop.xlane.xlu0 %476
  %478 = vadd.xlane.f32.xlu0 %v412
  %v479 = vpop.xlane.xlu0 %478
  %480 = vadd.xlane.f32.xlu0 %v413
  %v481 = vpop.xlane.xlu0 %480
  %482 = vadd.xlane.f32.xlu0 %v414
  %v483 = vpop.xlane.xlu0 %482
  %484 = vadd.xlane.f32.xlu0 %v415
  %v485 = vpop.xlane.xlu0 %484
  %486 = vadd.xlane.f32.xlu0 %v416
  %v487 = vpop.xlane.xlu0 %486
  %488 = vadd.xlane.f32.xlu0 %v417
  %v489 = vpop.xlane.xlu0 %488
  %490 = vadd.xlane.f32.xlu0 %v418
  %v491 = vpop.xlane.xlu0 %490
  %492 = vadd.xlane.f32.xlu0 %v419
  %v493 = vpop.xlane.xlu0 %492
  %494 = vadd.xlane.f32.xlu0 %v420
  %v495 = vpop.xlane.xlu0 %494
  %496 = vadd.xlane.f32.xlu0 %v421
  %v497 = vpop.xlane.xlu0 %496
  %498 = vadd.xlane.f32.xlu0 %v422
  %v499 = vpop.xlane.xlu0 %498
  %500 = vadd.xlane.f32.xlu0 %v423
  %v501 = vpop.xlane.xlu0 %500
  %502 = vadd.xlane.f32.xlu0 %v424
  %v503 = vpop.xlane.xlu0 %502
  %504 = vadd.xlane.f32.xlu0 %v425
  %v505 = vpop.xlane.xlu0 %504
  %506 = vadd.xlane.f32.xlu0 %v426
  %v507 = vpop.xlane.xlu0 %506
  %508 = vadd.xlane.f32.xlu0 %v427
  %v509 = vpop.xlane.xlu0 %508
  %510 = vadd.xlane.f32.xlu0 %v428
  %v511 = vpop.xlane.xlu0 %510
  %512 = vadd.xlane.f32.xlu0 %v429
  %v513 = vpop.xlane.xlu0 %512
  %514 = vadd.xlane.f32.xlu0 %v430
  %v515 = vpop.xlane.xlu0 %514
  %516 = vadd.xlane.f32.xlu0 %v431
  %v517 = vpop.xlane.xlu0 %516
  %518 = vadd.xlane.f32.xlu0 %v432
  %v519 = vpop.xlane.xlu0 %518
  %520 = vadd.xlane.f32.xlu0 %v433
  %v521 = vpop.xlane.xlu0 %520
  %522 = vadd.xlane.f32.xlu0 %v434
  %v523 = vpop.xlane.xlu0 %522
  %524 = vadd.xlane.f32.xlu0 %v435
  %v525 = vpop.xlane.xlu0 %524
  %526 = vadd.xlane.f32.xlu0 %v436
  %v527 = vpop.xlane.xlu0 %526
  %528 = vadd.xlane.f32.xlu0 %v437
  %v529 = vpop.xlane.xlu0 %528
  %530 = vadd.xlane.f32.xlu0 %v438
  %v531 = vpop.xlane.xlu0 %530
  %532 = vadd.xlane.f32.xlu0 %v439
  %v533 = vpop.xlane.xlu0 %532
  %534 = vadd.xlane.f32.xlu0 %v440
  %v535 = vpop.xlane.xlu0 %534
  %536 = vadd.xlane.f32.xlu0 %v441
  %v537 = vpop.xlane.xlu0 %536
  %538 = vadd.xlane.f32.xlu0 %v442
  %v539 = vpop.xlane.xlu0 %538
  %540 = vadd.xlane.f32.xlu0 %v443
  %v541 = vpop.xlane.xlu0 %540
  %542 = vadd.xlane.f32.xlu0 %v444
  %v543 = vpop.xlane.xlu0 %542
  %544 = vadd.xlane.f32.xlu0 %v445
  %v545 = vpop.xlane.xlu0 %544
  %546 = vadd.xlane.f32.xlu0 %v446
  %v547 = vpop.xlane.xlu0 %546
  %548 = vadd.xlane.f32.xlu0 %v447
  %v549 = vpop.xlane.xlu0 %548
  %550 = vadd.xlane.f32.xlu0 %v448
  %v551 = vpop.xlane.xlu0 %550
  %552 = vadd.xlane.f32.xlu0 %v449
  %v553 = vpop.xlane.xlu0 %552
  %554 = vadd.xlane.f32.xlu0 %v450
  %v555 = vpop.xlane.xlu0 %554
  %556 = vadd.xlane.f32.xlu0 %v451
  %v557 = vpop.xlane.xlu0 %556
  %558 = vadd.xlane.f32.xlu0 %v452
  %v559 = vpop.xlane.xlu0 %558
  %560 = vadd.xlane.f32.xlu0 %v453
  %v561 = vpop.xlane.xlu0 %560
  %562 = vadd.xlane.f32.xlu0 %v454
  %v563 = vpop.xlane.xlu0 %562
  %564 = vadd.xlane.f32.xlu0 %v455
  %v565 = vpop.xlane.xlu0 %564
  %566 = vadd.xlane.f32.xlu0 %v456
  %v567 = vpop.xlane.xlu0 %566
  %568 = vadd.xlane.f32.xlu0 %v457
  %v569 = vpop.xlane.xlu0 %568
  %570 = vadd.xlane.f32.xlu0 %v458
  %v571 = vpop.xlane.xlu0 %570
  %572 = vadd.xlane.f32.xlu0 %v459
  %v573 = vpop.xlane.xlu0 %572
  %574 = vadd.xlane.f32.xlu0 %v460
  %v575 = vpop.xlane.xlu0 %574
  %576 = vadd.xlane.f32.xlu0 %v461
  %v577 = vpop.xlane.xlu0 %576
  %578 = vadd.xlane.f32.xlu0 %v462
  %v579 = vpop.xlane.xlu0 %578
  %580 = vadd.xlane.f32.xlu0 %v463
  %v581 = vpop.xlane.xlu0 %580
  %582 = vadd.xlane.f32.xlu0 %v464
  %v583 = vpop.xlane.xlu0 %582
  %584 = vadd.xlane.f32.xlu0 %v465
  %v585 = vpop.xlane.xlu0 %584
  %586 = vadd.xlane.f32.xlu0 %v466
  %v587 = vpop.xlane.xlu0 %586
  %588 = vadd.xlane.f32.xlu0 %v467
  %v589 = vpop.xlane.xlu0 %588
  %590 = vadd.xlane.f32.xlu0 %v468
  %v591 = vpop.xlane.xlu0 %590
  %592 = vadd.xlane.f32.xlu0 %v469
  %v593 = vpop.xlane.xlu0 %592
  %594 = vadd.xlane.f32.xlu0 %v470
  %v595 = vpop.xlane.xlu0 %594
  %596 = vadd.xlane.f32.xlu0 %v471
  %v597 = vpop.xlane.xlu0 %596
  %598 = vadd.xlane.f32.xlu0 %v472
  %v599 = vpop.xlane.xlu0 %598
  %600 = vadd.xlane.f32.xlu0 %v473
  %v601 = vpop.xlane.xlu0 %600
  %v602 = vmul.f32 %v475, 0.125
  %v603 = vmul.f32 %v477, 0.125
  %v604 = vmul.f32 %v479, 0.125
  %v605 = vmul.f32 %v481, 0.125
  %v606 = vmul.f32 %v483, 0.125
  %v607 = vmul.f32 %v485, 0.125
  %v608 = vmul.f32 %v487, 0.125
  %v609 = vmul.f32 %v489, 0.125
  %v610 = vmul.f32 %v491, 0.125
  %v611 = vmul.f32 %v493, 0.125
  %v612 = vmul.f32 %v495, 0.125
  %v613 = vmul.f32 %v497, 0.125
  %v614 = vmul.f32 %v499, 0.125
  %v615 = vmul.f32 %v501, 0.125
  %v616 = vmul.f32 %v503, 0.125
  %v617 = vmul.f32 %v505, 0.125
  %v618 = vmul.f32 %v507, 0.125
  %v619 = vmul.f32 %v509, 0.125
  %v620 = vmul.f32 %v511, 0.125
  %v621 = vmul.f32 %v513, 0.125
  %v622 = vmul.f32 %v515, 0.125
  %v623 = vmul.f32 %v517, 0.125
  %v624 = vmul.f32 %v519, 0.125
  %v625 = vmul.f32 %v521, 0.125
  %v626 = vmul.f32 %v523, 0.125
  %v627 = vmul.f32 %v525, 0.125
  %v628 = vmul.f32 %v527, 0.125
  %v629 = vmul.f32 %v529, 0.125
  %v630 = vmul.f32 %v531, 0.125
  %v631 = vmul.f32 %v533, 0.125
  %v632 = vmul.f32 %v535, 0.125
  %v633 = vmul.f32 %v537, 0.125
  %v634 = vmul.f32 %v539, 0.125
  %v635 = vmul.f32 %v541, 0.125
  %v636 = vmul.f32 %v543, 0.125
  %v637 = vmul.f32 %v545, 0.125
  %v638 = vmul.f32 %v547, 0.125
  %v639 = vmul.f32 %v549, 0.125
  %v640 = vmul.f32 %v551, 0.125
  %v641 = vmul.f32 %v553, 0.125
  %v642 = vmul.f32 %v555, 0.125
  %v643 = vmul.f32 %v557, 0.125
  %v644 = vmul.f32 %v559, 0.125
  %v645 = vmul.f32 %v561, 0.125
  %v646 = vmul.f32 %v563, 0.125
  %v647 = vmul.f32 %v565, 0.125
  %v648 = vmul.f32 %v567, 0.125
  %v649 = vmul.f32 %v569, 0.125
  %v650 = vmul.f32 %v571, 0.125
  %v651 = vmul.f32 %v573, 0.125
  %v652 = vmul.f32 %v575, 0.125
  %v653 = vmul.f32 %v577, 0.125
  %v654 = vmul.f32 %v579, 0.125
  %v655 = vmul.f32 %v581, 0.125
  %v656 = vmul.f32 %v583, 0.125
  %v657 = vmul.f32 %v585, 0.125
  %v658 = vmul.f32 %v587, 0.125
  %v659 = vmul.f32 %v589, 0.125
  %v660 = vmul.f32 %v591, 0.125
  %v661 = vmul.f32 %v593, 0.125
  %v662 = vmul.f32 %v595, 0.125
  %v663 = vmul.f32 %v597, 0.125
  %v664 = vmul.f32 %v599, 0.125
  %v665 = vmul.f32 %v601, 0.125
  %v666 = vadd.f32 %v602, 1e-05
  %v667 = vadd.f32 %v603, 1e-05
  %v668 = vadd.f32 %v604, 1e-05
  %v669 = vadd.f32 %v605, 1e-05
  %v670 = vadd.f32 %v606, 1e-05
  %v671 = vadd.f32 %v607, 1e-05
  %v672 = vadd.f32 %v608, 1e-05
  %v673 = vadd.f32 %v609, 1e-05
  %v674 = vadd.f32 %v610, 1e-05
  %v675 = vadd.f32 %v611, 1e-05
  %v676 = vadd.f32 %v612, 1e-05
  %v677 = vadd.f32 %v613, 1e-05
  %v678 = vadd.f32 %v614, 1e-05
  %v679 = vadd.f32 %v615, 1e-05
  %v680 = vadd.f32 %v616, 1e-05
  %v681 = vadd.f32 %v617, 1e-05
  %v682 = vadd.f32 %v618, 1e-05
  %v683 = vadd.f32 %v619, 1e-05
  %v684 = vadd.f32 %v620, 1e-05
  %v685 = vadd.f32 %v621, 1e-05
  %v686 = vadd.f32 %v622, 1e-05
  %v687 = vadd.f32 %v623, 1e-05
  %v688 = vadd.f32 %v624, 1e-05
  %v689 = vadd.f32 %v625, 1e-05
  %v690 = vadd.f32 %v626, 1e-05
  %v691 = vadd.f32 %v627, 1e-05
  %v692 = vadd.f32 %v628, 1e-05
  %v693 = vadd.f32 %v629, 1e-05
  %v694 = vadd.f32 %v630, 1e-05
  %v695 = vadd.f32 %v631, 1e-05
  %v696 = vadd.f32 %v632, 1e-05
  %v697 = vadd.f32 %v633, 1e-05
  %v698 = vadd.f32 %v634, 1e-05
  %v699 = vadd.f32 %v635, 1e-05
  %v700 = vadd.f32 %v636, 1e-05
  %v701 = vadd.f32 %v637, 1e-05
  %v702 = vadd.f32 %v638, 1e-05
  %v703 = vadd.f32 %v639, 1e-05
  %v704 = vadd.f32 %v640, 1e-05
  %v705 = vadd.f32 %v641, 1e-05
  %v706 = vadd.f32 %v642, 1e-05
  %v707 = vadd.f32 %v643, 1e-05
  %v708 = vadd.f32 %v644, 1e-05
  %v709 = vadd.f32 %v645, 1e-05
  %v710 = vadd.f32 %v646, 1e-05
  %v711 = vadd.f32 %v647, 1e-05
  %v712 = vadd.f32 %v648, 1e-05
  %v713 = vadd.f32 %v649, 1e-05
  %v714 = vadd.f32 %v650, 1e-05
  %v715 = vadd.f32 %v651, 1e-05
  %v716 = vadd.f32 %v652, 1e-05
  %v717 = vadd.f32 %v653, 1e-05
  %v718 = vadd.f32 %v654, 1e-05
  %v719 = vadd.f32 %v655, 1e-05
  %v720 = vadd.f32 %v656, 1e-05
  %v721 = vadd.f32 %v657, 1e-05
  %v722 = vadd.f32 %v658, 1e-05
  %v723 = vadd.f32 %v659, 1e-05
  %v724 = vadd.f32 %v660, 1e-05
  %v725 = vadd.f32 %v661, 1e-05
  %v726 = vadd.f32 %v662, 1e-05
  %v727 = vadd.f32 %v663, 1e-05
  %v728 = vadd.f32 %v664, 1e-05
  %v729 = vadd.f32 %v665, 1e-05
  %v730 = vrsqrt.pop %v666
  %v731 = vrsqrt.pop %v667
  %v732 = vrsqrt.pop %v668
  %v733 = vrsqrt.pop %v669
  %v734 = vrsqrt.pop %v670
  %v735 = vrsqrt.pop %v671
  %v736 = vrsqrt.pop %v672
  %v737 = vrsqrt.pop %v673
  %v738 = vrsqrt.pop %v674
  %v739 = vrsqrt.pop %v675
  %v740 = vrsqrt.pop %v676
  %v741 = vrsqrt.pop %v677
  %v742 = vrsqrt.pop %v678
  %v743 = vrsqrt.pop %v679
  %v744 = vrsqrt.pop %v680
  %v745 = vrsqrt.pop %v681
  %v746 = vrsqrt.pop %v682
  %v747 = vrsqrt.pop %v683
  %v748 = vrsqrt.pop %v684
  %v749 = vrsqrt.pop %v685
  %v750 = vrsqrt.pop %v686
  %v751 = vrsqrt.pop %v687
  %v752 = vrsqrt.pop %v688
  %v753 = vrsqrt.pop %v689
  %v754 = vrsqrt.pop %v690
  %v755 = vrsqrt.pop %v691
  %v756 = vrsqrt.pop %v692
  %v757 = vrsqrt.pop %v693
  %v758 = vrsqrt.pop %v694
  %v759 = vrsqrt.pop %v695
  %v760 = vrsqrt.pop %v696
  %v761 = vrsqrt.pop %v697
  %v762 = vrsqrt.pop %v698
  %v763 = vrsqrt.pop %v699
  %v764 = vrsqrt.pop %v700
  %v765 = vrsqrt.pop %v701
  %v766 = vrsqrt.pop %v702
  %v767 = vrsqrt.pop %v703
  %v768 = vrsqrt.pop %v704
  %v769 = vrsqrt.pop %v705
  %v770 = vrsqrt.pop %v706
  %v771 = vrsqrt.pop %v707
  %v772 = vrsqrt.pop %v708
  %v773 = vrsqrt.pop %v709
  %v774 = vrsqrt.pop %v710
  %v775 = vrsqrt.pop %v711
  %v776 = vrsqrt.pop %v712
  %v777 = vrsqrt.pop %v713
  %v778 = vrsqrt.pop %v714
  %v779 = vrsqrt.pop %v715
  %v780 = vrsqrt.pop %v716
  %v781 = vrsqrt.pop %v717
  %v782 = vrsqrt.pop %v718
  %v783 = vrsqrt.pop %v719
  %v784 = vrsqrt.pop %v720
  %v785 = vrsqrt.pop %v721
  %v786 = vrsqrt.pop %v722
  %v787 = vrsqrt.pop %v723
  %v788 = vrsqrt.pop %v724
  %v789 = vrsqrt.pop %v725
  %v790 = vrsqrt.pop %v726
  %v791 = vrsqrt.pop %v727
  %v792 = vrsqrt.pop %v728
  %v793 = vrsqrt.pop %v729
  %v794 = vmul.f32 %v346, %v730
  %v795 = vmul.f32 %v347, %v731
  %v796 = vmul.f32 %v348, %v732
  %v797 = vmul.f32 %v349, %v733
  %v798 = vmul.f32 %v350, %v734
  %v799 = vmul.f32 %v351, %v735
  %v800 = vmul.f32 %v352, %v736
  %v801 = vmul.f32 %v353, %v737
  %v802 = vmul.f32 %v354, %v738
  %v803 = vmul.f32 %v355, %v739
  %v804 = vmul.f32 %v356, %v740
  %v805 = vmul.f32 %v357, %v741
  %v806 = vmul.f32 %v358, %v742
  %v807 = vmul.f32 %v359, %v743
  %v808 = vmul.f32 %v360, %v744
  %v809 = vmul.f32 %v361, %v745
  %v810 = vmul.f32 %v362, %v746
  %v811 = vmul.f32 %v363, %v747
  %v812 = vmul.f32 %v364, %v748
  %v813 = vmul.f32 %v365, %v749
  %v814 = vmul.f32 %v366, %v750
  %v815 = vmul.f32 %v367, %v751
  %v816 = vmul.f32 %v368, %v752
  %v817 = vmul.f32 %v369, %v753
  %v818 = vmul.f32 %v370, %v754
  %v819 = vmul.f32 %v371, %v755
  %v820 = vmul.f32 %v372, %v756
  %v821 = vmul.f32 %v373, %v757
  %v822 = vmul.f32 %v374, %v758
  %v823 = vmul.f32 %v375, %v759
  %v824 = vmul.f32 %v376, %v760
  %v825 = vmul.f32 %v377, %v761
  %v826 = vmul.f32 %v378, %v762
  %v827 = vmul.f32 %v379, %v763
  %v828 = vmul.f32 %v380, %v764
  %v829 = vmul.f32 %v381, %v765
  %v830 = vmul.f32 %v382, %v766
  %v831 = vmul.f32 %v383, %v767
  %v832 = vmul.f32 %v384, %v768
  %v833 = vmul.f32 %v385, %v769
  %v834 = vmul.f32 %v386, %v770
  %v835 = vmul.f32 %v387, %v771
  %v836 = vmul.f32 %v388, %v772
  %v837 = vmul.f32 %v389, %v773
  %v838 = vmul.f32 %v390, %v774
  %v839 = vmul.f32 %v391, %v775
  %v840 = vmul.f32 %v392, %v776
  %v841 = vmul.f32 %v393, %v777
  %v842 = vmul.f32 %v394, %v778
  %v843 = vmul.f32 %v395, %v779
  %v844 = vmul.f32 %v396, %v780
  %v845 = vmul.f32 %v397, %v781
  %v846 = vmul.f32 %v398, %v782
  %v847 = vmul.f32 %v399, %v783
  %v848 = vmul.f32 %v400, %v784
  %v849 = vmul.f32 %v401, %v785
  %v850 = vmul.f32 %v402, %v786
  %v851 = vmul.f32 %v403, %v787
  %v852 = vmul.f32 %v404, %v788
  %v853 = vmul.f32 %v405, %v789
  %v854 = vmul.f32 %v406, %v790
  %v855 = vmul.f32 %v407, %v791
  %v856 = vmul.f32 %v408, %v792
  %v857 = vmul.f32 %v409, %v793
  %v858 = vld [vmem:[%s1] sm:$0x1]
  %v860 = vlaneseq
  %v861 = vshrl.u32 %v860, 7
  %v862 = vsub.s32 0, %v861
  %v863 = vrot.slane %v858, %v862
  %v865 = vmul.f32 %v794, %v863
  %v866 = vmul.f32 %v795, %v863
  %v867 = vmul.f32 %v796, %v863
  %v868 = vmul.f32 %v797, %v863
  %v869 = vmul.f32 %v798, %v863
  %v870 = vmul.f32 %v799, %v863
  %v871 = vmul.f32 %v800, %v863
  %v872 = vmul.f32 %v801, %v863
  %v873 = vmul.f32 %v802, %v863
  %v874 = vmul.f32 %v803, %v863
  %v875 = vmul.f32 %v804, %v863
  %v876 = vmul.f32 %v805, %v863
  %v877 = vmul.f32 %v806, %v863
  %v878 = vmul.f32 %v807, %v863
  %v879 = vmul.f32 %v808, %v863
  %v880 = vmul.f32 %v809, %v863
  %v881 = vmul.f32 %v810, %v863
  %v882 = vmul.f32 %v811, %v863
  %v883 = vmul.f32 %v812, %v863
  %v884 = vmul.f32 %v813, %v863
  %v885 = vmul.f32 %v814, %v863
  %v886 = vmul.f32 %v815, %v863
  %v887 = vmul.f32 %v816, %v863
  %v888 = vmul.f32 %v817, %v863
  %v889 = vmul.f32 %v818, %v863
  %v890 = vmul.f32 %v819, %v863
  %v891 = vmul.f32 %v820, %v863
  %v892 = vmul.f32 %v821, %v863
  %v893 = vmul.f32 %v822, %v863
  %v894 = vmul.f32 %v823, %v863
  %v895 = vmul.f32 %v824, %v863
  %v896 = vmul.f32 %v825, %v863
  %v897 = vmul.f32 %v826, %v863
  %v898 = vmul.f32 %v827, %v863
  %v899 = vmul.f32 %v828, %v863
  %v900 = vmul.f32 %v829, %v863
  %v901 = vmul.f32 %v830, %v863
  %v902 = vmul.f32 %v831, %v863
  %v903 = vmul.f32 %v832, %v863
  %v904 = vmul.f32 %v833, %v863
  %v905 = vmul.f32 %v834, %v863
  %v906 = vmul.f32 %v835, %v863
  %v907 = vmul.f32 %v836, %v863
  %v908 = vmul.f32 %v837, %v863
  %v909 = vmul.f32 %v838, %v863
  %v910 = vmul.f32 %v839, %v863
  %v911 = vmul.f32 %v840, %v863
  %v912 = vmul.f32 %v841, %v863
  %v913 = vmul.f32 %v842, %v863
  %v914 = vmul.f32 %v843, %v863
  %v915 = vmul.f32 %v844, %v863
  %v916 = vmul.f32 %v845, %v863
  %v917 = vmul.f32 %v846, %v863
  %v918 = vmul.f32 %v847, %v863
  %v919 = vmul.f32 %v848, %v863
  %v920 = vmul.f32 %v849, %v863
  %v921 = vmul.f32 %v850, %v863
  %v922 = vmul.f32 %v851, %v863
  %v923 = vmul.f32 %v852, %v863
  %v924 = vmul.f32 %v853, %v863
  %v925 = vmul.f32 %v854, %v863
  %v926 = vmul.f32 %v855, %v863
  %v927 = vmul.f32 %v856, %v863
  %v928 = vmul.f32 %v857, %v863
  %v929 = vld [vmem:[%s2] sm:$0x1]
  %v931 = vlaneseq
  %v932 = vshrl.u32 %v931, 7
  %v933 = vsub.s32 0, %v932
  %v934 = vrot.slane %v929, %v933
  %v936 = vmul.f32 %v934, %v89
  %v937 = vadd.f32 %v865, %v936
  %v938 = vadd.f32 %v866, %v936
  %v939 = vadd.f32 %v867, %v936
  %v940 = vadd.f32 %v868, %v936
  %v941 = vadd.f32 %v869, %v936
  %v942 = vadd.f32 %v870, %v936
  %v943 = vadd.f32 %v871, %v936
  %v944 = vadd.f32 %v872, %v936
  %v945 = vadd.f32 %v873, %v936
  %v946 = vadd.f32 %v874, %v936
  %v947 = vadd.f32 %v875, %v936
  %v948 = vadd.f32 %v876, %v936
  %v949 = vadd.f32 %v877, %v936
  %v950 = vadd.f32 %v878, %v936
  %v951 = vadd.f32 %v879, %v936
  %v952 = vadd.f32 %v880, %v936
  %v953 = vadd.f32 %v881, %v936
  %v954 = vadd.f32 %v882, %v936
  %v955 = vadd.f32 %v883, %v936
  %v956 = vadd.f32 %v884, %v936
  %v957 = vadd.f32 %v885, %v936
  %v958 = vadd.f32 %v886, %v936
  %v959 = vadd.f32 %v887, %v936
  %v960 = vadd.f32 %v888, %v936
  %v961 = vadd.f32 %v889, %v936
  %v962 = vadd.f32 %v890, %v936
  %v963 = vadd.f32 %v891, %v936
  %v964 = vadd.f32 %v892, %v936
  %v965 = vadd.f32 %v893, %v936
  %v966 = vadd.f32 %v894, %v936
  %v967 = vadd.f32 %v895, %v936
  %v968 = vadd.f32 %v896, %v936
  %v969 = vadd.f32 %v897, %v936
  %v970 = vadd.f32 %v898, %v936
  %v971 = vadd.f32 %v899, %v936
  %v972 = vadd.f32 %v900, %v936
  %v973 = vadd.f32 %v901, %v936
  %v974 = vadd.f32 %v902, %v936
  %v975 = vadd.f32 %v903, %v936
  %v976 = vadd.f32 %v904, %v936
  %v977 = vadd.f32 %v905, %v936
  %v978 = vadd.f32 %v906, %v936
  %v979 = vadd.f32 %v907, %v936
  %v980 = vadd.f32 %v908, %v936
  %v981 = vadd.f32 %v909, %v936
  %v982 = vadd.f32 %v910, %v936
  %v983 = vadd.f32 %v911, %v936
  %v984 = vadd.f32 %v912, %v936
  %v985 = vadd.f32 %v913, %v936
  %v986 = vadd.f32 %v914, %v936
  %v987 = vadd.f32 %v915, %v936
  %v988 = vadd.f32 %v916, %v936
  %v989 = vadd.f32 %v917, %v936
  %v990 = vadd.f32 %v918, %v936
  %v991 = vadd.f32 %v919, %v936
  %v992 = vadd.f32 %v920, %v936
  %v993 = vadd.f32 %v921, %v936
  %v994 = vadd.f32 %v922, %v936
  %v995 = vadd.f32 %v923, %v936
  %v996 = vadd.f32 %v924, %v936
  %v997 = vadd.f32 %v925, %v936
  %v998 = vadd.f32 %v926, %v936
  %v999 = vadd.f32 %v927, %v936
  %v1000 = vadd.f32 %v928, %v936
  %v1001 = vpack.c.bf16 %v938, %v937
  %v1002 = vpack.c.bf16 %v940, %v939
  %v1003 = vpack.c.bf16 %v942, %v941
  %v1004 = vpack.c.bf16 %v944, %v943
  %v1005 = vpack.c.bf16 %v946, %v945
  %v1006 = vpack.c.bf16 %v948, %v947
  %v1007 = vpack.c.bf16 %v950, %v949
  %v1008 = vpack.c.bf16 %v952, %v951
  %v1009 = vpack.c.bf16 %v954, %v953
  %v1010 = vpack.c.bf16 %v956, %v955
  %v1011 = vpack.c.bf16 %v958, %v957
  %v1012 = vpack.c.bf16 %v960, %v959
  %v1013 = vpack.c.bf16 %v962, %v961
  %v1014 = vpack.c.bf16 %v964, %v963
  %v1015 = vpack.c.bf16 %v966, %v965
  %v1016 = vpack.c.bf16 %v968, %v967
  %v1017 = vpack.c.bf16 %v970, %v969
  %v1018 = vpack.c.bf16 %v972, %v971
  %v1019 = vpack.c.bf16 %v974, %v973
  %v1020 = vpack.c.bf16 %v976, %v975
  %v1021 = vpack.c.bf16 %v978, %v977
  %v1022 = vpack.c.bf16 %v980, %v979
  %v1023 = vpack.c.bf16 %v982, %v981
  %v1024 = vpack.c.bf16 %v984, %v983
  %v1025 = vpack.c.bf16 %v986, %v985
  %v1026 = vpack.c.bf16 %v988, %v987
  %v1027 = vpack.c.bf16 %v990, %v989
  %v1028 = vpack.c.bf16 %v992, %v991
  %v1029 = vpack.c.bf16 %v994, %v993
  %v1030 = vpack.c.bf16 %v996, %v995
  %v1031 = vpack.c.bf16 %v998, %v997
  %v1032 = vpack.c.bf16 %v1000, %v999
  %v1033 = vld [vmem:[%s3] sm:$0xf]
  %v1034 = vld [vmem:[%s3 + $0x4] sm:$0xf]
  %v1035 = vld [vmem:[%s3 + $0x8] sm:$0xf]
  %v1036 = vld [vmem:[%s3 + $0xc] sm:$0xf]
  %v1037 = vld [vmem:[%s3 + $0x10] sm:$0xf]
  %v1038 = vld [vmem:[%s3 + $0x14] sm:$0xf]
  %v1039 = vld [vmem:[%s3 + $0x18] sm:$0xf]
  %v1040 = vld [vmem:[%s3 + $0x1c] sm:$0xf]
  %v1041 = vld [vmem:[%s3 + $0x20] sm:$0xf]
  %v1042 = vld [vmem:[%s3 + $0x24] sm:$0xf]
  %v1043 = vld [vmem:[%s3 + $0x28] sm:$0xf]
  %v1044 = vld [vmem:[%s3 + $0x2c] sm:$0xf]
  %v1045 = vld [vmem:[%s3 + $0x30] sm:$0xf]
  %v1046 = vld [vmem:[%s3 + $0x34] sm:$0xf]
  %v1047 = vld [vmem:[%s3 + $0x38] sm:$0xf]
  %v1048 = vld [vmem:[%s3 + $0x3c] sm:$0xf]
  %v1049 = vld [vmem:[%s4] sm:$0x1]
  %v1051 = vlaneseq
  %v1052 = vshrl.u32 %v1051, 7
  %v1053 = vsub.s32 0, %v1052
  %v1054 = vrot.slane %v1049, %v1053
  %v1072 = vunpack.c.l.b16 %v1033
  %v1073 = vunpack.c.l.b16 %v1034
  %v1074 = vunpack.c.l.b16 %v1035
  %v1075 = vunpack.c.l.b16 %v1036
  %v1076 = vunpack.c.l.b16 %v1037
  %v1077 = vunpack.c.l.b16 %v1038
  %v1078 = vunpack.c.l.b16 %v1039
  %v1079 = vunpack.c.l.b16 %v1040
  %v1080 = vunpack.c.l.b16 %v1041
  %v1081 = vunpack.c.l.b16 %v1042
  %v1082 = vunpack.c.l.b16 %v1043
  %v1083 = vunpack.c.l.b16 %v1044
  %v1084 = vunpack.c.l.b16 %v1045
  %v1085 = vunpack.c.l.b16 %v1046
  %v1086 = vunpack.c.l.b16 %v1047
  %v1087 = vunpack.c.l.b16 %v1048
  %v1088 = vpack.c.b16 %v1073, %v1072
  %v1089 = vpack.c.b16 %v1075, %v1074
  %v1090 = vpack.c.b16 %v1077, %v1076
  %v1091 = vpack.c.b16 %v1079, %v1078
  %v1092 = vpack.c.b16 %v1081, %v1080
  %v1093 = vpack.c.b16 %v1083, %v1082
  %v1094 = vpack.c.b16 %v1085, %v1084
  %v1095 = vpack.c.b16 %v1087, %v1086
  %1104 = vmatprep.subr.bf16.mxu0 0
  %1105 = vmatpush1.bf16.msra.mxu0 %v1095
  %1106 = vmatprep.subr.bf16.mxu0 0
  %1107 = vmatpush1.bf16.msra.mxu0 %v1094
  %1108 = vmatprep.subr.bf16.mxu0 0
  %1109 = vmatpush1.bf16.msra.mxu0 %v1093
  %1110 = vmatprep.subr.bf16.mxu0 0
  %1111 = vmatpush1.bf16.msra.mxu0 %v1092
  %1112 = vmatprep.subr.bf16.mxu0 0
  %1113 = vmatpush1.bf16.msra.mxu0 %v1091
  %1114 = vmatprep.subr.bf16.mxu0 0
  %1115 = vmatpush1.bf16.msra.mxu0 %v1090
  %1116 = vmatprep.subr.bf16.mxu0 0
  %1117 = vmatpush1.bf16.msra.mxu0 %v1089
  %1118 = vmatprep.subr.bf16.mxu0 0
  %1119 = vmatpush1.bf16.msra.mxu0 %v1088
  %1120 = vmatprep.subr.bf16.mxu0 0
  %1121 = vmatpush2.bf16.msra.mxu0 0
  %1122 = vmatprep.subr.bf16.mxu0 0
  %1123 = vmatpush2.bf16.msra.mxu0 0
  %1124 = vmatprep.subr.bf16.mxu0 0
  %1125 = vmatpush2.bf16.msra.mxu0 0
  %1126 = vmatprep.subr.bf16.mxu0 0
  %1127 = vmatpush2.bf16.msra.mxu0 0
  %1128 = vmatprep.subr.bf16.mxu0 0
  %1129 = vmatpush2.bf16.msra.mxu0 0
  %1130 = vmatprep.subr.bf16.mxu0 0
  %1131 = vmatpush2.bf16.msra.mxu0 0
  %1132 = vmatprep.subr.bf16.mxu0 0
  %1133 = vmatpush2.bf16.msra.mxu0 0
  %1134 = vmatprep.subr.bf16.mxu0 0
  %1135 = vmatpush2.bf16.msra.mxu0 0
  %1136 = vmatprep.mubr.bf16.mxu0 0
  %1137 = vmatmul.mubr.bf16.gmra.mxu0 %v1001
  %v1138 = vpop.f32.mrf.mxu0
  %v1139 = vadd.f32 %v1054, %v1138
  %v1140 = vpop.f32.mrf.mxu0
  %v1141 = vpop.f32.mrf.mxu0
  %v1142 = vadd.f32 %v1054, %v1141
  %v1143 = vpop.f32.mrf.mxu0
  %1144 = vmatprep.mubr.bf16.mxu0 0
  %1145 = vmatmul.mubr.bf16.gmra.mxu0 %v1002
  %v1146 = vpop.f32.mrf.mxu0
  %v1147 = vadd.f32 %v1054, %v1146
  %v1148 = vpop.f32.mrf.mxu0
  %v1149 = vpop.f32.mrf.mxu0
  %v1150 = vadd.f32 %v1054, %v1149
  %v1151 = vpop.f32.mrf.mxu0
  %1152 = vmatprep.mubr.bf16.mxu0 0
  %1153 = vmatmul.mubr.bf16.gmra.mxu0 %v1003
  %v1154 = vpop.f32.mrf.mxu0
  %v1155 = vadd.f32 %v1054, %v1154
  %v1156 = vpop.f32.mrf.mxu0
  %v1157 = vpop.f32.mrf.mxu0
  %v1158 = vadd.f32 %v1054, %v1157
  %v1159 = vpop.f32.mrf.mxu0
  %1160 = vmatprep.mubr.bf16.mxu0 0
  %1161 = vmatmul.mubr.bf16.gmra.mxu0 %v1004
  %v1162 = vpop.f32.mrf.mxu0
  %v1163 = vadd.f32 %v1054, %v1162
  %v1164 = vpop.f32.mrf.mxu0
  %v1165 = vpop.f32.mrf.mxu0
  %v1166 = vadd.f32 %v1054, %v1165
  %v1167 = vpop.f32.mrf.mxu0
  %1168 = vmatprep.mubr.bf16.mxu0 0
  %1169 = vmatmul.mubr.bf16.gmra.mxu0 %v1005
  %v1170 = vpop.f32.mrf.mxu0
  %v1171 = vadd.f32 %v1054, %v1170
  %v1172 = vpop.f32.mrf.mxu0
  %v1173 = vpop.f32.mrf.mxu0
  %v1174 = vadd.f32 %v1054, %v1173
  %v1175 = vpop.f32.mrf.mxu0
  %1176 = vmatprep.mubr.bf16.mxu0 0
  %1177 = vmatmul.mubr.bf16.gmra.mxu0 %v1006
  %v1178 = vpop.f32.mrf.mxu0
  %v1179 = vadd.f32 %v1054, %v1178
  %v1180 = vpop.f32.mrf.mxu0
  %v1181 = vpop.f32.mrf.mxu0
  %v1182 = vadd.f32 %v1054, %v1181
  %v1183 = vpop.f32.mrf.mxu0
  %1184 = vmatprep.mubr.bf16.mxu0 0
  %1185 = vmatmul.mubr.bf16.gmra.mxu0 %v1007
  %v1186 = vpop.f32.mrf.mxu0
  %v1187 = vadd.f32 %v1054, %v1186
  %v1188 = vpop.f32.mrf.mxu0
  %v1189 = vpop.f32.mrf.mxu0
  %v1190 = vadd.f32 %v1054, %v1189
  %v1191 = vpop.f32.mrf.mxu0
  %1192 = vmatprep.mubr.bf16.mxu0 0
  %1193 = vmatmul.mubr.bf16.gmra.mxu0 %v1008
  %v1194 = vpop.f32.mrf.mxu0
  %v1195 = vadd.f32 %v1054, %v1194
  %v1196 = vpop.f32.mrf.mxu0
  %v1197 = vpop.f32.mrf.mxu0
  %v1198 = vadd.f32 %v1054, %v1197
  %v1199 = vpop.f32.mrf.mxu0
  %1200 = vmatprep.mubr.bf16.mxu0 0
  %1201 = vmatmul.mubr.bf16.gmra.mxu0 %v1009
  %v1202 = vpop.f32.mrf.mxu0
  %v1203 = vadd.f32 %v1054, %v1202
  %v1204 = vpop.f32.mrf.mxu0
  %v1205 = vpop.f32.mrf.mxu0
  %v1206 = vadd.f32 %v1054, %v1205
  %v1207 = vpop.f32.mrf.mxu0
  %1208 = vmatprep.mubr.bf16.mxu0 0
  %1209 = vmatmul.mubr.bf16.gmra.mxu0 %v1010
  %v1210 = vpop.f32.mrf.mxu0
  %v1211 = vadd.f32 %v1054, %v1210
  %v1212 = vpop.f32.mrf.mxu0
  %v1213 = vpop.f32.mrf.mxu0
  %v1214 = vadd.f32 %v1054, %v1213
  %v1215 = vpop.f32.mrf.mxu0
  %1216 = vmatprep.mubr.bf16.mxu0 0
  %1217 = vmatmul.mubr.bf16.gmra.mxu0 %v1011
  %v1218 = vpop.f32.mrf.mxu0
  %v1219 = vadd.f32 %v1054, %v1218
  %v1220 = vpop.f32.mrf.mxu0
  %v1221 = vpop.f32.mrf.mxu0
  %v1222 = vadd.f32 %v1054, %v1221
  %v1223 = vpop.f32.mrf.mxu0
  %1224 = vmatprep.mubr.bf16.mxu0 0
  %1225 = vmatmul.mubr.bf16.gmra.mxu0 %v1012
  %v1226 = vpop.f32.mrf.mxu0
  %v1227 = vadd.f32 %v1054, %v1226
  %v1228 = vpop.f32.mrf.mxu0
  %v1229 = vpop.f32.mrf.mxu0
  %v1230 = vadd.f32 %v1054, %v1229
  %v1231 = vpop.f32.mrf.mxu0
  %1232 = vmatprep.mubr.bf16.mxu0 0
  %1233 = vmatmul.mubr.bf16.gmra.mxu0 %v1013
  %v1234 = vpop.f32.mrf.mxu0
  %v1235 = vadd.f32 %v1054, %v1234
  %v1236 = vpop.f32.mrf.mxu0
  %v1237 = vpop.f32.mrf.mxu0
  %v1238 = vadd.f32 %v1054, %v1237
  %v1239 = vpop.f32.mrf.mxu0
  %1240 = vmatprep.mubr.bf16.mxu0 0
  %1241 = vmatmul.mubr.bf16.gmra.mxu0 %v1014
  %v1242 = vpop.f32.mrf.mxu0
  %v1243 = vadd.f32 %v1054, %v1242
  %v1244 = vpop.f32.mrf.mxu0
  %v1245 = vpop.f32.mrf.mxu0
  %v1246 = vadd.f32 %v1054, %v1245
  %v1247 = vpop.f32.mrf.mxu0
  %1248 = vmatprep.mubr.bf16.mxu0 0
  %1249 = vmatmul.mubr.bf16.gmra.mxu0 %v1015
  %v1250 = vpop.f32.mrf.mxu0
  %v1251 = vadd.f32 %v1054, %v1250
  %v1252 = vpop.f32.mrf.mxu0
  %v1253 = vpop.f32.mrf.mxu0
  %v1254 = vadd.f32 %v1054, %v1253
  %v1255 = vpop.f32.mrf.mxu0
  %1256 = vmatprep.mubr.bf16.mxu0 0
  %1257 = vmatmul.mubr.bf16.gmra.mxu0 %v1016
  %v1258 = vpop.f32.mrf.mxu0
  %v1259 = vadd.f32 %v1054, %v1258
  %v1260 = vpop.f32.mrf.mxu0
  %v1261 = vpop.f32.mrf.mxu0
  %v1262 = vadd.f32 %v1054, %v1261
  %v1263 = vpop.f32.mrf.mxu0
  %1264 = vmatprep.mubr.bf16.mxu0 0
  %1265 = vmatmul.mubr.bf16.gmra.mxu0 %v1017
  %v1266 = vpop.f32.mrf.mxu0
  %v1267 = vadd.f32 %v1054, %v1266
  %v1268 = vpop.f32.mrf.mxu0
  %v1269 = vpop.f32.mrf.mxu0
  %v1270 = vadd.f32 %v1054, %v1269
  %v1271 = vpop.f32.mrf.mxu0
  %1272 = vmatprep.mubr.bf16.mxu0 0
  %1273 = vmatmul.mubr.bf16.gmra.mxu0 %v1018
  %v1274 = vpop.f32.mrf.mxu0
  %v1275 = vadd.f32 %v1054, %v1274
  %v1276 = vpop.f32.mrf.mxu0
  %v1277 = vpop.f32.mrf.mxu0
  %v1278 = vadd.f32 %v1054, %v1277
  %v1279 = vpop.f32.mrf.mxu0
  %1280 = vmatprep.mubr.bf16.mxu0 0
  %1281 = vmatmul.mubr.bf16.gmra.mxu0 %v1019
  %v1282 = vpop.f32.mrf.mxu0
  %v1283 = vadd.f32 %v1054, %v1282
  %v1284 = vpop.f32.mrf.mxu0
  %v1285 = vpop.f32.mrf.mxu0
  %v1286 = vadd.f32 %v1054, %v1285
  %v1287 = vpop.f32.mrf.mxu0
  %1288 = vmatprep.mubr.bf16.mxu0 0
  %1289 = vmatmul.mubr.bf16.gmra.mxu0 %v1020
  %v1290 = vpop.f32.mrf.mxu0
  %v1291 = vadd.f32 %v1054, %v1290
  %v1292 = vpop.f32.mrf.mxu0
  %v1293 = vpop.f32.mrf.mxu0
  %v1294 = vadd.f32 %v1054, %v1293
  %v1295 = vpop.f32.mrf.mxu0
  %1296 = vmatprep.mubr.bf16.mxu0 0
  %1297 = vmatmul.mubr.bf16.gmra.mxu0 %v1021
  %v1298 = vpop.f32.mrf.mxu0
  %v1299 = vadd.f32 %v1054, %v1298
  %v1300 = vpop.f32.mrf.mxu0
  %v1301 = vpop.f32.mrf.mxu0
  %v1302 = vadd.f32 %v1054, %v1301
  %v1303 = vpop.f32.mrf.mxu0
  %1304 = vmatprep.mubr.bf16.mxu0 0
  %1305 = vmatmul.mubr.bf16.gmra.mxu0 %v1022
  %v1306 = vpop.f32.mrf.mxu0
  %v1307 = vadd.f32 %v1054, %v1306
  %v1308 = vpop.f32.mrf.mxu0
  %v1309 = vpop.f32.mrf.mxu0
  %v1310 = vadd.f32 %v1054, %v1309
  %v1311 = vpop.f32.mrf.mxu0
  %1312 = vmatprep.mubr.bf16.mxu0 0
  %1313 = vmatmul.mubr.bf16.gmra.mxu0 %v1023
  %v1314 = vpop.f32.mrf.mxu0
  %v1315 = vadd.f32 %v1054, %v1314
  %v1316 = vpop.f32.mrf.mxu0
  %v1317 = vpop.f32.mrf.mxu0
  %v1318 = vadd.f32 %v1054, %v1317
  %v1319 = vpop.f32.mrf.mxu0
  %1320 = vmatprep.mubr.bf16.mxu0 0
  %1321 = vmatmul.mubr.bf16.gmra.mxu0 %v1024
  %v1322 = vpop.f32.mrf.mxu0
  %v1323 = vadd.f32 %v1054, %v1322
  %v1324 = vpop.f32.mrf.mxu0
  %v1325 = vpop.f32.mrf.mxu0
  %v1326 = vadd.f32 %v1054, %v1325
  %v1327 = vpop.f32.mrf.mxu0
  %1328 = vmatprep.mubr.bf16.mxu0 0
  %1329 = vmatmul.mubr.bf16.gmra.mxu0 %v1025
  %v1330 = vpop.f32.mrf.mxu0
  %v1331 = vadd.f32 %v1054, %v1330
  %v1332 = vpop.f32.mrf.mxu0
  %v1333 = vpop.f32.mrf.mxu0
  %v1334 = vadd.f32 %v1054, %v1333
  %v1335 = vpop.f32.mrf.mxu0
  %1336 = vmatprep.mubr.bf16.mxu0 0
  %1337 = vmatmul.mubr.bf16.gmra.mxu0 %v1026
  %v1338 = vpop.f32.mrf.mxu0
  %v1339 = vadd.f32 %v1054, %v1338
  %v1340 = vpop.f32.mrf.mxu0
  %v1341 = vpop.f32.mrf.mxu0
  %v1342 = vadd.f32 %v1054, %v1341
  %v1343 = vpop.f32.mrf.mxu0
  %1344 = vmatprep.mubr.bf16.mxu0 0
  %1345 = vmatmul.mubr.bf16.gmra.mxu0 %v1027
  %v1346 = vpop.f32.mrf.mxu0
  %v1347 = vadd.f32 %v1054, %v1346
  %v1348 = vpop.f32.mrf.mxu0
  %v1349 = vpop.f32.mrf.mxu0
  %v1350 = vadd.f32 %v1054, %v1349
  %v1351 = vpop.f32.mrf.mxu0
  %1352 = vmatprep.mubr.bf16.mxu0 0
  %1353 = vmatmul.mubr.bf16.gmra.mxu0 %v1028
  %v1354 = vpop.f32.mrf.mxu0
  %v1355 = vadd.f32 %v1054, %v1354
  %v1356 = vpop.f32.mrf.mxu0
  %v1357 = vpop.f32.mrf.mxu0
  %v1358 = vadd.f32 %v1054, %v1357
  %v1359 = vpop.f32.mrf.mxu0
  %1360 = vmatprep.mubr.bf16.mxu0 0
  %1361 = vmatmul.mubr.bf16.gmra.mxu0 %v1029
  %v1362 = vpop.f32.mrf.mxu0
  %v1363 = vadd.f32 %v1054, %v1362
  %v1364 = vpop.f32.mrf.mxu0
  %v1365 = vpop.f32.mrf.mxu0
  %v1366 = vadd.f32 %v1054, %v1365
  %v1367 = vpop.f32.mrf.mxu0
  %1368 = vmatprep.mubr.bf16.mxu0 0
  %1369 = vmatmul.mubr.bf16.gmra.mxu0 %v1030
  %v1370 = vpop.f32.mrf.mxu0
  %v1371 = vadd.f32 %v1054, %v1370
  %v1372 = vpop.f32.mrf.mxu0
  %v1373 = vpop.f32.mrf.mxu0
  %v1374 = vadd.f32 %v1054, %v1373
  %v1375 = vpop.f32.mrf.mxu0
  %1376 = vmatprep.mubr.bf16.mxu0 0
  %1377 = vmatmul.mubr.bf16.gmra.mxu0 %v1031
  %v1378 = vpop.f32.mrf.mxu0
  %v1379 = vadd.f32 %v1054, %v1378
  %v1380 = vpop.f32.mrf.mxu0
  %v1381 = vpop.f32.mrf.mxu0
  %v1382 = vadd.f32 %v1054, %v1381
  %v1383 = vpop.f32.mrf.mxu0
  %1384 = vmatprep.mubr.bf16.mxu0 0
  %1385 = vmatmul.mubr.bf16.gmra.mxu0 %v1032
  %v1386 = vpop.f32.mrf.mxu0
  %v1387 = vadd.f32 %v1054, %v1386
  %v1388 = vpop.f32.mrf.mxu0
  %v1389 = vpop.f32.mrf.mxu0
  %v1390 = vadd.f32 %v1054, %v1389
  %v1391 = vpop.f32.mrf.mxu0
  %1392 = vdwg.mxu0
  %1393 = vst [vmem:[%s5] sm:$0xff] %v1139
  %1394 = vst [vmem:[%s5 + $0x8] sm:$0xff] %v1142
  %1395 = vst [vmem:[%s5 + $0x10] sm:$0xff] %v1147
  %1396 = vst [vmem:[%s5 + $0x18] sm:$0xff] %v1150
  %1397 = vst [vmem:[%s5 + $0x20] sm:$0xff] %v1155
  %1398 = vst [vmem:[%s5 + $0x28] sm:$0xff] %v1158
  %1399 = vst [vmem:[%s5 + $0x30] sm:$0xff] %v1163
  %1400 = vst [vmem:[%s5 + $0x38] sm:$0xff] %v1166
  %1401 = vst [vmem:[%s5 + $0x40] sm:$0xff] %v1171
  %1402 = vst [vmem:[%s5 + $0x48] sm:$0xff] %v1174
  %1403 = vst [vmem:[%s5 + $0x50] sm:$0xff] %v1179
  %1404 = vst [vmem:[%s5 + $0x58] sm:$0xff] %v1182
  %1405 = vst [vmem:[%s5 + $0x60] sm:$0xff] %v1187
  %1406 = vst [vmem:[%s5 + $0x68] sm:$0xff] %v1190
  %1407 = vst [vmem:[%s5 + $0x70] sm:$0xff] %v1195
  %1408 = vst [vmem:[%s5 + $0x78] sm:$0xff] %v1198
  %1409 = vst [vmem:[%s5 + $0x80] sm:$0xff] %v1203
  %1410 = vst [vmem:[%s5 + $0x88] sm:$0xff] %v1206
  %1411 = vst [vmem:[%s5 + $0x90] sm:$0xff] %v1211
  %1412 = vst [vmem:[%s5 + $0x98] sm:$0xff] %v1214
  %1413 = vst [vmem:[%s5 + $0xa0] sm:$0xff] %v1219
  %1414 = vst [vmem:[%s5 + $0xa8] sm:$0xff] %v1222
  %1415 = vst [vmem:[%s5 + $0xb0] sm:$0xff] %v1227
  %1416 = vst [vmem:[%s5 + $0xb8] sm:$0xff] %v1230
  %1417 = vst [vmem:[%s5 + $0xc0] sm:$0xff] %v1235
  %1418 = vst [vmem:[%s5 + $0xc8] sm:$0xff] %v1238
  %1419 = vst [vmem:[%s5 + $0xd0] sm:$0xff] %v1243
  %1420 = vst [vmem:[%s5 + $0xd8] sm:$0xff] %v1246
  %1421 = vst [vmem:[%s5 + $0xe0] sm:$0xff] %v1251
  %1422 = vst [vmem:[%s5 + $0xe8] sm:$0xff] %v1254
  %1423 = vst [vmem:[%s5 + $0xf0] sm:$0xff] %v1259
  %1424 = vst [vmem:[%s5 + $0xf8] sm:$0xff] %v1262
  %1425 = vst [vmem:[%s5 + $0x100] sm:$0xff] %v1267
  %1426 = vst [vmem:[%s5 + $0x108] sm:$0xff] %v1270
  %1427 = vst [vmem:[%s5 + $0x110] sm:$0xff] %v1275
  %1428 = vst [vmem:[%s5 + $0x118] sm:$0xff] %v1278
  %1429 = vst [vmem:[%s5 + $0x120] sm:$0xff] %v1283
  %1430 = vst [vmem:[%s5 + $0x128] sm:$0xff] %v1286
  %1431 = vst [vmem:[%s5 + $0x130] sm:$0xff] %v1291
  %1432 = vst [vmem:[%s5 + $0x138] sm:$0xff] %v1294
  %1433 = vst [vmem:[%s5 + $0x140] sm:$0xff] %v1299
  %1434 = vst [vmem:[%s5 + $0x148] sm:$0xff] %v1302
  %1435 = vst [vmem:[%s5 + $0x150] sm:$0xff] %v1307
  %1436 = vst [vmem:[%s5 + $0x158] sm:$0xff] %v1310
  %1437 = vst [vmem:[%s5 + $0x160] sm:$0xff] %v1315
  %1438 = vst [vmem:[%s5 + $0x168] sm:$0xff] %v1318
  %1439 = vst [vmem:[%s5 + $0x170] sm:$0xff] %v1323
  %1440 = vst [vmem:[%s5 + $0x178] sm:$0xff] %v1326
  %1441 = vst [vmem:[%s5 + $0x180] sm:$0xff] %v1331
  %1442 = vst [vmem:[%s5 + $0x188] sm:$0xff] %v1334
  %1443 = vst [vmem:[%s5 + $0x190] sm:$0xff] %v1339
  %1444 = vst [vmem:[%s5 + $0x198] sm:$0xff] %v1342
  %1445 = vst [vmem:[%s5 + $0x1a0] sm:$0xff] %v1347
  %1446 = vst [vmem:[%s5 + $0x1a8] sm:$0xff] %v1350
  %1447 = vst [vmem:[%s5 + $0x1b0] sm:$0xff] %v1355
  %1448 = vst [vmem:[%s5 + $0x1b8] sm:$0xff] %v1358
  %1449 = vst [vmem:[%s5 + $0x1c0] sm:$0xff] %v1363
  %1450 = vst [vmem:[%s5 + $0x1c8] sm:$0xff] %v1366
  %1451 = vst [vmem:[%s5 + $0x1d0] sm:$0xff] %v1371
  %1452 = vst [vmem:[%s5 + $0x1d8] sm:$0xff] %v1374
  %1453 = vst [vmem:[%s5 + $0x1e0] sm:$0xff] %v1379
  %1454 = vst [vmem:[%s5 + $0x1e8] sm:$0xff] %v1382
  %1455 = vst [vmem:[%s5 + $0x1f0] sm:$0xff] %v1387
  %1456 = vst [vmem:[%s5 + $0x1f8] sm:$0xff] %v1390
  // Predicated region
  $region22: #{sfi_forward.23} parent=0 // pred_check
    _
  $region23: #{sfi_forward.23} parent=0 // pred_check_branch
    %1458 = sbr.rel (0) target = $region25
  $region24: #{sfi_forward.23} parent=0 // pred_region
    _
  $region25: #{sfi_forward.23} parent=0 // pred_fallthru
    _
  // Predicated region
  $region26: #{sfi_forward.23} parent=0 // pred_check
    _
  $region27: #{sfi_forward.23} parent=0 // pred_check_branch
    %1460 = sbr.rel (0) target = $region29
  $region28: #{sfi_forward.23} parent=0 // pred_region
    _
  $region29: #{sfi_forward.23} parent=0 // pred_fallthru
    _

</llo_original>
